<compile_context>
chip_gen: v7x
topology: tpu7x:2x2x1
jax: 0.10.0
libtpu: 0.0.40
codegen_flags: <defaults>
</compile_context>

<pallas_src>
import functools

import jax
import jax.numpy as jnp
from jax import lax
from jax.experimental import pallas as pl
from jax.experimental.pallas import tpu as pltpu

BN_EPS = 1e-5  # PyTorch BatchNorm2d default eps


# ---------------------------------------------------------------------------
# In-kernel math helpers (f32)
# ---------------------------------------------------------------------------
def _bn(y, gamma, beta):
    # batch statistics over all rows (= N*H*W) per channel, biased variance,
    # one-pass form: var = E[y^2] - E[y]^2.
    mu = jnp.mean(y, axis=0, keepdims=True)
    var = jnp.maximum(jnp.mean(y * y, axis=0, keepdims=True) - mu * mu, 0.0)
    return (y - mu) * lax.rsqrt(var + BN_EPS) * gamma + beta


def _softmax(logits):
    m = jnp.max(logits, axis=1, keepdims=True)
    e = jnp.exp(logits - m)
    return e / jnp.sum(e, axis=1, keepdims=True)


# ---------------------------------------------------------------------------
# Single fused kernel:
#   grid=(f_blocks,) ("arbitrary"); step 0 additionally runs the stem conv, the
#   last step additionally runs the fused policy/value heads.  The flat
#   activation stays resident in VMEM scratch across steps.
# ---------------------------------------------------------------------------
def _fused_kernel(xin_ref, mask_ref, stem_w_ref, stem_b_ref,
                  w1_ref, w2_ref, bn_ref, head_w_ref, head_bn_ref,
                  selT_ref, wp0_ref, wp1_ref, bp_ref,
                  wv1e_ref, bv1_ref, wv2_ref, bv2_ref, supp_ref,
                  p_ref, v_ref, xflat_ref, yflat_ref,
                  *, m, w_sz, pad, is_train, epsilon):
    blk = pl.program_id(0)
    nblk = pl.num_programs(0)

    def conv3x3(src_ref, w_ref):
        # 3x3 "same" conv on a flat (PAD + M + PAD, Cin) activation: nine static
        # sublane-shifted slices, border-masked, contracted with per-tap bf16
        # weights, accumulated in f32 (no im2col panel, no concatenation).
        acc = None
        for dy in (-1, 0, 1):
            for dx in (-1, 0, 1):
                tap = (dy + 1) * 3 + (dx + 1)
                shifted = src_ref[pl.ds(pad + dy * w_sz + dx, m), :]
                if dy == 0 and dx == 0:
                    tapped = shifted                       # center: always valid
                else:
                    tapped = shifted * mask_ref[tap]       # zero outside borders
                part = jnp.dot(tapped.astype(jnp.bfloat16), w_ref[tap],
                               preferred_element_type=jnp.float32)
                acc = part if acc is None else acc + part
        return acc

    # ---- stem conv (grid step 0 only): fill the flat running activation ------
    @pl.when(blk == 0)
    def _stem():
        xflat_ref[...] = jnp.zeros_like(xflat_ref)   # keep row-padding zero
        yflat_ref[...] = jnp.zeros_like(yflat_ref)
        y = conv3x3(xin_ref, stem_w_ref) + stem_b_ref[...]
        xflat_ref[pl.ds(pad, m), :] = y

    # ---- BasicBlock: conv -> BN -> ReLU -> conv -> BN -> +skip -> ReLU -------
    bnp = bn_ref[...]                                 # (6, C): b1,g1,be1,b2,g2,be2
    residual = xflat_ref[pl.ds(pad, m), :]

    y1 = conv3x3(xflat_ref, w1_ref) + bnp[0:1, :]
    y1 = jnp.maximum(_bn(y1, bnp[1:2, :], bnp[2:3, :]), 0.0)
    yflat_ref[pl.ds(pad, m), :] = y1

    y2 = conv3x3(yflat_ref, w2_ref) + bnp[3:4, :]
    x_new = jnp.maximum(_bn(y2, bnp[4:5, :], bnp[5:6, :]) + residual, 0.0)
    xflat_ref[pl.ds(pad, m), :] = x_new

    # ---- fused heads (last grid step only) ------------------------------------
    @pl.when(blk == nblk - 1)
    def _heads():
        # fused policy(2ch)+value(1ch) 1x1 conv + per-channel BN + ReLU
        z = jnp.dot(x_new.astype(jnp.bfloat16), head_w_ref[...],
                    preferred_element_type=jnp.float32)          # (M, 3)
        hb = head_bn_ref[...]                                    # rows: bias,gamma,beta
        z = jnp.maximum(_bn(z + hb[0:1, :], hb[1:2, :], hb[2:3, :]), 0.0)

        selT = selT_ref[...]                                     # (N, M) 0/1 row->sample

        # policy: per-pixel weight combine then per-sample sum via selT matmul.
        # (The NCHW .view() flatten is folded into wp0/wp1 at prep time.)
        zp = z[:, 0:1] * wp0_ref[...] + z[:, 1:2] * wp1_ref[...]  # (M, A)
        logits_p = (jnp.dot(selT, zp.astype(jnp.bfloat16),
                            preferred_element_type=jnp.float32) + bp_ref[...])
        p_ref[...] = _softmax(logits_p)

        # value: Linear(H*W -> C) + ReLU + Linear(C -> v_dim) + softmax (+ to_scalar)
        zv = z[:, 2:3] * wv1e_ref[...]                            # (M, C)
        hv = jnp.maximum(jnp.dot(selT, zv.astype(jnp.bfloat16),
                                 preferred_element_type=jnp.float32)
                         + bv1_ref[...], 0.0)
        logits_v = (jnp.dot(hv.astype(jnp.bfloat16), wv2_ref[...],
                            preferred_element_type=jnp.float32) + bv2_ref[...])
        probs = _softmax(logits_v)
        if is_train:
            v_ref[...] = probs
        else:
            # MuZeroAtari.to_scalar (inverse value transform)
            x = jnp.sum(supp_ref[...] * probs, axis=1, keepdims=True)
            sign = jnp.where(x > 0.0, 1.0, jnp.where(x < 0.0, -1.0, 0.0))
            s = (jnp.sqrt(1.0 + 4.0 * epsilon * (jnp.abs(x) + 1.0 + epsilon))
                 - 1.0) / (2.0 * epsilon)
            v_ref[...] = sign * (s * s - 1.0)


# ---------------------------------------------------------------------------
# Deterministic parameter init (synthetic; shapes follow the PyTorch __init__)
# ---------------------------------------------------------------------------
def init_params(key, state_shape, action_dim, f_blocks, f_channels, v_heads):
    h_channels, height, width = state_shape
    keys = iter(jax.random.split(key, 128))

    def wgt(shape):
        fan_in = 1
        for d in shape[1:]:
            fan_in *= d
        return jax.random.normal(next(keys), shape, jnp.float32) / jnp.sqrt(float(fan_in))

    def small(shape):
        return 0.05 * jax.random.normal(next(keys), shape, jnp.float32)

    v_dim = v_heads[1] - v_heads[0] + 1
    return {
        'pred_conv_w': wgt((f_channels, h_channels, 3, 3)),
        'pred_conv_b': small((f_channels,)),
        'pred_blocks': [
            {'w1': wgt((f_channels, f_channels, 3, 3)), 'b1': small((f_channels,)),
             'g1': 1.0 + small((f_channels,)), 'be1': small((f_channels,)),
             'w2': wgt((f_channels, f_channels, 3, 3)), 'b2': small((f_channels,)),
             'g2': 1.0 + small((f_channels,)), 'be2': small((f_channels,))}
            for _ in range(f_blocks)
        ],
        'p_front_w': wgt((2, f_channels, 1, 1)), 'p_front_b': small((2,)),
        'p_front_g': 1.0 + small((2,)), 'p_front_be': small((2,)),
        'p_end_w': wgt((action_dim, 2 * height * width)), 'p_end_b': small((action_dim,)),
        'v_front_w': wgt((1, f_channels, 1, 1)), 'v_front_b': small((1,)),
        'v_front_g': 1.0 + small((1,)), 'v_front_be': small((1,)),
        'v_end_w1': wgt((f_channels, height * width)), 'v_end_b1': small((f_channels,)),
        'v_end_w2': wgt((v_dim, f_channels)), 'v_end_b2': small((v_dim,)),
        'v_supp': jnp.arange(v_heads[0], v_heads[1] + 1, dtype=jnp.float32),
    }


# ---------------------------------------------------------------------------
# One-time parameter preparation: everything pre-laid-out for the kernel.
# (batch is needed because the per-pixel head weights / selection matrix are
#  tiled over the batch so the kernel never reshapes.)
# ---------------------------------------------------------------------------
def prepare_params(raw, state_shape, batch):
    _, height, width = state_shape
    hw = height * width
    m = batch * hw
    c = raw['pred_conv_w'].shape[0]
    bf16 = jnp.bfloat16

    def conv3x3_w(w):   # (cout, cin, 3, 3) -> (9, cin, cout), tap-major (ky*3+kx)
        cout, cin = w.shape[0], w.shape[1]
        return jnp.transpose(w, (2, 3, 1, 0)).reshape(9, cin, cout)

    def row(v):
        return jnp.asarray(v, jnp.float32).reshape(1, -1)

    blk_w1 = jnp.stack([conv3x3_w(b['w1']) for b in raw['pred_blocks']]).astype(bf16)
    blk_w2 = jnp.stack([conv3x3_w(b['w2']) for b in raw['pred_blocks']]).astype(bf16)
    blk_bn = jnp.stack([jnp.stack([b['b1'], b['g1'], b['be1'],
                                   b['b2'], b['g2'], b['be2']])
                        for b in raw['pred_blocks']])                      # (B, 6, C)

    # fused policy(2)+value(1) 1x1 conv; per-channel BN so stats stay correct
    head_w = jnp.concatenate([raw['p_front_w'].reshape(2, c).T,
                              raw['v_front_w'].reshape(1, c).T], axis=1).astype(bf16)
    head_bn = jnp.stack([
        jnp.concatenate([raw['p_front_b'], raw['v_front_b']]),
        jnp.concatenate([raw['p_front_g'], raw['v_front_g']]),
        jnp.concatenate([raw['p_front_be'], raw['v_front_be']]),
    ])                                                                      # (3, 3)

    # 3x3-conv border masks for the flat (M, C) activation layout.
    rows = jnp.arange(m, dtype=jnp.int32)
    wc = rows % width
    hc = (rows // width) % height
    masks = []
    for dy in (-1, 0, 1):
        for dx in (-1, 0, 1):
            ok = ((hc + dy >= 0) & (hc + dy < height) &
                  (wc + dx >= 0) & (wc + dx < width))
            masks.append(ok.astype(jnp.float32))
    masks = jnp.stack(masks).reshape(9, m, 1)

    # row -> sample selection matrix, and per-pixel expanded head-end weights
    # (this is where the PyTorch NCHW .view() flatten of the heads is folded in).
    selT = (rows[None, :] // hw ==
            jnp.arange(batch, dtype=jnp.int32)[:, None]).astype(bf16)       # (N, M)
    wp0 = jnp.tile(raw['p_end_w'][:, 0:hw].T, (batch, 1))                   # (M, A)
    wp1 = jnp.tile(raw['p_end_w'][:, hw:2 * hw].T, (batch, 1))              # (M, A)
    wv1e = jnp.tile(raw['v_end_w1'].T, (batch, 1))                          # (M, C)

    return {
        'stem_w': conv3x3_w(raw['pred_conv_w']).astype(bf16),
        'stem_b': row(raw['pred_conv_b']),
        'blk_w1': blk_w1, 'blk_w2': blk_w2, 'blk_bn': blk_bn,
        'head_w': head_w, 'head_bn': head_bn,
        'masks': masks, 'selT': selT,
        'wp0': wp0, 'wp1': wp1, 'bp': row(raw['p_end_b']),
        'wv1e': wv1e, 'bv1': row(raw['v_end_b1']),
        'wv2': raw['v_end_w2'].T.astype(bf16), 'bv2': row(raw['v_end_b2']),
        'supp': row(raw['v_supp']),
    }


# ---------------------------------------------------------------------------
# MuZeroAtari.forward  (f: prediction function) — one pallas_call total
# ---------------------------------------------------------------------------
def muzero_atari_forward(params, state_nchw, *, is_train, epsilon=0.001):
    n, c_in, height, width = state_nchw.shape
    c_out = params['stem_w'].shape[2]
    f_blocks = params['blk_w1'].shape[0]
    action_dim = params['wp0'].shape[1]
    fch = params['wv2'].shape[0]
    v_dim = params['wv2'].shape[1]
    hw = height * width
    m = n * hw
    pad = ((width + 1 + 7) // 8) * 8          # >= width+1 and sublane aligned
    assert f_blocks >= 1 and params['selT'].shape == (n, m)

    # One-time input prep: NCHW -> flat NHWC rows, zero row-padding for the taps.
    xflat = jnp.transpose(state_nchw, (0, 2, 3, 1)).reshape(m, c_in)
    xin = jnp.pad(xflat, ((pad, pad), (0, 0)))
    rows = 2 * pad + m

    out_dim = v_dim if is_train else 1
    kern = functools.partial(_fused_kernel, m=m, w_sz=width, pad=pad,
                             is_train=is_train, epsilon=epsilon)

    p, v = pl.pallas_call(
        kern,
        out_shape=(jax.ShapeDtypeStruct((n, action_dim), jnp.float32),
                   jax.ShapeDtypeStruct((n, out_dim), jnp.float32)),
        grid=(f_blocks,),
        in_specs=[
            pl.BlockSpec((rows, c_in), lambda i: (0, 0)),            # xin (padded flat)
            pl.BlockSpec((9, m, 1), lambda i: (0, 0, 0)),            # border masks
            pl.BlockSpec((9, c_in, c_out), lambda i: (0, 0, 0)),     # stem_w
            pl.BlockSpec((1, c_out), lambda i: (0, 0)),              # stem_b
            pl.BlockSpec((None, 9, c_out, c_out), lambda i: (i, 0, 0, 0)),  # blk_w1
            pl.BlockSpec((None, 9, c_out, c_out), lambda i: (i, 0, 0, 0)),  # blk_w2
            pl.BlockSpec((None, 6, c_out), lambda i: (i, 0, 0)),            # blk_bn
            pl.BlockSpec((c_out, 3), lambda i: (0, 0)),              # head_w
            pl.BlockSpec((3, 3), lambda i: (0, 0)),                  # head_bn
            pl.BlockSpec((n, m), lambda i: (0, 0)),                  # selT
            pl.BlockSpec((m, action_dim), lambda i: (0, 0)),         # wp0
            pl.BlockSpec((m, action_dim), lambda i: (0, 0)),         # wp1
            pl.BlockSpec((1, action_dim), lambda i: (0, 0)),         # bp
            pl.BlockSpec((m, fch), lambda i: (0, 0)),                # wv1e
            pl.BlockSpec((1, fch), lambda i: (0, 0)),                # bv1
            pl.BlockSpec((fch, v_dim), lambda i: (0, 0)),            # wv2
            pl.BlockSpec((1, v_dim), lambda i: (0, 0)),              # bv2
            pl.BlockSpec((1, v_dim), lambda i: (0, 0)),              # supp
        ],
        out_specs=(pl.BlockSpec((n, action_dim), lambda i: (0, 0)),
                   pl.BlockSpec((n, out_dim), lambda i: (0, 0))),
        scratch_shapes=[pltpu.VMEM((rows, c_out), jnp.float32),      # running x
                        pltpu.VMEM((rows, c_out), jnp.float32)],     # block intermediate
        compiler_params=pltpu.CompilerParams(
            dimension_semantics=("arbitrary",)),
    )(xin, params['masks'], params['stem_w'], params['stem_b'],
      params['blk_w1'], params['blk_w2'], params['blk_bn'],
      params['head_w'], params['head_bn'],
      params['selT'], params['wp0'], params['wp1'], params['bp'],
      params['wv1e'], params['bv1'], params['wv2'], params['bv2'], params['supp'])
    return p, v


if __name__ == "__main__":
    state_shape = (32, 8, 8)        # (channels, height, width) of the latent state
    action_dim = 4
    f_blocks = 2
    f_channels = 32
    v_heads = (-3, 3)
    is_train = False                # exercise the to_scalar path too
    batch = 2

    key = jax.random.PRNGKey(0)
    pkey, skey = jax.random.split(key)
    raw = init_params(pkey, state_shape, action_dim, f_blocks, f_channels, v_heads)
    params = prepare_params(raw, state_shape, batch)
    state = jax.random.normal(skey, (batch,) + state_shape, dtype=jnp.float32)

    fwd = jax.jit(functools.partial(muzero_atari_forward, is_train=is_train))
    p, v = fwd(params, state)
    jax.block_until_ready((p, v))

    v_dim = v_heads[1] - v_heads[0] + 1
    assert p.shape == (batch, action_dim), p.shape
    assert v.shape == (batch, 1 if not is_train else v_dim), v.shape
    assert bool(jnp.all(jnp.isfinite(p))) and bool(jnp.all(jnp.isfinite(v)))
    assert bool(jnp.all(p >= 0.0))
    assert bool(jnp.allclose(jnp.sum(p, axis=1), 1.0, atol=1e-3))
    print("KERNEL_OK")
</pallas_src>

<mosaic_0001>
module attributes {stable_mosaic.version = 11 : i64} {
  func.func @_fused_kernel(%arg0: i32, %arg1: memref<160x32xf32, #tpu.memory_space<vmem>>, %arg2: memref<9x128x1xf32, #tpu.memory_space<vmem>>, %arg3: memref<9x32x32xbf16, #tpu.memory_space<vmem>>, %arg4: memref<1x32xf32, #tpu.memory_space<vmem>>, %arg5: memref<1x9x32x32xbf16, #tpu.memory_space<vmem>>, %arg6: memref<1x9x32x32xbf16, #tpu.memory_space<vmem>>, %arg7: memref<1x6x32xf32, #tpu.memory_space<vmem>>, %arg8: memref<32x3xbf16, #tpu.memory_space<vmem>>, %arg9: memref<3x3xf32, #tpu.memory_space<vmem>>, %arg10: memref<2x128xbf16, #tpu.memory_space<vmem>>, %arg11: memref<128x4xf32, #tpu.memory_space<vmem>>, %arg12: memref<128x4xf32, #tpu.memory_space<vmem>>, %arg13: memref<1x4xf32, #tpu.memory_space<vmem>>, %arg14: memref<128x32xf32, #tpu.memory_space<vmem>>, %arg15: memref<1x32xf32, #tpu.memory_space<vmem>>, %arg16: memref<32x7xbf16, #tpu.memory_space<vmem>>, %arg17: memref<1x7xf32, #tpu.memory_space<vmem>>, %arg18: memref<1x7xf32, #tpu.memory_space<vmem>>, %arg19: memref<2x4xf32, #tpu.memory_space<vmem>>, %arg20: memref<2x1xf32, #tpu.memory_space<vmem>>, %arg21: memref<160x32xf32, #tpu.memory_space<vmem>>, %arg22: memref<160x32xf32, #tpu.memory_space<vmem>>) attributes {dimension_semantics = [#tpu.dimension_semantics<arbitrary>], iteration_bounds = array<i64: 2>, scalar_prefetch = 0 : i64, scratch_operands = 2 : i64, tpu.core_type = #tpu.core_type<tc>, window_params = [{pipeline_mode = #tpu.pipeline_mode<synchronous>, transform_indices = @transform_0, window_bounds = array<i64: 160, 32>}, {pipeline_mode = #tpu.pipeline_mode<synchronous>, transform_indices = @transform_1, window_bounds = array<i64: 9, 128, 1>}, {pipeline_mode = #tpu.pipeline_mode<synchronous>, transform_indices = @transform_2, window_bounds = array<i64: 9, 32, 32>}, {pipeline_mode = #tpu.pipeline_mode<synchronous>, transform_indices = @transform_3, window_bounds = array<i64: 1, 32>}, {transform_indices = @transform_4, window_bounds = array<i64: 1, 9, 32, 32>}, {transform_indices = @transform_5, window_bounds = array<i64: 1, 9, 32, 32>}, {transform_indices = @transform_6, window_bounds = array<i64: 1, 6, 32>}, {pipeline_mode = #tpu.pipeline_mode<synchronous>, transform_indices = @transform_7, window_bounds = array<i64: 32, 3>}, {pipeline_mode = #tpu.pipeline_mode<synchronous>, transform_indices = @transform_8, window_bounds = array<i64: 3, 3>}, {pipeline_mode = #tpu.pipeline_mode<synchronous>, transform_indices = @transform_9, window_bounds = array<i64: 2, 128>}, {pipeline_mode = #tpu.pipeline_mode<synchronous>, transform_indices = @transform_10, window_bounds = array<i64: 128, 4>}, {pipeline_mode = #tpu.pipeline_mode<synchronous>, transform_indices = @transform_11, window_bounds = array<i64: 128, 4>}, {pipeline_mode = #tpu.pipeline_mode<synchronous>, transform_indices = @transform_12, window_bounds = array<i64: 1, 4>}, {pipeline_mode = #tpu.pipeline_mode<synchronous>, transform_indices = @transform_13, window_bounds = array<i64: 128, 32>}, {pipeline_mode = #tpu.pipeline_mode<synchronous>, transform_indices = @transform_14, window_bounds = array<i64: 1, 32>}, {pipeline_mode = #tpu.pipeline_mode<synchronous>, transform_indices = @transform_15, window_bounds = array<i64: 32, 7>}, {pipeline_mode = #tpu.pipeline_mode<synchronous>, transform_indices = @transform_16, window_bounds = array<i64: 1, 7>}, {pipeline_mode = #tpu.pipeline_mode<synchronous>, transform_indices = @transform_17, window_bounds = array<i64: 1, 7>}, {pipeline_mode = #tpu.pipeline_mode<synchronous>, transform_indices = @transform_18, window_bounds = array<i64: 2, 4>}, {pipeline_mode = #tpu.pipeline_mode<synchronous>, transform_indices = @transform_19, window_bounds = array<i64: 2, 1>}]} {
    %c0_i32 = arith.constant 0 : i32
    %0 = arith.cmpi eq, %arg0, %c0_i32 : i32
    %1 = arith.extui %0 : i1 to i32
    %c0_i32_0 = arith.constant 0 : i32
    %2 = arith.cmpi ne, %1, %c0_i32_0 : i32
    scf.if %2 {
      %cst_182 = arith.constant 0.000000e+00 : f32
      %244 = vector.broadcast %cst_182 : f32 to vector<160x32xf32>
      %c0_183 = arith.constant 0 : index
      %c0_184 = arith.constant 0 : index
      %245 = vector.load %arg21[%c0_183, %c0_184] : memref<160x32xf32, #tpu.memory_space<vmem>>, vector<160x32xf32>
      tpu.vector_store %arg21[%c0_183, %c0_184], %244 {strides = array<i32>} : memref<160x32xf32, #tpu.memory_space<vmem>>, vector<160x32xf32>,
      %cst_185 = arith.constant 0.000000e+00 : f32
      %246 = vector.broadcast %cst_185 : f32 to vector<160x32xf32>
      %c0_186 = arith.constant 0 : index
      %c0_187 = arith.constant 0 : index
      %247 = vector.load %arg22[%c0_186, %c0_187] : memref<160x32xf32, #tpu.memory_space<vmem>>, vector<160x32xf32>
      tpu.vector_store %arg22[%c0_186, %c0_187], %246 {strides = array<i32>} : memref<160x32xf32, #tpu.memory_space<vmem>>, vector<160x32xf32>,
      %c7_188 = arith.constant 7 : index
      %c0_189 = arith.constant 0 : index
      %248 = vector.load %arg1[%c7_188, %c0_189] : memref<160x32xf32, #tpu.memory_space<vmem>>, vector<128x32xf32>
      %c0_190 = arith.constant 0 : index
      %c0_191 = arith.constant 0 : index
      %c0_192 = arith.constant 0 : index
      %249 = vector.load %arg2[%c0_190, %c0_191, %c0_192] : memref<9x128x1xf32, #tpu.memory_space<vmem>>, vector<1x128x1xf32>
      %250 = vector.shape_cast %249 : vector<1x128x1xf32> to vector<128x1xf32>
      %251 = vector.broadcast %250 : vector<128x1xf32> to vector<128x32xf32>
      %252 = arith.mulf %248, %251 : vector<128x32xf32>
      %253 = arith.truncf %252 : vector<128x32xf32> to vector<128x32xbf16>
      %c0_193 = arith.constant 0 : index
      %c0_194 = arith.constant 0 : index
      %c0_195 = arith.constant 0 : index
      %254 = vector.load %arg3[%c0_193, %c0_194, %c0_195] : memref<9x32x32xbf16, #tpu.memory_space<vmem>>, vector<1x32x32xbf16>
      %255 = vector.shape_cast %254 : vector<1x32x32xbf16> to vector<32x32xbf16>
      %cst_196 = arith.constant dense<0.000000e+00> : vector<128x32xf32>
      %256 = tpu.matmul %253, %255, %cst_196 {dimension_numbers = #tpu.dot_dimension_numbers<[1], [0], [0], [1], [0, 0, 1, 1], [], []>} : vector<128x32xbf16>, vector<32x32xbf16>, vector<128x32xf32> -> vector<128x32xf32>
      %c8_197 = arith.constant 8 : index
      %c0_198 = arith.constant 0 : index
      %257 = vector.load %arg1[%c8_197, %c0_198] : memref<160x32xf32, #tpu.memory_space<vmem>>, vector<128x32xf32>
      %c1_199 = arith.constant 1 : index
      %c0_200 = arith.constant 0 : index
      %c0_201 = arith.constant 0 : index
      %258 = vector.load %arg2[%c1_199, %c0_200, %c0_201] : memref<9x128x1xf32, #tpu.memory_space<vmem>>, vector<1x128x1xf32>
      %259 = vector.shape_cast %258 : vector<1x128x1xf32> to vector<128x1xf32>
      %260 = vector.broadcast %259 : vector<128x1xf32> to vector<128x32xf32>
      %261 = arith.mulf %257, %260 : vector<128x32xf32>
      %262 = arith.truncf %261 : vector<128x32xf32> to vector<128x32xbf16>
      %c1_202 = arith.constant 1 : index
      %c0_203 = arith.constant 0 : index
      %c0_204 = arith.constant 0 : index
      %263 = vector.load %arg3[%c1_202, %c0_203, %c0_204] : memref<9x32x32xbf16, #tpu.memory_space<vmem>>, vector<1x32x32xbf16>
      %264 = vector.shape_cast %263 : vector<1x32x32xbf16> to vector<32x32xbf16>
      %cst_205 = arith.constant dense<0.000000e+00> : vector<128x32xf32>
      %265 = tpu.matmul %262, %264, %cst_205 {dimension_numbers = #tpu.dot_dimension_numbers<[1], [0], [0], [1], [0, 0, 1, 1], [], []>} : vector<128x32xbf16>, vector<32x32xbf16>, vector<128x32xf32> -> vector<128x32xf32>
      %266 = arith.addf %256, %265 : vector<128x32xf32>
      %c9_206 = arith.constant 9 : index
      %c0_207 = arith.constant 0 : index
      %267 = vector.load %arg1[%c9_206, %c0_207] : memref<160x32xf32, #tpu.memory_space<vmem>>, vector<128x32xf32>
      %c2_208 = arith.constant 2 : index
      %c0_209 = arith.constant 0 : index
      %c0_210 = arith.constant 0 : index
      %268 = vector.load %arg2[%c2_208, %c0_209, %c0_210] : memref<9x128x1xf32, #tpu.memory_space<vmem>>, vector<1x128x1xf32>
      %269 = vector.shape_cast %268 : vector<1x128x1xf32> to vector<128x1xf32>
      %270 = vector.broadcast %269 : vector<128x1xf32> to vector<128x32xf32>
      %271 = arith.mulf %267, %270 : vector<128x32xf32>
      %272 = arith.truncf %271 : vector<128x32xf32> to vector<128x32xbf16>
      %c2_211 = arith.constant 2 : index
      %c0_212 = arith.constant 0 : index
      %c0_213 = arith.constant 0 : index
      %273 = vector.load %arg3[%c2_211, %c0_212, %c0_213] : memref<9x32x32xbf16, #tpu.memory_space<vmem>>, vector<1x32x32xbf16>
      %274 = vector.shape_cast %273 : vector<1x32x32xbf16> to vector<32x32xbf16>
      %cst_214 = arith.constant dense<0.000000e+00> : vector<128x32xf32>
      %275 = tpu.matmul %272, %274, %cst_214 {dimension_numbers = #tpu.dot_dimension_numbers<[1], [0], [0], [1], [0, 0, 1, 1], [], []>} : vector<128x32xbf16>, vector<32x32xbf16>, vector<128x32xf32> -> vector<128x32xf32>
      %276 = arith.addf %266, %275 : vector<128x32xf32>
      %c15_215 = arith.constant 15 : index
      %c0_216 = arith.constant 0 : index
      %277 = vector.load %arg1[%c15_215, %c0_216] : memref<160x32xf32, #tpu.memory_space<vmem>>, vector<128x32xf32>
      %c3_217 = arith.constant 3 : index
      %c0_218 = arith.constant 0 : index
      %c0_219 = arith.constant 0 : index
      %278 = vector.load %arg2[%c3_217, %c0_218, %c0_219] : memref<9x128x1xf32, #tpu.memory_space<vmem>>, vector<1x128x1xf32>
      %279 = vector.shape_cast %278 : vector<1x128x1xf32> to vector<128x1xf32>
      %280 = vector.broadcast %279 : vector<128x1xf32> to vector<128x32xf32>
      %281 = arith.mulf %277, %280 : vector<128x32xf32>
      %282 = arith.truncf %281 : vector<128x32xf32> to vector<128x32xbf16>
      %c3_220 = arith.constant 3 : index
      %c0_221 = arith.constant 0 : index
      %c0_222 = arith.constant 0 : index
      %283 = vector.load %arg3[%c3_220, %c0_221, %c0_222] : memref<9x32x32xbf16, #tpu.memory_space<vmem>>, vector<1x32x32xbf16>
      %284 = vector.shape_cast %283 : vector<1x32x32xbf16> to vector<32x32xbf16>
      %cst_223 = arith.constant dense<0.000000e+00> : vector<128x32xf32>
      %285 = tpu.matmul %282, %284, %cst_223 {dimension_numbers = #tpu.dot_dimension_numbers<[1], [0], [0], [1], [0, 0, 1, 1], [], []>} : vector<128x32xbf16>, vector<32x32xbf16>, vector<128x32xf32> -> vector<128x32xf32>
      %286 = arith.addf %276, %285 : vector<128x32xf32>
      %c16_224 = arith.constant 16 : index
      %c0_225 = arith.constant 0 : index
      %287 = vector.load %arg1[%c16_224, %c0_225] : memref<160x32xf32, #tpu.memory_space<vmem>>, vector<128x32xf32>
      %288 = arith.truncf %287 : vector<128x32xf32> to vector<128x32xbf16>
      %c4_226 = arith.constant 4 : index
      %c0_227 = arith.constant 0 : index
      %c0_228 = arith.constant 0 : index
      %289 = vector.load %arg3[%c4_226, %c0_227, %c0_228] : memref<9x32x32xbf16, #tpu.memory_space<vmem>>, vector<1x32x32xbf16>
      %290 = vector.shape_cast %289 : vector<1x32x32xbf16> to vector<32x32xbf16>
      %cst_229 = arith.constant dense<0.000000e+00> : vector<128x32xf32>
      %291 = tpu.matmul %288, %290, %cst_229 {dimension_numbers = #tpu.dot_dimension_numbers<[1], [0], [0], [1], [0, 0, 1, 1], [], []>} : vector<128x32xbf16>, vector<32x32xbf16>, vector<128x32xf32> -> vector<128x32xf32>
      %292 = arith.addf %286, %291 : vector<128x32xf32>
      %c17_230 = arith.constant 17 : index
      %c0_231 = arith.constant 0 : index
      %293 = vector.load %arg1[%c17_230, %c0_231] : memref<160x32xf32, #tpu.memory_space<vmem>>, vector<128x32xf32>
      %c5_232 = arith.constant 5 : index
      %c0_233 = arith.constant 0 : index
      %c0_234 = arith.constant 0 : index
      %294 = vector.load %arg2[%c5_232, %c0_233, %c0_234] : memref<9x128x1xf32, #tpu.memory_space<vmem>>, vector<1x128x1xf32>
      %295 = vector.shape_cast %294 : vector<1x128x1xf32> to vector<128x1xf32>
      %296 = vector.broadcast %295 : vector<128x1xf32> to vector<128x32xf32>
      %297 = arith.mulf %293, %296 : vector<128x32xf32>
      %298 = arith.truncf %297 : vector<128x32xf32> to vector<128x32xbf16>
      %c5_235 = arith.constant 5 : index
      %c0_236 = arith.constant 0 : index
      %c0_237 = arith.constant 0 : index
      %299 = vector.load %arg3[%c5_235, %c0_236, %c0_237] : memref<9x32x32xbf16, #tpu.memory_space<vmem>>, vector<1x32x32xbf16>
      %300 = vector.shape_cast %299 : vector<1x32x32xbf16> to vector<32x32xbf16>
      %cst_238 = arith.constant dense<0.000000e+00> : vector<128x32xf32>
      %301 = tpu.matmul %298, %300, %cst_238 {dimension_numbers = #tpu.dot_dimension_numbers<[1], [0], [0], [1], [0, 0, 1, 1], [], []>} : vector<128x32xbf16>, vector<32x32xbf16>, vector<128x32xf32> -> vector<128x32xf32>
      %302 = arith.addf %292, %301 : vector<128x32xf32>
      %c23_239 = arith.constant 23 : index
      %c0_240 = arith.constant 0 : index
      %303 = vector.load %arg1[%c23_239, %c0_240] : memref<160x32xf32, #tpu.memory_space<vmem>>, vector<128x32xf32>
      %c6_241 = arith.constant 6 : index
      %c0_242 = arith.constant 0 : index
      %c0_243 = arith.constant 0 : index
      %304 = vector.load %arg2[%c6_241, %c0_242, %c0_243] : memref<9x128x1xf32, #tpu.memory_space<vmem>>, vector<1x128x1xf32>
      %305 = vector.shape_cast %304 : vector<1x128x1xf32> to vector<128x1xf32>
      %306 = vector.broadcast %305 : vector<128x1xf32> to vector<128x32xf32>
      %307 = arith.mulf %303, %306 : vector<128x32xf32>
      %308 = arith.truncf %307 : vector<128x32xf32> to vector<128x32xbf16>
      %c6_244 = arith.constant 6 : index
      %c0_245 = arith.constant 0 : index
      %c0_246 = arith.constant 0 : index
      %309 = vector.load %arg3[%c6_244, %c0_245, %c0_246] : memref<9x32x32xbf16, #tpu.memory_space<vmem>>, vector<1x32x32xbf16>
      %310 = vector.shape_cast %309 : vector<1x32x32xbf16> to vector<32x32xbf16>
      %cst_247 = arith.constant dense<0.000000e+00> : vector<128x32xf32>
      %311 = tpu.matmul %308, %310, %cst_247 {dimension_numbers = #tpu.dot_dimension_numbers<[1], [0], [0], [1], [0, 0, 1, 1], [], []>} : vector<128x32xbf16>, vector<32x32xbf16>, vector<128x32xf32> -> vector<128x32xf32>
      %312 = arith.addf %302, %311 : vector<128x32xf32>
      %c24_248 = arith.constant 24 : index
      %c0_249 = arith.constant 0 : index
      %313 = vector.load %arg1[%c24_248, %c0_249] : memref<160x32xf32, #tpu.memory_space<vmem>>, vector<128x32xf32>
      %c7_250 = arith.constant 7 : index
      %c0_251 = arith.constant 0 : index
      %c0_252 = arith.constant 0 : index
      %314 = vector.load %arg2[%c7_250, %c0_251, %c0_252] : memref<9x128x1xf32, #tpu.memory_space<vmem>>, vector<1x128x1xf32>
      %315 = vector.shape_cast %314 : vector<1x128x1xf32> to vector<128x1xf32>
      %316 = vector.broadcast %315 : vector<128x1xf32> to vector<128x32xf32>
      %317 = arith.mulf %313, %316 : vector<128x32xf32>
      %318 = arith.truncf %317 : vector<128x32xf32> to vector<128x32xbf16>
      %c7_253 = arith.constant 7 : index
      %c0_254 = arith.constant 0 : index
      %c0_255 = arith.constant 0 : index
      %319 = vector.load %arg3[%c7_253, %c0_254, %c0_255] : memref<9x32x32xbf16, #tpu.memory_space<vmem>>, vector<1x32x32xbf16>
      %320 = vector.shape_cast %319 : vector<1x32x32xbf16> to vector<32x32xbf16>
      %cst_256 = arith.constant dense<0.000000e+00> : vector<128x32xf32>
      %321 = tpu.matmul %318, %320, %cst_256 {dimension_numbers = #tpu.dot_dimension_numbers<[1], [0], [0], [1], [0, 0, 1, 1], [], []>} : vector<128x32xbf16>, vector<32x32xbf16>, vector<128x32xf32> -> vector<128x32xf32>
      %322 = arith.addf %312, %321 : vector<128x32xf32>
      %c25_257 = arith.constant 25 : index
      %c0_258 = arith.constant 0 : index
      %323 = vector.load %arg1[%c25_257, %c0_258] : memref<160x32xf32, #tpu.memory_space<vmem>>, vector<128x32xf32>
      %c8_259 = arith.constant 8 : index
      %c0_260 = arith.constant 0 : index
      %c0_261 = arith.constant 0 : index
      %324 = vector.load %arg2[%c8_259, %c0_260, %c0_261] : memref<9x128x1xf32, #tpu.memory_space<vmem>>, vector<1x128x1xf32>
      %325 = vector.shape_cast %324 : vector<1x128x1xf32> to vector<128x1xf32>
      %326 = vector.broadcast %325 : vector<128x1xf32> to vector<128x32xf32>
      %327 = arith.mulf %323, %326 : vector<128x32xf32>
      %328 = arith.truncf %327 : vector<128x32xf32> to vector<128x32xbf16>
      %c8_262 = arith.constant 8 : index
      %c0_263 = arith.constant 0 : index
      %c0_264 = arith.constant 0 : index
      %329 = vector.load %arg3[%c8_262, %c0_263, %c0_264] : memref<9x32x32xbf16, #tpu.memory_space<vmem>>, vector<1x32x32xbf16>
      %330 = vector.shape_cast %329 : vector<1x32x32xbf16> to vector<32x32xbf16>
      %cst_265 = arith.constant dense<0.000000e+00> : vector<128x32xf32>
      %331 = tpu.matmul %328, %330, %cst_265 {dimension_numbers = #tpu.dot_dimension_numbers<[1], [0], [0], [1], [0, 0, 1, 1], [], []>} : vector<128x32xbf16>, vector<32x32xbf16>, vector<128x32xf32> -> vector<128x32xf32>
      %332 = arith.addf %322, %331 : vector<128x32xf32>
      %c0_266 = arith.constant 0 : index
      %c0_267 = arith.constant 0 : index
      %333 = vector.load %arg4[%c0_266, %c0_267] : memref<1x32xf32, #tpu.memory_space<vmem>>, vector<1x32xf32>
      %334 = vector.broadcast %333 : vector<1x32xf32> to vector<128x32xf32>
      %335 = arith.addf %332, %334 : vector<128x32xf32>
      %c16_268 = arith.constant 16 : index
      %c0_269 = arith.constant 0 : index
      %336 = vector.load %arg21[%c16_268, %c0_269] : memref<160x32xf32, #tpu.memory_space<vmem>>, vector<128x32xf32>
      tpu.vector_store %arg21[%c16_268, %c0_269], %335 {strides = array<i32>} : memref<160x32xf32, #tpu.memory_space<vmem>>, vector<128x32xf32>,
    } else {
    }
    %c0 = arith.constant 0 : index
    %c0_1 = arith.constant 0 : index
    %c0_2 = arith.constant 0 : index
    %3 = vector.load %arg7[%c0, %c0_1, %c0_2] : memref<1x6x32xf32, #tpu.memory_space<vmem>>, vector<1x6x32xf32>
    %4 = vector.shape_cast %3 : vector<1x6x32xf32> to vector<6x32xf32>
    %c16 = arith.constant 16 : index
    %c0_3 = arith.constant 0 : index
    %5 = vector.load %arg21[%c16, %c0_3] : memref<160x32xf32, #tpu.memory_space<vmem>>, vector<128x32xf32>
    %c7 = arith.constant 7 : index
    %c0_4 = arith.constant 0 : index
    %6 = vector.load %arg21[%c7, %c0_4] : memref<160x32xf32, #tpu.memory_space<vmem>>, vector<128x32xf32>
    %c0_5 = arith.constant 0 : index
    %c0_6 = arith.constant 0 : index
    %c0_7 = arith.constant 0 : index
    %7 = vector.load %arg2[%c0_5, %c0_6, %c0_7] : memref<9x128x1xf32, #tpu.memory_space<vmem>>, vector<1x128x1xf32>
    %8 = vector.shape_cast %7 : vector<1x128x1xf32> to vector<128x1xf32>
    %9 = vector.broadcast %8 : vector<128x1xf32> to vector<128x32xf32>
    %10 = arith.mulf %6, %9 : vector<128x32xf32>
    %11 = arith.truncf %10 : vector<128x32xf32> to vector<128x32xbf16>
    %c0_8 = arith.constant 0 : index
    %c0_9 = arith.constant 0 : index
    %c0_10 = arith.constant 0 : index
    %c0_11 = arith.constant 0 : index
    %12 = vector.load %arg5[%c0_8, %c0_9, %c0_10, %c0_11] : memref<1x9x32x32xbf16, #tpu.memory_space<vmem>>, vector<1x1x32x32xbf16>
    %13 = vector.shape_cast %12 : vector<1x1x32x32xbf16> to vector<32x32xbf16>
    %cst = arith.constant dense<0.000000e+00> : vector<128x32xf32>
    %14 = tpu.matmul %11, %13, %cst {dimension_numbers = #tpu.dot_dimension_numbers<[1], [0], [0], [1], [0, 0, 1, 1], [], []>} : vector<128x32xbf16>, vector<32x32xbf16>, vector<128x32xf32> -> vector<128x32xf32>
    %c8 = arith.constant 8 : index
    %c0_12 = arith.constant 0 : index
    %15 = vector.load %arg21[%c8, %c0_12] : memref<160x32xf32, #tpu.memory_space<vmem>>, vector<128x32xf32>
    %c1 = arith.constant 1 : index
    %c0_13 = arith.constant 0 : index
    %c0_14 = arith.constant 0 : index
    %16 = vector.load %arg2[%c1, %c0_13, %c0_14] : memref<9x128x1xf32, #tpu.memory_space<vmem>>, vector<1x128x1xf32>
    %17 = vector.shape_cast %16 : vector<1x128x1xf32> to vector<128x1xf32>
    %18 = vector.broadcast %17 : vector<128x1xf32> to vector<128x32xf32>
    %19 = arith.mulf %15, %18 : vector<128x32xf32>
    %20 = arith.truncf %19 : vector<128x32xf32> to vector<128x32xbf16>
    %c0_15 = arith.constant 0 : index
    %c1_16 = arith.constant 1 : index
    %c0_17 = arith.constant 0 : index
    %c0_18 = arith.constant 0 : index
    %21 = vector.load %arg5[%c0_15, %c1_16, %c0_17, %c0_18] : memref<1x9x32x32xbf16, #tpu.memory_space<vmem>>, vector<1x1x32x32xbf16>
    %22 = vector.shape_cast %21 : vector<1x1x32x32xbf16> to vector<32x32xbf16>
    %cst_19 = arith.constant dense<0.000000e+00> : vector<128x32xf32>
    %23 = tpu.matmul %20, %22, %cst_19 {dimension_numbers = #tpu.dot_dimension_numbers<[1], [0], [0], [1], [0, 0, 1, 1], [], []>} : vector<128x32xbf16>, vector<32x32xbf16>, vector<128x32xf32> -> vector<128x32xf32>
    %24 = arith.addf %14, %23 : vector<128x32xf32>
    %c9 = arith.constant 9 : index
    %c0_20 = arith.constant 0 : index
    %25 = vector.load %arg21[%c9, %c0_20] : memref<160x32xf32, #tpu.memory_space<vmem>>, vector<128x32xf32>
    %c2 = arith.constant 2 : index
    %c0_21 = arith.constant 0 : index
    %c0_22 = arith.constant 0 : index
    %26 = vector.load %arg2[%c2, %c0_21, %c0_22] : memref<9x128x1xf32, #tpu.memory_space<vmem>>, vector<1x128x1xf32>
    %27 = vector.shape_cast %26 : vector<1x128x1xf32> to vector<128x1xf32>
    %28 = vector.broadcast %27 : vector<128x1xf32> to vector<128x32xf32>
    %29 = arith.mulf %25, %28 : vector<128x32xf32>
    %30 = arith.truncf %29 : vector<128x32xf32> to vector<128x32xbf16>
    %c0_23 = arith.constant 0 : index
    %c2_24 = arith.constant 2 : index
    %c0_25 = arith.constant 0 : index
    %c0_26 = arith.constant 0 : index
    %31 = vector.load %arg5[%c0_23, %c2_24, %c0_25, %c0_26] : memref<1x9x32x32xbf16, #tpu.memory_space<vmem>>, vector<1x1x32x32xbf16>
    %32 = vector.shape_cast %31 : vector<1x1x32x32xbf16> to vector<32x32xbf16>
    %cst_27 = arith.constant dense<0.000000e+00> : vector<128x32xf32>
    %33 = tpu.matmul %30, %32, %cst_27 {dimension_numbers = #tpu.dot_dimension_numbers<[1], [0], [0], [1], [0, 0, 1, 1], [], []>} : vector<128x32xbf16>, vector<32x32xbf16>, vector<128x32xf32> -> vector<128x32xf32>
    %34 = arith.addf %24, %33 : vector<128x32xf32>
    %c15 = arith.constant 15 : index
    %c0_28 = arith.constant 0 : index
    %35 = vector.load %arg21[%c15, %c0_28] : memref<160x32xf32, #tpu.memory_space<vmem>>, vector<128x32xf32>
    %c3 = arith.constant 3 : index
    %c0_29 = arith.constant 0 : index
    %c0_30 = arith.constant 0 : index
    %36 = vector.load %arg2[%c3, %c0_29, %c0_30] : memref<9x128x1xf32, #tpu.memory_space<vmem>>, vector<1x128x1xf32>
    %37 = vector.shape_cast %36 : vector<1x128x1xf32> to vector<128x1xf32>
    %38 = vector.broadcast %37 : vector<128x1xf32> to vector<128x32xf32>
    %39 = arith.mulf %35, %38 : vector<128x32xf32>
    %40 = arith.truncf %39 : vector<128x32xf32> to vector<128x32xbf16>
    %c0_31 = arith.constant 0 : index
    %c3_32 = arith.constant 3 : index
    %c0_33 = arith.constant 0 : index
    %c0_34 = arith.constant 0 : index
    %41 = vector.load %arg5[%c0_31, %c3_32, %c0_33, %c0_34] : memref<1x9x32x32xbf16, #tpu.memory_space<vmem>>, vector<1x1x32x32xbf16>
    %42 = vector.shape_cast %41 : vector<1x1x32x32xbf16> to vector<32x32xbf16>
    %cst_35 = arith.constant dense<0.000000e+00> : vector<128x32xf32>
    %43 = tpu.matmul %40, %42, %cst_35 {dimension_numbers = #tpu.dot_dimension_numbers<[1], [0], [0], [1], [0, 0, 1, 1], [], []>} : vector<128x32xbf16>, vector<32x32xbf16>, vector<128x32xf32> -> vector<128x32xf32>
    %44 = arith.addf %34, %43 : vector<128x32xf32>
    %c16_36 = arith.constant 16 : index
    %c0_37 = arith.constant 0 : index
    %45 = vector.load %arg21[%c16_36, %c0_37] : memref<160x32xf32, #tpu.memory_space<vmem>>, vector<128x32xf32>
    %46 = arith.truncf %45 : vector<128x32xf32> to vector<128x32xbf16>
    %c0_38 = arith.constant 0 : index
    %c4 = arith.constant 4 : index
    %c0_39 = arith.constant 0 : index
    %c0_40 = arith.constant 0 : index
    %47 = vector.load %arg5[%c0_38, %c4, %c0_39, %c0_40] : memref<1x9x32x32xbf16, #tpu.memory_space<vmem>>, vector<1x1x32x32xbf16>
    %48 = vector.shape_cast %47 : vector<1x1x32x32xbf16> to vector<32x32xbf16>
    %cst_41 = arith.constant dense<0.000000e+00> : vector<128x32xf32>
    %49 = tpu.matmul %46, %48, %cst_41 {dimension_numbers = #tpu.dot_dimension_numbers<[1], [0], [0], [1], [0, 0, 1, 1], [], []>} : vector<128x32xbf16>, vector<32x32xbf16>, vector<128x32xf32> -> vector<128x32xf32>
    %50 = arith.addf %44, %49 : vector<128x32xf32>
    %c17 = arith.constant 17 : index
    %c0_42 = arith.constant 0 : index
    %51 = vector.load %arg21[%c17, %c0_42] : memref<160x32xf32, #tpu.memory_space<vmem>>, vector<128x32xf32>
    %c5 = arith.constant 5 : index
    %c0_43 = arith.constant 0 : index
    %c0_44 = arith.constant 0 : index
    %52 = vector.load %arg2[%c5, %c0_43, %c0_44] : memref<9x128x1xf32, #tpu.memory_space<vmem>>, vector<1x128x1xf32>
    %53 = vector.shape_cast %52 : vector<1x128x1xf32> to vector<128x1xf32>
    %54 = vector.broadcast %53 : vector<128x1xf32> to vector<128x32xf32>
    %55 = arith.mulf %51, %54 : vector<128x32xf32>
    %56 = arith.truncf %55 : vector<128x32xf32> to vector<128x32xbf16>
    %c0_45 = arith.constant 0 : index
    %c5_46 = arith.constant 5 : index
    %c0_47 = arith.constant 0 : index
    %c0_48 = arith.constant 0 : index
    %57 = vector.load %arg5[%c0_45, %c5_46, %c0_47, %c0_48] : memref<1x9x32x32xbf16, #tpu.memory_space<vmem>>, vector<1x1x32x32xbf16>
    %58 = vector.shape_cast %57 : vector<1x1x32x32xbf16> to vector<32x32xbf16>
    %cst_49 = arith.constant dense<0.000000e+00> : vector<128x32xf32>
    %59 = tpu.matmul %56, %58, %cst_49 {dimension_numbers = #tpu.dot_dimension_numbers<[1], [0], [0], [1], [0, 0, 1, 1], [], []>} : vector<128x32xbf16>, vector<32x32xbf16>, vector<128x32xf32> -> vector<128x32xf32>
    %60 = arith.addf %50, %59 : vector<128x32xf32>
    %c23 = arith.constant 23 : index
    %c0_50 = arith.constant 0 : index
    %61 = vector.load %arg21[%c23, %c0_50] : memref<160x32xf32, #tpu.memory_space<vmem>>, vector<128x32xf32>
    %c6 = arith.constant 6 : index
    %c0_51 = arith.constant 0 : index
    %c0_52 = arith.constant 0 : index
    %62 = vector.load %arg2[%c6, %c0_51, %c0_52] : memref<9x128x1xf32, #tpu.memory_space<vmem>>, vector<1x128x1xf32>
    %63 = vector.shape_cast %62 : vector<1x128x1xf32> to vector<128x1xf32>
    %64 = vector.broadcast %63 : vector<128x1xf32> to vector<128x32xf32>
    %65 = arith.mulf %61, %64 : vector<128x32xf32>
    %66 = arith.truncf %65 : vector<128x32xf32> to vector<128x32xbf16>
    %c0_53 = arith.constant 0 : index
    %c6_54 = arith.constant 6 : index
    %c0_55 = arith.constant 0 : index
    %c0_56 = arith.constant 0 : index
    %67 = vector.load %arg5[%c0_53, %c6_54, %c0_55, %c0_56] : memref<1x9x32x32xbf16, #tpu.memory_space<vmem>>, vector<1x1x32x32xbf16>
    %68 = vector.shape_cast %67 : vector<1x1x32x32xbf16> to vector<32x32xbf16>
    %cst_57 = arith.constant dense<0.000000e+00> : vector<128x32xf32>
    %69 = tpu.matmul %66, %68, %cst_57 {dimension_numbers = #tpu.dot_dimension_numbers<[1], [0], [0], [1], [0, 0, 1, 1], [], []>} : vector<128x32xbf16>, vector<32x32xbf16>, vector<128x32xf32> -> vector<128x32xf32>
    %70 = arith.addf %60, %69 : vector<128x32xf32>
    %c24 = arith.constant 24 : index
    %c0_58 = arith.constant 0 : index
    %71 = vector.load %arg21[%c24, %c0_58] : memref<160x32xf32, #tpu.memory_space<vmem>>, vector<128x32xf32>
    %c7_59 = arith.constant 7 : index
    %c0_60 = arith.constant 0 : index
    %c0_61 = arith.constant 0 : index
    %72 = vector.load %arg2[%c7_59, %c0_60, %c0_61] : memref<9x128x1xf32, #tpu.memory_space<vmem>>, vector<1x128x1xf32>
    %73 = vector.shape_cast %72 : vector<1x128x1xf32> to vector<128x1xf32>
    %74 = vector.broadcast %73 : vector<128x1xf32> to vector<128x32xf32>
    %75 = arith.mulf %71, %74 : vector<128x32xf32>
    %76 = arith.truncf %75 : vector<128x32xf32> to vector<128x32xbf16>
    %c0_62 = arith.constant 0 : index
    %c7_63 = arith.constant 7 : index
    %c0_64 = arith.constant 0 : index
    %c0_65 = arith.constant 0 : index
    %77 = vector.load %arg5[%c0_62, %c7_63, %c0_64, %c0_65] : memref<1x9x32x32xbf16, #tpu.memory_space<vmem>>, vector<1x1x32x32xbf16>
    %78 = vector.shape_cast %77 : vector<1x1x32x32xbf16> to vector<32x32xbf16>
    %cst_66 = arith.constant dense<0.000000e+00> : vector<128x32xf32>
    %79 = tpu.matmul %76, %78, %cst_66 {dimension_numbers = #tpu.dot_dimension_numbers<[1], [0], [0], [1], [0, 0, 1, 1], [], []>} : vector<128x32xbf16>, vector<32x32xbf16>, vector<128x32xf32> -> vector<128x32xf32>
    %80 = arith.addf %70, %79 : vector<128x32xf32>
    %c25 = arith.constant 25 : index
    %c0_67 = arith.constant 0 : index
    %81 = vector.load %arg21[%c25, %c0_67] : memref<160x32xf32, #tpu.memory_space<vmem>>, vector<128x32xf32>
    %c8_68 = arith.constant 8 : index
    %c0_69 = arith.constant 0 : index
    %c0_70 = arith.constant 0 : index
    %82 = vector.load %arg2[%c8_68, %c0_69, %c0_70] : memref<9x128x1xf32, #tpu.memory_space<vmem>>, vector<1x128x1xf32>
    %83 = vector.shape_cast %82 : vector<1x128x1xf32> to vector<128x1xf32>
    %84 = vector.broadcast %83 : vector<128x1xf32> to vector<128x32xf32>
    %85 = arith.mulf %81, %84 : vector<128x32xf32>
    %86 = arith.truncf %85 : vector<128x32xf32> to vector<128x32xbf16>
    %c0_71 = arith.constant 0 : index
    %c8_72 = arith.constant 8 : index
    %c0_73 = arith.constant 0 : index
    %c0_74 = arith.constant 0 : index
    %87 = vector.load %arg5[%c0_71, %c8_72, %c0_73, %c0_74] : memref<1x9x32x32xbf16, #tpu.memory_space<vmem>>, vector<1x1x32x32xbf16>
    %88 = vector.shape_cast %87 : vector<1x1x32x32xbf16> to vector<32x32xbf16>
    %cst_75 = arith.constant dense<0.000000e+00> : vector<128x32xf32>
    %89 = tpu.matmul %86, %88, %cst_75 {dimension_numbers = #tpu.dot_dimension_numbers<[1], [0], [0], [1], [0, 0, 1, 1], [], []>} : vector<128x32xbf16>, vector<32x32xbf16>, vector<128x32xf32> -> vector<128x32xf32>
    %90 = arith.addf %80, %89 : vector<128x32xf32>
    %91 = vector.extract_strided_slice %4 {offsets = [0, 0], sizes = [1, 32], strides = [1, 1]} : vector<6x32xf32> to vector<1x32xf32>
    %92 = vector.broadcast %91 : vector<1x32xf32> to vector<128x32xf32>
    %93 = arith.addf %90, %92 : vector<128x32xf32>
    %94 = vector.extract_strided_slice %4 {offsets = [1, 0], sizes = [1, 32], strides = [1, 1]} : vector<6x32xf32> to vector<1x32xf32>
    %95 = vector.extract_strided_slice %4 {offsets = [2, 0], sizes = [1, 32], strides = [1, 1]} : vector<6x32xf32> to vector<1x32xf32>
    %cst_76 = arith.constant dense<0.000000e+00> : vector<32xf32>
    %96 = vector.multi_reduction <add>, %93, %cst_76 [0] : vector<128x32xf32> to vector<32xf32>
    %97 = vector.shape_cast %96 : vector<32xf32> to vector<1x32xf32>
    %cst_77 = arith.constant 1.280000e+02 : f32
    %98 = vector.broadcast %cst_77 : f32 to vector<1x32xf32>
    %99 = arith.divf %97, %98 : vector<1x32xf32>
    %100 = arith.mulf %93, %93 : vector<128x32xf32>
    %cst_78 = arith.constant dense<0.000000e+00> : vector<32xf32>
    %101 = vector.multi_reduction <add>, %100, %cst_78 [0] : vector<128x32xf32> to vector<32xf32>
    %102 = vector.shape_cast %101 : vector<32xf32> to vector<1x32xf32>
    %cst_79 = arith.constant 1.280000e+02 : f32
    %103 = vector.broadcast %cst_79 : f32 to vector<1x32xf32>
    %104 = arith.divf %102, %103 : vector<1x32xf32>
    %105 = arith.mulf %99, %99 : vector<1x32xf32>
    %106 = arith.subf %104, %105 : vector<1x32xf32>
    %cst_80 = arith.constant 0.000000e+00 : f32
    %107 = vector.broadcast %cst_80 : f32 to vector<1x32xf32>
    %108 = arith.maximumf %106, %107 : vector<1x32xf32>
    %109 = vector.broadcast %99 : vector<1x32xf32> to vector<128x32xf32>
    %110 = arith.subf %93, %109 : vector<128x32xf32>
    %cst_81 = arith.constant 9.99999974E-6 : f32
    %111 = vector.broadcast %cst_81 : f32 to vector<1x32xf32>
    %112 = arith.addf %108, %111 : vector<1x32xf32>
    %113 = math.rsqrt %112 : vector<1x32xf32>
    %114 = vector.broadcast %113 : vector<1x32xf32> to vector<128x32xf32>
    %115 = arith.mulf %110, %114 : vector<128x32xf32>
    %116 = vector.broadcast %94 : vector<1x32xf32> to vector<128x32xf32>
    %117 = arith.mulf %115, %116 : vector<128x32xf32>
    %118 = vector.broadcast %95 : vector<1x32xf32> to vector<128x32xf32>
    %119 = arith.addf %117, %118 : vector<128x32xf32>
    %cst_82 = arith.constant 0.000000e+00 : f32
    %120 = vector.broadcast %cst_82 : f32 to vector<128x32xf32>
    %121 = arith.maximumf %119, %120 : vector<128x32xf32>
    %c16_83 = arith.constant 16 : index
    %c0_84 = arith.constant 0 : index
    %122 = vector.load %arg22[%c16_83, %c0_84] : memref<160x32xf32, #tpu.memory_space<vmem>>, vector<128x32xf32>
    tpu.vector_store %arg22[%c16_83, %c0_84], %121 {strides = array<i32>} : memref<160x32xf32, #tpu.memory_space<vmem>>, vector<128x32xf32>,
    %c7_85 = arith.constant 7 : index
    %c0_86 = arith.constant 0 : index
    %123 = vector.load %arg22[%c7_85, %c0_86] : memref<160x32xf32, #tpu.memory_space<vmem>>, vector<128x32xf32>
    %c0_87 = arith.constant 0 : index
    %c0_88 = arith.constant 0 : index
    %c0_89 = arith.constant 0 : index
    %124 = vector.load %arg2[%c0_87, %c0_88, %c0_89] : memref<9x128x1xf32, #tpu.memory_space<vmem>>, vector<1x128x1xf32>
    %125 = vector.shape_cast %124 : vector<1x128x1xf32> to vector<128x1xf32>
    %126 = vector.broadcast %125 : vector<128x1xf32> to vector<128x32xf32>
    %127 = arith.mulf %123, %126 : vector<128x32xf32>
    %128 = arith.truncf %127 : vector<128x32xf32> to vector<128x32xbf16>
    %c0_90 = arith.constant 0 : index
    %c0_91 = arith.constant 0 : index
    %c0_92 = arith.constant 0 : index
    %c0_93 = arith.constant 0 : index
    %129 = vector.load %arg6[%c0_90, %c0_91, %c0_92, %c0_93] : memref<1x9x32x32xbf16, #tpu.memory_space<vmem>>, vector<1x1x32x32xbf16>
    %130 = vector.shape_cast %129 : vector<1x1x32x32xbf16> to vector<32x32xbf16>
    %cst_94 = arith.constant dense<0.000000e+00> : vector<128x32xf32>
    %131 = tpu.matmul %128, %130, %cst_94 {dimension_numbers = #tpu.dot_dimension_numbers<[1], [0], [0], [1], [0, 0, 1, 1], [], []>} : vector<128x32xbf16>, vector<32x32xbf16>, vector<128x32xf32> -> vector<128x32xf32>
    %c8_95 = arith.constant 8 : index
    %c0_96 = arith.constant 0 : index
    %132 = vector.load %arg22[%c8_95, %c0_96] : memref<160x32xf32, #tpu.memory_space<vmem>>, vector<128x32xf32>
    %c1_97 = arith.constant 1 : index
    %c0_98 = arith.constant 0 : index
    %c0_99 = arith.constant 0 : index
    %133 = vector.load %arg2[%c1_97, %c0_98, %c0_99] : memref<9x128x1xf32, #tpu.memory_space<vmem>>, vector<1x128x1xf32>
    %134 = vector.shape_cast %133 : vector<1x128x1xf32> to vector<128x1xf32>
    %135 = vector.broadcast %134 : vector<128x1xf32> to vector<128x32xf32>
    %136 = arith.mulf %132, %135 : vector<128x32xf32>
    %137 = arith.truncf %136 : vector<128x32xf32> to vector<128x32xbf16>
    %c0_100 = arith.constant 0 : index
    %c1_101 = arith.constant 1 : index
    %c0_102 = arith.constant 0 : index
    %c0_103 = arith.constant 0 : index
    %138 = vector.load %arg6[%c0_100, %c1_101, %c0_102, %c0_103] : memref<1x9x32x32xbf16, #tpu.memory_space<vmem>>, vector<1x1x32x32xbf16>
    %139 = vector.shape_cast %138 : vector<1x1x32x32xbf16> to vector<32x32xbf16>
    %cst_104 = arith.constant dense<0.000000e+00> : vector<128x32xf32>
    %140 = tpu.matmul %137, %139, %cst_104 {dimension_numbers = #tpu.dot_dimension_numbers<[1], [0], [0], [1], [0, 0, 1, 1], [], []>} : vector<128x32xbf16>, vector<32x32xbf16>, vector<128x32xf32> -> vector<128x32xf32>
    %141 = arith.addf %131, %140 : vector<128x32xf32>
    %c9_105 = arith.constant 9 : index
    %c0_106 = arith.constant 0 : index
    %142 = vector.load %arg22[%c9_105, %c0_106] : memref<160x32xf32, #tpu.memory_space<vmem>>, vector<128x32xf32>
    %c2_107 = arith.constant 2 : index
    %c0_108 = arith.constant 0 : index
    %c0_109 = arith.constant 0 : index
    %143 = vector.load %arg2[%c2_107, %c0_108, %c0_109] : memref<9x128x1xf32, #tpu.memory_space<vmem>>, vector<1x128x1xf32>
    %144 = vector.shape_cast %143 : vector<1x128x1xf32> to vector<128x1xf32>
    %145 = vector.broadcast %144 : vector<128x1xf32> to vector<128x32xf32>
    %146 = arith.mulf %142, %145 : vector<128x32xf32>
    %147 = arith.truncf %146 : vector<128x32xf32> to vector<128x32xbf16>
    %c0_110 = arith.constant 0 : index
    %c2_111 = arith.constant 2 : index
    %c0_112 = arith.constant 0 : index
    %c0_113 = arith.constant 0 : index
    %148 = vector.load %arg6[%c0_110, %c2_111, %c0_112, %c0_113] : memref<1x9x32x32xbf16, #tpu.memory_space<vmem>>, vector<1x1x32x32xbf16>
    %149 = vector.shape_cast %148 : vector<1x1x32x32xbf16> to vector<32x32xbf16>
    %cst_114 = arith.constant dense<0.000000e+00> : vector<128x32xf32>
    %150 = tpu.matmul %147, %149, %cst_114 {dimension_numbers = #tpu.dot_dimension_numbers<[1], [0], [0], [1], [0, 0, 1, 1], [], []>} : vector<128x32xbf16>, vector<32x32xbf16>, vector<128x32xf32> -> vector<128x32xf32>
    %151 = arith.addf %141, %150 : vector<128x32xf32>
    %c15_115 = arith.constant 15 : index
    %c0_116 = arith.constant 0 : index
    %152 = vector.load %arg22[%c15_115, %c0_116] : memref<160x32xf32, #tpu.memory_space<vmem>>, vector<128x32xf32>
    %c3_117 = arith.constant 3 : index
    %c0_118 = arith.constant 0 : index
    %c0_119 = arith.constant 0 : index
    %153 = vector.load %arg2[%c3_117, %c0_118, %c0_119] : memref<9x128x1xf32, #tpu.memory_space<vmem>>, vector<1x128x1xf32>
    %154 = vector.shape_cast %153 : vector<1x128x1xf32> to vector<128x1xf32>
    %155 = vector.broadcast %154 : vector<128x1xf32> to vector<128x32xf32>
    %156 = arith.mulf %152, %155 : vector<128x32xf32>
    %157 = arith.truncf %156 : vector<128x32xf32> to vector<128x32xbf16>
    %c0_120 = arith.constant 0 : index
    %c3_121 = arith.constant 3 : index
    %c0_122 = arith.constant 0 : index
    %c0_123 = arith.constant 0 : index
    %158 = vector.load %arg6[%c0_120, %c3_121, %c0_122, %c0_123] : memref<1x9x32x32xbf16, #tpu.memory_space<vmem>>, vector<1x1x32x32xbf16>
    %159 = vector.shape_cast %158 : vector<1x1x32x32xbf16> to vector<32x32xbf16>
    %cst_124 = arith.constant dense<0.000000e+00> : vector<128x32xf32>
    %160 = tpu.matmul %157, %159, %cst_124 {dimension_numbers = #tpu.dot_dimension_numbers<[1], [0], [0], [1], [0, 0, 1, 1], [], []>} : vector<128x32xbf16>, vector<32x32xbf16>, vector<128x32xf32> -> vector<128x32xf32>
    %161 = arith.addf %151, %160 : vector<128x32xf32>
    %c16_125 = arith.constant 16 : index
    %c0_126 = arith.constant 0 : index
    %162 = vector.load %arg22[%c16_125, %c0_126] : memref<160x32xf32, #tpu.memory_space<vmem>>, vector<128x32xf32>
    %163 = arith.truncf %162 : vector<128x32xf32> to vector<128x32xbf16>
    %c0_127 = arith.constant 0 : index
    %c4_128 = arith.constant 4 : index
    %c0_129 = arith.constant 0 : index
    %c0_130 = arith.constant 0 : index
    %164 = vector.load %arg6[%c0_127, %c4_128, %c0_129, %c0_130] : memref<1x9x32x32xbf16, #tpu.memory_space<vmem>>, vector<1x1x32x32xbf16>
    %165 = vector.shape_cast %164 : vector<1x1x32x32xbf16> to vector<32x32xbf16>
    %cst_131 = arith.constant dense<0.000000e+00> : vector<128x32xf32>
    %166 = tpu.matmul %163, %165, %cst_131 {dimension_numbers = #tpu.dot_dimension_numbers<[1], [0], [0], [1], [0, 0, 1, 1], [], []>} : vector<128x32xbf16>, vector<32x32xbf16>, vector<128x32xf32> -> vector<128x32xf32>
    %167 = arith.addf %161, %166 : vector<128x32xf32>
    %c17_132 = arith.constant 17 : index
    %c0_133 = arith.constant 0 : index
    %168 = vector.load %arg22[%c17_132, %c0_133] : memref<160x32xf32, #tpu.memory_space<vmem>>, vector<128x32xf32>
    %c5_134 = arith.constant 5 : index
    %c0_135 = arith.constant 0 : index
    %c0_136 = arith.constant 0 : index
    %169 = vector.load %arg2[%c5_134, %c0_135, %c0_136] : memref<9x128x1xf32, #tpu.memory_space<vmem>>, vector<1x128x1xf32>
    %170 = vector.shape_cast %169 : vector<1x128x1xf32> to vector<128x1xf32>
    %171 = vector.broadcast %170 : vector<128x1xf32> to vector<128x32xf32>
    %172 = arith.mulf %168, %171 : vector<128x32xf32>
    %173 = arith.truncf %172 : vector<128x32xf32> to vector<128x32xbf16>
    %c0_137 = arith.constant 0 : index
    %c5_138 = arith.constant 5 : index
    %c0_139 = arith.constant 0 : index
    %c0_140 = arith.constant 0 : index
    %174 = vector.load %arg6[%c0_137, %c5_138, %c0_139, %c0_140] : memref<1x9x32x32xbf16, #tpu.memory_space<vmem>>, vector<1x1x32x32xbf16>
    %175 = vector.shape_cast %174 : vector<1x1x32x32xbf16> to vector<32x32xbf16>
    %cst_141 = arith.constant dense<0.000000e+00> : vector<128x32xf32>
    %176 = tpu.matmul %173, %175, %cst_141 {dimension_numbers = #tpu.dot_dimension_numbers<[1], [0], [0], [1], [0, 0, 1, 1], [], []>} : vector<128x32xbf16>, vector<32x32xbf16>, vector<128x32xf32> -> vector<128x32xf32>
    %177 = arith.addf %167, %176 : vector<128x32xf32>
    %c23_142 = arith.constant 23 : index
    %c0_143 = arith.constant 0 : index
    %178 = vector.load %arg22[%c23_142, %c0_143] : memref<160x32xf32, #tpu.memory_space<vmem>>, vector<128x32xf32>
    %c6_144 = arith.constant 6 : index
    %c0_145 = arith.constant 0 : index
    %c0_146 = arith.constant 0 : index
    %179 = vector.load %arg2[%c6_144, %c0_145, %c0_146] : memref<9x128x1xf32, #tpu.memory_space<vmem>>, vector<1x128x1xf32>
    %180 = vector.shape_cast %179 : vector<1x128x1xf32> to vector<128x1xf32>
    %181 = vector.broadcast %180 : vector<128x1xf32> to vector<128x32xf32>
    %182 = arith.mulf %178, %181 : vector<128x32xf32>
    %183 = arith.truncf %182 : vector<128x32xf32> to vector<128x32xbf16>
    %c0_147 = arith.constant 0 : index
    %c6_148 = arith.constant 6 : index
    %c0_149 = arith.constant 0 : index
    %c0_150 = arith.constant 0 : index
    %184 = vector.load %arg6[%c0_147, %c6_148, %c0_149, %c0_150] : memref<1x9x32x32xbf16, #tpu.memory_space<vmem>>, vector<1x1x32x32xbf16>
    %185 = vector.shape_cast %184 : vector<1x1x32x32xbf16> to vector<32x32xbf16>
    %cst_151 = arith.constant dense<0.000000e+00> : vector<128x32xf32>
    %186 = tpu.matmul %183, %185, %cst_151 {dimension_numbers = #tpu.dot_dimension_numbers<[1], [0], [0], [1], [0, 0, 1, 1], [], []>} : vector<128x32xbf16>, vector<32x32xbf16>, vector<128x32xf32> -> vector<128x32xf32>
    %187 = arith.addf %177, %186 : vector<128x32xf32>
    %c24_152 = arith.constant 24 : index
    %c0_153 = arith.constant 0 : index
    %188 = vector.load %arg22[%c24_152, %c0_153] : memref<160x32xf32, #tpu.memory_space<vmem>>, vector<128x32xf32>
    %c7_154 = arith.constant 7 : index
    %c0_155 = arith.constant 0 : index
    %c0_156 = arith.constant 0 : index
    %189 = vector.load %arg2[%c7_154, %c0_155, %c0_156] : memref<9x128x1xf32, #tpu.memory_space<vmem>>, vector<1x128x1xf32>
    %190 = vector.shape_cast %189 : vector<1x128x1xf32> to vector<128x1xf32>
    %191 = vector.broadcast %190 : vector<128x1xf32> to vector<128x32xf32>
    %192 = arith.mulf %188, %191 : vector<128x32xf32>
    %193 = arith.truncf %192 : vector<128x32xf32> to vector<128x32xbf16>
    %c0_157 = arith.constant 0 : index
    %c7_158 = arith.constant 7 : index
    %c0_159 = arith.constant 0 : index
    %c0_160 = arith.constant 0 : index
    %194 = vector.load %arg6[%c0_157, %c7_158, %c0_159, %c0_160] : memref<1x9x32x32xbf16, #tpu.memory_space<vmem>>, vector<1x1x32x32xbf16>
    %195 = vector.shape_cast %194 : vector<1x1x32x32xbf16> to vector<32x32xbf16>
    %cst_161 = arith.constant dense<0.000000e+00> : vector<128x32xf32>
    %196 = tpu.matmul %193, %195, %cst_161 {dimension_numbers = #tpu.dot_dimension_numbers<[1], [0], [0], [1], [0, 0, 1, 1], [], []>} : vector<128x32xbf16>, vector<32x32xbf16>, vector<128x32xf32> -> vector<128x32xf32>
    %197 = arith.addf %187, %196 : vector<128x32xf32>
    %c25_162 = arith.constant 25 : index
    %c0_163 = arith.constant 0 : index
    %198 = vector.load %arg22[%c25_162, %c0_163] : memref<160x32xf32, #tpu.memory_space<vmem>>, vector<128x32xf32>
    %c8_164 = arith.constant 8 : index
    %c0_165 = arith.constant 0 : index
    %c0_166 = arith.constant 0 : index
    %199 = vector.load %arg2[%c8_164, %c0_165, %c0_166] : memref<9x128x1xf32, #tpu.memory_space<vmem>>, vector<1x128x1xf32>
    %200 = vector.shape_cast %199 : vector<1x128x1xf32> to vector<128x1xf32>
    %201 = vector.broadcast %200 : vector<128x1xf32> to vector<128x32xf32>
    %202 = arith.mulf %198, %201 : vector<128x32xf32>
    %203 = arith.truncf %202 : vector<128x32xf32> to vector<128x32xbf16>
    %c0_167 = arith.constant 0 : index
    %c8_168 = arith.constant 8 : index
    %c0_169 = arith.constant 0 : index
    %c0_170 = arith.constant 0 : index
    %204 = vector.load %arg6[%c0_167, %c8_168, %c0_169, %c0_170] : memref<1x9x32x32xbf16, #tpu.memory_space<vmem>>, vector<1x1x32x32xbf16>
    %205 = vector.shape_cast %204 : vector<1x1x32x32xbf16> to vector<32x32xbf16>
    %cst_171 = arith.constant dense<0.000000e+00> : vector<128x32xf32>
    %206 = tpu.matmul %203, %205, %cst_171 {dimension_numbers = #tpu.dot_dimension_numbers<[1], [0], [0], [1], [0, 0, 1, 1], [], []>} : vector<128x32xbf16>, vector<32x32xbf16>, vector<128x32xf32> -> vector<128x32xf32>
    %207 = arith.addf %197, %206 : vector<128x32xf32>
    %208 = vector.extract_strided_slice %4 {offsets = [3, 0], sizes = [1, 32], strides = [1, 1]} : vector<6x32xf32> to vector<1x32xf32>
    %209 = vector.broadcast %208 : vector<1x32xf32> to vector<128x32xf32>
    %210 = arith.addf %207, %209 : vector<128x32xf32>
    %211 = vector.extract_strided_slice %4 {offsets = [4, 0], sizes = [1, 32], strides = [1, 1]} : vector<6x32xf32> to vector<1x32xf32>
    %212 = vector.extract_strided_slice %4 {offsets = [5, 0], sizes = [1, 32], strides = [1, 1]} : vector<6x32xf32> to vector<1x32xf32>
    %cst_172 = arith.constant dense<0.000000e+00> : vector<32xf32>
    %213 = vector.multi_reduction <add>, %210, %cst_172 [0] : vector<128x32xf32> to vector<32xf32>
    %214 = vector.shape_cast %213 : vector<32xf32> to vector<1x32xf32>
    %cst_173 = arith.constant 1.280000e+02 : f32
    %215 = vector.broadcast %cst_173 : f32 to vector<1x32xf32>
    %216 = arith.divf %214, %215 : vector<1x32xf32>
    %217 = arith.mulf %210, %210 : vector<128x32xf32>
    %cst_174 = arith.constant dense<0.000000e+00> : vector<32xf32>
    %218 = vector.multi_reduction <add>, %217, %cst_174 [0] : vector<128x32xf32> to vector<32xf32>
    %219 = vector.shape_cast %218 : vector<32xf32> to vector<1x32xf32>
    %cst_175 = arith.constant 1.280000e+02 : f32
    %220 = vector.broadcast %cst_175 : f32 to vector<1x32xf32>
    %221 = arith.divf %219, %220 : vector<1x32xf32>
    %222 = arith.mulf %216, %216 : vector<1x32xf32>
    %223 = arith.subf %221, %222 : vector<1x32xf32>
    %cst_176 = arith.constant 0.000000e+00 : f32
    %224 = vector.broadcast %cst_176 : f32 to vector<1x32xf32>
    %225 = arith.maximumf %223, %224 : vector<1x32xf32>
    %226 = vector.broadcast %216 : vector<1x32xf32> to vector<128x32xf32>
    %227 = arith.subf %210, %226 : vector<128x32xf32>
    %cst_177 = arith.constant 9.99999974E-6 : f32
    %228 = vector.broadcast %cst_177 : f32 to vector<1x32xf32>
    %229 = arith.addf %225, %228 : vector<1x32xf32>
    %230 = math.rsqrt %229 : vector<1x32xf32>
    %231 = vector.broadcast %230 : vector<1x32xf32> to vector<128x32xf32>
    %232 = arith.mulf %227, %231 : vector<128x32xf32>
    %233 = vector.broadcast %211 : vector<1x32xf32> to vector<128x32xf32>
    %234 = arith.mulf %232, %233 : vector<128x32xf32>
    %235 = vector.broadcast %212 : vector<1x32xf32> to vector<128x32xf32>
    %236 = arith.addf %234, %235 : vector<128x32xf32>
    %237 = arith.addf %236, %5 : vector<128x32xf32>
    %cst_178 = arith.constant 0.000000e+00 : f32
    %238 = vector.broadcast %cst_178 : f32 to vector<128x32xf32>
    %239 = arith.maximumf %237, %238 : vector<128x32xf32>
    %c16_179 = arith.constant 16 : index
    %c0_180 = arith.constant 0 : index
    %240 = vector.load %arg21[%c16_179, %c0_180] : memref<160x32xf32, #tpu.memory_space<vmem>>, vector<128x32xf32>
    tpu.vector_store %arg21[%c16_179, %c0_180], %239 {strides = array<i32>} : memref<160x32xf32, #tpu.memory_space<vmem>>, vector<128x32xf32>,
    %c1_i32 = arith.constant 1 : i32
    %241 = arith.cmpi eq, %arg0, %c1_i32 : i32
    %242 = arith.extui %241 : i1 to i32
    %c0_i32_181 = arith.constant 0 : i32
    %243 = arith.cmpi ne, %242, %c0_i32_181 : i32
    scf.if %243 {
      %244 = arith.truncf %239 : vector<128x32xf32> to vector<128x32xbf16>
      %c0_182 = arith.constant 0 : index
      %c0_183 = arith.constant 0 : index
      %245 = vector.load %arg8[%c0_182, %c0_183] : memref<32x3xbf16, #tpu.memory_space<vmem>>, vector<32x3xbf16>
      %cst_184 = arith.constant dense<0.000000e+00> : vector<128x3xf32>
      %246 = tpu.matmul %244, %245, %cst_184 {dimension_numbers = #tpu.dot_dimension_numbers<[1], [0], [0], [1], [0, 0, 1, 1], [], []>} : vector<128x32xbf16>, vector<32x3xbf16>, vector<128x3xf32> -> vector<128x3xf32>
      %c0_185 = arith.constant 0 : index
      %c0_186 = arith.constant 0 : index
      %247 = vector.load %arg9[%c0_185, %c0_186] : memref<3x3xf32, #tpu.memory_space<vmem>>, vector<3x3xf32>
      %248 = vector.extract_strided_slice %247 {offsets = [0, 0], sizes = [1, 3], strides = [1, 1]} : vector<3x3xf32> to vector<1x3xf32>
      %249 = vector.broadcast %248 : vector<1x3xf32> to vector<128x3xf32>
      %250 = arith.addf %246, %249 : vector<128x3xf32>
      %251 = vector.extract_strided_slice %247 {offsets = [1, 0], sizes = [1, 3], strides = [1, 1]} : vector<3x3xf32> to vector<1x3xf32>
      %252 = vector.extract_strided_slice %247 {offsets = [2, 0], sizes = [1, 3], strides = [1, 1]} : vector<3x3xf32> to vector<1x3xf32>
      %cst_187 = arith.constant dense<0.000000e+00> : vector<3xf32>
      %253 = vector.multi_reduction <add>, %250, %cst_187 [0] : vector<128x3xf32> to vector<3xf32>
      %254 = vector.shape_cast %253 : vector<3xf32> to vector<1x3xf32>
      %cst_188 = arith.constant 1.280000e+02 : f32
      %255 = vector.broadcast %cst_188 : f32 to vector<1x3xf32>
      %256 = arith.divf %254, %255 : vector<1x3xf32>
      %257 = arith.mulf %250, %250 : vector<128x3xf32>
      %cst_189 = arith.constant dense<0.000000e+00> : vector<3xf32>
      %258 = vector.multi_reduction <add>, %257, %cst_189 [0] : vector<128x3xf32> to vector<3xf32>
      %259 = vector.shape_cast %258 : vector<3xf32> to vector<1x3xf32>
      %cst_190 = arith.constant 1.280000e+02 : f32
      %260 = vector.broadcast %cst_190 : f32 to vector<1x3xf32>
      %261 = arith.divf %259, %260 : vector<1x3xf32>
      %262 = arith.mulf %256, %256 : vector<1x3xf32>
      %263 = arith.subf %261, %262 : vector<1x3xf32>
      %cst_191 = arith.constant 0.000000e+00 : f32
      %264 = vector.broadcast %cst_191 : f32 to vector<1x3xf32>
      %265 = arith.maximumf %263, %264 : vector<1x3xf32>
      %266 = vector.broadcast %256 : vector<1x3xf32> to vector<128x3xf32>
      %267 = arith.subf %250, %266 : vector<128x3xf32>
      %cst_192 = arith.constant 9.99999974E-6 : f32
      %268 = vector.broadcast %cst_192 : f32 to vector<1x3xf32>
      %269 = arith.addf %265, %268 : vector<1x3xf32>
      %270 = math.rsqrt %269 : vector<1x3xf32>
      %271 = vector.broadcast %270 : vector<1x3xf32> to vector<128x3xf32>
      %272 = arith.mulf %267, %271 : vector<128x3xf32>
      %273 = vector.broadcast %251 : vector<1x3xf32> to vector<128x3xf32>
      %274 = arith.mulf %272, %273 : vector<128x3xf32>
      %275 = vector.broadcast %252 : vector<1x3xf32> to vector<128x3xf32>
      %276 = arith.addf %274, %275 : vector<128x3xf32>
      %cst_193 = arith.constant 0.000000e+00 : f32
      %277 = vector.broadcast %cst_193 : f32 to vector<128x3xf32>
      %278 = arith.maximumf %276, %277 : vector<128x3xf32>
      %c0_194 = arith.constant 0 : index
      %c0_195 = arith.constant 0 : index
      %279 = vector.load %arg10[%c0_194, %c0_195] : memref<2x128xbf16, #tpu.memory_space<vmem>>, vector<2x128xbf16>
      %280 = vector.extract_strided_slice %278 {offsets = [0, 0], sizes = [128, 1], strides = [1, 1]} : vector<128x3xf32> to vector<128x1xf32>
      %c0_196 = arith.constant 0 : index
      %c0_197 = arith.constant 0 : index
      %281 = vector.load %arg11[%c0_196, %c0_197] : memref<128x4xf32, #tpu.memory_space<vmem>>, vector<128x4xf32>
      %282 = vector.broadcast %280 : vector<128x1xf32> to vector<128x4xf32>
      %283 = arith.mulf %282, %281 : vector<128x4xf32>
      %284 = vector.extract_strided_slice %278 {offsets = [0, 1], sizes = [128, 1], strides = [1, 1]} : vector<128x3xf32> to vector<128x1xf32>
      %c0_198 = arith.constant 0 : index
      %c0_199 = arith.constant 0 : index
      %285 = vector.load %arg12[%c0_198, %c0_199] : memref<128x4xf32, #tpu.memory_space<vmem>>, vector<128x4xf32>
      %286 = vector.broadcast %284 : vector<128x1xf32> to vector<128x4xf32>
      %287 = arith.mulf %286, %285 : vector<128x4xf32>
      %288 = arith.addf %283, %287 : vector<128x4xf32>
      %289 = arith.truncf %288 : vector<128x4xf32> to vector<128x4xbf16>
      %cst_200 = arith.constant dense<0.000000e+00> : vector<2x4xf32>
      %290 = tpu.matmul %279, %289, %cst_200 {dimension_numbers = #tpu.dot_dimension_numbers<[1], [0], [0], [1], [0, 0, 1, 1], [], []>} : vector<2x128xbf16>, vector<128x4xbf16>, vector<2x4xf32> -> vector<2x4xf32>
      %c0_201 = arith.constant 0 : index
      %c0_202 = arith.constant 0 : index
      %291 = vector.load %arg13[%c0_201, %c0_202] : memref<1x4xf32, #tpu.memory_space<vmem>>, vector<1x4xf32>
      %292 = vector.broadcast %291 : vector<1x4xf32> to vector<2x4xf32>
      %293 = arith.addf %290, %292 : vector<2x4xf32>
      %cst_203 = arith.constant dense<0xFF800000> : vector<2xf32>
      %294 = vector.multi_reduction <maximumf>, %293, %cst_203 [1] : vector<2x4xf32> to vector<2xf32>
      %295 = vector.shape_cast %294 : vector<2xf32> to vector<2x1xf32>
      %296 = vector.broadcast %295 : vector<2x1xf32> to vector<2x4xf32>
      %297 = arith.subf %293, %296 : vector<2x4xf32>
      %298 = math.exp %297 : vector<2x4xf32>
      %cst_204 = arith.constant dense<0.000000e+00> : vector<2xf32>
      %299 = vector.multi_reduction <add>, %298, %cst_204 [1] : vector<2x4xf32> to vector<2xf32>
      %300 = vector.shape_cast %299 : vector<2xf32> to vector<2x1xf32>
      %301 = vector.broadcast %300 : vector<2x1xf32> to vector<2x4xf32>
      %302 = arith.divf %298, %301 : vector<2x4xf32>
      %c0_205 = arith.constant 0 : index
      %c0_206 = arith.constant 0 : index
      %303 = vector.load %arg19[%c0_205, %c0_206] : memref<2x4xf32, #tpu.memory_space<vmem>>, vector<2x4xf32>
      tpu.vector_store %arg19[%c0_205, %c0_206], %302 {strides = array<i32>} : memref<2x4xf32, #tpu.memory_space<vmem>>, vector<2x4xf32>,
      %304 = vector.extract_strided_slice %278 {offsets = [0, 2], sizes = [128, 1], strides = [1, 1]} : vector<128x3xf32> to vector<128x1xf32>
      %c0_207 = arith.constant 0 : index
      %c0_208 = arith.constant 0 : index
      %305 = vector.load %arg14[%c0_207, %c0_208] : memref<128x32xf32, #tpu.memory_space<vmem>>, vector<128x32xf32>
      %306 = vector.broadcast %304 : vector<128x1xf32> to vector<128x32xf32>
      %307 = arith.mulf %306, %305 : vector<128x32xf32>
      %308 = arith.truncf %307 : vector<128x32xf32> to vector<128x32xbf16>
      %cst_209 = arith.constant dense<0.000000e+00> : vector<2x32xf32>
      %309 = tpu.matmul %279, %308, %cst_209 {dimension_numbers = #tpu.dot_dimension_numbers<[1], [0], [0], [1], [0, 0, 1, 1], [], []>} : vector<2x128xbf16>, vector<128x32xbf16>, vector<2x32xf32> -> vector<2x32xf32>
      %c0_210 = arith.constant 0 : index
      %c0_211 = arith.constant 0 : index
      %310 = vector.load %arg15[%c0_210, %c0_211] : memref<1x32xf32, #tpu.memory_space<vmem>>, vector<1x32xf32>
      %311 = vector.broadcast %310 : vector<1x32xf32> to vector<2x32xf32>
      %312 = arith.addf %309, %311 : vector<2x32xf32>
      %cst_212 = arith.constant 0.000000e+00 : f32
      %313 = vector.broadcast %cst_212 : f32 to vector<2x32xf32>
      %314 = arith.maximumf %312, %313 : vector<2x32xf32>
      %315 = arith.truncf %314 : vector<2x32xf32> to vector<2x32xbf16>
      %c0_213 = arith.constant 0 : index
      %c0_214 = arith.constant 0 : index
      %316 = vector.load %arg16[%c0_213, %c0_214] : memref<32x7xbf16, #tpu.memory_space<vmem>>, vector<32x7xbf16>
      %cst_215 = arith.constant dense<0.000000e+00> : vector<2x7xf32>
      %317 = tpu.matmul %315, %316, %cst_215 {dimension_numbers = #tpu.dot_dimension_numbers<[1], [0], [0], [1], [0, 0, 1, 1], [], []>} : vector<2x32xbf16>, vector<32x7xbf16>, vector<2x7xf32> -> vector<2x7xf32>
      %c0_216 = arith.constant 0 : index
      %c0_217 = arith.constant 0 : index
      %318 = vector.load %arg17[%c0_216, %c0_217] : memref<1x7xf32, #tpu.memory_space<vmem>>, vector<1x7xf32>
      %319 = vector.broadcast %318 : vector<1x7xf32> to vector<2x7xf32>
      %320 = arith.addf %317, %319 : vector<2x7xf32>
      %cst_218 = arith.constant dense<0xFF800000> : vector<2xf32>
      %321 = vector.multi_reduction <maximumf>, %320, %cst_218 [1] : vector<2x7xf32> to vector<2xf32>
      %322 = vector.shape_cast %321 : vector<2xf32> to vector<2x1xf32>
      %323 = vector.broadcast %322 : vector<2x1xf32> to vector<2x7xf32>
      %324 = arith.subf %320, %323 : vector<2x7xf32>
      %325 = math.exp %324 : vector<2x7xf32>
      %cst_219 = arith.constant dense<0.000000e+00> : vector<2xf32>
      %326 = vector.multi_reduction <add>, %325, %cst_219 [1] : vector<2x7xf32> to vector<2xf32>
      %327 = vector.shape_cast %326 : vector<2xf32> to vector<2x1xf32>
      %328 = vector.broadcast %327 : vector<2x1xf32> to vector<2x7xf32>
      %329 = arith.divf %325, %328 : vector<2x7xf32>
      %c0_220 = arith.constant 0 : index
      %c0_221 = arith.constant 0 : index
      %330 = vector.load %arg18[%c0_220, %c0_221] : memref<1x7xf32, #tpu.memory_space<vmem>>, vector<1x7xf32>
      %331 = vector.broadcast %330 : vector<1x7xf32> to vector<2x7xf32>
      %332 = arith.mulf %331, %329 : vector<2x7xf32>
      %cst_222 = arith.constant dense<0.000000e+00> : vector<2xf32>
      %333 = vector.multi_reduction <add>, %332, %cst_222 [1] : vector<2x7xf32> to vector<2xf32>
      %334 = vector.shape_cast %333 : vector<2xf32> to vector<2x1xf32>
      %cst_223 = arith.constant 0.000000e+00 : f32
      %335 = vector.broadcast %cst_223 : f32 to vector<2x1xf32>
      %336 = arith.cmpf ogt, %334, %335 : vector<2x1xf32>
      %cst_224 = arith.constant 0.000000e+00 : f32
      %337 = vector.broadcast %cst_224 : f32 to vector<2x1xf32>
      %338 = arith.cmpf olt, %334, %337 : vector<2x1xf32>
      %cst_225 = arith.constant -1.000000e+00 : f32
      %cst_226 = arith.constant 0.000000e+00 : f32
      %339 = vector.broadcast %cst_225 : f32 to vector<2x1xf32>
      %340 = vector.broadcast %cst_226 : f32 to vector<2x1xf32>
      %341 = arith.select %338, %339, %340 : vector<2x1xi1>, vector<2x1xf32>
      %cst_227 = arith.constant 1.000000e+00 : f32
      %342 = vector.broadcast %cst_227 : f32 to vector<2x1xf32>
      %343 = arith.select %336, %342, %341 : vector<2x1xi1>, vector<2x1xf32>
      %344 = math.absf %334 : vector<2x1xf32>
      %cst_228 = arith.constant 1.000000e+00 : f32
      %345 = vector.broadcast %cst_228 : f32 to vector<2x1xf32>
      %346 = arith.addf %344, %345 : vector<2x1xf32>
      %cst_229 = arith.constant 1.000000e-03 : f32
      %347 = vector.broadcast %cst_229 : f32 to vector<2x1xf32>
      %348 = arith.addf %346, %347 : vector<2x1xf32>
      %cst_230 = arith.constant 4.000000e-03 : f32
      %349 = vector.broadcast %cst_230 : f32 to vector<2x1xf32>
      %350 = arith.mulf %349, %348 : vector<2x1xf32>
      %cst_231 = arith.constant 1.000000e+00 : f32
      %351 = vector.broadcast %cst_231 : f32 to vector<2x1xf32>
      %352 = arith.addf %351, %350 : vector<2x1xf32>
      %353 = math.sqrt %352 : vector<2x1xf32>
      %cst_232 = arith.constant 1.000000e+00 : f32
      %354 = vector.broadcast %cst_232 : f32 to vector<2x1xf32>
      %355 = arith.subf %353, %354 : vector<2x1xf32>
      %cst_233 = arith.constant 2.000000e-03 : f32
      %356 = vector.broadcast %cst_233 : f32 to vector<2x1xf32>
      %357 = arith.divf %355, %356 : vector<2x1xf32>
      %358 = arith.mulf %357, %357 : vector<2x1xf32>
      %cst_234 = arith.constant 1.000000e+00 : f32
      %359 = vector.broadcast %cst_234 : f32 to vector<2x1xf32>
      %360 = arith.subf %358, %359 : vector<2x1xf32>
      %361 = arith.mulf %343, %360 : vector<2x1xf32>
      %c0_235 = arith.constant 0 : index
      %c0_236 = arith.constant 0 : index
      %362 = vector.load %arg20[%c0_235, %c0_236] : memref<2x1xf32, #tpu.memory_space<vmem>>, vector<2x1xf32>
      tpu.vector_store %arg20[%c0_235, %c0_236], %361 {strides = array<i32>} : memref<2x1xf32, #tpu.memory_space<vmem>>, vector<2x1xf32>,
    } else {
    }
    return
  }
  func.func @transform_0(%arg0: i32) -> (i32, i32) {
    %c0_i32 = arith.constant 0 : i32
    %c0_i32_0 = arith.constant 0 : i32
    %c0_i32_1 = arith.constant 0 : i32
    return %c0_i32, %c0_i32_0 : i32, i32
  }
  func.func @transform_1(%arg0: i32) -> (i32, i32, i32) {
    %c0_i32 = arith.constant 0 : i32
    %c0_i32_0 = arith.constant 0 : i32
    %c0_i32_1 = arith.constant 0 : i32
    %c0_i32_2 = arith.constant 0 : i32
    return %c0_i32, %c0_i32_0, %c0_i32_1 : i32, i32, i32
  }
  func.func @transform_2(%arg0: i32) -> (i32, i32, i32) {
    %c0_i32 = arith.constant 0 : i32
    %c0_i32_0 = arith.constant 0 : i32
    %c0_i32_1 = arith.constant 0 : i32
    %c0_i32_2 = arith.constant 0 : i32
    return %c0_i32, %c0_i32_0, %c0_i32_1 : i32, i32, i32
  }
  func.func @transform_3(%arg0: i32) -> (i32, i32) {
    %c0_i32 = arith.constant 0 : i32
    %c0_i32_0 = arith.constant 0 : i32
    %c0_i32_1 = arith.constant 0 : i32
    return %c0_i32, %c0_i32_0 : i32, i32
  }
  func.func @transform_4(%arg0: i32) -> (i32, i32, i32, i32) {
    %c0_i32 = arith.constant 0 : i32
    %c0_i32_0 = arith.constant 0 : i32
    %c0_i32_1 = arith.constant 0 : i32
    %c0_i32_2 = arith.constant 0 : i32
    return %arg0, %c0_i32, %c0_i32_0, %c0_i32_1 : i32, i32, i32, i32
  }
  func.func @transform_5(%arg0: i32) -> (i32, i32, i32, i32) {
    %c0_i32 = arith.constant 0 : i32
    %c0_i32_0 = arith.constant 0 : i32
    %c0_i32_1 = arith.constant 0 : i32
    %c0_i32_2 = arith.constant 0 : i32
    return %arg0, %c0_i32, %c0_i32_0, %c0_i32_1 : i32, i32, i32, i32
  }
  func.func @transform_6(%arg0: i32) -> (i32, i32, i32) {
    %c0_i32 = arith.constant 0 : i32
    %c0_i32_0 = arith.constant 0 : i32
    %c0_i32_1 = arith.constant 0 : i32
    return %arg0, %c0_i32, %c0_i32_0 : i32, i32, i32
  }
  func.func @transform_7(%arg0: i32) -> (i32, i32) {
    %c0_i32 = arith.constant 0 : i32
    %c0_i32_0 = arith.constant 0 : i32
    %c0_i32_1 = arith.constant 0 : i32
    return %c0_i32, %c0_i32_0 : i32, i32
  }
  func.func @transform_8(%arg0: i32) -> (i32, i32) {
    %c0_i32 = arith.constant 0 : i32
    %c0_i32_0 = arith.constant 0 : i32
    %c0_i32_1 = arith.constant 0 : i32
    return %c0_i32, %c0_i32_0 : i32, i32
  }
  func.func @transform_9(%arg0: i32) -> (i32, i32) {
    %c0_i32 = arith.constant 0 : i32
    %c0_i32_0 = arith.constant 0 : i32
    %c0_i32_1 = arith.constant 0 : i32
    return %c0_i32, %c0_i32_0 : i32, i32
  }
  func.func @transform_10(%arg0: i32) -> (i32, i32) {
    %c0_i32 = arith.constant 0 : i32
    %c0_i32_0 = arith.constant 0 : i32
    %c0_i32_1 = arith.constant 0 : i32
    return %c0_i32, %c0_i32_0 : i32, i32
  }
  func.func @transform_11(%arg0: i32) -> (i32, i32) {
    %c0_i32 = arith.constant 0 : i32
    %c0_i32_0 = arith.constant 0 : i32
    %c0_i32_1 = arith.constant 0 : i32
    return %c0_i32, %c0_i32_0 : i32, i32
  }
  func.func @transform_12(%arg0: i32) -> (i32, i32) {
    %c0_i32 = arith.constant 0 : i32
    %c0_i32_0 = arith.constant 0 : i32
    %c0_i32_1 = arith.constant 0 : i32
    return %c0_i32, %c0_i32_0 : i32, i32
  }
  func.func @transform_13(%arg0: i32) -> (i32, i32) {
    %c0_i32 = arith.constant 0 : i32
    %c0_i32_0 = arith.constant 0 : i32
    %c0_i32_1 = arith.constant 0 : i32
    return %c0_i32, %c0_i32_0 : i32, i32
  }
  func.func @transform_14(%arg0: i32) -> (i32, i32) {
    %c0_i32 = arith.constant 0 : i32
    %c0_i32_0 = arith.constant 0 : i32
    %c0_i32_1 = arith.constant 0 : i32
    return %c0_i32, %c0_i32_0 : i32, i32
  }
  func.func @transform_15(%arg0: i32) -> (i32, i32) {
    %c0_i32 = arith.constant 0 : i32
    %c0_i32_0 = arith.constant 0 : i32
    %c0_i32_1 = arith.constant 0 : i32
    return %c0_i32, %c0_i32_0 : i32, i32
  }
  func.func @transform_16(%arg0: i32) -> (i32, i32) {
    %c0_i32 = arith.constant 0 : i32
    %c0_i32_0 = arith.constant 0 : i32
    %c0_i32_1 = arith.constant 0 : i32
    return %c0_i32, %c0_i32_0 : i32, i32
  }
  func.func @transform_17(%arg0: i32) -> (i32, i32) {
    %c0_i32 = arith.constant 0 : i32
    %c0_i32_0 = arith.constant 0 : i32
    %c0_i32_1 = arith.constant 0 : i32
    return %c0_i32, %c0_i32_0 : i32, i32
  }
  func.func @transform_18(%arg0: i32) -> (i32, i32) {
    %c0_i32 = arith.constant 0 : i32
    %c0_i32_0 = arith.constant 0 : i32
    %c0_i32_1 = arith.constant 0 : i32
    return %c0_i32, %c0_i32_0 : i32, i32
  }
  func.func @transform_19(%arg0: i32) -> (i32, i32) {
    %c0_i32 = arith.constant 0 : i32
    %c0_i32_0 = arith.constant 0 : i32
    %c0_i32_1 = arith.constant 0 : i32
    return %c0_i32, %c0_i32_0 : i32, i32
  }
}

</mosaic_0001>

<llo_original>
// kernel: muzero_atari_forward.1
$region0: #{muzero_atari_forward.1}
  #allocation0 [shape = 'u32[]', space=smem, size = 0x4, offset = 0x4, fixed_abs, tag = 'smem constant byte address 0x4 - core index']
  #allocation1 [shape = 'u32[144,128]{1,0:T(1,128)}', space=vmem, size = 0x12000, scoped, tag = 'internal scratch']
  #allocation2 [shape = 'f32[160,32]{1,0:T(8,128)}', space=vmem, size = 0x14000, scoped, tag = 'scratch operand']
  #allocation3 [shape = 'f32[160,32]{1,0:T(8,128)}', space=vmem, size = 0x14000, scoped, tag = 'scratch operand']
  %s0 = inlined_call_operand.vmem [shape: f32[160,32], index: 0, kind: input, shape index: {}]
  %s1 = inlined_call_operand.vmem [shape: f32[9,128,1], index: 1, kind: input, shape index: {}]
  %s2 = inlined_call_operand.vmem [shape: bf16[9,32,32], index: 2, kind: input, shape index: {}]
  %s3 = inlined_call_operand.vmem [shape: f32[1,32], index: 3, kind: input, shape index: {}]
  %s4 = inlined_call_operand.vmem [shape: bf16[2,9,32,32], index: 4, kind: input, shape index: {}]
  %s5 = inlined_call_operand.vmem [shape: bf16[2,9,32,32], index: 5, kind: input, shape index: {}]
  %s6 = inlined_call_operand.vmem [shape: f32[2,6,32], index: 6, kind: input, shape index: {}]
  %s7 = inlined_call_operand.vmem [shape: bf16[32,3], index: 7, kind: input, shape index: {}]
  %s8 = inlined_call_operand.vmem [shape: f32[3,3], index: 8, kind: input, shape index: {}]
  %s9 = inlined_call_operand.vmem [shape: bf16[2,128], index: 9, kind: input, shape index: {}]
  %s10 = inlined_call_operand.vmem [shape: f32[128,4], index: 10, kind: input, shape index: {}]
  %s11 = inlined_call_operand.vmem [shape: f32[128,4], index: 11, kind: input, shape index: {}]
  %s12 = inlined_call_operand.vmem [shape: f32[1,4], index: 12, kind: input, shape index: {}]
  %s13 = inlined_call_operand.vmem [shape: f32[128,32], index: 13, kind: input, shape index: {}]
  %s14 = inlined_call_operand.vmem [shape: f32[1,32], index: 14, kind: input, shape index: {}]
  %s15 = inlined_call_operand.vmem [shape: bf16[32,7], index: 15, kind: input, shape index: {}]
  %s16 = inlined_call_operand.vmem [shape: f32[1,7], index: 16, kind: input, shape index: {}]
  %s17 = inlined_call_operand.vmem [shape: f32[1,7], index: 17, kind: input, shape index: {}]
  %s18 = inlined_call_operand.hbm [shape: f32[2,4], index: 18, kind: output, shape index: {0}]
  %s19 = inlined_call_operand.vmem [shape: f32[2,1], index: 19, kind: output, shape index: {1}]
  %20 = xla_tuple %s18, %s19
  %s21 = sld [smem:[#allocation0]]
  $region121: #{muzero_atari_forward.1} parent=0
    _
  %s23 = ssub.s32 1, %s21
  %s24 = scalar_select 0, %s23, %s21
  $region1: #{muzero_atari_forward.1} parent=0
    #allocation4 [shape = 'u8[1024]{0}', space=vmem, size = 0x400, scoped, tag = 'output window, operand 0, single buffered']
    #allocation5 [shape = 's32[2]{0}', space=sflag, size = 0x8, scoped, tag = 'scoped memory for muzero_atari_forward.1']
    %25 = vsyncpa [#allocation5], 0
    loop: start=0, step=1, limit=4
    $region2: #{muzero_atari_forward.1} parent=1 // loop_pre_header
      _
    $region3: #{muzero_atari_forward.1} parent=1 // loop_header
      %s27 = sphi 0, %s31
      %p28 = scmp.ge.s32.totalorder %s27, 4
      %s35 = sphi 0, %s35
      %s37 = sphi 0, %s35
      %s38 = sphi 0, %s37
      %s52 = sphi 0, %s38
      %s56 = sphi 0, %s56
      %s58 = sphi 0, %s56
      %s59 = sphi 0, %s58
      %s73 = sphi 0, %s59
      %s77 = sphi 0, %s77
      %s79 = sphi 0, %s77
      %s80 = sphi 0, %s79
      %s94 = sphi 0, %s80
      %s98 = sphi 0, %s98
      %s100 = sphi 0, %s98
      %s101 = sphi 0, %s100
      %s115 = sphi 0, %s101
      %s121 = sphi 0, %s123
      %s124 = sphi 0, %s121
      %s125 = sphi 0, %s124
      %s141 = sphi 0, %s125
      %s147 = sphi 0, %s149
      %s150 = sphi 0, %s147
      %s151 = sphi 0, %s150
      %s167 = sphi 0, %s151
      %s173 = sphi 0, %s175
      %s176 = sphi 0, %s173
      %s177 = sphi 0, %s176
      %s193 = sphi 0, %s177
      %s197 = sphi 0, %s197
      %s199 = sphi 0, %s197
      %s200 = sphi 0, %s199
      %s214 = sphi 0, %s200
      %s218 = sphi 0, %s218
      %s220 = sphi 0, %s218
      %s221 = sphi 0, %s220
      %s235 = sphi 0, %s221
      %s239 = sphi 0, %s239
      %s241 = sphi 0, %s239
      %s242 = sphi 0, %s241
      %s256 = sphi 0, %s242
      %s260 = sphi 0, %s260
      %s262 = sphi 0, %s260
      %s263 = sphi 0, %s262
      %s277 = sphi 0, %s263
      %s281 = sphi 0, %s281
      %s283 = sphi 0, %s281
      %s284 = sphi 0, %s283
      %s298 = sphi 0, %s284
      %s302 = sphi 0, %s302
      %s304 = sphi 0, %s302
      %s305 = sphi 0, %s304
      %s319 = sphi 0, %s305
      %s323 = sphi 0, %s323
      %s325 = sphi 0, %s323
      %s326 = sphi 0, %s325
      %s340 = sphi 0, %s326
      %s344 = sphi 0, %s344
      %s346 = sphi 0, %s344
      %s347 = sphi 0, %s346
      %s361 = sphi 0, %s347
      %s365 = sphi 0, %s365
      %s367 = sphi 0, %s365
      %s368 = sphi 0, %s367
      %s382 = sphi 0, %s368
      %s386 = sphi 0, %s386
      %s388 = sphi 0, %s386
      %s389 = sphi 0, %s388
      %s403 = sphi 0, %s389
      %s407 = sphi 0, %s407
      %s409 = sphi 0, %s407
      %s410 = sphi 0, %s409
      %s424 = sphi 0, %s410
      %s428 = sphi 0, %s428
      %s430 = sphi 0, %s428
      %s431 = sphi 0, %s430
      %s445 = sphi 0, %s431
      %s449 = sphi 0, %s449
      %s451 = sphi 0, %s449
      %s452 = sphi 0, %s451
      %s466 = sphi 0, %s452
    $region4: #{muzero_atari_forward.1} parent=1 // loop_header_branch
      %30 = sbr.rel (%p28) target = $region8
    $region5: #{muzero_atari_forward.1} parent=1 // loop_body
      %s32 = ssub.s32 %s27, 1
      %s33 = ssub.s32 %s27, 2
      %s34 = sadd.s32 %s27, 1
      %s36 = sadd.s32 %s35, 1
      %p39 = scmp.eq.s32.totalorder %s27, 1
      %p40 = scmp.ne.s32.totalorder %s35, %s37
      %p41 = scmp.eq.s32.totalorder %s27, 0
      %p42 = por %p40, %p41
      %p43 = scmp.ne.s32.totalorder %s35, %s37
      %p44 = scmp.eq.s32.totalorder %s32, 1
      %p45 = por %p43, %p44
      %p46 = scmp.ne.s32.totalorder %s37, %s38
      %p47 = scmp.eq.s32.totalorder %s32, 0
      %p48 = por %p46, %p47
      %p49 = scmp.ne.s32.totalorder %s37, %s38
      %p50 = scmp.eq.s32.totalorder %s33, 1
      %p51 = por %p49, %p50
      %p53 = scmp.ne.s32.totalorder %s38, %s52
      %p54 = scmp.eq.s32.totalorder %s33, 0
      %p55 = por %p53, %p54
      %s57 = sadd.s32 %s56, 1
      %p60 = scmp.eq.s32.totalorder %s27, 1
      %p61 = scmp.ne.s32.totalorder %s56, %s58
      %p62 = scmp.eq.s32.totalorder %s27, 0
      %p63 = por %p61, %p62
      %p64 = scmp.ne.s32.totalorder %s56, %s58
      %p65 = scmp.eq.s32.totalorder %s32, 1
      %p66 = por %p64, %p65
      %p67 = scmp.ne.s32.totalorder %s58, %s59
      %p68 = scmp.eq.s32.totalorder %s32, 0
      %p69 = por %p67, %p68
      %p70 = scmp.ne.s32.totalorder %s58, %s59
      %p71 = scmp.eq.s32.totalorder %s33, 1
      %p72 = por %p70, %p71
      %p74 = scmp.ne.s32.totalorder %s59, %s73
      %p75 = scmp.eq.s32.totalorder %s33, 0
      %p76 = por %p74, %p75
      %s78 = sadd.s32 %s77, 1
      %p81 = scmp.eq.s32.totalorder %s27, 1
      %p82 = scmp.ne.s32.totalorder %s77, %s79
      %p83 = scmp.eq.s32.totalorder %s27, 0
      %p84 = por %p82, %p83
      %p85 = scmp.ne.s32.totalorder %s77, %s79
      %p86 = scmp.eq.s32.totalorder %s32, 1
      %p87 = por %p85, %p86
      %p88 = scmp.ne.s32.totalorder %s79, %s80
      %p89 = scmp.eq.s32.totalorder %s32, 0
      %p90 = por %p88, %p89
      %p91 = scmp.ne.s32.totalorder %s79, %s80
      %p92 = scmp.eq.s32.totalorder %s33, 1
      %p93 = por %p91, %p92
      %p95 = scmp.ne.s32.totalorder %s80, %s94
      %p96 = scmp.eq.s32.totalorder %s33, 0
      %p97 = por %p95, %p96
      %s99 = sadd.s32 %s98, 1
      %p102 = scmp.eq.s32.totalorder %s27, 1
      %p103 = scmp.ne.s32.totalorder %s98, %s100
      %p104 = scmp.eq.s32.totalorder %s27, 0
      %p105 = por %p103, %p104
      %p106 = scmp.ne.s32.totalorder %s98, %s100
      %p107 = scmp.eq.s32.totalorder %s32, 1
      %p108 = por %p106, %p107
      %p109 = scmp.ne.s32.totalorder %s100, %s101
      %p110 = scmp.eq.s32.totalorder %s32, 0
      %p111 = por %p109, %p110
      %p112 = scmp.ne.s32.totalorder %s100, %s101
      %p113 = scmp.eq.s32.totalorder %s33, 1
      %p114 = por %p112, %p113
      %p116 = scmp.ne.s32.totalorder %s101, %s115
      %p117 = scmp.eq.s32.totalorder %s33, 0
      %p118 = por %p116, %p117
      %s119 = ssub.s32 %s27, %s34
      %p120 = scmp.eq.s32.totalorder %s119, 0
      %s122 = sadd.s32 %s121, 1
      %s123 = scalar_select %p120, %s121, %s122
      %p126 = pneg %p120
      %p127 = scmp.eq.s32.totalorder %s27, 1
      %p128 = por %p126, %p127
      %p129 = scmp.ne.s32.totalorder %s121, %s124
      %p130 = scmp.eq.s32.totalorder %s27, 0
      %p131 = por %p129, %p130
      %p132 = scmp.ne.s32.totalorder %s121, %s124
      %p133 = scmp.eq.s32.totalorder %s32, 1
      %p134 = por %p132, %p133
      %p135 = scmp.ne.s32.totalorder %s124, %s125
      %p136 = scmp.eq.s32.totalorder %s32, 0
      %p137 = por %p135, %p136
      %p138 = scmp.ne.s32.totalorder %s124, %s125
      %p139 = scmp.eq.s32.totalorder %s33, 1
      %p140 = por %p138, %p139
      %p142 = scmp.ne.s32.totalorder %s125, %s141
      %p143 = scmp.eq.s32.totalorder %s33, 0
      %p144 = por %p142, %p143
      %s145 = ssub.s32 %s27, %s34
      %p146 = scmp.eq.s32.totalorder %s145, 0
      %s148 = sadd.s32 %s147, 1
      %s149 = scalar_select %p146, %s147, %s148
      %p152 = pneg %p146
      %p153 = scmp.eq.s32.totalorder %s27, 1
      %p154 = por %p152, %p153
      %p155 = scmp.ne.s32.totalorder %s147, %s150
      %p156 = scmp.eq.s32.totalorder %s27, 0
      %p157 = por %p155, %p156
      %p158 = scmp.ne.s32.totalorder %s147, %s150
      %p159 = scmp.eq.s32.totalorder %s32, 1
      %p160 = por %p158, %p159
      %p161 = scmp.ne.s32.totalorder %s150, %s151
      %p162 = scmp.eq.s32.totalorder %s32, 0
      %p163 = por %p161, %p162
      %p164 = scmp.ne.s32.totalorder %s150, %s151
      %p165 = scmp.eq.s32.totalorder %s33, 1
      %p166 = por %p164, %p165
      %p168 = scmp.ne.s32.totalorder %s151, %s167
      %p169 = scmp.eq.s32.totalorder %s33, 0
      %p170 = por %p168, %p169
      %s171 = ssub.s32 %s27, %s34
      %p172 = scmp.eq.s32.totalorder %s171, 0
      %s174 = sadd.s32 %s173, 1
      %s175 = scalar_select %p172, %s173, %s174
      %p178 = pneg %p172
      %p179 = scmp.eq.s32.totalorder %s27, 1
      %p180 = por %p178, %p179
      %p181 = scmp.ne.s32.totalorder %s173, %s176
      %p182 = scmp.eq.s32.totalorder %s27, 0
      %p183 = por %p181, %p182
      %p184 = scmp.ne.s32.totalorder %s173, %s176
      %p185 = scmp.eq.s32.totalorder %s32, 1
      %p186 = por %p184, %p185
      %p187 = scmp.ne.s32.totalorder %s176, %s177
      %p188 = scmp.eq.s32.totalorder %s32, 0
      %p189 = por %p187, %p188
      %p190 = scmp.ne.s32.totalorder %s176, %s177
      %p191 = scmp.eq.s32.totalorder %s33, 1
      %p192 = por %p190, %p191
      %p194 = scmp.ne.s32.totalorder %s177, %s193
      %p195 = scmp.eq.s32.totalorder %s33, 0
      %p196 = por %p194, %p195
      %s198 = sadd.s32 %s197, 1
      %p201 = scmp.eq.s32.totalorder %s27, 1
      %p202 = scmp.ne.s32.totalorder %s197, %s199
      %p203 = scmp.eq.s32.totalorder %s27, 0
      %p204 = por %p202, %p203
      %p205 = scmp.ne.s32.totalorder %s197, %s199
      %p206 = scmp.eq.s32.totalorder %s32, 1
      %p207 = por %p205, %p206
      %p208 = scmp.ne.s32.totalorder %s199, %s200
      %p209 = scmp.eq.s32.totalorder %s32, 0
      %p210 = por %p208, %p209
      %p211 = scmp.ne.s32.totalorder %s199, %s200
      %p212 = scmp.eq.s32.totalorder %s33, 1
      %p213 = por %p211, %p212
      %p215 = scmp.ne.s32.totalorder %s200, %s214
      %p216 = scmp.eq.s32.totalorder %s33, 0
      %p217 = por %p215, %p216
      %s219 = sadd.s32 %s218, 1
      %p222 = scmp.eq.s32.totalorder %s27, 1
      %p223 = scmp.ne.s32.totalorder %s218, %s220
      %p224 = scmp.eq.s32.totalorder %s27, 0
      %p225 = por %p223, %p224
      %p226 = scmp.ne.s32.totalorder %s218, %s220
      %p227 = scmp.eq.s32.totalorder %s32, 1
      %p228 = por %p226, %p227
      %p229 = scmp.ne.s32.totalorder %s220, %s221
      %p230 = scmp.eq.s32.totalorder %s32, 0
      %p231 = por %p229, %p230
      %p232 = scmp.ne.s32.totalorder %s220, %s221
      %p233 = scmp.eq.s32.totalorder %s33, 1
      %p234 = por %p232, %p233
      %p236 = scmp.ne.s32.totalorder %s221, %s235
      %p237 = scmp.eq.s32.totalorder %s33, 0
      %p238 = por %p236, %p237
      %s240 = sadd.s32 %s239, 1
      %p243 = scmp.eq.s32.totalorder %s27, 1
      %p244 = scmp.ne.s32.totalorder %s239, %s241
      %p245 = scmp.eq.s32.totalorder %s27, 0
      %p246 = por %p244, %p245
      %p247 = scmp.ne.s32.totalorder %s239, %s241
      %p248 = scmp.eq.s32.totalorder %s32, 1
      %p249 = por %p247, %p248
      %p250 = scmp.ne.s32.totalorder %s241, %s242
      %p251 = scmp.eq.s32.totalorder %s32, 0
      %p252 = por %p250, %p251
      %p253 = scmp.ne.s32.totalorder %s241, %s242
      %p254 = scmp.eq.s32.totalorder %s33, 1
      %p255 = por %p253, %p254
      %p257 = scmp.ne.s32.totalorder %s242, %s256
      %p258 = scmp.eq.s32.totalorder %s33, 0
      %p259 = por %p257, %p258
      %s261 = sadd.s32 %s260, 1
      %p264 = scmp.eq.s32.totalorder %s27, 1
      %p265 = scmp.ne.s32.totalorder %s260, %s262
      %p266 = scmp.eq.s32.totalorder %s27, 0
      %p267 = por %p265, %p266
      %p268 = scmp.ne.s32.totalorder %s260, %s262
      %p269 = scmp.eq.s32.totalorder %s32, 1
      %p270 = por %p268, %p269
      %p271 = scmp.ne.s32.totalorder %s262, %s263
      %p272 = scmp.eq.s32.totalorder %s32, 0
      %p273 = por %p271, %p272
      %p274 = scmp.ne.s32.totalorder %s262, %s263
      %p275 = scmp.eq.s32.totalorder %s33, 1
      %p276 = por %p274, %p275
      %p278 = scmp.ne.s32.totalorder %s263, %s277
      %p279 = scmp.eq.s32.totalorder %s33, 0
      %p280 = por %p278, %p279
      %s282 = sadd.s32 %s281, 1
      %p285 = scmp.eq.s32.totalorder %s27, 1
      %p286 = scmp.ne.s32.totalorder %s281, %s283
      %p287 = scmp.eq.s32.totalorder %s27, 0
      %p288 = por %p286, %p287
      %p289 = scmp.ne.s32.totalorder %s281, %s283
      %p290 = scmp.eq.s32.totalorder %s32, 1
      %p291 = por %p289, %p290
      %p292 = scmp.ne.s32.totalorder %s283, %s284
      %p293 = scmp.eq.s32.totalorder %s32, 0
      %p294 = por %p292, %p293
      %p295 = scmp.ne.s32.totalorder %s283, %s284
      %p296 = scmp.eq.s32.totalorder %s33, 1
      %p297 = por %p295, %p296
      %p299 = scmp.ne.s32.totalorder %s284, %s298
      %p300 = scmp.eq.s32.totalorder %s33, 0
      %p301 = por %p299, %p300
      %s303 = sadd.s32 %s302, 1
      %p306 = scmp.eq.s32.totalorder %s27, 1
      %p307 = scmp.ne.s32.totalorder %s302, %s304
      %p308 = scmp.eq.s32.totalorder %s27, 0
      %p309 = por %p307, %p308
      %p310 = scmp.ne.s32.totalorder %s302, %s304
      %p311 = scmp.eq.s32.totalorder %s32, 1
      %p312 = por %p310, %p311
      %p313 = scmp.ne.s32.totalorder %s304, %s305
      %p314 = scmp.eq.s32.totalorder %s32, 0
      %p315 = por %p313, %p314
      %p316 = scmp.ne.s32.totalorder %s304, %s305
      %p317 = scmp.eq.s32.totalorder %s33, 1
      %p318 = por %p316, %p317
      %p320 = scmp.ne.s32.totalorder %s305, %s319
      %p321 = scmp.eq.s32.totalorder %s33, 0
      %p322 = por %p320, %p321
      %s324 = sadd.s32 %s323, 1
      %p327 = scmp.eq.s32.totalorder %s27, 1
      %p328 = scmp.ne.s32.totalorder %s323, %s325
      %p329 = scmp.eq.s32.totalorder %s27, 0
      %p330 = por %p328, %p329
      %p331 = scmp.ne.s32.totalorder %s323, %s325
      %p332 = scmp.eq.s32.totalorder %s32, 1
      %p333 = por %p331, %p332
      %p334 = scmp.ne.s32.totalorder %s325, %s326
      %p335 = scmp.eq.s32.totalorder %s32, 0
      %p336 = por %p334, %p335
      %p337 = scmp.ne.s32.totalorder %s325, %s326
      %p338 = scmp.eq.s32.totalorder %s33, 1
      %p339 = por %p337, %p338
      %p341 = scmp.ne.s32.totalorder %s326, %s340
      %p342 = scmp.eq.s32.totalorder %s33, 0
      %p343 = por %p341, %p342
      %s345 = sadd.s32 %s344, 1
      %p348 = scmp.eq.s32.totalorder %s27, 1
      %p349 = scmp.ne.s32.totalorder %s344, %s346
      %p350 = scmp.eq.s32.totalorder %s27, 0
      %p351 = por %p349, %p350
      %p352 = scmp.ne.s32.totalorder %s344, %s346
      %p353 = scmp.eq.s32.totalorder %s32, 1
      %p354 = por %p352, %p353
      %p355 = scmp.ne.s32.totalorder %s346, %s347
      %p356 = scmp.eq.s32.totalorder %s32, 0
      %p357 = por %p355, %p356
      %p358 = scmp.ne.s32.totalorder %s346, %s347
      %p359 = scmp.eq.s32.totalorder %s33, 1
      %p360 = por %p358, %p359
      %p362 = scmp.ne.s32.totalorder %s347, %s361
      %p363 = scmp.eq.s32.totalorder %s33, 0
      %p364 = por %p362, %p363
      %s366 = sadd.s32 %s365, 1
      %p369 = scmp.eq.s32.totalorder %s27, 1
      %p370 = scmp.ne.s32.totalorder %s365, %s367
      %p371 = scmp.eq.s32.totalorder %s27, 0
      %p372 = por %p370, %p371
      %p373 = scmp.ne.s32.totalorder %s365, %s367
      %p374 = scmp.eq.s32.totalorder %s32, 1
      %p375 = por %p373, %p374
      %p376 = scmp.ne.s32.totalorder %s367, %s368
      %p377 = scmp.eq.s32.totalorder %s32, 0
      %p378 = por %p376, %p377
      %p379 = scmp.ne.s32.totalorder %s367, %s368
      %p380 = scmp.eq.s32.totalorder %s33, 1
      %p381 = por %p379, %p380
      %p383 = scmp.ne.s32.totalorder %s368, %s382
      %p384 = scmp.eq.s32.totalorder %s33, 0
      %p385 = por %p383, %p384
      %s387 = sadd.s32 %s386, 1
      %p390 = scmp.eq.s32.totalorder %s27, 1
      %p391 = scmp.ne.s32.totalorder %s386, %s388
      %p392 = scmp.eq.s32.totalorder %s27, 0
      %p393 = por %p391, %p392
      %p394 = scmp.ne.s32.totalorder %s386, %s388
      %p395 = scmp.eq.s32.totalorder %s32, 1
      %p396 = por %p394, %p395
      %p397 = scmp.ne.s32.totalorder %s388, %s389
      %p398 = scmp.eq.s32.totalorder %s32, 0
      %p399 = por %p397, %p398
      %p400 = scmp.ne.s32.totalorder %s388, %s389
      %p401 = scmp.eq.s32.totalorder %s33, 1
      %p402 = por %p400, %p401
      %p404 = scmp.ne.s32.totalorder %s389, %s403
      %p405 = scmp.eq.s32.totalorder %s33, 0
      %p406 = por %p404, %p405
      %s408 = sadd.s32 %s407, 1
      %p411 = scmp.eq.s32.totalorder %s27, 1
      %p412 = scmp.ne.s32.totalorder %s407, %s409
      %p413 = scmp.eq.s32.totalorder %s27, 0
      %p414 = por %p412, %p413
      %p415 = scmp.ne.s32.totalorder %s407, %s409
      %p416 = scmp.eq.s32.totalorder %s32, 1
      %p417 = por %p415, %p416
      %p418 = scmp.ne.s32.totalorder %s409, %s410
      %p419 = scmp.eq.s32.totalorder %s32, 0
      %p420 = por %p418, %p419
      %p421 = scmp.ne.s32.totalorder %s409, %s410
      %p422 = scmp.eq.s32.totalorder %s33, 1
      %p423 = por %p421, %p422
      %p425 = scmp.ne.s32.totalorder %s410, %s424
      %p426 = scmp.eq.s32.totalorder %s33, 0
      %p427 = por %p425, %p426
      %s429 = sadd.s32 %s428, 1
      %p432 = scmp.eq.s32.totalorder %s27, 1
      %p433 = scmp.ne.s32.totalorder %s428, %s430
      %p434 = scmp.eq.s32.totalorder %s27, 0
      %p435 = por %p433, %p434
      %p436 = scmp.ne.s32.totalorder %s428, %s430
      %p437 = scmp.eq.s32.totalorder %s32, 1
      %p438 = por %p436, %p437
      %p439 = scmp.ne.s32.totalorder %s430, %s431
      %p440 = scmp.eq.s32.totalorder %s32, 0
      %p441 = por %p439, %p440
      %p442 = scmp.ne.s32.totalorder %s430, %s431
      %p443 = scmp.eq.s32.totalorder %s33, 1
      %p444 = por %p442, %p443
      %p446 = scmp.ne.s32.totalorder %s431, %s445
      %p447 = scmp.eq.s32.totalorder %s33, 0
      %p448 = por %p446, %p447
      %s450 = sadd.s32 %s449, 1
      %p453 = scmp.eq.s32.totalorder %s27, 1
      %p454 = scmp.ne.s32.totalorder %s449, %s451
      %p455 = scmp.eq.s32.totalorder %s27, 0
      %p456 = por %p454, %p455
      %p457 = scmp.ne.s32.totalorder %s449, %s451
      %p458 = scmp.eq.s32.totalorder %s32, 1
      %p459 = por %p457, %p458
      %p460 = scmp.ne.s32.totalorder %s451, %s452
      %p461 = scmp.eq.s32.totalorder %s32, 0
      %p462 = por %p460, %p461
      %p463 = scmp.ne.s32.totalorder %s451, %s452
      %p464 = scmp.eq.s32.totalorder %s33, 1
      %p465 = por %p463, %p464
      %p467 = scmp.ne.s32.totalorder %s452, %s466
      %p468 = scmp.eq.s32.totalorder %s33, 0
      %p469 = por %p467, %p468
      %p470 = scmp.le.s32.totalorder 1, %s27
      %p471 = scmp.lt.s32.totalorder %s27, 3
      %p472 = pnand %p470, %p471
      %p473 = pneg %p472
      // Predicated region
      $region9: #{muzero_atari_forward.1} parent=5 // pred_check
        _
      $region10: #{muzero_atari_forward.1} parent=5 // pred_check_branch
        %475 = sbr.rel (%p472) target = $region12
      $region11: #{muzero_atari_forward.1} parent=5 // pred_region
        %s476 = ssub.s32 %s27, 1
        // Predicated region
        $region13: #{muzero_atari_forward.1} parent=11 // pred_check
          %p477 = pneg %p48
        $region14: #{muzero_atari_forward.1} parent=11 // pred_check_branch
          %479 = sbr.rel (%p477) target = $region16
        $region15: #{muzero_atari_forward.1} parent=11 // pred_region
          _
        $region16: #{muzero_atari_forward.1} parent=11 // pred_fallthru
          _
        // Predicated region
        $region17: #{muzero_atari_forward.1} parent=11 // pred_check
          %p480 = pneg %p69
        $region18: #{muzero_atari_forward.1} parent=11 // pred_check_branch
          %482 = sbr.rel (%p480) target = $region20
        $region19: #{muzero_atari_forward.1} parent=11 // pred_region
          _
        $region20: #{muzero_atari_forward.1} parent=11 // pred_fallthru
          _
        // Predicated region
        $region21: #{muzero_atari_forward.1} parent=11 // pred_check
          %p483 = pneg %p90
        $region22: #{muzero_atari_forward.1} parent=11 // pred_check_branch
          %485 = sbr.rel (%p483) target = $region24
        $region23: #{muzero_atari_forward.1} parent=11 // pred_region
          _
        $region24: #{muzero_atari_forward.1} parent=11 // pred_fallthru
          _
        // Predicated region
        $region25: #{muzero_atari_forward.1} parent=11 // pred_check
          %p486 = pneg %p111
        $region26: #{muzero_atari_forward.1} parent=11 // pred_check_branch
          %488 = sbr.rel (%p486) target = $region28
        $region27: #{muzero_atari_forward.1} parent=11 // pred_region
          _
        $region28: #{muzero_atari_forward.1} parent=11 // pred_fallthru
          _
        // Predicated region
        $region29: #{muzero_atari_forward.1} parent=11 // pred_check
          %p489 = pneg %p210
        $region30: #{muzero_atari_forward.1} parent=11 // pred_check_branch
          %491 = sbr.rel (%p489) target = $region32
        $region31: #{muzero_atari_forward.1} parent=11 // pred_region
          _
        $region32: #{muzero_atari_forward.1} parent=11 // pred_fallthru
          _
        // Predicated region
        $region33: #{muzero_atari_forward.1} parent=11 // pred_check
          %p492 = pneg %p231
        $region34: #{muzero_atari_forward.1} parent=11 // pred_check_branch
          %494 = sbr.rel (%p492) target = $region36
        $region35: #{muzero_atari_forward.1} parent=11 // pred_region
          _
        $region36: #{muzero_atari_forward.1} parent=11 // pred_fallthru
          _
        // Predicated region
        $region37: #{muzero_atari_forward.1} parent=11 // pred_check
          %p495 = pneg %p252
        $region38: #{muzero_atari_forward.1} parent=11 // pred_check_branch
          %497 = sbr.rel (%p495) target = $region40
        $region39: #{muzero_atari_forward.1} parent=11 // pred_region
          _
        $region40: #{muzero_atari_forward.1} parent=11 // pred_fallthru
          _
        // Predicated region
        $region41: #{muzero_atari_forward.1} parent=11 // pred_check
          %p498 = pneg %p273
        $region42: #{muzero_atari_forward.1} parent=11 // pred_check_branch
          %500 = sbr.rel (%p498) target = $region44
        $region43: #{muzero_atari_forward.1} parent=11 // pred_region
          _
        $region44: #{muzero_atari_forward.1} parent=11 // pred_fallthru
          _
        // Predicated region
        $region45: #{muzero_atari_forward.1} parent=11 // pred_check
          %p501 = pneg %p294
        $region46: #{muzero_atari_forward.1} parent=11 // pred_check_branch
          %503 = sbr.rel (%p501) target = $region48
        $region47: #{muzero_atari_forward.1} parent=11 // pred_region
          _
        $region48: #{muzero_atari_forward.1} parent=11 // pred_fallthru
          _
        // Predicated region
        $region49: #{muzero_atari_forward.1} parent=11 // pred_check
          %p504 = pneg %p315
        $region50: #{muzero_atari_forward.1} parent=11 // pred_check_branch
          %506 = sbr.rel (%p504) target = $region52
        $region51: #{muzero_atari_forward.1} parent=11 // pred_region
          _
        $region52: #{muzero_atari_forward.1} parent=11 // pred_fallthru
          _
        // Predicated region
        $region53: #{muzero_atari_forward.1} parent=11 // pred_check
          %p507 = pneg %p336
        $region54: #{muzero_atari_forward.1} parent=11 // pred_check_branch
          %509 = sbr.rel (%p507) target = $region56
        $region55: #{muzero_atari_forward.1} parent=11 // pred_region
          _
        $region56: #{muzero_atari_forward.1} parent=11 // pred_fallthru
          _
        // Predicated region
        $region57: #{muzero_atari_forward.1} parent=11 // pred_check
          %p510 = pneg %p357
        $region58: #{muzero_atari_forward.1} parent=11 // pred_check_branch
          %512 = sbr.rel (%p510) target = $region60
        $region59: #{muzero_atari_forward.1} parent=11 // pred_region
          _
        $region60: #{muzero_atari_forward.1} parent=11 // pred_fallthru
          _
        // Predicated region
        $region61: #{muzero_atari_forward.1} parent=11 // pred_check
          %p513 = pneg %p378
        $region62: #{muzero_atari_forward.1} parent=11 // pred_check_branch
          %515 = sbr.rel (%p513) target = $region64
        $region63: #{muzero_atari_forward.1} parent=11 // pred_region
          _
        $region64: #{muzero_atari_forward.1} parent=11 // pred_fallthru
          _
        // Predicated region
        $region65: #{muzero_atari_forward.1} parent=11 // pred_check
          %p516 = pneg %p399
        $region66: #{muzero_atari_forward.1} parent=11 // pred_check_branch
          %518 = sbr.rel (%p516) target = $region68
        $region67: #{muzero_atari_forward.1} parent=11 // pred_region
          _
        $region68: #{muzero_atari_forward.1} parent=11 // pred_fallthru
          _
        // Predicated region
        $region69: #{muzero_atari_forward.1} parent=11 // pred_check
          %p519 = pneg %p420
        $region70: #{muzero_atari_forward.1} parent=11 // pred_check_branch
          %521 = sbr.rel (%p519) target = $region72
        $region71: #{muzero_atari_forward.1} parent=11 // pred_region
          _
        $region72: #{muzero_atari_forward.1} parent=11 // pred_fallthru
          _
      $region12: #{muzero_atari_forward.1} parent=5 // pred_fallthru
        _
      %p522 = scmp.lt.s32.totalorder %s27, 2
      // Predicated region
      $region73: #{muzero_atari_forward.1} parent=5 // pred_check
        %p523 = pneg %p522
      $region74: #{muzero_atari_forward.1} parent=5 // pred_check_branch
        %525 = sbr.rel (%p523) target = $region76
      $region75: #{muzero_atari_forward.1} parent=5 // pred_region
        // Predicated region
        $region77: #{muzero_atari_forward.1} parent=75 // pred_check
          %p526 = pneg %p131
        $region78: #{muzero_atari_forward.1} parent=75 // pred_check_branch
          %528 = sbr.rel (%p526) target = $region80
        $region79: #{muzero_atari_forward.1} parent=75 // pred_region
          %p529 = scmp.lt.s32.totalorder %s27, 1
          %s530 = scalar_select %p529, %s27, 1
          %s531 = smul.addr %s530, 36
          %s532 = smul.addr %s531, 4
          %s533 = scalar_lea.vmem %s4, %s532
        $region80: #{muzero_atari_forward.1} parent=75 // pred_fallthru
          _
        // Predicated region
        $region81: #{muzero_atari_forward.1} parent=75 // pred_check
          %p534 = pneg %p157
        $region82: #{muzero_atari_forward.1} parent=75 // pred_check_branch
          %536 = sbr.rel (%p534) target = $region84
        $region83: #{muzero_atari_forward.1} parent=75 // pred_region
          %p537 = scmp.lt.s32.totalorder %s27, 1
          %s538 = scalar_select %p537, %s27, 1
          %s539 = smul.addr %s538, 36
          %s540 = smul.addr %s539, 4
          %s541 = scalar_lea.vmem %s5, %s540
        $region84: #{muzero_atari_forward.1} parent=75 // pred_fallthru
          _
        // Predicated region
        $region85: #{muzero_atari_forward.1} parent=75 // pred_check
          %p542 = pneg %p183
        $region86: #{muzero_atari_forward.1} parent=75 // pred_check_branch
          %544 = sbr.rel (%p542) target = $region88
        $region87: #{muzero_atari_forward.1} parent=75 // pred_region
          %p545 = scmp.lt.s32.totalorder %s27, 1
          %s546 = scalar_select %p545, %s27, 1
          %s547 = smul.addr %s546, 8
          %s548 = scalar_lea.vmem %s6, %s547
        $region88: #{muzero_atari_forward.1} parent=75 // pred_fallthru
          _
      $region76: #{muzero_atari_forward.1} parent=5 // pred_fallthru
        _
      %p549 = scmp.le.s32.totalorder 1, %s27
      %p550 = scmp.lt.s32.totalorder %s27, 3
      %p551 = pnand %p549, %p550
      %p552 = pneg %p551
      // Predicated region
      $region89: #{muzero_atari_forward.1} parent=5 // pred_check
        _
      $region90: #{muzero_atari_forward.1} parent=5 // pred_check_branch
        %554 = sbr.rel (%p551) target = $region92
      $region91: #{muzero_atari_forward.1} parent=5 // pred_region
        %s555 = ssub.s32 %s27, 1
        %p556 = pneg %p48
        %p557 = pneg %p45
        %p558 = pneg %p69
        %p559 = pneg %p66
        %p560 = pneg %p90
        %p561 = pneg %p87
        %p562 = pneg %p111
        %p563 = pneg %p108
        %p564 = scmp.lt.s32.totalorder %s32, 1
        %s565 = scalar_select %p564, %s32, 1
        %s566 = smul.addr %s565, 36
        %s567 = smul.addr %s566, 4
        %s568 = scalar_lea.vmem %s4, %s567
        %p569 = pneg %p137
        %p570 = pneg %p134
        %p571 = scmp.lt.s32.totalorder %s32, 1
        %s572 = scalar_select %p571, %s32, 1
        %s573 = smul.addr %s572, 36
        %s574 = smul.addr %s573, 4
        %s575 = scalar_lea.vmem %s5, %s574
        %p576 = pneg %p163
        %p577 = pneg %p160
        %p578 = scmp.lt.s32.totalorder %s32, 1
        %s579 = scalar_select %p578, %s32, 1
        %s580 = smul.addr %s579, 8
        %s581 = scalar_lea.vmem %s6, %s580
        %p582 = pneg %p189
        %p583 = pneg %p186
        %p584 = pneg %p210
        %p585 = pneg %p207
        %p586 = pneg %p231
        %p587 = pneg %p228
        %p588 = pneg %p252
        %p589 = pneg %p249
        %p590 = pneg %p273
        %p591 = pneg %p270
        %p592 = pneg %p294
        %p593 = pneg %p291
        %p594 = pneg %p315
        %p595 = pneg %p312
        %p596 = pneg %p336
        %p597 = pneg %p333
        %p598 = pneg %p357
        %p599 = pneg %p354
        %p600 = pneg %p378
        %p601 = pneg %p375
        %p602 = pneg %p399
        %p603 = pneg %p396
        %p604 = pneg %p420
        %p605 = pneg %p417
        %p606 = pneg %p441
        %p607 = pneg %p438
        %p608 = pneg %p462
        %p609 = pneg %p459
        %p610 = scmp.lt.s32.totalorder %s32, 1
        %s611 = scalar_select %p610, %s32, 1
        %s612 = smul.addr %s611, 36
        %s613 = smul.addr %s612, 4
        %s614 = scalar_lea.vmem %s4, %s613
        %p615 = scmp.lt.s32.totalorder %s32, 1
        %s616 = scalar_select %p615, %s32, 1
        %s617 = smul.addr %s616, 36
        %s618 = smul.addr %s617, 4
        %s619 = scalar_lea.vmem %s5, %s618
        %p620 = scmp.lt.s32.totalorder %s32, 1
        %s621 = scalar_select %p620, %s32, 1
        %s622 = smul.addr %s621, 8
        %s623 = scalar_lea.vmem %s6, %s622
        %p625 = scmp.eq.s32.totalorder %s32, 0
        // Predicated region
        $region93: #{muzero_atari_forward.1} parent=91 // pred_check
          %p626 = pneg %p625
        $region94: #{muzero_atari_forward.1} parent=91 // pred_check_branch
          %628 = sbr.rel (%p626) target = $region96
        $region95: #{muzero_atari_forward.1} parent=91 // pred_region
          %vm629 = vcmask 261120
          %630 = vst.msk [vmem:[#allocation2] sm:$0xff] %vm629, 0.0
          %631 = vst.msk [vmem:[#allocation2 + $0x8] sm:$0xff] %vm629, 0.0
          %632 = vst.msk [vmem:[#allocation2 + $0x10] sm:$0xff] %vm629, 0.0
          %633 = vst.msk [vmem:[#allocation2 + $0x18] sm:$0xff] %vm629, 0.0
          %634 = vst.msk [vmem:[#allocation2 + $0x20] sm:$0xff] %vm629, 0.0
          %635 = vst.msk [vmem:[#allocation2 + $0x28] sm:$0xff] %vm629, 0.0
          %636 = vst.msk [vmem:[#allocation2 + $0x30] sm:$0xff] %vm629, 0.0
          %637 = vst.msk [vmem:[#allocation2 + $0x38] sm:$0xff] %vm629, 0.0
          %638 = vst.msk [vmem:[#allocation2 + $0x40] sm:$0xff] %vm629, 0.0
          %639 = vst.msk [vmem:[#allocation2 + $0x48] sm:$0xff] %vm629, 0.0
          %640 = vst.msk [vmem:[#allocation2 + $0x50] sm:$0xff] %vm629, 0.0
          %641 = vst.msk [vmem:[#allocation2 + $0x58] sm:$0xff] %vm629, 0.0
          %642 = vst.msk [vmem:[#allocation2 + $0x60] sm:$0xff] %vm629, 0.0
          %643 = vst.msk [vmem:[#allocation2 + $0x68] sm:$0xff] %vm629, 0.0
          %644 = vst.msk [vmem:[#allocation2 + $0x70] sm:$0xff] %vm629, 0.0
          %645 = vst.msk [vmem:[#allocation2 + $0x78] sm:$0xff] %vm629, 0.0
          %646 = vst.msk [vmem:[#allocation2 + $0x80] sm:$0xff] %vm629, 0.0
          %647 = vst.msk [vmem:[#allocation2 + $0x88] sm:$0xff] %vm629, 0.0
          %648 = vst.msk [vmem:[#allocation2 + $0x90] sm:$0xff] %vm629, 0.0
          %649 = vst.msk [vmem:[#allocation2 + $0x98] sm:$0xff] %vm629, 0.0
          %650 = vst.msk [vmem:[#allocation3] sm:$0xff] %vm629, 0.0
          %651 = vst.msk [vmem:[#allocation3 + $0x8] sm:$0xff] %vm629, 0.0
          %652 = vst.msk [vmem:[#allocation3 + $0x10] sm:$0xff] %vm629, 0.0
          %653 = vst.msk [vmem:[#allocation3 + $0x18] sm:$0xff] %vm629, 0.0
          %654 = vst.msk [vmem:[#allocation3 + $0x20] sm:$0xff] %vm629, 0.0
          %655 = vst.msk [vmem:[#allocation3 + $0x28] sm:$0xff] %vm629, 0.0
          %656 = vst.msk [vmem:[#allocation3 + $0x30] sm:$0xff] %vm629, 0.0
          %657 = vst.msk [vmem:[#allocation3 + $0x38] sm:$0xff] %vm629, 0.0
          %658 = vst.msk [vmem:[#allocation3 + $0x40] sm:$0xff] %vm629, 0.0
          %659 = vst.msk [vmem:[#allocation3 + $0x48] sm:$0xff] %vm629, 0.0
          %660 = vst.msk [vmem:[#allocation3 + $0x50] sm:$0xff] %vm629, 0.0
          %661 = vst.msk [vmem:[#allocation3 + $0x58] sm:$0xff] %vm629, 0.0
          %662 = vst.msk [vmem:[#allocation3 + $0x60] sm:$0xff] %vm629, 0.0
          %663 = vst.msk [vmem:[#allocation3 + $0x68] sm:$0xff] %vm629, 0.0
          %664 = vst.msk [vmem:[#allocation3 + $0x70] sm:$0xff] %vm629, 0.0
          %665 = vst.msk [vmem:[#allocation3 + $0x78] sm:$0xff] %vm629, 0.0
          %666 = vst.msk [vmem:[#allocation3 + $0x80] sm:$0xff] %vm629, 0.0
          %667 = vst.msk [vmem:[#allocation3 + $0x88] sm:$0xff] %vm629, 0.0
          %668 = vst.msk [vmem:[#allocation3 + $0x90] sm:$0xff] %vm629, 0.0
          %669 = vst.msk [vmem:[#allocation3 + $0x98] sm:$0xff] %vm629, 0.0
          %v670 = vld [vmem:[%s0 + $0x7] sm:$0xff]
          %v671 = vld [vmem:[%s0 + $0xf] sm:$0xff]
          %v672 = vld [vmem:[%s0 + $0x17] sm:$0xff]
          %v673 = vld [vmem:[%s0 + $0x1f] sm:$0xff]
          %v674 = vld [vmem:[%s0 + $0x27] sm:$0xff]
          %v675 = vld [vmem:[%s0 + $0x2f] sm:$0xff]
          %v676 = vld [vmem:[%s0 + $0x37] sm:$0xff]
          %v677 = vld [vmem:[%s0 + $0x3f] sm:$0xff]
          %v678 = vld [vmem:[%s0 + $0x47] sm:$0xff]
          %v679 = vld [vmem:[%s0 + $0x4f] sm:$0xff]
          %v680 = vld [vmem:[%s0 + $0x57] sm:$0xff]
          %v681 = vld [vmem:[%s0 + $0x5f] sm:$0xff]
          %v682 = vld [vmem:[%s0 + $0x67] sm:$0xff]
          %v683 = vld [vmem:[%s0 + $0x6f] sm:$0xff]
          %v684 = vld [vmem:[%s0 + $0x77] sm:$0xff]
          %v685 = vld [vmem:[%s0 + $0x7f] sm:$0xff]
          %v686 = vld [vmem:[%s1] sm:$0xff]
          %v687 = vld [vmem:[%s1 + $0x8] sm:$0xff]
          %v688 = vld [vmem:[%s1 + $0x10] sm:$0xff]
          %v689 = vld [vmem:[%s1 + $0x18] sm:$0xff]
          %v690 = vld [vmem:[%s1 + $0x20] sm:$0xff]
          %v691 = vld [vmem:[%s1 + $0x28] sm:$0xff]
          %v692 = vld [vmem:[%s1 + $0x30] sm:$0xff]
          %v693 = vld [vmem:[%s1 + $0x38] sm:$0xff]
          %v694 = vld [vmem:[%s1 + $0x40] sm:$0xff]
          %v695 = vld [vmem:[%s1 + $0x48] sm:$0xff]
          %v696 = vld [vmem:[%s1 + $0x50] sm:$0xff]
          %v697 = vld [vmem:[%s1 + $0x58] sm:$0xff]
          %v698 = vld [vmem:[%s1 + $0x60] sm:$0xff]
          %v699 = vld [vmem:[%s1 + $0x68] sm:$0xff]
          %v700 = vld [vmem:[%s1 + $0x70] sm:$0xff]
          %v701 = vld [vmem:[%s1 + $0x78] sm:$0xff]
          %703 = vset.pattern.permute.xlu0 0
          %704 = vperm.xlu0 %703, %v686
          %v705 = vpop.permute.xlu0 %704
          %708 = vset.pattern.permute.xlu0 0
          %709 = vperm.xlu0 %708, %v687
          %v710 = vpop.permute.xlu0 %709
          %713 = vset.pattern.permute.xlu0 0
          %714 = vperm.xlu0 %713, %v688
          %v715 = vpop.permute.xlu0 %714
          %718 = vset.pattern.permute.xlu0 0
          %719 = vperm.xlu0 %718, %v689
          %v720 = vpop.permute.xlu0 %719
          %723 = vset.pattern.permute.xlu0 0
          %724 = vperm.xlu0 %723, %v690
          %v725 = vpop.permute.xlu0 %724
          %728 = vset.pattern.permute.xlu0 0
          %729 = vperm.xlu0 %728, %v691
          %v730 = vpop.permute.xlu0 %729
          %733 = vset.pattern.permute.xlu0 0
          %734 = vperm.xlu0 %733, %v692
          %v735 = vpop.permute.xlu0 %734
          %738 = vset.pattern.permute.xlu0 0
          %739 = vperm.xlu0 %738, %v693
          %v740 = vpop.permute.xlu0 %739
          %743 = vset.pattern.permute.xlu0 0
          %744 = vperm.xlu0 %743, %v694
          %v745 = vpop.permute.xlu0 %744
          %748 = vset.pattern.permute.xlu0 0
          %749 = vperm.xlu0 %748, %v695
          %v750 = vpop.permute.xlu0 %749
          %753 = vset.pattern.permute.xlu0 0
          %754 = vperm.xlu0 %753, %v696
          %v755 = vpop.permute.xlu0 %754
          %758 = vset.pattern.permute.xlu0 0
          %759 = vperm.xlu0 %758, %v697
          %v760 = vpop.permute.xlu0 %759
          %763 = vset.pattern.permute.xlu0 0
          %764 = vperm.xlu0 %763, %v698
          %v765 = vpop.permute.xlu0 %764
          %768 = vset.pattern.permute.xlu0 0
          %769 = vperm.xlu0 %768, %v699
          %v770 = vpop.permute.xlu0 %769
          %773 = vset.pattern.permute.xlu0 0
          %774 = vperm.xlu0 %773, %v700
          %v775 = vpop.permute.xlu0 %774
          %778 = vset.pattern.permute.xlu0 0
          %779 = vperm.xlu0 %778, %v701
          %v780 = vpop.permute.xlu0 %779
          %v782 = vmul.f32 %v670, %v705
          %v783 = vmul.f32 %v671, %v710
          %v784 = vmul.f32 %v672, %v715
          %v785 = vmul.f32 %v673, %v720
          %v786 = vmul.f32 %v674, %v725
          %v787 = vmul.f32 %v675, %v730
          %v788 = vmul.f32 %v676, %v735
          %v789 = vmul.f32 %v677, %v740
          %v790 = vmul.f32 %v678, %v745
          %v791 = vmul.f32 %v679, %v750
          %v792 = vmul.f32 %v680, %v755
          %v793 = vmul.f32 %v681, %v760
          %v794 = vmul.f32 %v682, %v765
          %v795 = vmul.f32 %v683, %v770
          %v796 = vmul.f32 %v684, %v775
          %v797 = vmul.f32 %v685, %v780
          %v798 = vpack.c.bf16 %v783, %v782
          %v799 = vpack.c.bf16 %v785, %v784
          %v800 = vpack.c.bf16 %v787, %v786
          %v801 = vpack.c.bf16 %v789, %v788
          %v802 = vpack.c.bf16 %v791, %v790
          %v803 = vpack.c.bf16 %v793, %v792
          %v804 = vpack.c.bf16 %v795, %v794
          %v805 = vpack.c.bf16 %v797, %v796
          %v806 = vld [vmem:[%s2] sm:$0xf]
          %v807 = vld [vmem:[%s2 + $0x4] sm:$0xf]
          %v808 = vld [vmem:[%s2 + $0x8] sm:$0xf]
          %v809 = vld [vmem:[%s2 + $0xc] sm:$0xf]
          %v810 = vld [vmem:[%s0 + $0x8] sm:$0xff]
          %v811 = vld [vmem:[%s0 + $0x10] sm:$0xff]
          %v812 = vld [vmem:[%s0 + $0x18] sm:$0xff]
          %v813 = vld [vmem:[%s0 + $0x20] sm:$0xff]
          %v814 = vld [vmem:[%s0 + $0x28] sm:$0xff]
          %v815 = vld [vmem:[%s0 + $0x30] sm:$0xff]
          %v816 = vld [vmem:[%s0 + $0x38] sm:$0xff]
          %v817 = vld [vmem:[%s0 + $0x40] sm:$0xff]
          %v818 = vld [vmem:[%s0 + $0x48] sm:$0xff]
          %v819 = vld [vmem:[%s0 + $0x50] sm:$0xff]
          %v820 = vld [vmem:[%s0 + $0x58] sm:$0xff]
          %v821 = vld [vmem:[%s0 + $0x60] sm:$0xff]
          %v822 = vld [vmem:[%s0 + $0x68] sm:$0xff]
          %v823 = vld [vmem:[%s0 + $0x70] sm:$0xff]
          %v824 = vld [vmem:[%s0 + $0x78] sm:$0xff]
          %v825 = vld [vmem:[%s0 + $0x80] sm:$0xff]
          %s826 = scalar_lea.vmem %s1, 128
          %v827 = vld [vmem:[%s826] sm:$0xff]
          %v828 = vld [vmem:[%s826 + $0x8] sm:$0xff]
          %v829 = vld [vmem:[%s826 + $0x10] sm:$0xff]
          %v830 = vld [vmem:[%s826 + $0x18] sm:$0xff]
          %v831 = vld [vmem:[%s826 + $0x20] sm:$0xff]
          %v832 = vld [vmem:[%s826 + $0x28] sm:$0xff]
          %v833 = vld [vmem:[%s826 + $0x30] sm:$0xff]
          %v834 = vld [vmem:[%s826 + $0x38] sm:$0xff]
          %v835 = vld [vmem:[%s826 + $0x40] sm:$0xff]
          %v836 = vld [vmem:[%s826 + $0x48] sm:$0xff]
          %v837 = vld [vmem:[%s826 + $0x50] sm:$0xff]
          %v838 = vld [vmem:[%s826 + $0x58] sm:$0xff]
          %v839 = vld [vmem:[%s826 + $0x60] sm:$0xff]
          %v840 = vld [vmem:[%s826 + $0x68] sm:$0xff]
          %v841 = vld [vmem:[%s826 + $0x70] sm:$0xff]
          %v842 = vld [vmem:[%s826 + $0x78] sm:$0xff]
          %844 = vset.pattern.permute.xlu0 0
          %845 = vperm.xlu0 %844, %v827
          %v846 = vpop.permute.xlu0 %845
          %849 = vset.pattern.permute.xlu0 0
          %850 = vperm.xlu0 %849, %v828
          %v851 = vpop.permute.xlu0 %850
          %854 = vset.pattern.permute.xlu0 0
          %855 = vperm.xlu0 %854, %v829
          %v856 = vpop.permute.xlu0 %855
          %859 = vset.pattern.permute.xlu0 0
          %860 = vperm.xlu0 %859, %v830
          %v861 = vpop.permute.xlu0 %860
          %864 = vset.pattern.permute.xlu0 0
          %865 = vperm.xlu0 %864, %v831
          %v866 = vpop.permute.xlu0 %865
          %869 = vset.pattern.permute.xlu0 0
          %870 = vperm.xlu0 %869, %v832
          %v871 = vpop.permute.xlu0 %870
          %874 = vset.pattern.permute.xlu0 0
          %875 = vperm.xlu0 %874, %v833
          %v876 = vpop.permute.xlu0 %875
          %879 = vset.pattern.permute.xlu0 0
          %880 = vperm.xlu0 %879, %v834
          %v881 = vpop.permute.xlu0 %880
          %884 = vset.pattern.permute.xlu0 0
          %885 = vperm.xlu0 %884, %v835
          %v886 = vpop.permute.xlu0 %885
          %889 = vset.pattern.permute.xlu0 0
          %890 = vperm.xlu0 %889, %v836
          %v891 = vpop.permute.xlu0 %890
          %894 = vset.pattern.permute.xlu0 0
          %895 = vperm.xlu0 %894, %v837
          %v896 = vpop.permute.xlu0 %895
          %899 = vset.pattern.permute.xlu0 0
          %900 = vperm.xlu0 %899, %v838
          %v901 = vpop.permute.xlu0 %900
          %904 = vset.pattern.permute.xlu0 0
          %905 = vperm.xlu0 %904, %v839
          %v906 = vpop.permute.xlu0 %905
          %909 = vset.pattern.permute.xlu0 0
          %910 = vperm.xlu0 %909, %v840
          %v911 = vpop.permute.xlu0 %910
          %914 = vset.pattern.permute.xlu0 0
          %915 = vperm.xlu0 %914, %v841
          %v916 = vpop.permute.xlu0 %915
          %919 = vset.pattern.permute.xlu0 0
          %920 = vperm.xlu0 %919, %v842
          %v921 = vpop.permute.xlu0 %920
          %v923 = vmul.f32 %v810, %v846
          %v924 = vmul.f32 %v811, %v851
          %v925 = vmul.f32 %v812, %v856
          %v926 = vmul.f32 %v813, %v861
          %v927 = vmul.f32 %v814, %v866
          %v928 = vmul.f32 %v815, %v871
          %v929 = vmul.f32 %v816, %v876
          %v930 = vmul.f32 %v817, %v881
          %v931 = vmul.f32 %v818, %v886
          %v932 = vmul.f32 %v819, %v891
          %v933 = vmul.f32 %v820, %v896
          %v934 = vmul.f32 %v821, %v901
          %v935 = vmul.f32 %v822, %v906
          %v936 = vmul.f32 %v823, %v911
          %v937 = vmul.f32 %v824, %v916
          %v938 = vmul.f32 %v825, %v921
          %v939 = vpack.c.bf16 %v924, %v923
          %v940 = vpack.c.bf16 %v926, %v925
          %v941 = vpack.c.bf16 %v928, %v927
          %v942 = vpack.c.bf16 %v930, %v929
          %v943 = vpack.c.bf16 %v932, %v931
          %v944 = vpack.c.bf16 %v934, %v933
          %v945 = vpack.c.bf16 %v936, %v935
          %v946 = vpack.c.bf16 %v938, %v937
          %s947 = scalar_lea.vmem %s2, 16
          %v948 = vld [vmem:[%s947] sm:$0xf]
          %v949 = vld [vmem:[%s947 + $0x4] sm:$0xf]
          %v950 = vld [vmem:[%s947 + $0x8] sm:$0xf]
          %v951 = vld [vmem:[%s947 + $0xc] sm:$0xf]
          %v956 = vunpack.c.l.b16 %v948
          %v957 = vunpack.c.l.b16 %v949
          %v958 = vunpack.c.l.b16 %v950
          %v959 = vunpack.c.l.b16 %v951
          %v960 = vpack.c.b16 %v957, %v956
          %v961 = vpack.c.b16 %v959, %v958
          %v965 = vsel %vm629, %v939, 0
          %v968 = vsel %vm629, %v940, 0
          %v971 = vsel %vm629, %v941, 0
          %v974 = vsel %vm629, %v942, 0
          %v977 = vsel %vm629, %v943, 0
          %v980 = vsel %vm629, %v944, 0
          %v983 = vsel %vm629, %v945, 0
          %v986 = vsel %vm629, %v946, 0
          %988 = vmatprep.subr.bf16.mxu0 0
          %989 = vmatpush1.bf16.msra.mxu0 %v960
          %990 = vmatprep.subr.bf16.mxu0 0
          %991 = vmatpush1.bf16.msra.mxu0 %v961
          %992 = vmatprep.subr.bf16.mxu0 0
          %993 = vmatpush1.bf16.msra.mxu0 0
          %994 = vmatprep.subr.bf16.mxu0 0
          %995 = vmatpush1.bf16.msra.mxu0 0
          %996 = vmatprep.subr.bf16.mxu0 0
          %997 = vmatpush1.bf16.msra.mxu0 0
          %998 = vmatprep.subr.bf16.mxu0 0
          %999 = vmatpush1.bf16.msra.mxu0 0
          %1000 = vmatprep.subr.bf16.mxu0 0
          %1001 = vmatpush1.bf16.msra.mxu0 0
          %1002 = vmatprep.subr.bf16.mxu0 0
          %1003 = vmatpush1.bf16.msra.mxu0 0
          %1004 = vmatprep.subr.bf16.mxu0 0
          %1005 = vmatpush1.bf16.msra.mxu0 0
          %1006 = vmatprep.subr.bf16.mxu0 0
          %1007 = vmatpush1.bf16.msra.mxu0 0
          %1008 = vmatprep.subr.bf16.mxu0 0
          %1009 = vmatpush1.bf16.msra.mxu0 0
          %1010 = vmatprep.subr.bf16.mxu0 0
          %1011 = vmatpush1.bf16.msra.mxu0 0
          %1012 = vmatprep.subr.bf16.mxu0 0
          %1013 = vmatpush1.bf16.msra.mxu0 0
          %1014 = vmatprep.subr.bf16.mxu0 0
          %1015 = vmatpush1.bf16.msra.mxu0 0
          %1016 = vmatprep.subr.bf16.mxu0 0
          %1017 = vmatpush1.bf16.msra.mxu0 0
          %1018 = vmatprep.subr.bf16.mxu0 0
          %1019 = vmatpush1.bf16.msra.mxu0 0
          %1020 = vmatprep.mubr.bf16.mxu0 0
          %1021 = vmatmul.mubr.bf16.gmra.mrb[0].mxu0 %v965
          %v1022 = vpop.f32.mrb[0].mxu0
          %v1023 = vadd.f32 0.0, %v1022
          %v1024 = vpop.f32.mrb[0].mxu0
          %v1025 = vpop.f32.mrb[0].mxu0
          %v1026 = vadd.f32 0.0, %v1025
          %v1027 = vpop.f32.mrb[0].mxu0
          %1028 = vmatprep.mubr.bf16.mxu0 0
          %1029 = vmatmul.mubr.bf16.gmra.mrb[0].mxu0 %v968
          %v1030 = vpop.f32.mrb[0].mxu0
          %v1031 = vadd.f32 0.0, %v1030
          %v1032 = vpop.f32.mrb[0].mxu0
          %v1033 = vpop.f32.mrb[0].mxu0
          %v1034 = vadd.f32 0.0, %v1033
          %v1035 = vpop.f32.mrb[0].mxu0
          %1036 = vmatprep.mubr.bf16.mxu0 0
          %1037 = vmatmul.mubr.bf16.gmra.mrb[0].mxu0 %v971
          %v1038 = vpop.f32.mrb[0].mxu0
          %v1039 = vadd.f32 0.0, %v1038
          %v1040 = vpop.f32.mrb[0].mxu0
          %v1041 = vpop.f32.mrb[0].mxu0
          %v1042 = vadd.f32 0.0, %v1041
          %v1043 = vpop.f32.mrb[0].mxu0
          %1044 = vmatprep.mubr.bf16.mxu0 0
          %1045 = vmatmul.mubr.bf16.gmra.mrb[0].mxu0 %v974
          %v1046 = vpop.f32.mrb[0].mxu0
          %v1047 = vadd.f32 0.0, %v1046
          %v1048 = vpop.f32.mrb[0].mxu0
          %v1049 = vpop.f32.mrb[0].mxu0
          %v1050 = vadd.f32 0.0, %v1049
          %v1051 = vpop.f32.mrb[0].mxu0
          %1052 = vmatprep.mubr.bf16.mxu0 0
          %1053 = vmatmul.mubr.bf16.gmra.mrb[0].mxu0 %v977
          %v1054 = vpop.f32.mrb[0].mxu0
          %v1055 = vadd.f32 0.0, %v1054
          %v1056 = vpop.f32.mrb[0].mxu0
          %v1057 = vpop.f32.mrb[0].mxu0
          %v1058 = vadd.f32 0.0, %v1057
          %v1059 = vpop.f32.mrb[0].mxu0
          %1060 = vmatprep.mubr.bf16.mxu0 0
          %1061 = vmatmul.mubr.bf16.gmra.mrb[0].mxu0 %v980
          %v1062 = vpop.f32.mrb[0].mxu0
          %v1063 = vadd.f32 0.0, %v1062
          %v1064 = vpop.f32.mrb[0].mxu0
          %v1065 = vpop.f32.mrb[0].mxu0
          %v1066 = vadd.f32 0.0, %v1065
          %v1067 = vpop.f32.mrb[0].mxu0
          %1068 = vmatprep.mubr.bf16.mxu0 0
          %1069 = vmatmul.mubr.bf16.gmra.mrb[0].mxu0 %v983
          %v1070 = vpop.f32.mrb[0].mxu0
          %v1071 = vadd.f32 0.0, %v1070
          %v1072 = vpop.f32.mrb[0].mxu0
          %v1073 = vpop.f32.mrb[0].mxu0
          %v1074 = vadd.f32 0.0, %v1073
          %v1075 = vpop.f32.mrb[0].mxu0
          %1076 = vmatprep.mubr.bf16.mxu0 0
          %1077 = vmatmul.mubr.bf16.gmra.mrb[0].mxu0 %v986
          %v1078 = vpop.f32.mrb[0].mxu0
          %v1079 = vadd.f32 0.0, %v1078
          %v1080 = vpop.f32.mrb[0].mxu0
          %v1081 = vpop.f32.mrb[0].mxu0
          %v1082 = vadd.f32 0.0, %v1081
          %v1083 = vpop.f32.mrb[0].mxu0
          %1084 = vdwg.mxu0
          %v1089 = vunpack.c.l.b16 %v806
          %v1090 = vunpack.c.l.b16 %v807
          %v1091 = vunpack.c.l.b16 %v808
          %v1092 = vunpack.c.l.b16 %v809
          %v1093 = vpack.c.b16 %v1090, %v1089
          %v1094 = vpack.c.b16 %v1092, %v1091
          %v1098 = vsel %vm629, %v798, 0
          %v1101 = vsel %vm629, %v799, 0
          %v1104 = vsel %vm629, %v800, 0
          %v1107 = vsel %vm629, %v801, 0
          %v1110 = vsel %vm629, %v802, 0
          %v1113 = vsel %vm629, %v803, 0
          %v1116 = vsel %vm629, %v804, 0
          %v1119 = vsel %vm629, %v805, 0
          %1121 = vmatprep.subr.bf16.mxu0 0
          %1122 = vmatpush1.bf16.msra.mxu0 %v1093
          %1123 = vmatprep.subr.bf16.mxu0 0
          %1124 = vmatpush1.bf16.msra.mxu0 %v1094
          %1125 = vmatprep.subr.bf16.mxu0 0
          %1126 = vmatpush1.bf16.msra.mxu0 0
          %1127 = vmatprep.subr.bf16.mxu0 0
          %1128 = vmatpush1.bf16.msra.mxu0 0
          %1129 = vmatprep.subr.bf16.mxu0 0
          %1130 = vmatpush1.bf16.msra.mxu0 0
          %1131 = vmatprep.subr.bf16.mxu0 0
          %1132 = vmatpush1.bf16.msra.mxu0 0
          %1133 = vmatprep.subr.bf16.mxu0 0
          %1134 = vmatpush1.bf16.msra.mxu0 0
          %1135 = vmatprep.subr.bf16.mxu0 0
          %1136 = vmatpush1.bf16.msra.mxu0 0
          %1137 = vmatprep.subr.bf16.mxu0 0
          %1138 = vmatpush1.bf16.msra.mxu0 0
          %1139 = vmatprep.subr.bf16.mxu0 0
          %1140 = vmatpush1.bf16.msra.mxu0 0
          %1141 = vmatprep.subr.bf16.mxu0 0
          %1142 = vmatpush1.bf16.msra.mxu0 0
          %1143 = vmatprep.subr.bf16.mxu0 0
          %1144 = vmatpush1.bf16.msra.mxu0 0
          %1145 = vmatprep.subr.bf16.mxu0 0
          %1146 = vmatpush1.bf16.msra.mxu0 0
          %1147 = vmatprep.subr.bf16.mxu0 0
          %1148 = vmatpush1.bf16.msra.mxu0 0
          %1149 = vmatprep.subr.bf16.mxu0 0
          %1150 = vmatpush1.bf16.msra.mxu0 0
          %1151 = vmatprep.subr.bf16.mxu0 0
          %1152 = vmatpush1.bf16.msra.mxu0 0
          %1153 = vmatprep.mubr.bf16.mxu0 0
          %1154 = vmatmul.mubr.bf16.gmra.mrb[0].mxu0 %v1098
          %v1155 = vpop.f32.mrb[0].mxu0
          %v1156 = vadd.f32 %v1023, %v1155
          %v1157 = vpop.f32.mrb[0].mxu0
          %v1158 = vpop.f32.mrb[0].mxu0
          %v1159 = vadd.f32 %v1026, %v1158
          %v1160 = vpop.f32.mrb[0].mxu0
          %1161 = vmatprep.mubr.bf16.mxu0 0
          %1162 = vmatmul.mubr.bf16.gmra.mrb[0].mxu0 %v1101
          %v1163 = vpop.f32.mrb[0].mxu0
          %v1164 = vadd.f32 %v1031, %v1163
          %v1165 = vpop.f32.mrb[0].mxu0
          %v1166 = vpop.f32.mrb[0].mxu0
          %v1167 = vadd.f32 %v1034, %v1166
          %v1168 = vpop.f32.mrb[0].mxu0
          %1169 = vmatprep.mubr.bf16.mxu0 0
          %1170 = vmatmul.mubr.bf16.gmra.mrb[0].mxu0 %v1104
          %v1171 = vpop.f32.mrb[0].mxu0
          %v1172 = vadd.f32 %v1039, %v1171
          %v1173 = vpop.f32.mrb[0].mxu0
          %v1174 = vpop.f32.mrb[0].mxu0
          %v1175 = vadd.f32 %v1042, %v1174
          %v1176 = vpop.f32.mrb[0].mxu0
          %1177 = vmatprep.mubr.bf16.mxu0 0
          %1178 = vmatmul.mubr.bf16.gmra.mrb[0].mxu0 %v1107
          %v1179 = vpop.f32.mrb[0].mxu0
          %v1180 = vadd.f32 %v1047, %v1179
          %v1181 = vpop.f32.mrb[0].mxu0
          %v1182 = vpop.f32.mrb[0].mxu0
          %v1183 = vadd.f32 %v1050, %v1182
          %v1184 = vpop.f32.mrb[0].mxu0
          %1185 = vmatprep.mubr.bf16.mxu0 0
          %1186 = vmatmul.mubr.bf16.gmra.mrb[0].mxu0 %v1110
          %v1187 = vpop.f32.mrb[0].mxu0
          %v1188 = vadd.f32 %v1055, %v1187
          %v1189 = vpop.f32.mrb[0].mxu0
          %v1190 = vpop.f32.mrb[0].mxu0
          %v1191 = vadd.f32 %v1058, %v1190
          %v1192 = vpop.f32.mrb[0].mxu0
          %1193 = vmatprep.mubr.bf16.mxu0 0
          %1194 = vmatmul.mubr.bf16.gmra.mrb[0].mxu0 %v1113
          %v1195 = vpop.f32.mrb[0].mxu0
          %v1196 = vadd.f32 %v1063, %v1195
          %v1197 = vpop.f32.mrb[0].mxu0
          %v1198 = vpop.f32.mrb[0].mxu0
          %v1199 = vadd.f32 %v1066, %v1198
          %v1200 = vpop.f32.mrb[0].mxu0
          %1201 = vmatprep.mubr.bf16.mxu0 0
          %1202 = vmatmul.mubr.bf16.gmra.mrb[0].mxu0 %v1116
          %v1203 = vpop.f32.mrb[0].mxu0
          %v1204 = vadd.f32 %v1071, %v1203
          %v1205 = vpop.f32.mrb[0].mxu0
          %v1206 = vpop.f32.mrb[0].mxu0
          %v1207 = vadd.f32 %v1074, %v1206
          %v1208 = vpop.f32.mrb[0].mxu0
          %1209 = vmatprep.mubr.bf16.mxu0 0
          %1210 = vmatmul.mubr.bf16.gmra.mrb[0].mxu0 %v1119
          %v1211 = vpop.f32.mrb[0].mxu0
          %v1212 = vadd.f32 %v1079, %v1211
          %v1213 = vpop.f32.mrb[0].mxu0
          %v1214 = vpop.f32.mrb[0].mxu0
          %v1215 = vadd.f32 %v1082, %v1214
          %v1216 = vpop.f32.mrb[0].mxu0
          %1217 = vdwg.mxu0
          %v1218 = vld [vmem:[%s0 + $0x9] sm:$0xff]
          %v1219 = vld [vmem:[%s0 + $0x11] sm:$0xff]
          %v1220 = vld [vmem:[%s0 + $0x19] sm:$0xff]
          %v1221 = vld [vmem:[%s0 + $0x21] sm:$0xff]
          %v1222 = vld [vmem:[%s0 + $0x29] sm:$0xff]
          %v1223 = vld [vmem:[%s0 + $0x31] sm:$0xff]
          %v1224 = vld [vmem:[%s0 + $0x39] sm:$0xff]
          %v1225 = vld [vmem:[%s0 + $0x41] sm:$0xff]
          %v1226 = vld [vmem:[%s0 + $0x49] sm:$0xff]
          %v1227 = vld [vmem:[%s0 + $0x51] sm:$0xff]
          %v1228 = vld [vmem:[%s0 + $0x59] sm:$0xff]
          %v1229 = vld [vmem:[%s0 + $0x61] sm:$0xff]
          %v1230 = vld [vmem:[%s0 + $0x69] sm:$0xff]
          %v1231 = vld [vmem:[%s0 + $0x71] sm:$0xff]
          %v1232 = vld [vmem:[%s0 + $0x79] sm:$0xff]
          %v1233 = vld [vmem:[%s0 + $0x81] sm:$0xff]
          %s1234 = scalar_lea.vmem %s1, 256
          %v1235 = vld [vmem:[%s1234] sm:$0xff]
          %v1236 = vld [vmem:[%s1234 + $0x8] sm:$0xff]
          %v1237 = vld [vmem:[%s1234 + $0x10] sm:$0xff]
          %v1238 = vld [vmem:[%s1234 + $0x18] sm:$0xff]
          %v1239 = vld [vmem:[%s1234 + $0x20] sm:$0xff]
          %v1240 = vld [vmem:[%s1234 + $0x28] sm:$0xff]
          %v1241 = vld [vmem:[%s1234 + $0x30] sm:$0xff]
          %v1242 = vld [vmem:[%s1234 + $0x38] sm:$0xff]
          %v1243 = vld [vmem:[%s1234 + $0x40] sm:$0xff]
          %v1244 = vld [vmem:[%s1234 + $0x48] sm:$0xff]
          %v1245 = vld [vmem:[%s1234 + $0x50] sm:$0xff]
          %v1246 = vld [vmem:[%s1234 + $0x58] sm:$0xff]
          %v1247 = vld [vmem:[%s1234 + $0x60] sm:$0xff]
          %v1248 = vld [vmem:[%s1234 + $0x68] sm:$0xff]
          %v1249 = vld [vmem:[%s1234 + $0x70] sm:$0xff]
          %v1250 = vld [vmem:[%s1234 + $0x78] sm:$0xff]
          %1252 = vset.pattern.permute.xlu0 0
          %1253 = vperm.xlu0 %1252, %v1235
          %v1254 = vpop.permute.xlu0 %1253
          %1257 = vset.pattern.permute.xlu0 0
          %1258 = vperm.xlu0 %1257, %v1236
          %v1259 = vpop.permute.xlu0 %1258
          %1262 = vset.pattern.permute.xlu0 0
          %1263 = vperm.xlu0 %1262, %v1237
          %v1264 = vpop.permute.xlu0 %1263
          %1267 = vset.pattern.permute.xlu0 0
          %1268 = vperm.xlu0 %1267, %v1238
          %v1269 = vpop.permute.xlu0 %1268
          %1272 = vset.pattern.permute.xlu0 0
          %1273 = vperm.xlu0 %1272, %v1239
          %v1274 = vpop.permute.xlu0 %1273
          %1277 = vset.pattern.permute.xlu0 0
          %1278 = vperm.xlu0 %1277, %v1240
          %v1279 = vpop.permute.xlu0 %1278
          %1282 = vset.pattern.permute.xlu0 0
          %1283 = vperm.xlu0 %1282, %v1241
          %v1284 = vpop.permute.xlu0 %1283
          %1287 = vset.pattern.permute.xlu0 0
          %1288 = vperm.xlu0 %1287, %v1242
          %v1289 = vpop.permute.xlu0 %1288
          %1292 = vset.pattern.permute.xlu0 0
          %1293 = vperm.xlu0 %1292, %v1243
          %v1294 = vpop.permute.xlu0 %1293
          %1297 = vset.pattern.permute.xlu0 0
          %1298 = vperm.xlu0 %1297, %v1244
          %v1299 = vpop.permute.xlu0 %1298
          %1302 = vset.pattern.permute.xlu0 0
          %1303 = vperm.xlu0 %1302, %v1245
          %v1304 = vpop.permute.xlu0 %1303
          %1307 = vset.pattern.permute.xlu0 0
          %1308 = vperm.xlu0 %1307, %v1246
          %v1309 = vpop.permute.xlu0 %1308
          %1312 = vset.pattern.permute.xlu0 0
          %1313 = vperm.xlu0 %1312, %v1247
          %v1314 = vpop.permute.xlu0 %1313
          %1317 = vset.pattern.permute.xlu0 0
          %1318 = vperm.xlu0 %1317, %v1248
          %v1319 = vpop.permute.xlu0 %1318
          %1322 = vset.pattern.permute.xlu0 0
          %1323 = vperm.xlu0 %1322, %v1249
          %v1324 = vpop.permute.xlu0 %1323
          %1327 = vset.pattern.permute.xlu0 0
          %1328 = vperm.xlu0 %1327, %v1250
          %v1329 = vpop.permute.xlu0 %1328
          %v1331 = vmul.f32 %v1218, %v1254
          %v1332 = vmul.f32 %v1219, %v1259
          %v1333 = vmul.f32 %v1220, %v1264
          %v1334 = vmul.f32 %v1221, %v1269
          %v1335 = vmul.f32 %v1222, %v1274
          %v1336 = vmul.f32 %v1223, %v1279
          %v1337 = vmul.f32 %v1224, %v1284
          %v1338 = vmul.f32 %v1225, %v1289
          %v1339 = vmul.f32 %v1226, %v1294
          %v1340 = vmul.f32 %v1227, %v1299
          %v1341 = vmul.f32 %v1228, %v1304
          %v1342 = vmul.f32 %v1229, %v1309
          %v1343 = vmul.f32 %v1230, %v1314
          %v1344 = vmul.f32 %v1231, %v1319
          %v1345 = vmul.f32 %v1232, %v1324
          %v1346 = vmul.f32 %v1233, %v1329
          %v1347 = vpack.c.bf16 %v1332, %v1331
          %v1348 = vpack.c.bf16 %v1334, %v1333
          %v1349 = vpack.c.bf16 %v1336, %v1335
          %v1350 = vpack.c.bf16 %v1338, %v1337
          %v1351 = vpack.c.bf16 %v1340, %v1339
          %v1352 = vpack.c.bf16 %v1342, %v1341
          %v1353 = vpack.c.bf16 %v1344, %v1343
          %v1354 = vpack.c.bf16 %v1346, %v1345
          %s1355 = scalar_lea.vmem %s2, 32
          %v1356 = vld [vmem:[%s1355] sm:$0xf]
          %v1357 = vld [vmem:[%s1355 + $0x4] sm:$0xf]
          %v1358 = vld [vmem:[%s1355 + $0x8] sm:$0xf]
          %v1359 = vld [vmem:[%s1355 + $0xc] sm:$0xf]
          %v1364 = vunpack.c.l.b16 %v1356
          %v1365 = vunpack.c.l.b16 %v1357
          %v1366 = vunpack.c.l.b16 %v1358
          %v1367 = vunpack.c.l.b16 %v1359
          %v1368 = vpack.c.b16 %v1365, %v1364
          %v1369 = vpack.c.b16 %v1367, %v1366
          %v1373 = vsel %vm629, %v1347, 0
          %v1376 = vsel %vm629, %v1348, 0
          %v1379 = vsel %vm629, %v1349, 0
          %v1382 = vsel %vm629, %v1350, 0
          %v1385 = vsel %vm629, %v1351, 0
          %v1388 = vsel %vm629, %v1352, 0
          %v1391 = vsel %vm629, %v1353, 0
          %v1394 = vsel %vm629, %v1354, 0
          %1396 = vmatprep.subr.bf16.mxu0 0
          %1397 = vmatpush1.bf16.msra.mxu0 %v1368
          %1398 = vmatprep.subr.bf16.mxu0 0
          %1399 = vmatpush1.bf16.msra.mxu0 %v1369
          %1400 = vmatprep.subr.bf16.mxu0 0
          %1401 = vmatpush1.bf16.msra.mxu0 0
          %1402 = vmatprep.subr.bf16.mxu0 0
          %1403 = vmatpush1.bf16.msra.mxu0 0
          %1404 = vmatprep.subr.bf16.mxu0 0
          %1405 = vmatpush1.bf16.msra.mxu0 0
          %1406 = vmatprep.subr.bf16.mxu0 0
          %1407 = vmatpush1.bf16.msra.mxu0 0
          %1408 = vmatprep.subr.bf16.mxu0 0
          %1409 = vmatpush1.bf16.msra.mxu0 0
          %1410 = vmatprep.subr.bf16.mxu0 0
          %1411 = vmatpush1.bf16.msra.mxu0 0
          %1412 = vmatprep.subr.bf16.mxu0 0
          %1413 = vmatpush1.bf16.msra.mxu0 0
          %1414 = vmatprep.subr.bf16.mxu0 0
          %1415 = vmatpush1.bf16.msra.mxu0 0
          %1416 = vmatprep.subr.bf16.mxu0 0
          %1417 = vmatpush1.bf16.msra.mxu0 0
          %1418 = vmatprep.subr.bf16.mxu0 0
          %1419 = vmatpush1.bf16.msra.mxu0 0
          %1420 = vmatprep.subr.bf16.mxu0 0
          %1421 = vmatpush1.bf16.msra.mxu0 0
          %1422 = vmatprep.subr.bf16.mxu0 0
          %1423 = vmatpush1.bf16.msra.mxu0 0
          %1424 = vmatprep.subr.bf16.mxu0 0
          %1425 = vmatpush1.bf16.msra.mxu0 0
          %1426 = vmatprep.subr.bf16.mxu0 0
          %1427 = vmatpush1.bf16.msra.mxu0 0
          %1428 = vmatprep.mubr.bf16.mxu0 0
          %1429 = vmatmul.mubr.bf16.gmra.mrb[0].mxu0 %v1373
          %v1430 = vpop.f32.mrb[0].mxu0
          %v1431 = vadd.f32 0.0, %v1430
          %v1432 = vpop.f32.mrb[0].mxu0
          %v1433 = vpop.f32.mrb[0].mxu0
          %v1434 = vadd.f32 0.0, %v1433
          %v1435 = vpop.f32.mrb[0].mxu0
          %1436 = vmatprep.mubr.bf16.mxu0 0
          %1437 = vmatmul.mubr.bf16.gmra.mrb[0].mxu0 %v1376
          %v1438 = vpop.f32.mrb[0].mxu0
          %v1439 = vadd.f32 0.0, %v1438
          %v1440 = vpop.f32.mrb[0].mxu0
          %v1441 = vpop.f32.mrb[0].mxu0
          %v1442 = vadd.f32 0.0, %v1441
          %v1443 = vpop.f32.mrb[0].mxu0
          %1444 = vmatprep.mubr.bf16.mxu0 0
          %1445 = vmatmul.mubr.bf16.gmra.mrb[0].mxu0 %v1379
          %v1446 = vpop.f32.mrb[0].mxu0
          %v1447 = vadd.f32 0.0, %v1446
          %v1448 = vpop.f32.mrb[0].mxu0
          %v1449 = vpop.f32.mrb[0].mxu0
          %v1450 = vadd.f32 0.0, %v1449
          %v1451 = vpop.f32.mrb[0].mxu0
          %1452 = vmatprep.mubr.bf16.mxu0 0
          %1453 = vmatmul.mubr.bf16.gmra.mrb[0].mxu0 %v1382
          %v1454 = vpop.f32.mrb[0].mxu0
          %v1455 = vadd.f32 0.0, %v1454
          %v1456 = vpop.f32.mrb[0].mxu0
          %v1457 = vpop.f32.mrb[0].mxu0
          %v1458 = vadd.f32 0.0, %v1457
          %v1459 = vpop.f32.mrb[0].mxu0
          %1460 = vmatprep.mubr.bf16.mxu0 0
          %1461 = vmatmul.mubr.bf16.gmra.mrb[0].mxu0 %v1385
          %v1462 = vpop.f32.mrb[0].mxu0
          %v1463 = vadd.f32 0.0, %v1462
          %v1464 = vpop.f32.mrb[0].mxu0
          %v1465 = vpop.f32.mrb[0].mxu0
          %v1466 = vadd.f32 0.0, %v1465
          %v1467 = vpop.f32.mrb[0].mxu0
          %1468 = vmatprep.mubr.bf16.mxu0 0
          %1469 = vmatmul.mubr.bf16.gmra.mrb[0].mxu0 %v1388
          %v1470 = vpop.f32.mrb[0].mxu0
          %v1471 = vadd.f32 0.0, %v1470
          %v1472 = vpop.f32.mrb[0].mxu0
          %v1473 = vpop.f32.mrb[0].mxu0
          %v1474 = vadd.f32 0.0, %v1473
          %v1475 = vpop.f32.mrb[0].mxu0
          %1476 = vmatprep.mubr.bf16.mxu0 0
          %1477 = vmatmul.mubr.bf16.gmra.mrb[0].mxu0 %v1391
          %v1478 = vpop.f32.mrb[0].mxu0
          %v1479 = vadd.f32 0.0, %v1478
          %v1480 = vpop.f32.mrb[0].mxu0
          %v1481 = vpop.f32.mrb[0].mxu0
          %v1482 = vadd.f32 0.0, %v1481
          %v1483 = vpop.f32.mrb[0].mxu0
          %1484 = vmatprep.mubr.bf16.mxu0 0
          %1485 = vmatmul.mubr.bf16.gmra.mrb[0].mxu0 %v1394
          %v1486 = vpop.f32.mrb[0].mxu0
          %v1487 = vadd.f32 0.0, %v1486
          %v1488 = vpop.f32.mrb[0].mxu0
          %v1489 = vpop.f32.mrb[0].mxu0
          %v1490 = vadd.f32 0.0, %v1489
          %v1491 = vpop.f32.mrb[0].mxu0
          %1492 = vdwg.mxu0
          %v1493 = vadd.f32 %v1156, %v1431
          %v1494 = vadd.f32 %v1159, %v1434
          %v1495 = vadd.f32 %v1164, %v1439
          %v1496 = vadd.f32 %v1167, %v1442
          %v1497 = vadd.f32 %v1172, %v1447
          %v1498 = vadd.f32 %v1175, %v1450
          %v1499 = vadd.f32 %v1180, %v1455
          %v1500 = vadd.f32 %v1183, %v1458
          %v1501 = vadd.f32 %v1188, %v1463
          %v1502 = vadd.f32 %v1191, %v1466
          %v1503 = vadd.f32 %v1196, %v1471
          %v1504 = vadd.f32 %v1199, %v1474
          %v1505 = vadd.f32 %v1204, %v1479
          %v1506 = vadd.f32 %v1207, %v1482
          %v1507 = vadd.f32 %v1212, %v1487
          %v1508 = vadd.f32 %v1215, %v1490
          %v1509 = vld [vmem:[%s0 + $0xf] sm:$0xff]
          %v1510 = vld [vmem:[%s0 + $0x17] sm:$0xff]
          %v1511 = vld [vmem:[%s0 + $0x1f] sm:$0xff]
          %v1512 = vld [vmem:[%s0 + $0x27] sm:$0xff]
          %v1513 = vld [vmem:[%s0 + $0x2f] sm:$0xff]
          %v1514 = vld [vmem:[%s0 + $0x37] sm:$0xff]
          %v1515 = vld [vmem:[%s0 + $0x3f] sm:$0xff]
          %v1516 = vld [vmem:[%s0 + $0x47] sm:$0xff]
          %v1517 = vld [vmem:[%s0 + $0x4f] sm:$0xff]
          %v1518 = vld [vmem:[%s0 + $0x57] sm:$0xff]
          %v1519 = vld [vmem:[%s0 + $0x5f] sm:$0xff]
          %v1520 = vld [vmem:[%s0 + $0x67] sm:$0xff]
          %v1521 = vld [vmem:[%s0 + $0x6f] sm:$0xff]
          %v1522 = vld [vmem:[%s0 + $0x77] sm:$0xff]
          %v1523 = vld [vmem:[%s0 + $0x7f] sm:$0xff]
          %v1524 = vld [vmem:[%s0 + $0x87] sm:$0xff]
          %s1525 = scalar_lea.vmem %s1, 384
          %v1526 = vld [vmem:[%s1525] sm:$0xff]
          %v1527 = vld [vmem:[%s1525 + $0x8] sm:$0xff]
          %v1528 = vld [vmem:[%s1525 + $0x10] sm:$0xff]
          %v1529 = vld [vmem:[%s1525 + $0x18] sm:$0xff]
          %v1530 = vld [vmem:[%s1525 + $0x20] sm:$0xff]
          %v1531 = vld [vmem:[%s1525 + $0x28] sm:$0xff]
          %v1532 = vld [vmem:[%s1525 + $0x30] sm:$0xff]
          %v1533 = vld [vmem:[%s1525 + $0x38] sm:$0xff]
          %v1534 = vld [vmem:[%s1525 + $0x40] sm:$0xff]
          %v1535 = vld [vmem:[%s1525 + $0x48] sm:$0xff]
          %v1536 = vld [vmem:[%s1525 + $0x50] sm:$0xff]
          %v1537 = vld [vmem:[%s1525 + $0x58] sm:$0xff]
          %v1538 = vld [vmem:[%s1525 + $0x60] sm:$0xff]
          %v1539 = vld [vmem:[%s1525 + $0x68] sm:$0xff]
          %v1540 = vld [vmem:[%s1525 + $0x70] sm:$0xff]
          %v1541 = vld [vmem:[%s1525 + $0x78] sm:$0xff]
          %1543 = vset.pattern.permute.xlu0 0
          %1544 = vperm.xlu0 %1543, %v1526
          %v1545 = vpop.permute.xlu0 %1544
          %1548 = vset.pattern.permute.xlu0 0
          %1549 = vperm.xlu0 %1548, %v1527
          %v1550 = vpop.permute.xlu0 %1549
          %1553 = vset.pattern.permute.xlu0 0
          %1554 = vperm.xlu0 %1553, %v1528
          %v1555 = vpop.permute.xlu0 %1554
          %1558 = vset.pattern.permute.xlu0 0
          %1559 = vperm.xlu0 %1558, %v1529
          %v1560 = vpop.permute.xlu0 %1559
          %1563 = vset.pattern.permute.xlu0 0
          %1564 = vperm.xlu0 %1563, %v1530
          %v1565 = vpop.permute.xlu0 %1564
          %1568 = vset.pattern.permute.xlu0 0
          %1569 = vperm.xlu0 %1568, %v1531
          %v1570 = vpop.permute.xlu0 %1569
          %1573 = vset.pattern.permute.xlu0 0
          %1574 = vperm.xlu0 %1573, %v1532
          %v1575 = vpop.permute.xlu0 %1574
          %1578 = vset.pattern.permute.xlu0 0
          %1579 = vperm.xlu0 %1578, %v1533
          %v1580 = vpop.permute.xlu0 %1579
          %1583 = vset.pattern.permute.xlu0 0
          %1584 = vperm.xlu0 %1583, %v1534
          %v1585 = vpop.permute.xlu0 %1584
          %1588 = vset.pattern.permute.xlu0 0
          %1589 = vperm.xlu0 %1588, %v1535
          %v1590 = vpop.permute.xlu0 %1589
          %1593 = vset.pattern.permute.xlu0 0
          %1594 = vperm.xlu0 %1593, %v1536
          %v1595 = vpop.permute.xlu0 %1594
          %1598 = vset.pattern.permute.xlu0 0
          %1599 = vperm.xlu0 %1598, %v1537
          %v1600 = vpop.permute.xlu0 %1599
          %1603 = vset.pattern.permute.xlu0 0
          %1604 = vperm.xlu0 %1603, %v1538
          %v1605 = vpop.permute.xlu0 %1604
          %1608 = vset.pattern.permute.xlu0 0
          %1609 = vperm.xlu0 %1608, %v1539
          %v1610 = vpop.permute.xlu0 %1609
          %1613 = vset.pattern.permute.xlu0 0
          %1614 = vperm.xlu0 %1613, %v1540
          %v1615 = vpop.permute.xlu0 %1614
          %1618 = vset.pattern.permute.xlu0 0
          %1619 = vperm.xlu0 %1618, %v1541
          %v1620 = vpop.permute.xlu0 %1619
          %v1622 = vmul.f32 %v1509, %v1545
          %v1623 = vmul.f32 %v1510, %v1550
          %v1624 = vmul.f32 %v1511, %v1555
          %v1625 = vmul.f32 %v1512, %v1560
          %v1626 = vmul.f32 %v1513, %v1565
          %v1627 = vmul.f32 %v1514, %v1570
          %v1628 = vmul.f32 %v1515, %v1575
          %v1629 = vmul.f32 %v1516, %v1580
          %v1630 = vmul.f32 %v1517, %v1585
          %v1631 = vmul.f32 %v1518, %v1590
          %v1632 = vmul.f32 %v1519, %v1595
          %v1633 = vmul.f32 %v1520, %v1600
          %v1634 = vmul.f32 %v1521, %v1605
          %v1635 = vmul.f32 %v1522, %v1610
          %v1636 = vmul.f32 %v1523, %v1615
          %v1637 = vmul.f32 %v1524, %v1620
          %v1638 = vpack.c.bf16 %v1623, %v1622
          %v1639 = vpack.c.bf16 %v1625, %v1624
          %v1640 = vpack.c.bf16 %v1627, %v1626
          %v1641 = vpack.c.bf16 %v1629, %v1628
          %v1642 = vpack.c.bf16 %v1631, %v1630
          %v1643 = vpack.c.bf16 %v1633, %v1632
          %v1644 = vpack.c.bf16 %v1635, %v1634
          %v1645 = vpack.c.bf16 %v1637, %v1636
          %s1646 = scalar_lea.vmem %s2, 48
          %v1647 = vld [vmem:[%s1646] sm:$0xf]
          %v1648 = vld [vmem:[%s1646 + $0x4] sm:$0xf]
          %v1649 = vld [vmem:[%s1646 + $0x8] sm:$0xf]
          %v1650 = vld [vmem:[%s1646 + $0xc] sm:$0xf]
          %v1655 = vunpack.c.l.b16 %v1647
          %v1656 = vunpack.c.l.b16 %v1648
          %v1657 = vunpack.c.l.b16 %v1649
          %v1658 = vunpack.c.l.b16 %v1650
          %v1659 = vpack.c.b16 %v1656, %v1655
          %v1660 = vpack.c.b16 %v1658, %v1657
          %v1664 = vsel %vm629, %v1638, 0
          %v1667 = vsel %vm629, %v1639, 0
          %v1670 = vsel %vm629, %v1640, 0
          %v1673 = vsel %vm629, %v1641, 0
          %v1676 = vsel %vm629, %v1642, 0
          %v1679 = vsel %vm629, %v1643, 0
          %v1682 = vsel %vm629, %v1644, 0
          %v1685 = vsel %vm629, %v1645, 0
          %1687 = vmatprep.subr.bf16.mxu0 0
          %1688 = vmatpush1.bf16.msra.mxu0 %v1659
          %1689 = vmatprep.subr.bf16.mxu0 0
          %1690 = vmatpush1.bf16.msra.mxu0 %v1660
          %1691 = vmatprep.subr.bf16.mxu0 0
          %1692 = vmatpush1.bf16.msra.mxu0 0
          %1693 = vmatprep.subr.bf16.mxu0 0
          %1694 = vmatpush1.bf16.msra.mxu0 0
          %1695 = vmatprep.subr.bf16.mxu0 0
          %1696 = vmatpush1.bf16.msra.mxu0 0
          %1697 = vmatprep.subr.bf16.mxu0 0
          %1698 = vmatpush1.bf16.msra.mxu0 0
          %1699 = vmatprep.subr.bf16.mxu0 0
          %1700 = vmatpush1.bf16.msra.mxu0 0
          %1701 = vmatprep.subr.bf16.mxu0 0
          %1702 = vmatpush1.bf16.msra.mxu0 0
          %1703 = vmatprep.subr.bf16.mxu0 0
          %1704 = vmatpush1.bf16.msra.mxu0 0
          %1705 = vmatprep.subr.bf16.mxu0 0
          %1706 = vmatpush1.bf16.msra.mxu0 0
          %1707 = vmatprep.subr.bf16.mxu0 0
          %1708 = vmatpush1.bf16.msra.mxu0 0
          %1709 = vmatprep.subr.bf16.mxu0 0
          %1710 = vmatpush1.bf16.msra.mxu0 0
          %1711 = vmatprep.subr.bf16.mxu0 0
          %1712 = vmatpush1.bf16.msra.mxu0 0
          %1713 = vmatprep.subr.bf16.mxu0 0
          %1714 = vmatpush1.bf16.msra.mxu0 0
          %1715 = vmatprep.subr.bf16.mxu0 0
          %1716 = vmatpush1.bf16.msra.mxu0 0
          %1717 = vmatprep.subr.bf16.mxu0 0
          %1718 = vmatpush1.bf16.msra.mxu0 0
          %1719 = vmatprep.mubr.bf16.mxu0 0
          %1720 = vmatmul.mubr.bf16.gmra.mrb[0].mxu0 %v1664
          %v1721 = vpop.f32.mrb[0].mxu0
          %v1722 = vadd.f32 0.0, %v1721
          %v1723 = vpop.f32.mrb[0].mxu0
          %v1724 = vpop.f32.mrb[0].mxu0
          %v1725 = vadd.f32 0.0, %v1724
          %v1726 = vpop.f32.mrb[0].mxu0
          %1727 = vmatprep.mubr.bf16.mxu0 0
          %1728 = vmatmul.mubr.bf16.gmra.mrb[0].mxu0 %v1667
          %v1729 = vpop.f32.mrb[0].mxu0
          %v1730 = vadd.f32 0.0, %v1729
          %v1731 = vpop.f32.mrb[0].mxu0
          %v1732 = vpop.f32.mrb[0].mxu0
          %v1733 = vadd.f32 0.0, %v1732
          %v1734 = vpop.f32.mrb[0].mxu0
          %1735 = vmatprep.mubr.bf16.mxu0 0
          %1736 = vmatmul.mubr.bf16.gmra.mrb[0].mxu0 %v1670
          %v1737 = vpop.f32.mrb[0].mxu0
          %v1738 = vadd.f32 0.0, %v1737
          %v1739 = vpop.f32.mrb[0].mxu0
          %v1740 = vpop.f32.mrb[0].mxu0
          %v1741 = vadd.f32 0.0, %v1740
          %v1742 = vpop.f32.mrb[0].mxu0
          %1743 = vmatprep.mubr.bf16.mxu0 0
          %1744 = vmatmul.mubr.bf16.gmra.mrb[0].mxu0 %v1673
          %v1745 = vpop.f32.mrb[0].mxu0
          %v1746 = vadd.f32 0.0, %v1745
          %v1747 = vpop.f32.mrb[0].mxu0
          %v1748 = vpop.f32.mrb[0].mxu0
          %v1749 = vadd.f32 0.0, %v1748
          %v1750 = vpop.f32.mrb[0].mxu0
          %1751 = vmatprep.mubr.bf16.mxu0 0
          %1752 = vmatmul.mubr.bf16.gmra.mrb[0].mxu0 %v1676
          %v1753 = vpop.f32.mrb[0].mxu0
          %v1754 = vadd.f32 0.0, %v1753
          %v1755 = vpop.f32.mrb[0].mxu0
          %v1756 = vpop.f32.mrb[0].mxu0
          %v1757 = vadd.f32 0.0, %v1756
          %v1758 = vpop.f32.mrb[0].mxu0
          %1759 = vmatprep.mubr.bf16.mxu0 0
          %1760 = vmatmul.mubr.bf16.gmra.mrb[0].mxu0 %v1679
          %v1761 = vpop.f32.mrb[0].mxu0
          %v1762 = vadd.f32 0.0, %v1761
          %v1763 = vpop.f32.mrb[0].mxu0
          %v1764 = vpop.f32.mrb[0].mxu0
          %v1765 = vadd.f32 0.0, %v1764
          %v1766 = vpop.f32.mrb[0].mxu0
          %1767 = vmatprep.mubr.bf16.mxu0 0
          %1768 = vmatmul.mubr.bf16.gmra.mrb[0].mxu0 %v1682
          %v1769 = vpop.f32.mrb[0].mxu0
          %v1770 = vadd.f32 0.0, %v1769
          %v1771 = vpop.f32.mrb[0].mxu0
          %v1772 = vpop.f32.mrb[0].mxu0
          %v1773 = vadd.f32 0.0, %v1772
          %v1774 = vpop.f32.mrb[0].mxu0
          %1775 = vmatprep.mubr.bf16.mxu0 0
          %1776 = vmatmul.mubr.bf16.gmra.mrb[0].mxu0 %v1685
          %v1777 = vpop.f32.mrb[0].mxu0
          %v1778 = vadd.f32 0.0, %v1777
          %v1779 = vpop.f32.mrb[0].mxu0
          %v1780 = vpop.f32.mrb[0].mxu0
          %v1781 = vadd.f32 0.0, %v1780
          %v1782 = vpop.f32.mrb[0].mxu0
          %1783 = vdwg.mxu0
          %v1784 = vadd.f32 %v1493, %v1722
          %v1785 = vadd.f32 %v1494, %v1725
          %v1786 = vadd.f32 %v1495, %v1730
          %v1787 = vadd.f32 %v1496, %v1733
          %v1788 = vadd.f32 %v1497, %v1738
          %v1789 = vadd.f32 %v1498, %v1741
          %v1790 = vadd.f32 %v1499, %v1746
          %v1791 = vadd.f32 %v1500, %v1749
          %v1792 = vadd.f32 %v1501, %v1754
          %v1793 = vadd.f32 %v1502, %v1757
          %v1794 = vadd.f32 %v1503, %v1762
          %v1795 = vadd.f32 %v1504, %v1765
          %v1796 = vadd.f32 %v1505, %v1770
          %v1797 = vadd.f32 %v1506, %v1773
          %v1798 = vadd.f32 %v1507, %v1778
          %v1799 = vadd.f32 %v1508, %v1781
          %v1800 = vld [vmem:[%s0 + $0x10] sm:$0xff]
          %v1801 = vld [vmem:[%s0 + $0x18] sm:$0xff]
          %v1802 = vld [vmem:[%s0 + $0x20] sm:$0xff]
          %v1803 = vld [vmem:[%s0 + $0x28] sm:$0xff]
          %v1804 = vld [vmem:[%s0 + $0x30] sm:$0xff]
          %v1805 = vld [vmem:[%s0 + $0x38] sm:$0xff]
          %v1806 = vld [vmem:[%s0 + $0x40] sm:$0xff]
          %v1807 = vld [vmem:[%s0 + $0x48] sm:$0xff]
          %v1808 = vld [vmem:[%s0 + $0x50] sm:$0xff]
          %v1809 = vld [vmem:[%s0 + $0x58] sm:$0xff]
          %v1810 = vld [vmem:[%s0 + $0x60] sm:$0xff]
          %v1811 = vld [vmem:[%s0 + $0x68] sm:$0xff]
          %v1812 = vld [vmem:[%s0 + $0x70] sm:$0xff]
          %v1813 = vld [vmem:[%s0 + $0x78] sm:$0xff]
          %v1814 = vld [vmem:[%s0 + $0x80] sm:$0xff]
          %v1815 = vld [vmem:[%s0 + $0x88] sm:$0xff]
          %v1816 = vpack.c.bf16 %v1801, %v1800
          %v1817 = vpack.c.bf16 %v1803, %v1802
          %v1818 = vpack.c.bf16 %v1805, %v1804
          %v1819 = vpack.c.bf16 %v1807, %v1806
          %v1820 = vpack.c.bf16 %v1809, %v1808
          %v1821 = vpack.c.bf16 %v1811, %v1810
          %v1822 = vpack.c.bf16 %v1813, %v1812
          %v1823 = vpack.c.bf16 %v1815, %v1814
          %s1824 = scalar_lea.vmem %s2, 64
          %v1825 = vld [vmem:[%s1824] sm:$0xf]
          %v1826 = vld [vmem:[%s1824 + $0x4] sm:$0xf]
          %v1827 = vld [vmem:[%s1824 + $0x8] sm:$0xf]
          %v1828 = vld [vmem:[%s1824 + $0xc] sm:$0xf]
          %v1833 = vunpack.c.l.b16 %v1825
          %v1834 = vunpack.c.l.b16 %v1826
          %v1835 = vunpack.c.l.b16 %v1827
          %v1836 = vunpack.c.l.b16 %v1828
          %v1837 = vpack.c.b16 %v1834, %v1833
          %v1838 = vpack.c.b16 %v1836, %v1835
          %v1842 = vsel %vm629, %v1816, 0
          %v1845 = vsel %vm629, %v1817, 0
          %v1848 = vsel %vm629, %v1818, 0
          %v1851 = vsel %vm629, %v1819, 0
          %v1854 = vsel %vm629, %v1820, 0
          %v1857 = vsel %vm629, %v1821, 0
          %v1860 = vsel %vm629, %v1822, 0
          %v1863 = vsel %vm629, %v1823, 0
          %1865 = vmatprep.subr.bf16.mxu0 0
          %1866 = vmatpush1.bf16.msra.mxu0 %v1837
          %1867 = vmatprep.subr.bf16.mxu0 0
          %1868 = vmatpush1.bf16.msra.mxu0 %v1838
          %1869 = vmatprep.subr.bf16.mxu0 0
          %1870 = vmatpush1.bf16.msra.mxu0 0
          %1871 = vmatprep.subr.bf16.mxu0 0
          %1872 = vmatpush1.bf16.msra.mxu0 0
          %1873 = vmatprep.subr.bf16.mxu0 0
          %1874 = vmatpush1.bf16.msra.mxu0 0
          %1875 = vmatprep.subr.bf16.mxu0 0
          %1876 = vmatpush1.bf16.msra.mxu0 0
          %1877 = vmatprep.subr.bf16.mxu0 0
          %1878 = vmatpush1.bf16.msra.mxu0 0
          %1879 = vmatprep.subr.bf16.mxu0 0
          %1880 = vmatpush1.bf16.msra.mxu0 0
          %1881 = vmatprep.subr.bf16.mxu0 0
          %1882 = vmatpush1.bf16.msra.mxu0 0
          %1883 = vmatprep.subr.bf16.mxu0 0
          %1884 = vmatpush1.bf16.msra.mxu0 0
          %1885 = vmatprep.subr.bf16.mxu0 0
          %1886 = vmatpush1.bf16.msra.mxu0 0
          %1887 = vmatprep.subr.bf16.mxu0 0
          %1888 = vmatpush1.bf16.msra.mxu0 0
          %1889 = vmatprep.subr.bf16.mxu0 0
          %1890 = vmatpush1.bf16.msra.mxu0 0
          %1891 = vmatprep.subr.bf16.mxu0 0
          %1892 = vmatpush1.bf16.msra.mxu0 0
          %1893 = vmatprep.subr.bf16.mxu0 0
          %1894 = vmatpush1.bf16.msra.mxu0 0
          %1895 = vmatprep.subr.bf16.mxu0 0
          %1896 = vmatpush1.bf16.msra.mxu0 0
          %1897 = vmatprep.mubr.bf16.mxu0 0
          %1898 = vmatmul.mubr.bf16.gmra.mrb[0].mxu0 %v1842
          %v1899 = vpop.f32.mrb[0].mxu0
          %v1900 = vadd.f32 0.0, %v1899
          %v1901 = vpop.f32.mrb[0].mxu0
          %v1902 = vpop.f32.mrb[0].mxu0
          %v1903 = vadd.f32 0.0, %v1902
          %v1904 = vpop.f32.mrb[0].mxu0
          %1905 = vmatprep.mubr.bf16.mxu0 0
          %1906 = vmatmul.mubr.bf16.gmra.mrb[0].mxu0 %v1845
          %v1907 = vpop.f32.mrb[0].mxu0
          %v1908 = vadd.f32 0.0, %v1907
          %v1909 = vpop.f32.mrb[0].mxu0
          %v1910 = vpop.f32.mrb[0].mxu0
          %v1911 = vadd.f32 0.0, %v1910
          %v1912 = vpop.f32.mrb[0].mxu0
          %1913 = vmatprep.mubr.bf16.mxu0 0
          %1914 = vmatmul.mubr.bf16.gmra.mrb[0].mxu0 %v1848
          %v1915 = vpop.f32.mrb[0].mxu0
          %v1916 = vadd.f32 0.0, %v1915
          %v1917 = vpop.f32.mrb[0].mxu0
          %v1918 = vpop.f32.mrb[0].mxu0
          %v1919 = vadd.f32 0.0, %v1918
          %v1920 = vpop.f32.mrb[0].mxu0
          %1921 = vmatprep.mubr.bf16.mxu0 0
          %1922 = vmatmul.mubr.bf16.gmra.mrb[0].mxu0 %v1851
          %v1923 = vpop.f32.mrb[0].mxu0
          %v1924 = vadd.f32 0.0, %v1923
          %v1925 = vpop.f32.mrb[0].mxu0
          %v1926 = vpop.f32.mrb[0].mxu0
          %v1927 = vadd.f32 0.0, %v1926
          %v1928 = vpop.f32.mrb[0].mxu0
          %1929 = vmatprep.mubr.bf16.mxu0 0
          %1930 = vmatmul.mubr.bf16.gmra.mrb[0].mxu0 %v1854
          %v1931 = vpop.f32.mrb[0].mxu0
          %v1932 = vadd.f32 0.0, %v1931
          %v1933 = vpop.f32.mrb[0].mxu0
          %v1934 = vpop.f32.mrb[0].mxu0
          %v1935 = vadd.f32 0.0, %v1934
          %v1936 = vpop.f32.mrb[0].mxu0
          %1937 = vmatprep.mubr.bf16.mxu0 0
          %1938 = vmatmul.mubr.bf16.gmra.mrb[0].mxu0 %v1857
          %v1939 = vpop.f32.mrb[0].mxu0
          %v1940 = vadd.f32 0.0, %v1939
          %v1941 = vpop.f32.mrb[0].mxu0
          %v1942 = vpop.f32.mrb[0].mxu0
          %v1943 = vadd.f32 0.0, %v1942
          %v1944 = vpop.f32.mrb[0].mxu0
          %1945 = vmatprep.mubr.bf16.mxu0 0
          %1946 = vmatmul.mubr.bf16.gmra.mrb[0].mxu0 %v1860
          %v1947 = vpop.f32.mrb[0].mxu0
          %v1948 = vadd.f32 0.0, %v1947
          %v1949 = vpop.f32.mrb[0].mxu0
          %v1950 = vpop.f32.mrb[0].mxu0
          %v1951 = vadd.f32 0.0, %v1950
          %v1952 = vpop.f32.mrb[0].mxu0
          %1953 = vmatprep.mubr.bf16.mxu0 0
          %1954 = vmatmul.mubr.bf16.gmra.mrb[0].mxu0 %v1863
          %v1955 = vpop.f32.mrb[0].mxu0
          %v1956 = vadd.f32 0.0, %v1955
          %v1957 = vpop.f32.mrb[0].mxu0
          %v1958 = vpop.f32.mrb[0].mxu0
          %v1959 = vadd.f32 0.0, %v1958
          %v1960 = vpop.f32.mrb[0].mxu0
          %1961 = vdwg.mxu0
          %v1962 = vadd.f32 %v1784, %v1900
          %v1963 = vadd.f32 %v1785, %v1903
          %v1964 = vadd.f32 %v1786, %v1908
          %v1965 = vadd.f32 %v1787, %v1911
          %v1966 = vadd.f32 %v1788, %v1916
          %v1967 = vadd.f32 %v1789, %v1919
          %v1968 = vadd.f32 %v1790, %v1924
          %v1969 = vadd.f32 %v1791, %v1927
          %v1970 = vadd.f32 %v1792, %v1932
          %v1971 = vadd.f32 %v1793, %v1935
          %v1972 = vadd.f32 %v1794, %v1940
          %v1973 = vadd.f32 %v1795, %v1943
          %v1974 = vadd.f32 %v1796, %v1948
          %v1975 = vadd.f32 %v1797, %v1951
          %v1976 = vadd.f32 %v1798, %v1956
          %v1977 = vadd.f32 %v1799, %v1959
          %v1978 = vld [vmem:[%s0 + $0x11] sm:$0xff]
          %v1979 = vld [vmem:[%s0 + $0x19] sm:$0xff]
          %v1980 = vld [vmem:[%s0 + $0x21] sm:$0xff]
          %v1981 = vld [vmem:[%s0 + $0x29] sm:$0xff]
          %v1982 = vld [vmem:[%s0 + $0x31] sm:$0xff]
          %v1983 = vld [vmem:[%s0 + $0x39] sm:$0xff]
          %v1984 = vld [vmem:[%s0 + $0x41] sm:$0xff]
          %v1985 = vld [vmem:[%s0 + $0x49] sm:$0xff]
          %v1986 = vld [vmem:[%s0 + $0x51] sm:$0xff]
          %v1987 = vld [vmem:[%s0 + $0x59] sm:$0xff]
          %v1988 = vld [vmem:[%s0 + $0x61] sm:$0xff]
          %v1989 = vld [vmem:[%s0 + $0x69] sm:$0xff]
          %v1990 = vld [vmem:[%s0 + $0x71] sm:$0xff]
          %v1991 = vld [vmem:[%s0 + $0x79] sm:$0xff]
          %v1992 = vld [vmem:[%s0 + $0x81] sm:$0xff]
          %v1993 = vld [vmem:[%s0 + $0x89] sm:$0xff]
          %s1994 = scalar_lea.vmem %s1, 640
          %v1995 = vld [vmem:[%s1994] sm:$0xff]
          %v1996 = vld [vmem:[%s1994 + $0x8] sm:$0xff]
          %v1997 = vld [vmem:[%s1994 + $0x10] sm:$0xff]
          %v1998 = vld [vmem:[%s1994 + $0x18] sm:$0xff]
          %v1999 = vld [vmem:[%s1994 + $0x20] sm:$0xff]
          %v2000 = vld [vmem:[%s1994 + $0x28] sm:$0xff]
          %v2001 = vld [vmem:[%s1994 + $0x30] sm:$0xff]
          %v2002 = vld [vmem:[%s1994 + $0x38] sm:$0xff]
          %v2003 = vld [vmem:[%s1994 + $0x40] sm:$0xff]
          %v2004 = vld [vmem:[%s1994 + $0x48] sm:$0xff]
          %v2005 = vld [vmem:[%s1994 + $0x50] sm:$0xff]
          %v2006 = vld [vmem:[%s1994 + $0x58] sm:$0xff]
          %v2007 = vld [vmem:[%s1994 + $0x60] sm:$0xff]
          %v2008 = vld [vmem:[%s1994 + $0x68] sm:$0xff]
          %v2009 = vld [vmem:[%s1994 + $0x70] sm:$0xff]
          %v2010 = vld [vmem:[%s1994 + $0x78] sm:$0xff]
          %2012 = vset.pattern.permute.xlu0 0
          %2013 = vperm.xlu0 %2012, %v1995
          %v2014 = vpop.permute.xlu0 %2013
          %2017 = vset.pattern.permute.xlu0 0
          %2018 = vperm.xlu0 %2017, %v1996
          %v2019 = vpop.permute.xlu0 %2018
          %2022 = vset.pattern.permute.xlu0 0
          %2023 = vperm.xlu0 %2022, %v1997
          %v2024 = vpop.permute.xlu0 %2023
          %2027 = vset.pattern.permute.xlu0 0
          %2028 = vperm.xlu0 %2027, %v1998
          %v2029 = vpop.permute.xlu0 %2028
          %2032 = vset.pattern.permute.xlu0 0
          %2033 = vperm.xlu0 %2032, %v1999
          %v2034 = vpop.permute.xlu0 %2033
          %2037 = vset.pattern.permute.xlu0 0
          %2038 = vperm.xlu0 %2037, %v2000
          %v2039 = vpop.permute.xlu0 %2038
          %2042 = vset.pattern.permute.xlu0 0
          %2043 = vperm.xlu0 %2042, %v2001
          %v2044 = vpop.permute.xlu0 %2043
          %2047 = vset.pattern.permute.xlu0 0
          %2048 = vperm.xlu0 %2047, %v2002
          %v2049 = vpop.permute.xlu0 %2048
          %2052 = vset.pattern.permute.xlu0 0
          %2053 = vperm.xlu0 %2052, %v2003
          %v2054 = vpop.permute.xlu0 %2053
          %2057 = vset.pattern.permute.xlu0 0
          %2058 = vperm.xlu0 %2057, %v2004
          %v2059 = vpop.permute.xlu0 %2058
          %2062 = vset.pattern.permute.xlu0 0
          %2063 = vperm.xlu0 %2062, %v2005
          %v2064 = vpop.permute.xlu0 %2063
          %2067 = vset.pattern.permute.xlu0 0
          %2068 = vperm.xlu0 %2067, %v2006
          %v2069 = vpop.permute.xlu0 %2068
          %2072 = vset.pattern.permute.xlu0 0
          %2073 = vperm.xlu0 %2072, %v2007
          %v2074 = vpop.permute.xlu0 %2073
          %2077 = vset.pattern.permute.xlu0 0
          %2078 = vperm.xlu0 %2077, %v2008
          %v2079 = vpop.permute.xlu0 %2078
          %2082 = vset.pattern.permute.xlu0 0
          %2083 = vperm.xlu0 %2082, %v2009
          %v2084 = vpop.permute.xlu0 %2083
          %2087 = vset.pattern.permute.xlu0 0
          %2088 = vperm.xlu0 %2087, %v2010
          %v2089 = vpop.permute.xlu0 %2088
          %v2091 = vmul.f32 %v1978, %v2014
          %v2092 = vmul.f32 %v1979, %v2019
          %v2093 = vmul.f32 %v1980, %v2024
          %v2094 = vmul.f32 %v1981, %v2029
          %v2095 = vmul.f32 %v1982, %v2034
          %v2096 = vmul.f32 %v1983, %v2039
          %v2097 = vmul.f32 %v1984, %v2044
          %v2098 = vmul.f32 %v1985, %v2049
          %v2099 = vmul.f32 %v1986, %v2054
          %v2100 = vmul.f32 %v1987, %v2059
          %v2101 = vmul.f32 %v1988, %v2064
          %v2102 = vmul.f32 %v1989, %v2069
          %v2103 = vmul.f32 %v1990, %v2074
          %v2104 = vmul.f32 %v1991, %v2079
          %v2105 = vmul.f32 %v1992, %v2084
          %v2106 = vmul.f32 %v1993, %v2089
          %v2107 = vpack.c.bf16 %v2092, %v2091
          %v2108 = vpack.c.bf16 %v2094, %v2093
          %v2109 = vpack.c.bf16 %v2096, %v2095
          %v2110 = vpack.c.bf16 %v2098, %v2097
          %v2111 = vpack.c.bf16 %v2100, %v2099
          %v2112 = vpack.c.bf16 %v2102, %v2101
          %v2113 = vpack.c.bf16 %v2104, %v2103
          %v2114 = vpack.c.bf16 %v2106, %v2105
          %s2115 = scalar_lea.vmem %s2, 80
          %v2116 = vld [vmem:[%s2115] sm:$0xf]
          %v2117 = vld [vmem:[%s2115 + $0x4] sm:$0xf]
          %v2118 = vld [vmem:[%s2115 + $0x8] sm:$0xf]
          %v2119 = vld [vmem:[%s2115 + $0xc] sm:$0xf]
          %v2124 = vunpack.c.l.b16 %v2116
          %v2125 = vunpack.c.l.b16 %v2117
          %v2126 = vunpack.c.l.b16 %v2118
          %v2127 = vunpack.c.l.b16 %v2119
          %v2128 = vpack.c.b16 %v2125, %v2124
          %v2129 = vpack.c.b16 %v2127, %v2126
          %v2133 = vsel %vm629, %v2107, 0
          %v2136 = vsel %vm629, %v2108, 0
          %v2139 = vsel %vm629, %v2109, 0
          %v2142 = vsel %vm629, %v2110, 0
          %v2145 = vsel %vm629, %v2111, 0
          %v2148 = vsel %vm629, %v2112, 0
          %v2151 = vsel %vm629, %v2113, 0
          %v2154 = vsel %vm629, %v2114, 0
          %2156 = vmatprep.subr.bf16.mxu0 0
          %2157 = vmatpush1.bf16.msra.mxu0 %v2128
          %2158 = vmatprep.subr.bf16.mxu0 0
          %2159 = vmatpush1.bf16.msra.mxu0 %v2129
          %2160 = vmatprep.subr.bf16.mxu0 0
          %2161 = vmatpush1.bf16.msra.mxu0 0
          %2162 = vmatprep.subr.bf16.mxu0 0
          %2163 = vmatpush1.bf16.msra.mxu0 0
          %2164 = vmatprep.subr.bf16.mxu0 0
          %2165 = vmatpush1.bf16.msra.mxu0 0
          %2166 = vmatprep.subr.bf16.mxu0 0
          %2167 = vmatpush1.bf16.msra.mxu0 0
          %2168 = vmatprep.subr.bf16.mxu0 0
          %2169 = vmatpush1.bf16.msra.mxu0 0
          %2170 = vmatprep.subr.bf16.mxu0 0
          %2171 = vmatpush1.bf16.msra.mxu0 0
          %2172 = vmatprep.subr.bf16.mxu0 0
          %2173 = vmatpush1.bf16.msra.mxu0 0
          %2174 = vmatprep.subr.bf16.mxu0 0
          %2175 = vmatpush1.bf16.msra.mxu0 0
          %2176 = vmatprep.subr.bf16.mxu0 0
          %2177 = vmatpush1.bf16.msra.mxu0 0
          %2178 = vmatprep.subr.bf16.mxu0 0
          %2179 = vmatpush1.bf16.msra.mxu0 0
          %2180 = vmatprep.subr.bf16.mxu0 0
          %2181 = vmatpush1.bf16.msra.mxu0 0
          %2182 = vmatprep.subr.bf16.mxu0 0
          %2183 = vmatpush1.bf16.msra.mxu0 0
          %2184 = vmatprep.subr.bf16.mxu0 0
          %2185 = vmatpush1.bf16.msra.mxu0 0
          %2186 = vmatprep.subr.bf16.mxu0 0
          %2187 = vmatpush1.bf16.msra.mxu0 0
          %2188 = vmatprep.mubr.bf16.mxu0 0
          %2189 = vmatmul.mubr.bf16.gmra.mrb[0].mxu0 %v2133
          %v2190 = vpop.f32.mrb[0].mxu0
          %v2191 = vadd.f32 0.0, %v2190
          %v2192 = vpop.f32.mrb[0].mxu0
          %v2193 = vpop.f32.mrb[0].mxu0
          %v2194 = vadd.f32 0.0, %v2193
          %v2195 = vpop.f32.mrb[0].mxu0
          %2196 = vmatprep.mubr.bf16.mxu0 0
          %2197 = vmatmul.mubr.bf16.gmra.mrb[0].mxu0 %v2136
          %v2198 = vpop.f32.mrb[0].mxu0
          %v2199 = vadd.f32 0.0, %v2198
          %v2200 = vpop.f32.mrb[0].mxu0
          %v2201 = vpop.f32.mrb[0].mxu0
          %v2202 = vadd.f32 0.0, %v2201
          %v2203 = vpop.f32.mrb[0].mxu0
          %2204 = vmatprep.mubr.bf16.mxu0 0
          %2205 = vmatmul.mubr.bf16.gmra.mrb[0].mxu0 %v2139
          %v2206 = vpop.f32.mrb[0].mxu0
          %v2207 = vadd.f32 0.0, %v2206
          %v2208 = vpop.f32.mrb[0].mxu0
          %v2209 = vpop.f32.mrb[0].mxu0
          %v2210 = vadd.f32 0.0, %v2209
          %v2211 = vpop.f32.mrb[0].mxu0
          %2212 = vmatprep.mubr.bf16.mxu0 0
          %2213 = vmatmul.mubr.bf16.gmra.mrb[0].mxu0 %v2142
          %v2214 = vpop.f32.mrb[0].mxu0
          %v2215 = vadd.f32 0.0, %v2214
          %v2216 = vpop.f32.mrb[0].mxu0
          %v2217 = vpop.f32.mrb[0].mxu0
          %v2218 = vadd.f32 0.0, %v2217
          %v2219 = vpop.f32.mrb[0].mxu0
          %2220 = vmatprep.mubr.bf16.mxu0 0
          %2221 = vmatmul.mubr.bf16.gmra.mrb[0].mxu0 %v2145
          %v2222 = vpop.f32.mrb[0].mxu0
          %v2223 = vadd.f32 0.0, %v2222
          %v2224 = vpop.f32.mrb[0].mxu0
          %v2225 = vpop.f32.mrb[0].mxu0
          %v2226 = vadd.f32 0.0, %v2225
          %v2227 = vpop.f32.mrb[0].mxu0
          %2228 = vmatprep.mubr.bf16.mxu0 0
          %2229 = vmatmul.mubr.bf16.gmra.mrb[0].mxu0 %v2148
          %v2230 = vpop.f32.mrb[0].mxu0
          %v2231 = vadd.f32 0.0, %v2230
          %v2232 = vpop.f32.mrb[0].mxu0
          %v2233 = vpop.f32.mrb[0].mxu0
          %v2234 = vadd.f32 0.0, %v2233
          %v2235 = vpop.f32.mrb[0].mxu0
          %2236 = vmatprep.mubr.bf16.mxu0 0
          %2237 = vmatmul.mubr.bf16.gmra.mrb[0].mxu0 %v2151
          %v2238 = vpop.f32.mrb[0].mxu0
          %v2239 = vadd.f32 0.0, %v2238
          %v2240 = vpop.f32.mrb[0].mxu0
          %v2241 = vpop.f32.mrb[0].mxu0
          %v2242 = vadd.f32 0.0, %v2241
          %v2243 = vpop.f32.mrb[0].mxu0
          %2244 = vmatprep.mubr.bf16.mxu0 0
          %2245 = vmatmul.mubr.bf16.gmra.mrb[0].mxu0 %v2154
          %v2246 = vpop.f32.mrb[0].mxu0
          %v2247 = vadd.f32 0.0, %v2246
          %v2248 = vpop.f32.mrb[0].mxu0
          %v2249 = vpop.f32.mrb[0].mxu0
          %v2250 = vadd.f32 0.0, %v2249
          %v2251 = vpop.f32.mrb[0].mxu0
          %2252 = vdwg.mxu0
          %v2253 = vadd.f32 %v1962, %v2191
          %v2254 = vadd.f32 %v1963, %v2194
          %v2255 = vadd.f32 %v1964, %v2199
          %v2256 = vadd.f32 %v1965, %v2202
          %v2257 = vadd.f32 %v1966, %v2207
          %v2258 = vadd.f32 %v1967, %v2210
          %v2259 = vadd.f32 %v1968, %v2215
          %v2260 = vadd.f32 %v1969, %v2218
          %v2261 = vadd.f32 %v1970, %v2223
          %v2262 = vadd.f32 %v1971, %v2226
          %v2263 = vadd.f32 %v1972, %v2231
          %v2264 = vadd.f32 %v1973, %v2234
          %v2265 = vadd.f32 %v1974, %v2239
          %v2266 = vadd.f32 %v1975, %v2242
          %v2267 = vadd.f32 %v1976, %v2247
          %v2268 = vadd.f32 %v1977, %v2250
          %v2269 = vld [vmem:[%s0 + $0x17] sm:$0xff]
          %v2270 = vld [vmem:[%s0 + $0x1f] sm:$0xff]
          %v2271 = vld [vmem:[%s0 + $0x27] sm:$0xff]
          %v2272 = vld [vmem:[%s0 + $0x2f] sm:$0xff]
          %v2273 = vld [vmem:[%s0 + $0x37] sm:$0xff]
          %v2274 = vld [vmem:[%s0 + $0x3f] sm:$0xff]
          %v2275 = vld [vmem:[%s0 + $0x47] sm:$0xff]
          %v2276 = vld [vmem:[%s0 + $0x4f] sm:$0xff]
          %v2277 = vld [vmem:[%s0 + $0x57] sm:$0xff]
          %v2278 = vld [vmem:[%s0 + $0x5f] sm:$0xff]
          %v2279 = vld [vmem:[%s0 + $0x67] sm:$0xff]
          %v2280 = vld [vmem:[%s0 + $0x6f] sm:$0xff]
          %v2281 = vld [vmem:[%s0 + $0x77] sm:$0xff]
          %v2282 = vld [vmem:[%s0 + $0x7f] sm:$0xff]
          %v2283 = vld [vmem:[%s0 + $0x87] sm:$0xff]
          %v2284 = vld [vmem:[%s0 + $0x8f] sm:$0xff]
          %s2285 = scalar_lea.vmem %s1, 768
          %v2286 = vld [vmem:[%s2285] sm:$0xff]
          %v2287 = vld [vmem:[%s2285 + $0x8] sm:$0xff]
          %v2288 = vld [vmem:[%s2285 + $0x10] sm:$0xff]
          %v2289 = vld [vmem:[%s2285 + $0x18] sm:$0xff]
          %v2290 = vld [vmem:[%s2285 + $0x20] sm:$0xff]
          %v2291 = vld [vmem:[%s2285 + $0x28] sm:$0xff]
          %v2292 = vld [vmem:[%s2285 + $0x30] sm:$0xff]
          %v2293 = vld [vmem:[%s2285 + $0x38] sm:$0xff]
          %v2294 = vld [vmem:[%s2285 + $0x40] sm:$0xff]
          %v2295 = vld [vmem:[%s2285 + $0x48] sm:$0xff]
          %v2296 = vld [vmem:[%s2285 + $0x50] sm:$0xff]
          %v2297 = vld [vmem:[%s2285 + $0x58] sm:$0xff]
          %v2298 = vld [vmem:[%s2285 + $0x60] sm:$0xff]
          %v2299 = vld [vmem:[%s2285 + $0x68] sm:$0xff]
          %v2300 = vld [vmem:[%s2285 + $0x70] sm:$0xff]
          %v2301 = vld [vmem:[%s2285 + $0x78] sm:$0xff]
          %2303 = vset.pattern.permute.xlu0 0
          %2304 = vperm.xlu0 %2303, %v2286
          %v2305 = vpop.permute.xlu0 %2304
          %2308 = vset.pattern.permute.xlu0 0
          %2309 = vperm.xlu0 %2308, %v2287
          %v2310 = vpop.permute.xlu0 %2309
          %2313 = vset.pattern.permute.xlu0 0
          %2314 = vperm.xlu0 %2313, %v2288
          %v2315 = vpop.permute.xlu0 %2314
          %2318 = vset.pattern.permute.xlu0 0
          %2319 = vperm.xlu0 %2318, %v2289
          %v2320 = vpop.permute.xlu0 %2319
          %2323 = vset.pattern.permute.xlu0 0
          %2324 = vperm.xlu0 %2323, %v2290
          %v2325 = vpop.permute.xlu0 %2324
          %2328 = vset.pattern.permute.xlu0 0
          %2329 = vperm.xlu0 %2328, %v2291
          %v2330 = vpop.permute.xlu0 %2329
          %2333 = vset.pattern.permute.xlu0 0
          %2334 = vperm.xlu0 %2333, %v2292
          %v2335 = vpop.permute.xlu0 %2334
          %2338 = vset.pattern.permute.xlu0 0
          %2339 = vperm.xlu0 %2338, %v2293
          %v2340 = vpop.permute.xlu0 %2339
          %2343 = vset.pattern.permute.xlu0 0
          %2344 = vperm.xlu0 %2343, %v2294
          %v2345 = vpop.permute.xlu0 %2344
          %2348 = vset.pattern.permute.xlu0 0
          %2349 = vperm.xlu0 %2348, %v2295
          %v2350 = vpop.permute.xlu0 %2349
          %2353 = vset.pattern.permute.xlu0 0
          %2354 = vperm.xlu0 %2353, %v2296
          %v2355 = vpop.permute.xlu0 %2354
          %2358 = vset.pattern.permute.xlu0 0
          %2359 = vperm.xlu0 %2358, %v2297
          %v2360 = vpop.permute.xlu0 %2359
          %2363 = vset.pattern.permute.xlu0 0
          %2364 = vperm.xlu0 %2363, %v2298
          %v2365 = vpop.permute.xlu0 %2364
          %2368 = vset.pattern.permute.xlu0 0
          %2369 = vperm.xlu0 %2368, %v2299
          %v2370 = vpop.permute.xlu0 %2369
          %2373 = vset.pattern.permute.xlu0 0
          %2374 = vperm.xlu0 %2373, %v2300
          %v2375 = vpop.permute.xlu0 %2374
          %2378 = vset.pattern.permute.xlu0 0
          %2379 = vperm.xlu0 %2378, %v2301
          %v2380 = vpop.permute.xlu0 %2379
          %v2382 = vmul.f32 %v2269, %v2305
          %v2383 = vmul.f32 %v2270, %v2310
          %v2384 = vmul.f32 %v2271, %v2315
          %v2385 = vmul.f32 %v2272, %v2320
          %v2386 = vmul.f32 %v2273, %v2325
          %v2387 = vmul.f32 %v2274, %v2330
          %v2388 = vmul.f32 %v2275, %v2335
          %v2389 = vmul.f32 %v2276, %v2340
          %v2390 = vmul.f32 %v2277, %v2345
          %v2391 = vmul.f32 %v2278, %v2350
          %v2392 = vmul.f32 %v2279, %v2355
          %v2393 = vmul.f32 %v2280, %v2360
          %v2394 = vmul.f32 %v2281, %v2365
          %v2395 = vmul.f32 %v2282, %v2370
          %v2396 = vmul.f32 %v2283, %v2375
          %v2397 = vmul.f32 %v2284, %v2380
          %v2398 = vpack.c.bf16 %v2383, %v2382
          %v2399 = vpack.c.bf16 %v2385, %v2384
          %v2400 = vpack.c.bf16 %v2387, %v2386
          %v2401 = vpack.c.bf16 %v2389, %v2388
          %v2402 = vpack.c.bf16 %v2391, %v2390
          %v2403 = vpack.c.bf16 %v2393, %v2392
          %v2404 = vpack.c.bf16 %v2395, %v2394
          %v2405 = vpack.c.bf16 %v2397, %v2396
          %s2406 = scalar_lea.vmem %s2, 96
          %v2407 = vld [vmem:[%s2406] sm:$0xf]
          %v2408 = vld [vmem:[%s2406 + $0x4] sm:$0xf]
          %v2409 = vld [vmem:[%s2406 + $0x8] sm:$0xf]
          %v2410 = vld [vmem:[%s2406 + $0xc] sm:$0xf]
          %v2415 = vunpack.c.l.b16 %v2407
          %v2416 = vunpack.c.l.b16 %v2408
          %v2417 = vunpack.c.l.b16 %v2409
          %v2418 = vunpack.c.l.b16 %v2410
          %v2419 = vpack.c.b16 %v2416, %v2415
          %v2420 = vpack.c.b16 %v2418, %v2417
          %v2424 = vsel %vm629, %v2398, 0
          %v2427 = vsel %vm629, %v2399, 0
          %v2430 = vsel %vm629, %v2400, 0
          %v2433 = vsel %vm629, %v2401, 0
          %v2436 = vsel %vm629, %v2402, 0
          %v2439 = vsel %vm629, %v2403, 0
          %v2442 = vsel %vm629, %v2404, 0
          %v2445 = vsel %vm629, %v2405, 0
          %2447 = vmatprep.subr.bf16.mxu0 0
          %2448 = vmatpush1.bf16.msra.mxu0 %v2419
          %2449 = vmatprep.subr.bf16.mxu0 0
          %2450 = vmatpush1.bf16.msra.mxu0 %v2420
          %2451 = vmatprep.subr.bf16.mxu0 0
          %2452 = vmatpush1.bf16.msra.mxu0 0
          %2453 = vmatprep.subr.bf16.mxu0 0
          %2454 = vmatpush1.bf16.msra.mxu0 0
          %2455 = vmatprep.subr.bf16.mxu0 0
          %2456 = vmatpush1.bf16.msra.mxu0 0
          %2457 = vmatprep.subr.bf16.mxu0 0
          %2458 = vmatpush1.bf16.msra.mxu0 0
          %2459 = vmatprep.subr.bf16.mxu0 0
          %2460 = vmatpush1.bf16.msra.mxu0 0
          %2461 = vmatprep.subr.bf16.mxu0 0
          %2462 = vmatpush1.bf16.msra.mxu0 0
          %2463 = vmatprep.subr.bf16.mxu0 0
          %2464 = vmatpush1.bf16.msra.mxu0 0
          %2465 = vmatprep.subr.bf16.mxu0 0
          %2466 = vmatpush1.bf16.msra.mxu0 0
          %2467 = vmatprep.subr.bf16.mxu0 0
          %2468 = vmatpush1.bf16.msra.mxu0 0
          %2469 = vmatprep.subr.bf16.mxu0 0
          %2470 = vmatpush1.bf16.msra.mxu0 0
          %2471 = vmatprep.subr.bf16.mxu0 0
          %2472 = vmatpush1.bf16.msra.mxu0 0
          %2473 = vmatprep.subr.bf16.mxu0 0
          %2474 = vmatpush1.bf16.msra.mxu0 0
          %2475 = vmatprep.subr.bf16.mxu0 0
          %2476 = vmatpush1.bf16.msra.mxu0 0
          %2477 = vmatprep.subr.bf16.mxu0 0
          %2478 = vmatpush1.bf16.msra.mxu0 0
          %2479 = vmatprep.mubr.bf16.mxu0 0
          %2480 = vmatmul.mubr.bf16.gmra.mrb[0].mxu0 %v2424
          %v2481 = vpop.f32.mrb[0].mxu0
          %v2482 = vadd.f32 0.0, %v2481
          %v2483 = vpop.f32.mrb[0].mxu0
          %v2484 = vpop.f32.mrb[0].mxu0
          %v2485 = vadd.f32 0.0, %v2484
          %v2486 = vpop.f32.mrb[0].mxu0
          %2487 = vmatprep.mubr.bf16.mxu0 0
          %2488 = vmatmul.mubr.bf16.gmra.mrb[0].mxu0 %v2427
          %v2489 = vpop.f32.mrb[0].mxu0
          %v2490 = vadd.f32 0.0, %v2489
          %v2491 = vpop.f32.mrb[0].mxu0
          %v2492 = vpop.f32.mrb[0].mxu0
          %v2493 = vadd.f32 0.0, %v2492
          %v2494 = vpop.f32.mrb[0].mxu0
          %2495 = vmatprep.mubr.bf16.mxu0 0
          %2496 = vmatmul.mubr.bf16.gmra.mrb[0].mxu0 %v2430
          %v2497 = vpop.f32.mrb[0].mxu0
          %v2498 = vadd.f32 0.0, %v2497
          %v2499 = vpop.f32.mrb[0].mxu0
          %v2500 = vpop.f32.mrb[0].mxu0
          %v2501 = vadd.f32 0.0, %v2500
          %v2502 = vpop.f32.mrb[0].mxu0
          %2503 = vmatprep.mubr.bf16.mxu0 0
          %2504 = vmatmul.mubr.bf16.gmra.mrb[0].mxu0 %v2433
          %v2505 = vpop.f32.mrb[0].mxu0
          %v2506 = vadd.f32 0.0, %v2505
          %v2507 = vpop.f32.mrb[0].mxu0
          %v2508 = vpop.f32.mrb[0].mxu0
          %v2509 = vadd.f32 0.0, %v2508
          %v2510 = vpop.f32.mrb[0].mxu0
          %2511 = vmatprep.mubr.bf16.mxu0 0
          %2512 = vmatmul.mubr.bf16.gmra.mrb[0].mxu0 %v2436
          %v2513 = vpop.f32.mrb[0].mxu0
          %v2514 = vadd.f32 0.0, %v2513
          %v2515 = vpop.f32.mrb[0].mxu0
          %v2516 = vpop.f32.mrb[0].mxu0
          %v2517 = vadd.f32 0.0, %v2516
          %v2518 = vpop.f32.mrb[0].mxu0
          %2519 = vmatprep.mubr.bf16.mxu0 0
          %2520 = vmatmul.mubr.bf16.gmra.mrb[0].mxu0 %v2439
          %v2521 = vpop.f32.mrb[0].mxu0
          %v2522 = vadd.f32 0.0, %v2521
          %v2523 = vpop.f32.mrb[0].mxu0
          %v2524 = vpop.f32.mrb[0].mxu0
          %v2525 = vadd.f32 0.0, %v2524
          %v2526 = vpop.f32.mrb[0].mxu0
          %2527 = vmatprep.mubr.bf16.mxu0 0
          %2528 = vmatmul.mubr.bf16.gmra.mrb[0].mxu0 %v2442
          %v2529 = vpop.f32.mrb[0].mxu0
          %v2530 = vadd.f32 0.0, %v2529
          %v2531 = vpop.f32.mrb[0].mxu0
          %v2532 = vpop.f32.mrb[0].mxu0
          %v2533 = vadd.f32 0.0, %v2532
          %v2534 = vpop.f32.mrb[0].mxu0
          %2535 = vmatprep.mubr.bf16.mxu0 0
          %2536 = vmatmul.mubr.bf16.gmra.mrb[0].mxu0 %v2445
          %v2537 = vpop.f32.mrb[0].mxu0
          %v2538 = vadd.f32 0.0, %v2537
          %v2539 = vpop.f32.mrb[0].mxu0
          %v2540 = vpop.f32.mrb[0].mxu0
          %v2541 = vadd.f32 0.0, %v2540
          %v2542 = vpop.f32.mrb[0].mxu0
          %2543 = vdwg.mxu0
          %v2544 = vadd.f32 %v2253, %v2482
          %v2545 = vadd.f32 %v2254, %v2485
          %v2546 = vadd.f32 %v2255, %v2490
          %v2547 = vadd.f32 %v2256, %v2493
          %v2548 = vadd.f32 %v2257, %v2498
          %v2549 = vadd.f32 %v2258, %v2501
          %v2550 = vadd.f32 %v2259, %v2506
          %v2551 = vadd.f32 %v2260, %v2509
          %v2552 = vadd.f32 %v2261, %v2514
          %v2553 = vadd.f32 %v2262, %v2517
          %v2554 = vadd.f32 %v2263, %v2522
          %v2555 = vadd.f32 %v2264, %v2525
          %v2556 = vadd.f32 %v2265, %v2530
          %v2557 = vadd.f32 %v2266, %v2533
          %v2558 = vadd.f32 %v2267, %v2538
          %v2559 = vadd.f32 %v2268, %v2541
          %v2560 = vld [vmem:[%s0 + $0x18] sm:$0xff]
          %v2561 = vld [vmem:[%s0 + $0x20] sm:$0xff]
          %v2562 = vld [vmem:[%s0 + $0x28] sm:$0xff]
          %v2563 = vld [vmem:[%s0 + $0x30] sm:$0xff]
          %v2564 = vld [vmem:[%s0 + $0x38] sm:$0xff]
          %v2565 = vld [vmem:[%s0 + $0x40] sm:$0xff]
          %v2566 = vld [vmem:[%s0 + $0x48] sm:$0xff]
          %v2567 = vld [vmem:[%s0 + $0x50] sm:$0xff]
          %v2568 = vld [vmem:[%s0 + $0x58] sm:$0xff]
          %v2569 = vld [vmem:[%s0 + $0x60] sm:$0xff]
          %v2570 = vld [vmem:[%s0 + $0x68] sm:$0xff]
          %v2571 = vld [vmem:[%s0 + $0x70] sm:$0xff]
          %v2572 = vld [vmem:[%s0 + $0x78] sm:$0xff]
          %v2573 = vld [vmem:[%s0 + $0x80] sm:$0xff]
          %v2574 = vld [vmem:[%s0 + $0x88] sm:$0xff]
          %v2575 = vld [vmem:[%s0 + $0x90] sm:$0xff]
          %s2576 = scalar_lea.vmem %s1, 896
          %v2577 = vld [vmem:[%s2576] sm:$0xff]
          %v2578 = vld [vmem:[%s2576 + $0x8] sm:$0xff]
          %v2579 = vld [vmem:[%s2576 + $0x10] sm:$0xff]
          %v2580 = vld [vmem:[%s2576 + $0x18] sm:$0xff]
          %v2581 = vld [vmem:[%s2576 + $0x20] sm:$0xff]
          %v2582 = vld [vmem:[%s2576 + $0x28] sm:$0xff]
          %v2583 = vld [vmem:[%s2576 + $0x30] sm:$0xff]
          %v2584 = vld [vmem:[%s2576 + $0x38] sm:$0xff]
          %v2585 = vld [vmem:[%s2576 + $0x40] sm:$0xff]
          %v2586 = vld [vmem:[%s2576 + $0x48] sm:$0xff]
          %v2587 = vld [vmem:[%s2576 + $0x50] sm:$0xff]
          %v2588 = vld [vmem:[%s2576 + $0x58] sm:$0xff]
          %v2589 = vld [vmem:[%s2576 + $0x60] sm:$0xff]
          %v2590 = vld [vmem:[%s2576 + $0x68] sm:$0xff]
          %v2591 = vld [vmem:[%s2576 + $0x70] sm:$0xff]
          %v2592 = vld [vmem:[%s2576 + $0x78] sm:$0xff]
          %2594 = vset.pattern.permute.xlu0 0
          %2595 = vperm.xlu0 %2594, %v2577
          %v2596 = vpop.permute.xlu0 %2595
          %2599 = vset.pattern.permute.xlu0 0
          %2600 = vperm.xlu0 %2599, %v2578
          %v2601 = vpop.permute.xlu0 %2600
          %2604 = vset.pattern.permute.xlu0 0
          %2605 = vperm.xlu0 %2604, %v2579
          %v2606 = vpop.permute.xlu0 %2605
          %2609 = vset.pattern.permute.xlu0 0
          %2610 = vperm.xlu0 %2609, %v2580
          %v2611 = vpop.permute.xlu0 %2610
          %2614 = vset.pattern.permute.xlu0 0
          %2615 = vperm.xlu0 %2614, %v2581
          %v2616 = vpop.permute.xlu0 %2615
          %2619 = vset.pattern.permute.xlu0 0
          %2620 = vperm.xlu0 %2619, %v2582
          %v2621 = vpop.permute.xlu0 %2620
          %2624 = vset.pattern.permute.xlu0 0
          %2625 = vperm.xlu0 %2624, %v2583
          %v2626 = vpop.permute.xlu0 %2625
          %2629 = vset.pattern.permute.xlu0 0
          %2630 = vperm.xlu0 %2629, %v2584
          %v2631 = vpop.permute.xlu0 %2630
          %2634 = vset.pattern.permute.xlu0 0
          %2635 = vperm.xlu0 %2634, %v2585
          %v2636 = vpop.permute.xlu0 %2635
          %2639 = vset.pattern.permute.xlu0 0
          %2640 = vperm.xlu0 %2639, %v2586
          %v2641 = vpop.permute.xlu0 %2640
          %2644 = vset.pattern.permute.xlu0 0
          %2645 = vperm.xlu0 %2644, %v2587
          %v2646 = vpop.permute.xlu0 %2645
          %2649 = vset.pattern.permute.xlu0 0
          %2650 = vperm.xlu0 %2649, %v2588
          %v2651 = vpop.permute.xlu0 %2650
          %2654 = vset.pattern.permute.xlu0 0
          %2655 = vperm.xlu0 %2654, %v2589
          %v2656 = vpop.permute.xlu0 %2655
          %2659 = vset.pattern.permute.xlu0 0
          %2660 = vperm.xlu0 %2659, %v2590
          %v2661 = vpop.permute.xlu0 %2660
          %2664 = vset.pattern.permute.xlu0 0
          %2665 = vperm.xlu0 %2664, %v2591
          %v2666 = vpop.permute.xlu0 %2665
          %2669 = vset.pattern.permute.xlu0 0
          %2670 = vperm.xlu0 %2669, %v2592
          %v2671 = vpop.permute.xlu0 %2670
          %v2673 = vmul.f32 %v2560, %v2596
          %v2674 = vmul.f32 %v2561, %v2601
          %v2675 = vmul.f32 %v2562, %v2606
          %v2676 = vmul.f32 %v2563, %v2611
          %v2677 = vmul.f32 %v2564, %v2616
          %v2678 = vmul.f32 %v2565, %v2621
          %v2679 = vmul.f32 %v2566, %v2626
          %v2680 = vmul.f32 %v2567, %v2631
          %v2681 = vmul.f32 %v2568, %v2636
          %v2682 = vmul.f32 %v2569, %v2641
          %v2683 = vmul.f32 %v2570, %v2646
          %v2684 = vmul.f32 %v2571, %v2651
          %v2685 = vmul.f32 %v2572, %v2656
          %v2686 = vmul.f32 %v2573, %v2661
          %v2687 = vmul.f32 %v2574, %v2666
          %v2688 = vmul.f32 %v2575, %v2671
          %v2689 = vpack.c.bf16 %v2674, %v2673
          %v2690 = vpack.c.bf16 %v2676, %v2675
          %v2691 = vpack.c.bf16 %v2678, %v2677
          %v2692 = vpack.c.bf16 %v2680, %v2679
          %v2693 = vpack.c.bf16 %v2682, %v2681
          %v2694 = vpack.c.bf16 %v2684, %v2683
          %v2695 = vpack.c.bf16 %v2686, %v2685
          %v2696 = vpack.c.bf16 %v2688, %v2687
          %s2697 = scalar_lea.vmem %s2, 112
          %v2698 = vld [vmem:[%s2697] sm:$0xf]
          %v2699 = vld [vmem:[%s2697 + $0x4] sm:$0xf]
          %v2700 = vld [vmem:[%s2697 + $0x8] sm:$0xf]
          %v2701 = vld [vmem:[%s2697 + $0xc] sm:$0xf]
          %v2706 = vunpack.c.l.b16 %v2698
          %v2707 = vunpack.c.l.b16 %v2699
          %v2708 = vunpack.c.l.b16 %v2700
          %v2709 = vunpack.c.l.b16 %v2701
          %v2710 = vpack.c.b16 %v2707, %v2706
          %v2711 = vpack.c.b16 %v2709, %v2708
          %v2715 = vsel %vm629, %v2689, 0
          %v2718 = vsel %vm629, %v2690, 0
          %v2721 = vsel %vm629, %v2691, 0
          %v2724 = vsel %vm629, %v2692, 0
          %v2727 = vsel %vm629, %v2693, 0
          %v2730 = vsel %vm629, %v2694, 0
          %v2733 = vsel %vm629, %v2695, 0
          %v2736 = vsel %vm629, %v2696, 0
          %2738 = vmatprep.subr.bf16.mxu0 0
          %2739 = vmatpush1.bf16.msra.mxu0 %v2710
          %2740 = vmatprep.subr.bf16.mxu0 0
          %2741 = vmatpush1.bf16.msra.mxu0 %v2711
          %2742 = vmatprep.subr.bf16.mxu0 0
          %2743 = vmatpush1.bf16.msra.mxu0 0
          %2744 = vmatprep.subr.bf16.mxu0 0
          %2745 = vmatpush1.bf16.msra.mxu0 0
          %2746 = vmatprep.subr.bf16.mxu0 0
          %2747 = vmatpush1.bf16.msra.mxu0 0
          %2748 = vmatprep.subr.bf16.mxu0 0
          %2749 = vmatpush1.bf16.msra.mxu0 0
          %2750 = vmatprep.subr.bf16.mxu0 0
          %2751 = vmatpush1.bf16.msra.mxu0 0
          %2752 = vmatprep.subr.bf16.mxu0 0
          %2753 = vmatpush1.bf16.msra.mxu0 0
          %2754 = vmatprep.subr.bf16.mxu0 0
          %2755 = vmatpush1.bf16.msra.mxu0 0
          %2756 = vmatprep.subr.bf16.mxu0 0
          %2757 = vmatpush1.bf16.msra.mxu0 0
          %2758 = vmatprep.subr.bf16.mxu0 0
          %2759 = vmatpush1.bf16.msra.mxu0 0
          %2760 = vmatprep.subr.bf16.mxu0 0
          %2761 = vmatpush1.bf16.msra.mxu0 0
          %2762 = vmatprep.subr.bf16.mxu0 0
          %2763 = vmatpush1.bf16.msra.mxu0 0
          %2764 = vmatprep.subr.bf16.mxu0 0
          %2765 = vmatpush1.bf16.msra.mxu0 0
          %2766 = vmatprep.subr.bf16.mxu0 0
          %2767 = vmatpush1.bf16.msra.mxu0 0
          %2768 = vmatprep.subr.bf16.mxu0 0
          %2769 = vmatpush1.bf16.msra.mxu0 0
          %2770 = vmatprep.mubr.bf16.mxu0 0
          %2771 = vmatmul.mubr.bf16.gmra.mrb[0].mxu0 %v2715
          %v2772 = vpop.f32.mrb[0].mxu0
          %v2773 = vadd.f32 0.0, %v2772
          %v2774 = vpop.f32.mrb[0].mxu0
          %v2775 = vpop.f32.mrb[0].mxu0
          %v2776 = vadd.f32 0.0, %v2775
          %v2777 = vpop.f32.mrb[0].mxu0
          %2778 = vmatprep.mubr.bf16.mxu0 0
          %2779 = vmatmul.mubr.bf16.gmra.mrb[0].mxu0 %v2718
          %v2780 = vpop.f32.mrb[0].mxu0
          %v2781 = vadd.f32 0.0, %v2780
          %v2782 = vpop.f32.mrb[0].mxu0
          %v2783 = vpop.f32.mrb[0].mxu0
          %v2784 = vadd.f32 0.0, %v2783
          %v2785 = vpop.f32.mrb[0].mxu0
          %2786 = vmatprep.mubr.bf16.mxu0 0
          %2787 = vmatmul.mubr.bf16.gmra.mrb[0].mxu0 %v2721
          %v2788 = vpop.f32.mrb[0].mxu0
          %v2789 = vadd.f32 0.0, %v2788
          %v2790 = vpop.f32.mrb[0].mxu0
          %v2791 = vpop.f32.mrb[0].mxu0
          %v2792 = vadd.f32 0.0, %v2791
          %v2793 = vpop.f32.mrb[0].mxu0
          %2794 = vmatprep.mubr.bf16.mxu0 0
          %2795 = vmatmul.mubr.bf16.gmra.mrb[0].mxu0 %v2724
          %v2796 = vpop.f32.mrb[0].mxu0
          %v2797 = vadd.f32 0.0, %v2796
          %v2798 = vpop.f32.mrb[0].mxu0
          %v2799 = vpop.f32.mrb[0].mxu0
          %v2800 = vadd.f32 0.0, %v2799
          %v2801 = vpop.f32.mrb[0].mxu0
          %2802 = vmatprep.mubr.bf16.mxu0 0
          %2803 = vmatmul.mubr.bf16.gmra.mrb[0].mxu0 %v2727
          %v2804 = vpop.f32.mrb[0].mxu0
          %v2805 = vadd.f32 0.0, %v2804
          %v2806 = vpop.f32.mrb[0].mxu0
          %v2807 = vpop.f32.mrb[0].mxu0
          %v2808 = vadd.f32 0.0, %v2807
          %v2809 = vpop.f32.mrb[0].mxu0
          %2810 = vmatprep.mubr.bf16.mxu0 0
          %2811 = vmatmul.mubr.bf16.gmra.mrb[0].mxu0 %v2730
          %v2812 = vpop.f32.mrb[0].mxu0
          %v2813 = vadd.f32 0.0, %v2812
          %v2814 = vpop.f32.mrb[0].mxu0
          %v2815 = vpop.f32.mrb[0].mxu0
          %v2816 = vadd.f32 0.0, %v2815
          %v2817 = vpop.f32.mrb[0].mxu0
          %2818 = vmatprep.mubr.bf16.mxu0 0
          %2819 = vmatmul.mubr.bf16.gmra.mrb[0].mxu0 %v2733
          %v2820 = vpop.f32.mrb[0].mxu0
          %v2821 = vadd.f32 0.0, %v2820
          %v2822 = vpop.f32.mrb[0].mxu0
          %v2823 = vpop.f32.mrb[0].mxu0
          %v2824 = vadd.f32 0.0, %v2823
          %v2825 = vpop.f32.mrb[0].mxu0
          %2826 = vmatprep.mubr.bf16.mxu0 0
          %2827 = vmatmul.mubr.bf16.gmra.mrb[0].mxu0 %v2736
          %v2828 = vpop.f32.mrb[0].mxu0
          %v2829 = vadd.f32 0.0, %v2828
          %v2830 = vpop.f32.mrb[0].mxu0
          %v2831 = vpop.f32.mrb[0].mxu0
          %v2832 = vadd.f32 0.0, %v2831
          %v2833 = vpop.f32.mrb[0].mxu0
          %2834 = vdwg.mxu0
          %v2835 = vadd.f32 %v2544, %v2773
          %v2836 = vadd.f32 %v2545, %v2776
          %v2837 = vadd.f32 %v2546, %v2781
          %v2838 = vadd.f32 %v2547, %v2784
          %v2839 = vadd.f32 %v2548, %v2789
          %v2840 = vadd.f32 %v2549, %v2792
          %v2841 = vadd.f32 %v2550, %v2797
          %v2842 = vadd.f32 %v2551, %v2800
          %v2843 = vadd.f32 %v2552, %v2805
          %v2844 = vadd.f32 %v2553, %v2808
          %v2845 = vadd.f32 %v2554, %v2813
          %v2846 = vadd.f32 %v2555, %v2816
          %v2847 = vadd.f32 %v2556, %v2821
          %v2848 = vadd.f32 %v2557, %v2824
          %v2849 = vadd.f32 %v2558, %v2829
          %v2850 = vadd.f32 %v2559, %v2832
          %v2851 = vld [vmem:[%s0 + $0x19] sm:$0xff]
          %v2852 = vld [vmem:[%s0 + $0x21] sm:$0xff]
          %v2853 = vld [vmem:[%s0 + $0x29] sm:$0xff]
          %v2854 = vld [vmem:[%s0 + $0x31] sm:$0xff]
          %v2855 = vld [vmem:[%s0 + $0x39] sm:$0xff]
          %v2856 = vld [vmem:[%s0 + $0x41] sm:$0xff]
          %v2857 = vld [vmem:[%s0 + $0x49] sm:$0xff]
          %v2858 = vld [vmem:[%s0 + $0x51] sm:$0xff]
          %v2859 = vld [vmem:[%s0 + $0x59] sm:$0xff]
          %v2860 = vld [vmem:[%s0 + $0x61] sm:$0xff]
          %v2861 = vld [vmem:[%s0 + $0x69] sm:$0xff]
          %v2862 = vld [vmem:[%s0 + $0x71] sm:$0xff]
          %v2863 = vld [vmem:[%s0 + $0x79] sm:$0xff]
          %v2864 = vld [vmem:[%s0 + $0x81] sm:$0xff]
          %v2865 = vld [vmem:[%s0 + $0x89] sm:$0xff]
          %v2866 = vld [vmem:[%s0 + $0x91] sm:$0xff]
          %s2867 = scalar_lea.vmem %s1, 1024
          %v2868 = vld [vmem:[%s2867] sm:$0xff]
          %v2869 = vld [vmem:[%s2867 + $0x8] sm:$0xff]
          %v2870 = vld [vmem:[%s2867 + $0x10] sm:$0xff]
          %v2871 = vld [vmem:[%s2867 + $0x18] sm:$0xff]
          %v2872 = vld [vmem:[%s2867 + $0x20] sm:$0xff]
          %v2873 = vld [vmem:[%s2867 + $0x28] sm:$0xff]
          %v2874 = vld [vmem:[%s2867 + $0x30] sm:$0xff]
          %v2875 = vld [vmem:[%s2867 + $0x38] sm:$0xff]
          %v2876 = vld [vmem:[%s2867 + $0x40] sm:$0xff]
          %v2877 = vld [vmem:[%s2867 + $0x48] sm:$0xff]
          %v2878 = vld [vmem:[%s2867 + $0x50] sm:$0xff]
          %v2879 = vld [vmem:[%s2867 + $0x58] sm:$0xff]
          %v2880 = vld [vmem:[%s2867 + $0x60] sm:$0xff]
          %v2881 = vld [vmem:[%s2867 + $0x68] sm:$0xff]
          %v2882 = vld [vmem:[%s2867 + $0x70] sm:$0xff]
          %v2883 = vld [vmem:[%s2867 + $0x78] sm:$0xff]
          %2885 = vset.pattern.permute.xlu0 0
          %2886 = vperm.xlu0 %2885, %v2868
          %v2887 = vpop.permute.xlu0 %2886
          %2890 = vset.pattern.permute.xlu0 0
          %2891 = vperm.xlu0 %2890, %v2869
          %v2892 = vpop.permute.xlu0 %2891
          %2895 = vset.pattern.permute.xlu0 0
          %2896 = vperm.xlu0 %2895, %v2870
          %v2897 = vpop.permute.xlu0 %2896
          %2900 = vset.pattern.permute.xlu0 0
          %2901 = vperm.xlu0 %2900, %v2871
          %v2902 = vpop.permute.xlu0 %2901
          %2905 = vset.pattern.permute.xlu0 0
          %2906 = vperm.xlu0 %2905, %v2872
          %v2907 = vpop.permute.xlu0 %2906
          %2910 = vset.pattern.permute.xlu0 0
          %2911 = vperm.xlu0 %2910, %v2873
          %v2912 = vpop.permute.xlu0 %2911
          %2915 = vset.pattern.permute.xlu0 0
          %2916 = vperm.xlu0 %2915, %v2874
          %v2917 = vpop.permute.xlu0 %2916
          %2920 = vset.pattern.permute.xlu0 0
          %2921 = vperm.xlu0 %2920, %v2875
          %v2922 = vpop.permute.xlu0 %2921
          %2925 = vset.pattern.permute.xlu0 0
          %2926 = vperm.xlu0 %2925, %v2876
          %v2927 = vpop.permute.xlu0 %2926
          %2930 = vset.pattern.permute.xlu0 0
          %2931 = vperm.xlu0 %2930, %v2877
          %v2932 = vpop.permute.xlu0 %2931
          %2935 = vset.pattern.permute.xlu0 0
          %2936 = vperm.xlu0 %2935, %v2878
          %v2937 = vpop.permute.xlu0 %2936
          %2940 = vset.pattern.permute.xlu0 0
          %2941 = vperm.xlu0 %2940, %v2879
          %v2942 = vpop.permute.xlu0 %2941
          %2945 = vset.pattern.permute.xlu0 0
          %2946 = vperm.xlu0 %2945, %v2880
          %v2947 = vpop.permute.xlu0 %2946
          %2950 = vset.pattern.permute.xlu0 0
          %2951 = vperm.xlu0 %2950, %v2881
          %v2952 = vpop.permute.xlu0 %2951
          %2955 = vset.pattern.permute.xlu0 0
          %2956 = vperm.xlu0 %2955, %v2882
          %v2957 = vpop.permute.xlu0 %2956
          %2960 = vset.pattern.permute.xlu0 0
          %2961 = vperm.xlu0 %2960, %v2883
          %v2962 = vpop.permute.xlu0 %2961
          %v2964 = vmul.f32 %v2851, %v2887
          %v2965 = vmul.f32 %v2852, %v2892
          %v2966 = vmul.f32 %v2853, %v2897
          %v2967 = vmul.f32 %v2854, %v2902
          %v2968 = vmul.f32 %v2855, %v2907
          %v2969 = vmul.f32 %v2856, %v2912
          %v2970 = vmul.f32 %v2857, %v2917
          %v2971 = vmul.f32 %v2858, %v2922
          %v2972 = vmul.f32 %v2859, %v2927
          %v2973 = vmul.f32 %v2860, %v2932
          %v2974 = vmul.f32 %v2861, %v2937
          %v2975 = vmul.f32 %v2862, %v2942
          %v2976 = vmul.f32 %v2863, %v2947
          %v2977 = vmul.f32 %v2864, %v2952
          %v2978 = vmul.f32 %v2865, %v2957
          %v2979 = vmul.f32 %v2866, %v2962
          %v2980 = vpack.c.bf16 %v2965, %v2964
          %v2981 = vpack.c.bf16 %v2967, %v2966
          %v2982 = vpack.c.bf16 %v2969, %v2968
          %v2983 = vpack.c.bf16 %v2971, %v2970
          %v2984 = vpack.c.bf16 %v2973, %v2972
          %v2985 = vpack.c.bf16 %v2975, %v2974
          %v2986 = vpack.c.bf16 %v2977, %v2976
          %v2987 = vpack.c.bf16 %v2979, %v2978
          %s2988 = scalar_lea.vmem %s2, 128
          %v2989 = vld [vmem:[%s2988] sm:$0xf]
          %v2990 = vld [vmem:[%s2988 + $0x4] sm:$0xf]
          %v2991 = vld [vmem:[%s2988 + $0x8] sm:$0xf]
          %v2992 = vld [vmem:[%s2988 + $0xc] sm:$0xf]
          %v2997 = vunpack.c.l.b16 %v2989
          %v2998 = vunpack.c.l.b16 %v2990
          %v2999 = vunpack.c.l.b16 %v2991
          %v3000 = vunpack.c.l.b16 %v2992
          %v3001 = vpack.c.b16 %v2998, %v2997
          %v3002 = vpack.c.b16 %v3000, %v2999
          %v3006 = vsel %vm629, %v2980, 0
          %v3009 = vsel %vm629, %v2981, 0
          %v3012 = vsel %vm629, %v2982, 0
          %v3015 = vsel %vm629, %v2983, 0
          %v3018 = vsel %vm629, %v2984, 0
          %v3021 = vsel %vm629, %v2985, 0
          %v3024 = vsel %vm629, %v2986, 0
          %v3027 = vsel %vm629, %v2987, 0
          %3029 = vmatprep.subr.bf16.mxu0 0
          %3030 = vmatpush1.bf16.msra.mxu0 %v3001
          %3031 = vmatprep.subr.bf16.mxu0 0
          %3032 = vmatpush1.bf16.msra.mxu0 %v3002
          %3033 = vmatprep.subr.bf16.mxu0 0
          %3034 = vmatpush1.bf16.msra.mxu0 0
          %3035 = vmatprep.subr.bf16.mxu0 0
          %3036 = vmatpush1.bf16.msra.mxu0 0
          %3037 = vmatprep.subr.bf16.mxu0 0
          %3038 = vmatpush1.bf16.msra.mxu0 0
          %3039 = vmatprep.subr.bf16.mxu0 0
          %3040 = vmatpush1.bf16.msra.mxu0 0
          %3041 = vmatprep.subr.bf16.mxu0 0
          %3042 = vmatpush1.bf16.msra.mxu0 0
          %3043 = vmatprep.subr.bf16.mxu0 0
          %3044 = vmatpush1.bf16.msra.mxu0 0
          %3045 = vmatprep.subr.bf16.mxu0 0
          %3046 = vmatpush1.bf16.msra.mxu0 0
          %3047 = vmatprep.subr.bf16.mxu0 0
          %3048 = vmatpush1.bf16.msra.mxu0 0
          %3049 = vmatprep.subr.bf16.mxu0 0
          %3050 = vmatpush1.bf16.msra.mxu0 0
          %3051 = vmatprep.subr.bf16.mxu0 0
          %3052 = vmatpush1.bf16.msra.mxu0 0
          %3053 = vmatprep.subr.bf16.mxu0 0
          %3054 = vmatpush1.bf16.msra.mxu0 0
          %3055 = vmatprep.subr.bf16.mxu0 0
          %3056 = vmatpush1.bf16.msra.mxu0 0
          %3057 = vmatprep.subr.bf16.mxu0 0
          %3058 = vmatpush1.bf16.msra.mxu0 0
          %3059 = vmatprep.subr.bf16.mxu0 0
          %3060 = vmatpush1.bf16.msra.mxu0 0
          %3061 = vmatprep.mubr.bf16.mxu0 0
          %3062 = vmatmul.mubr.bf16.gmra.mrb[0].mxu0 %v3006
          %v3063 = vpop.f32.mrb[0].mxu0
          %v3064 = vadd.f32 0.0, %v3063
          %v3065 = vpop.f32.mrb[0].mxu0
          %v3066 = vpop.f32.mrb[0].mxu0
          %v3067 = vadd.f32 0.0, %v3066
          %v3068 = vpop.f32.mrb[0].mxu0
          %3069 = vmatprep.mubr.bf16.mxu0 0
          %3070 = vmatmul.mubr.bf16.gmra.mrb[0].mxu0 %v3009
          %v3071 = vpop.f32.mrb[0].mxu0
          %v3072 = vadd.f32 0.0, %v3071
          %v3073 = vpop.f32.mrb[0].mxu0
          %v3074 = vpop.f32.mrb[0].mxu0
          %v3075 = vadd.f32 0.0, %v3074
          %v3076 = vpop.f32.mrb[0].mxu0
          %3077 = vmatprep.mubr.bf16.mxu0 0
          %3078 = vmatmul.mubr.bf16.gmra.mrb[0].mxu0 %v3012
          %v3079 = vpop.f32.mrb[0].mxu0
          %v3080 = vadd.f32 0.0, %v3079
          %v3081 = vpop.f32.mrb[0].mxu0
          %v3082 = vpop.f32.mrb[0].mxu0
          %v3083 = vadd.f32 0.0, %v3082
          %v3084 = vpop.f32.mrb[0].mxu0
          %3085 = vmatprep.mubr.bf16.mxu0 0
          %3086 = vmatmul.mubr.bf16.gmra.mrb[0].mxu0 %v3015
          %v3087 = vpop.f32.mrb[0].mxu0
          %v3088 = vadd.f32 0.0, %v3087
          %v3089 = vpop.f32.mrb[0].mxu0
          %v3090 = vpop.f32.mrb[0].mxu0
          %v3091 = vadd.f32 0.0, %v3090
          %v3092 = vpop.f32.mrb[0].mxu0
          %3093 = vmatprep.mubr.bf16.mxu0 0
          %3094 = vmatmul.mubr.bf16.gmra.mrb[0].mxu0 %v3018
          %v3095 = vpop.f32.mrb[0].mxu0
          %v3096 = vadd.f32 0.0, %v3095
          %v3097 = vpop.f32.mrb[0].mxu0
          %v3098 = vpop.f32.mrb[0].mxu0
          %v3099 = vadd.f32 0.0, %v3098
          %v3100 = vpop.f32.mrb[0].mxu0
          %3101 = vmatprep.mubr.bf16.mxu0 0
          %3102 = vmatmul.mubr.bf16.gmra.mrb[0].mxu0 %v3021
          %v3103 = vpop.f32.mrb[0].mxu0
          %v3104 = vadd.f32 0.0, %v3103
          %v3105 = vpop.f32.mrb[0].mxu0
          %v3106 = vpop.f32.mrb[0].mxu0
          %v3107 = vadd.f32 0.0, %v3106
          %v3108 = vpop.f32.mrb[0].mxu0
          %3109 = vmatprep.mubr.bf16.mxu0 0
          %3110 = vmatmul.mubr.bf16.gmra.mrb[0].mxu0 %v3024
          %v3111 = vpop.f32.mrb[0].mxu0
          %v3112 = vadd.f32 0.0, %v3111
          %v3113 = vpop.f32.mrb[0].mxu0
          %v3114 = vpop.f32.mrb[0].mxu0
          %v3115 = vadd.f32 0.0, %v3114
          %v3116 = vpop.f32.mrb[0].mxu0
          %3117 = vmatprep.mubr.bf16.mxu0 0
          %3118 = vmatmul.mubr.bf16.gmra.mrb[0].mxu0 %v3027
          %v3119 = vpop.f32.mrb[0].mxu0
          %v3120 = vadd.f32 0.0, %v3119
          %v3121 = vpop.f32.mrb[0].mxu0
          %v3122 = vpop.f32.mrb[0].mxu0
          %v3123 = vadd.f32 0.0, %v3122
          %v3124 = vpop.f32.mrb[0].mxu0
          %3125 = vdwg.mxu0
          %v3126 = vadd.f32 %v2835, %v3064
          %v3127 = vadd.f32 %v2836, %v3067
          %v3128 = vadd.f32 %v2837, %v3072
          %v3129 = vadd.f32 %v2838, %v3075
          %v3130 = vadd.f32 %v2839, %v3080
          %v3131 = vadd.f32 %v2840, %v3083
          %v3132 = vadd.f32 %v2841, %v3088
          %v3133 = vadd.f32 %v2842, %v3091
          %v3134 = vadd.f32 %v2843, %v3096
          %v3135 = vadd.f32 %v2844, %v3099
          %v3136 = vadd.f32 %v2845, %v3104
          %v3137 = vadd.f32 %v2846, %v3107
          %v3138 = vadd.f32 %v2847, %v3112
          %v3139 = vadd.f32 %v2848, %v3115
          %v3140 = vadd.f32 %v2849, %v3120
          %v3141 = vadd.f32 %v2850, %v3123
          %v3142 = vld [vmem:[%s3] sm:$0x1]
          %v3144 = vlaneseq
          %v3145 = vshrl.u32 %v3144, 7
          %v3146 = vsub.s32 0, %v3145
          %v3147 = vrot.slane %v3142, %v3146
          %v3149 = vadd.f32 %v3126, %v3147
          %v3150 = vadd.f32 %v3127, %v3147
          %v3151 = vadd.f32 %v3128, %v3147
          %v3152 = vadd.f32 %v3129, %v3147
          %v3153 = vadd.f32 %v3130, %v3147
          %v3154 = vadd.f32 %v3131, %v3147
          %v3155 = vadd.f32 %v3132, %v3147
          %v3156 = vadd.f32 %v3133, %v3147
          %v3157 = vadd.f32 %v3134, %v3147
          %v3158 = vadd.f32 %v3135, %v3147
          %v3159 = vadd.f32 %v3136, %v3147
          %v3160 = vadd.f32 %v3137, %v3147
          %v3161 = vadd.f32 %v3138, %v3147
          %v3162 = vadd.f32 %v3139, %v3147
          %v3163 = vadd.f32 %v3140, %v3147
          %v3164 = vadd.f32 %v3141, %v3147
          %3165 = vst.msk [vmem:[#allocation2 + $0x10] sm:$0xff] %vm629, %v3149
          %3166 = vst.msk [vmem:[#allocation2 + $0x18] sm:$0xff] %vm629, %v3150
          %3167 = vst.msk [vmem:[#allocation2 + $0x20] sm:$0xff] %vm629, %v3151
          %3168 = vst.msk [vmem:[#allocation2 + $0x28] sm:$0xff] %vm629, %v3152
          %3169 = vst.msk [vmem:[#allocation2 + $0x30] sm:$0xff] %vm629, %v3153
          %3170 = vst.msk [vmem:[#allocation2 + $0x38] sm:$0xff] %vm629, %v3154
          %3171 = vst.msk [vmem:[#allocation2 + $0x40] sm:$0xff] %vm629, %v3155
          %3172 = vst.msk [vmem:[#allocation2 + $0x48] sm:$0xff] %vm629, %v3156
          %3173 = vst.msk [vmem:[#allocation2 + $0x50] sm:$0xff] %vm629, %v3157
          %3174 = vst.msk [vmem:[#allocation2 + $0x58] sm:$0xff] %vm629, %v3158
          %3175 = vst.msk [vmem:[#allocation2 + $0x60] sm:$0xff] %vm629, %v3159
          %3176 = vst.msk [vmem:[#allocation2 + $0x68] sm:$0xff] %vm629, %v3160
          %3177 = vst.msk [vmem:[#allocation2 + $0x70] sm:$0xff] %vm629, %v3161
          %3178 = vst.msk [vmem:[#allocation2 + $0x78] sm:$0xff] %vm629, %v3162
          %3179 = vst.msk [vmem:[#allocation2 + $0x80] sm:$0xff] %vm629, %v3163
          %3180 = vst.msk [vmem:[#allocation2 + $0x88] sm:$0xff] %vm629, %v3164
        $region96: #{muzero_atari_forward.1} parent=91 // pred_fallthru
          _
        %v3181 = vld [vmem:[%s623] sm:$0x3f]
        %v3182 = vld [vmem:[#allocation2 + $0x10] sm:$0xff]
        %v3183 = vld [vmem:[#allocation2 + $0x18] sm:$0xff]
        %v3184 = vld [vmem:[#allocation2 + $0x20] sm:$0xff]
        %v3185 = vld [vmem:[#allocation2 + $0x28] sm:$0xff]
        %v3186 = vld [vmem:[#allocation2 + $0x30] sm:$0xff]
        %v3187 = vld [vmem:[#allocation2 + $0x38] sm:$0xff]
        %v3188 = vld [vmem:[#allocation2 + $0x40] sm:$0xff]
        %v3189 = vld [vmem:[#allocation2 + $0x48] sm:$0xff]
        %v3190 = vld [vmem:[#allocation2 + $0x50] sm:$0xff]
        %v3191 = vld [vmem:[#allocation2 + $0x58] sm:$0xff]
        %v3192 = vld [vmem:[#allocation2 + $0x60] sm:$0xff]
        %v3193 = vld [vmem:[#allocation2 + $0x68] sm:$0xff]
        %v3194 = vld [vmem:[#allocation2 + $0x70] sm:$0xff]
        %v3195 = vld [vmem:[#allocation2 + $0x78] sm:$0xff]
        %v3196 = vld [vmem:[#allocation2 + $0x80] sm:$0xff]
        %v3197 = vld [vmem:[#allocation2 + $0x88] sm:$0xff]
        %v3198 = vld [vmem:[#allocation2 + $0x7] sm:$0xff]
        %v3199 = vld [vmem:[#allocation2 + $0xf] sm:$0xff]
        %v3200 = vld [vmem:[#allocation2 + $0x17] sm:$0xff]
        %v3201 = vld [vmem:[#allocation2 + $0x1f] sm:$0xff]
        %v3202 = vld [vmem:[#allocation2 + $0x27] sm:$0xff]
        %v3203 = vld [vmem:[#allocation2 + $0x2f] sm:$0xff]
        %v3204 = vld [vmem:[#allocation2 + $0x37] sm:$0xff]
        %v3205 = vld [vmem:[#allocation2 + $0x3f] sm:$0xff]
        %v3206 = vld [vmem:[#allocation2 + $0x47] sm:$0xff]
        %v3207 = vld [vmem:[#allocation2 + $0x4f] sm:$0xff]
        %v3208 = vld [vmem:[#allocation2 + $0x57] sm:$0xff]
        %v3209 = vld [vmem:[#allocation2 + $0x5f] sm:$0xff]
        %v3210 = vld [vmem:[#allocation2 + $0x67] sm:$0xff]
        %v3211 = vld [vmem:[#allocation2 + $0x6f] sm:$0xff]
        %v3212 = vld [vmem:[#allocation2 + $0x77] sm:$0xff]
        %v3213 = vld [vmem:[#allocation2 + $0x7f] sm:$0xff]
        %v3214 = vld [vmem:[%s1] sm:$0xff]
        %v3215 = vld [vmem:[%s1 + $0x8] sm:$0xff]
        %v3216 = vld [vmem:[%s1 + $0x10] sm:$0xff]
        %v3217 = vld [vmem:[%s1 + $0x18] sm:$0xff]
        %v3218 = vld [vmem:[%s1 + $0x20] sm:$0xff]
        %v3219 = vld [vmem:[%s1 + $0x28] sm:$0xff]
        %v3220 = vld [vmem:[%s1 + $0x30] sm:$0xff]
        %v3221 = vld [vmem:[%s1 + $0x38] sm:$0xff]
        %v3222 = vld [vmem:[%s1 + $0x40] sm:$0xff]
        %v3223 = vld [vmem:[%s1 + $0x48] sm:$0xff]
        %v3224 = vld [vmem:[%s1 + $0x50] sm:$0xff]
        %v3225 = vld [vmem:[%s1 + $0x58] sm:$0xff]
        %v3226 = vld [vmem:[%s1 + $0x60] sm:$0xff]
        %v3227 = vld [vmem:[%s1 + $0x68] sm:$0xff]
        %v3228 = vld [vmem:[%s1 + $0x70] sm:$0xff]
        %v3229 = vld [vmem:[%s1 + $0x78] sm:$0xff]
        %3231 = vset.pattern.permute.xlu0 0
        %3232 = vperm.xlu0 %3231, %v3214
        %v3233 = vpop.permute.xlu0 %3232
        %3236 = vset.pattern.permute.xlu0 0
        %3237 = vperm.xlu0 %3236, %v3215
        %v3238 = vpop.permute.xlu0 %3237
        %3241 = vset.pattern.permute.xlu0 0
        %3242 = vperm.xlu0 %3241, %v3216
        %v3243 = vpop.permute.xlu0 %3242
        %3246 = vset.pattern.permute.xlu0 0
        %3247 = vperm.xlu0 %3246, %v3217
        %v3248 = vpop.permute.xlu0 %3247
        %3251 = vset.pattern.permute.xlu0 0
        %3252 = vperm.xlu0 %3251, %v3218
        %v3253 = vpop.permute.xlu0 %3252
        %3256 = vset.pattern.permute.xlu0 0
        %3257 = vperm.xlu0 %3256, %v3219
        %v3258 = vpop.permute.xlu0 %3257
        %3261 = vset.pattern.permute.xlu0 0
        %3262 = vperm.xlu0 %3261, %v3220
        %v3263 = vpop.permute.xlu0 %3262
        %3266 = vset.pattern.permute.xlu0 0
        %3267 = vperm.xlu0 %3266, %v3221
        %v3268 = vpop.permute.xlu0 %3267
        %3271 = vset.pattern.permute.xlu0 0
        %3272 = vperm.xlu0 %3271, %v3222
        %v3273 = vpop.permute.xlu0 %3272
        %3276 = vset.pattern.permute.xlu0 0
        %3277 = vperm.xlu0 %3276, %v3223
        %v3278 = vpop.permute.xlu0 %3277
        %3281 = vset.pattern.permute.xlu0 0
        %3282 = vperm.xlu0 %3281, %v3224
        %v3283 = vpop.permute.xlu0 %3282
        %3286 = vset.pattern.permute.xlu0 0
        %3287 = vperm.xlu0 %3286, %v3225
        %v3288 = vpop.permute.xlu0 %3287
        %3291 = vset.pattern.permute.xlu0 0
        %3292 = vperm.xlu0 %3291, %v3226
        %v3293 = vpop.permute.xlu0 %3292
        %3296 = vset.pattern.permute.xlu0 0
        %3297 = vperm.xlu0 %3296, %v3227
        %v3298 = vpop.permute.xlu0 %3297
        %3301 = vset.pattern.permute.xlu0 0
        %3302 = vperm.xlu0 %3301, %v3228
        %v3303 = vpop.permute.xlu0 %3302
        %3306 = vset.pattern.permute.xlu0 0
        %3307 = vperm.xlu0 %3306, %v3229
        %v3308 = vpop.permute.xlu0 %3307
        %v3310 = vmul.f32 %v3198, %v3233
        %v3311 = vmul.f32 %v3199, %v3238
        %v3312 = vmul.f32 %v3200, %v3243
        %v3313 = vmul.f32 %v3201, %v3248
        %v3314 = vmul.f32 %v3202, %v3253
        %v3315 = vmul.f32 %v3203, %v3258
        %v3316 = vmul.f32 %v3204, %v3263
        %v3317 = vmul.f32 %v3205, %v3268
        %v3318 = vmul.f32 %v3206, %v3273
        %v3319 = vmul.f32 %v3207, %v3278
        %v3320 = vmul.f32 %v3208, %v3283
        %v3321 = vmul.f32 %v3209, %v3288
        %v3322 = vmul.f32 %v3210, %v3293
        %v3323 = vmul.f32 %v3211, %v3298
        %v3324 = vmul.f32 %v3212, %v3303
        %v3325 = vmul.f32 %v3213, %v3308
        %v3326 = vpack.c.bf16 %v3311, %v3310
        %v3327 = vpack.c.bf16 %v3313, %v3312
        %v3328 = vpack.c.bf16 %v3315, %v3314
        %v3329 = vpack.c.bf16 %v3317, %v3316
        %v3330 = vpack.c.bf16 %v3319, %v3318
        %v3331 = vpack.c.bf16 %v3321, %v3320
        %v3332 = vpack.c.bf16 %v3323, %v3322
        %v3333 = vpack.c.bf16 %v3325, %v3324
        %v3334 = vld [vmem:[%s614] sm:$0xf]
        %v3335 = vld [vmem:[%s614 + $0x4] sm:$0xf]
        %v3336 = vld [vmem:[%s614 + $0x8] sm:$0xf]
        %v3337 = vld [vmem:[%s614 + $0xc] sm:$0xf]
        %v3338 = vld [vmem:[#allocation2 + $0x8] sm:$0xff]
        %v3339 = vld [vmem:[#allocation2 + $0x10] sm:$0xff]
        %v3340 = vld [vmem:[#allocation2 + $0x18] sm:$0xff]
        %v3341 = vld [vmem:[#allocation2 + $0x20] sm:$0xff]
        %v3342 = vld [vmem:[#allocation2 + $0x28] sm:$0xff]
        %v3343 = vld [vmem:[#allocation2 + $0x30] sm:$0xff]
        %v3344 = vld [vmem:[#allocation2 + $0x38] sm:$0xff]
        %v3345 = vld [vmem:[#allocation2 + $0x40] sm:$0xff]
        %v3346 = vld [vmem:[#allocation2 + $0x48] sm:$0xff]
        %v3347 = vld [vmem:[#allocation2 + $0x50] sm:$0xff]
        %v3348 = vld [vmem:[#allocation2 + $0x58] sm:$0xff]
        %v3349 = vld [vmem:[#allocation2 + $0x60] sm:$0xff]
        %v3350 = vld [vmem:[#allocation2 + $0x68] sm:$0xff]
        %v3351 = vld [vmem:[#allocation2 + $0x70] sm:$0xff]
        %v3352 = vld [vmem:[#allocation2 + $0x78] sm:$0xff]
        %v3353 = vld [vmem:[#allocation2 + $0x80] sm:$0xff]
        %s3354 = scalar_lea.vmem %s1, 128
        %v3355 = vld [vmem:[%s3354] sm:$0xff]
        %v3356 = vld [vmem:[%s3354 + $0x8] sm:$0xff]
        %v3357 = vld [vmem:[%s3354 + $0x10] sm:$0xff]
        %v3358 = vld [vmem:[%s3354 + $0x18] sm:$0xff]
        %v3359 = vld [vmem:[%s3354 + $0x20] sm:$0xff]
        %v3360 = vld [vmem:[%s3354 + $0x28] sm:$0xff]
        %v3361 = vld [vmem:[%s3354 + $0x30] sm:$0xff]
        %v3362 = vld [vmem:[%s3354 + $0x38] sm:$0xff]
        %v3363 = vld [vmem:[%s3354 + $0x40] sm:$0xff]
        %v3364 = vld [vmem:[%s3354 + $0x48] sm:$0xff]
        %v3365 = vld [vmem:[%s3354 + $0x50] sm:$0xff]
        %v3366 = vld [vmem:[%s3354 + $0x58] sm:$0xff]
        %v3367 = vld [vmem:[%s3354 + $0x60] sm:$0xff]
        %v3368 = vld [vmem:[%s3354 + $0x68] sm:$0xff]
        %v3369 = vld [vmem:[%s3354 + $0x70] sm:$0xff]
        %v3370 = vld [vmem:[%s3354 + $0x78] sm:$0xff]
        %3372 = vset.pattern.permute.xlu0 0
        %3373 = vperm.xlu0 %3372, %v3355
        %v3374 = vpop.permute.xlu0 %3373
        %3377 = vset.pattern.permute.xlu0 0
        %3378 = vperm.xlu0 %3377, %v3356
        %v3379 = vpop.permute.xlu0 %3378
        %3382 = vset.pattern.permute.xlu0 0
        %3383 = vperm.xlu0 %3382, %v3357
        %v3384 = vpop.permute.xlu0 %3383
        %3387 = vset.pattern.permute.xlu0 0
        %3388 = vperm.xlu0 %3387, %v3358
        %v3389 = vpop.permute.xlu0 %3388
        %3392 = vset.pattern.permute.xlu0 0
        %3393 = vperm.xlu0 %3392, %v3359
        %v3394 = vpop.permute.xlu0 %3393
        %3397 = vset.pattern.permute.xlu0 0
        %3398 = vperm.xlu0 %3397, %v3360
        %v3399 = vpop.permute.xlu0 %3398
        %3402 = vset.pattern.permute.xlu0 0
        %3403 = vperm.xlu0 %3402, %v3361
        %v3404 = vpop.permute.xlu0 %3403
        %3407 = vset.pattern.permute.xlu0 0
        %3408 = vperm.xlu0 %3407, %v3362
        %v3409 = vpop.permute.xlu0 %3408
        %3412 = vset.pattern.permute.xlu0 0
        %3413 = vperm.xlu0 %3412, %v3363
        %v3414 = vpop.permute.xlu0 %3413
        %3417 = vset.pattern.permute.xlu0 0
        %3418 = vperm.xlu0 %3417, %v3364
        %v3419 = vpop.permute.xlu0 %3418
        %3422 = vset.pattern.permute.xlu0 0
        %3423 = vperm.xlu0 %3422, %v3365
        %v3424 = vpop.permute.xlu0 %3423
        %3427 = vset.pattern.permute.xlu0 0
        %3428 = vperm.xlu0 %3427, %v3366
        %v3429 = vpop.permute.xlu0 %3428
        %3432 = vset.pattern.permute.xlu0 0
        %3433 = vperm.xlu0 %3432, %v3367
        %v3434 = vpop.permute.xlu0 %3433
        %3437 = vset.pattern.permute.xlu0 0
        %3438 = vperm.xlu0 %3437, %v3368
        %v3439 = vpop.permute.xlu0 %3438
        %3442 = vset.pattern.permute.xlu0 0
        %3443 = vperm.xlu0 %3442, %v3369
        %v3444 = vpop.permute.xlu0 %3443
        %3447 = vset.pattern.permute.xlu0 0
        %3448 = vperm.xlu0 %3447, %v3370
        %v3449 = vpop.permute.xlu0 %3448
        %v3451 = vmul.f32 %v3338, %v3374
        %v3452 = vmul.f32 %v3339, %v3379
        %v3453 = vmul.f32 %v3340, %v3384
        %v3454 = vmul.f32 %v3341, %v3389
        %v3455 = vmul.f32 %v3342, %v3394
        %v3456 = vmul.f32 %v3343, %v3399
        %v3457 = vmul.f32 %v3344, %v3404
        %v3458 = vmul.f32 %v3345, %v3409
        %v3459 = vmul.f32 %v3346, %v3414
        %v3460 = vmul.f32 %v3347, %v3419
        %v3461 = vmul.f32 %v3348, %v3424
        %v3462 = vmul.f32 %v3349, %v3429
        %v3463 = vmul.f32 %v3350, %v3434
        %v3464 = vmul.f32 %v3351, %v3439
        %v3465 = vmul.f32 %v3352, %v3444
        %v3466 = vmul.f32 %v3353, %v3449
        %v3467 = vpack.c.bf16 %v3452, %v3451
        %v3468 = vpack.c.bf16 %v3454, %v3453
        %v3469 = vpack.c.bf16 %v3456, %v3455
        %v3470 = vpack.c.bf16 %v3458, %v3457
        %v3471 = vpack.c.bf16 %v3460, %v3459
        %v3472 = vpack.c.bf16 %v3462, %v3461
        %v3473 = vpack.c.bf16 %v3464, %v3463
        %v3474 = vpack.c.bf16 %v3466, %v3465
        %s3475 = scalar_lea.vmem %s614, 16
        %v3476 = vld [vmem:[%s3475] sm:$0xf]
        %v3477 = vld [vmem:[%s3475 + $0x4] sm:$0xf]
        %v3478 = vld [vmem:[%s3475 + $0x8] sm:$0xf]
        %v3479 = vld [vmem:[%s3475 + $0xc] sm:$0xf]
        %v3484 = vunpack.c.l.b16 %v3476
        %v3485 = vunpack.c.l.b16 %v3477
        %v3486 = vunpack.c.l.b16 %v3478
        %v3487 = vunpack.c.l.b16 %v3479
        %v3488 = vpack.c.b16 %v3485, %v3484
        %v3489 = vpack.c.b16 %v3487, %v3486
        %vm3492 = vcmask 261120
        %v3494 = vsel %vm3492, %v3467, 0
        %v3497 = vsel %vm3492, %v3468, 0
        %v3500 = vsel %vm3492, %v3469, 0
        %v3503 = vsel %vm3492, %v3470, 0
        %v3506 = vsel %vm3492, %v3471, 0
        %v3509 = vsel %vm3492, %v3472, 0
        %v3512 = vsel %vm3492, %v3473, 0
        %v3515 = vsel %vm3492, %v3474, 0
        %3517 = vmatprep.subr.bf16.mxu0 0
        %3518 = vmatpush1.bf16.msra.mxu0 %v3488
        %3519 = vmatprep.subr.bf16.mxu0 0
        %3520 = vmatpush1.bf16.msra.mxu0 %v3489
        %3521 = vmatprep.subr.bf16.mxu0 0
        %3522 = vmatpush1.bf16.msra.mxu0 0
        %3523 = vmatprep.subr.bf16.mxu0 0
        %3524 = vmatpush1.bf16.msra.mxu0 0
        %3525 = vmatprep.subr.bf16.mxu0 0
        %3526 = vmatpush1.bf16.msra.mxu0 0
        %3527 = vmatprep.subr.bf16.mxu0 0
        %3528 = vmatpush1.bf16.msra.mxu0 0
        %3529 = vmatprep.subr.bf16.mxu0 0
        %3530 = vmatpush1.bf16.msra.mxu0 0
        %3531 = vmatprep.subr.bf16.mxu0 0
        %3532 = vmatpush1.bf16.msra.mxu0 0
        %3533 = vmatprep.subr.bf16.mxu0 0
        %3534 = vmatpush1.bf16.msra.mxu0 0
        %3535 = vmatprep.subr.bf16.mxu0 0
        %3536 = vmatpush1.bf16.msra.mxu0 0
        %3537 = vmatprep.subr.bf16.mxu0 0
        %3538 = vmatpush1.bf16.msra.mxu0 0
        %3539 = vmatprep.subr.bf16.mxu0 0
        %3540 = vmatpush1.bf16.msra.mxu0 0
        %3541 = vmatprep.subr.bf16.mxu0 0
        %3542 = vmatpush1.bf16.msra.mxu0 0
        %3543 = vmatprep.subr.bf16.mxu0 0
        %3544 = vmatpush1.bf16.msra.mxu0 0
        %3545 = vmatprep.subr.bf16.mxu0 0
        %3546 = vmatpush1.bf16.msra.mxu0 0
        %3547 = vmatprep.subr.bf16.mxu0 0
        %3548 = vmatpush1.bf16.msra.mxu0 0
        %3549 = vmatprep.mubr.bf16.mxu0 0
        %3550 = vmatmul.mubr.bf16.gmra.mrb[0].mxu0 %v3494
        %v3551 = vpop.f32.mrb[0].mxu0
        %v3552 = vadd.f32 0.0, %v3551
        %v3553 = vpop.f32.mrb[0].mxu0
        %v3554 = vpop.f32.mrb[0].mxu0
        %v3555 = vadd.f32 0.0, %v3554
        %v3556 = vpop.f32.mrb[0].mxu0
        %3557 = vmatprep.mubr.bf16.mxu0 0
        %3558 = vmatmul.mubr.bf16.gmra.mrb[0].mxu0 %v3497
        %v3559 = vpop.f32.mrb[0].mxu0
        %v3560 = vadd.f32 0.0, %v3559
        %v3561 = vpop.f32.mrb[0].mxu0
        %v3562 = vpop.f32.mrb[0].mxu0
        %v3563 = vadd.f32 0.0, %v3562
        %v3564 = vpop.f32.mrb[0].mxu0
        %3565 = vmatprep.mubr.bf16.mxu0 0
        %3566 = vmatmul.mubr.bf16.gmra.mrb[0].mxu0 %v3500
        %v3567 = vpop.f32.mrb[0].mxu0
        %v3568 = vadd.f32 0.0, %v3567
        %v3569 = vpop.f32.mrb[0].mxu0
        %v3570 = vpop.f32.mrb[0].mxu0
        %v3571 = vadd.f32 0.0, %v3570
        %v3572 = vpop.f32.mrb[0].mxu0
        %3573 = vmatprep.mubr.bf16.mxu0 0
        %3574 = vmatmul.mubr.bf16.gmra.mrb[0].mxu0 %v3503
        %v3575 = vpop.f32.mrb[0].mxu0
        %v3576 = vadd.f32 0.0, %v3575
        %v3577 = vpop.f32.mrb[0].mxu0
        %v3578 = vpop.f32.mrb[0].mxu0
        %v3579 = vadd.f32 0.0, %v3578
        %v3580 = vpop.f32.mrb[0].mxu0
        %3581 = vmatprep.mubr.bf16.mxu0 0
        %3582 = vmatmul.mubr.bf16.gmra.mrb[0].mxu0 %v3506
        %v3583 = vpop.f32.mrb[0].mxu0
        %v3584 = vadd.f32 0.0, %v3583
        %v3585 = vpop.f32.mrb[0].mxu0
        %v3586 = vpop.f32.mrb[0].mxu0
        %v3587 = vadd.f32 0.0, %v3586
        %v3588 = vpop.f32.mrb[0].mxu0
        %3589 = vmatprep.mubr.bf16.mxu0 0
        %3590 = vmatmul.mubr.bf16.gmra.mrb[0].mxu0 %v3509
        %v3591 = vpop.f32.mrb[0].mxu0
        %v3592 = vadd.f32 0.0, %v3591
        %v3593 = vpop.f32.mrb[0].mxu0
        %v3594 = vpop.f32.mrb[0].mxu0
        %v3595 = vadd.f32 0.0, %v3594
        %v3596 = vpop.f32.mrb[0].mxu0
        %3597 = vmatprep.mubr.bf16.mxu0 0
        %3598 = vmatmul.mubr.bf16.gmra.mrb[0].mxu0 %v3512
        %v3599 = vpop.f32.mrb[0].mxu0
        %v3600 = vadd.f32 0.0, %v3599
        %v3601 = vpop.f32.mrb[0].mxu0
        %v3602 = vpop.f32.mrb[0].mxu0
        %v3603 = vadd.f32 0.0, %v3602
        %v3604 = vpop.f32.mrb[0].mxu0
        %3605 = vmatprep.mubr.bf16.mxu0 0
        %3606 = vmatmul.mubr.bf16.gmra.mrb[0].mxu0 %v3515
        %v3607 = vpop.f32.mrb[0].mxu0
        %v3608 = vadd.f32 0.0, %v3607
        %v3609 = vpop.f32.mrb[0].mxu0
        %v3610 = vpop.f32.mrb[0].mxu0
        %v3611 = vadd.f32 0.0, %v3610
        %v3612 = vpop.f32.mrb[0].mxu0
        %3613 = vdwg.mxu0
        %v3618 = vunpack.c.l.b16 %v3334
        %v3619 = vunpack.c.l.b16 %v3335
        %v3620 = vunpack.c.l.b16 %v3336
        %v3621 = vunpack.c.l.b16 %v3337
        %v3622 = vpack.c.b16 %v3619, %v3618
        %v3623 = vpack.c.b16 %v3621, %v3620
        %v3627 = vsel %vm3492, %v3326, 0
        %v3630 = vsel %vm3492, %v3327, 0
        %v3633 = vsel %vm3492, %v3328, 0
        %v3636 = vsel %vm3492, %v3329, 0
        %v3639 = vsel %vm3492, %v3330, 0
        %v3642 = vsel %vm3492, %v3331, 0
        %v3645 = vsel %vm3492, %v3332, 0
        %v3648 = vsel %vm3492, %v3333, 0
        %3650 = vmatprep.subr.bf16.mxu0 0
        %3651 = vmatpush1.bf16.msra.mxu0 %v3622
        %3652 = vmatprep.subr.bf16.mxu0 0
        %3653 = vmatpush1.bf16.msra.mxu0 %v3623
        %3654 = vmatprep.subr.bf16.mxu0 0
        %3655 = vmatpush1.bf16.msra.mxu0 0
        %3656 = vmatprep.subr.bf16.mxu0 0
        %3657 = vmatpush1.bf16.msra.mxu0 0
        %3658 = vmatprep.subr.bf16.mxu0 0
        %3659 = vmatpush1.bf16.msra.mxu0 0
        %3660 = vmatprep.subr.bf16.mxu0 0
        %3661 = vmatpush1.bf16.msra.mxu0 0
        %3662 = vmatprep.subr.bf16.mxu0 0
        %3663 = vmatpush1.bf16.msra.mxu0 0
        %3664 = vmatprep.subr.bf16.mxu0 0
        %3665 = vmatpush1.bf16.msra.mxu0 0
        %3666 = vmatprep.subr.bf16.mxu0 0
        %3667 = vmatpush1.bf16.msra.mxu0 0
        %3668 = vmatprep.subr.bf16.mxu0 0
        %3669 = vmatpush1.bf16.msra.mxu0 0
        %3670 = vmatprep.subr.bf16.mxu0 0
        %3671 = vmatpush1.bf16.msra.mxu0 0
        %3672 = vmatprep.subr.bf16.mxu0 0
        %3673 = vmatpush1.bf16.msra.mxu0 0
        %3674 = vmatprep.subr.bf16.mxu0 0
        %3675 = vmatpush1.bf16.msra.mxu0 0
        %3676 = vmatprep.subr.bf16.mxu0 0
        %3677 = vmatpush1.bf16.msra.mxu0 0
        %3678 = vmatprep.subr.bf16.mxu0 0
        %3679 = vmatpush1.bf16.msra.mxu0 0
        %3680 = vmatprep.subr.bf16.mxu0 0
        %3681 = vmatpush1.bf16.msra.mxu0 0
        %3682 = vmatprep.mubr.bf16.mxu0 0
        %3683 = vmatmul.mubr.bf16.gmra.mrb[0].mxu0 %v3627
        %v3684 = vpop.f32.mrb[0].mxu0
        %v3685 = vadd.f32 %v3552, %v3684
        %v3686 = vpop.f32.mrb[0].mxu0
        %v3687 = vpop.f32.mrb[0].mxu0
        %v3688 = vadd.f32 %v3555, %v3687
        %v3689 = vpop.f32.mrb[0].mxu0
        %3690 = vmatprep.mubr.bf16.mxu0 0
        %3691 = vmatmul.mubr.bf16.gmra.mrb[0].mxu0 %v3630
        %v3692 = vpop.f32.mrb[0].mxu0
        %v3693 = vadd.f32 %v3560, %v3692
        %v3694 = vpop.f32.mrb[0].mxu0
        %v3695 = vpop.f32.mrb[0].mxu0
        %v3696 = vadd.f32 %v3563, %v3695
        %v3697 = vpop.f32.mrb[0].mxu0
        %3698 = vmatprep.mubr.bf16.mxu0 0
        %3699 = vmatmul.mubr.bf16.gmra.mrb[0].mxu0 %v3633
        %v3700 = vpop.f32.mrb[0].mxu0
        %v3701 = vadd.f32 %v3568, %v3700
        %v3702 = vpop.f32.mrb[0].mxu0
        %v3703 = vpop.f32.mrb[0].mxu0
        %v3704 = vadd.f32 %v3571, %v3703
        %v3705 = vpop.f32.mrb[0].mxu0
        %3706 = vmatprep.mubr.bf16.mxu0 0
        %3707 = vmatmul.mubr.bf16.gmra.mrb[0].mxu0 %v3636
        %v3708 = vpop.f32.mrb[0].mxu0
        %v3709 = vadd.f32 %v3576, %v3708
        %v3710 = vpop.f32.mrb[0].mxu0
        %v3711 = vpop.f32.mrb[0].mxu0
        %v3712 = vadd.f32 %v3579, %v3711
        %v3713 = vpop.f32.mrb[0].mxu0
        %3714 = vmatprep.mubr.bf16.mxu0 0
        %3715 = vmatmul.mubr.bf16.gmra.mrb[0].mxu0 %v3639
        %v3716 = vpop.f32.mrb[0].mxu0
        %v3717 = vadd.f32 %v3584, %v3716
        %v3718 = vpop.f32.mrb[0].mxu0
        %v3719 = vpop.f32.mrb[0].mxu0
        %v3720 = vadd.f32 %v3587, %v3719
        %v3721 = vpop.f32.mrb[0].mxu0
        %3722 = vmatprep.mubr.bf16.mxu0 0
        %3723 = vmatmul.mubr.bf16.gmra.mrb[0].mxu0 %v3642
        %v3724 = vpop.f32.mrb[0].mxu0
        %v3725 = vadd.f32 %v3592, %v3724
        %v3726 = vpop.f32.mrb[0].mxu0
        %v3727 = vpop.f32.mrb[0].mxu0
        %v3728 = vadd.f32 %v3595, %v3727
        %v3729 = vpop.f32.mrb[0].mxu0
        %3730 = vmatprep.mubr.bf16.mxu0 0
        %3731 = vmatmul.mubr.bf16.gmra.mrb[0].mxu0 %v3645
        %v3732 = vpop.f32.mrb[0].mxu0
        %v3733 = vadd.f32 %v3600, %v3732
        %v3734 = vpop.f32.mrb[0].mxu0
        %v3735 = vpop.f32.mrb[0].mxu0
        %v3736 = vadd.f32 %v3603, %v3735
        %v3737 = vpop.f32.mrb[0].mxu0
        %3738 = vmatprep.mubr.bf16.mxu0 0
        %3739 = vmatmul.mubr.bf16.gmra.mrb[0].mxu0 %v3648
        %v3740 = vpop.f32.mrb[0].mxu0
        %v3741 = vadd.f32 %v3608, %v3740
        %v3742 = vpop.f32.mrb[0].mxu0
        %v3743 = vpop.f32.mrb[0].mxu0
        %v3744 = vadd.f32 %v3611, %v3743
        %v3745 = vpop.f32.mrb[0].mxu0
        %3746 = vdwg.mxu0
        %v3747 = vld [vmem:[#allocation2 + $0x9] sm:$0xff]
        %v3748 = vld [vmem:[#allocation2 + $0x11] sm:$0xff]
        %v3749 = vld [vmem:[#allocation2 + $0x19] sm:$0xff]
        %v3750 = vld [vmem:[#allocation2 + $0x21] sm:$0xff]
        %v3751 = vld [vmem:[#allocation2 + $0x29] sm:$0xff]
        %v3752 = vld [vmem:[#allocation2 + $0x31] sm:$0xff]
        %v3753 = vld [vmem:[#allocation2 + $0x39] sm:$0xff]
        %v3754 = vld [vmem:[#allocation2 + $0x41] sm:$0xff]
        %v3755 = vld [vmem:[#allocation2 + $0x49] sm:$0xff]
        %v3756 = vld [vmem:[#allocation2 + $0x51] sm:$0xff]
        %v3757 = vld [vmem:[#allocation2 + $0x59] sm:$0xff]
        %v3758 = vld [vmem:[#allocation2 + $0x61] sm:$0xff]
        %v3759 = vld [vmem:[#allocation2 + $0x69] sm:$0xff]
        %v3760 = vld [vmem:[#allocation2 + $0x71] sm:$0xff]
        %v3761 = vld [vmem:[#allocation2 + $0x79] sm:$0xff]
        %v3762 = vld [vmem:[#allocation2 + $0x81] sm:$0xff]
        %s3763 = scalar_lea.vmem %s1, 256
        %v3764 = vld [vmem:[%s3763] sm:$0xff]
        %v3765 = vld [vmem:[%s3763 + $0x8] sm:$0xff]
        %v3766 = vld [vmem:[%s3763 + $0x10] sm:$0xff]
        %v3767 = vld [vmem:[%s3763 + $0x18] sm:$0xff]
        %v3768 = vld [vmem:[%s3763 + $0x20] sm:$0xff]
        %v3769 = vld [vmem:[%s3763 + $0x28] sm:$0xff]
        %v3770 = vld [vmem:[%s3763 + $0x30] sm:$0xff]
        %v3771 = vld [vmem:[%s3763 + $0x38] sm:$0xff]
        %v3772 = vld [vmem:[%s3763 + $0x40] sm:$0xff]
        %v3773 = vld [vmem:[%s3763 + $0x48] sm:$0xff]
        %v3774 = vld [vmem:[%s3763 + $0x50] sm:$0xff]
        %v3775 = vld [vmem:[%s3763 + $0x58] sm:$0xff]
        %v3776 = vld [vmem:[%s3763 + $0x60] sm:$0xff]
        %v3777 = vld [vmem:[%s3763 + $0x68] sm:$0xff]
        %v3778 = vld [vmem:[%s3763 + $0x70] sm:$0xff]
        %v3779 = vld [vmem:[%s3763 + $0x78] sm:$0xff]
        %3781 = vset.pattern.permute.xlu0 0
        %3782 = vperm.xlu0 %3781, %v3764
        %v3783 = vpop.permute.xlu0 %3782
        %3786 = vset.pattern.permute.xlu0 0
        %3787 = vperm.xlu0 %3786, %v3765
        %v3788 = vpop.permute.xlu0 %3787
        %3791 = vset.pattern.permute.xlu0 0
        %3792 = vperm.xlu0 %3791, %v3766
        %v3793 = vpop.permute.xlu0 %3792
        %3796 = vset.pattern.permute.xlu0 0
        %3797 = vperm.xlu0 %3796, %v3767
        %v3798 = vpop.permute.xlu0 %3797
        %3801 = vset.pattern.permute.xlu0 0
        %3802 = vperm.xlu0 %3801, %v3768
        %v3803 = vpop.permute.xlu0 %3802
        %3806 = vset.pattern.permute.xlu0 0
        %3807 = vperm.xlu0 %3806, %v3769
        %v3808 = vpop.permute.xlu0 %3807
        %3811 = vset.pattern.permute.xlu0 0
        %3812 = vperm.xlu0 %3811, %v3770
        %v3813 = vpop.permute.xlu0 %3812
        %3816 = vset.pattern.permute.xlu0 0
        %3817 = vperm.xlu0 %3816, %v3771
        %v3818 = vpop.permute.xlu0 %3817
        %3821 = vset.pattern.permute.xlu0 0
        %3822 = vperm.xlu0 %3821, %v3772
        %v3823 = vpop.permute.xlu0 %3822
        %3826 = vset.pattern.permute.xlu0 0
        %3827 = vperm.xlu0 %3826, %v3773
        %v3828 = vpop.permute.xlu0 %3827
        %3831 = vset.pattern.permute.xlu0 0
        %3832 = vperm.xlu0 %3831, %v3774
        %v3833 = vpop.permute.xlu0 %3832
        %3836 = vset.pattern.permute.xlu0 0
        %3837 = vperm.xlu0 %3836, %v3775
        %v3838 = vpop.permute.xlu0 %3837
        %3841 = vset.pattern.permute.xlu0 0
        %3842 = vperm.xlu0 %3841, %v3776
        %v3843 = vpop.permute.xlu0 %3842
        %3846 = vset.pattern.permute.xlu0 0
        %3847 = vperm.xlu0 %3846, %v3777
        %v3848 = vpop.permute.xlu0 %3847
        %3851 = vset.pattern.permute.xlu0 0
        %3852 = vperm.xlu0 %3851, %v3778
        %v3853 = vpop.permute.xlu0 %3852
        %3856 = vset.pattern.permute.xlu0 0
        %3857 = vperm.xlu0 %3856, %v3779
        %v3858 = vpop.permute.xlu0 %3857
        %v3860 = vmul.f32 %v3747, %v3783
        %v3861 = vmul.f32 %v3748, %v3788
        %v3862 = vmul.f32 %v3749, %v3793
        %v3863 = vmul.f32 %v3750, %v3798
        %v3864 = vmul.f32 %v3751, %v3803
        %v3865 = vmul.f32 %v3752, %v3808
        %v3866 = vmul.f32 %v3753, %v3813
        %v3867 = vmul.f32 %v3754, %v3818
        %v3868 = vmul.f32 %v3755, %v3823
        %v3869 = vmul.f32 %v3756, %v3828
        %v3870 = vmul.f32 %v3757, %v3833
        %v3871 = vmul.f32 %v3758, %v3838
        %v3872 = vmul.f32 %v3759, %v3843
        %v3873 = vmul.f32 %v3760, %v3848
        %v3874 = vmul.f32 %v3761, %v3853
        %v3875 = vmul.f32 %v3762, %v3858
        %v3876 = vpack.c.bf16 %v3861, %v3860
        %v3877 = vpack.c.bf16 %v3863, %v3862
        %v3878 = vpack.c.bf16 %v3865, %v3864
        %v3879 = vpack.c.bf16 %v3867, %v3866
        %v3880 = vpack.c.bf16 %v3869, %v3868
        %v3881 = vpack.c.bf16 %v3871, %v3870
        %v3882 = vpack.c.bf16 %v3873, %v3872
        %v3883 = vpack.c.bf16 %v3875, %v3874
        %s3884 = scalar_lea.vmem %s614, 32
        %v3885 = vld [vmem:[%s3884] sm:$0xf]
        %v3886 = vld [vmem:[%s3884 + $0x4] sm:$0xf]
        %v3887 = vld [vmem:[%s3884 + $0x8] sm:$0xf]
        %v3888 = vld [vmem:[%s3884 + $0xc] sm:$0xf]
        %v3893 = vunpack.c.l.b16 %v3885
        %v3894 = vunpack.c.l.b16 %v3886
        %v3895 = vunpack.c.l.b16 %v3887
        %v3896 = vunpack.c.l.b16 %v3888
        %v3897 = vpack.c.b16 %v3894, %v3893
        %v3898 = vpack.c.b16 %v3896, %v3895
        %v3902 = vsel %vm3492, %v3876, 0
        %v3905 = vsel %vm3492, %v3877, 0
        %v3908 = vsel %vm3492, %v3878, 0
        %v3911 = vsel %vm3492, %v3879, 0
        %v3914 = vsel %vm3492, %v3880, 0
        %v3917 = vsel %vm3492, %v3881, 0
        %v3920 = vsel %vm3492, %v3882, 0
        %v3923 = vsel %vm3492, %v3883, 0
        %3925 = vmatprep.subr.bf16.mxu0 0
        %3926 = vmatpush1.bf16.msra.mxu0 %v3897
        %3927 = vmatprep.subr.bf16.mxu0 0
        %3928 = vmatpush1.bf16.msra.mxu0 %v3898
        %3929 = vmatprep.subr.bf16.mxu0 0
        %3930 = vmatpush1.bf16.msra.mxu0 0
        %3931 = vmatprep.subr.bf16.mxu0 0
        %3932 = vmatpush1.bf16.msra.mxu0 0
        %3933 = vmatprep.subr.bf16.mxu0 0
        %3934 = vmatpush1.bf16.msra.mxu0 0
        %3935 = vmatprep.subr.bf16.mxu0 0
        %3936 = vmatpush1.bf16.msra.mxu0 0
        %3937 = vmatprep.subr.bf16.mxu0 0
        %3938 = vmatpush1.bf16.msra.mxu0 0
        %3939 = vmatprep.subr.bf16.mxu0 0
        %3940 = vmatpush1.bf16.msra.mxu0 0
        %3941 = vmatprep.subr.bf16.mxu0 0
        %3942 = vmatpush1.bf16.msra.mxu0 0
        %3943 = vmatprep.subr.bf16.mxu0 0
        %3944 = vmatpush1.bf16.msra.mxu0 0
        %3945 = vmatprep.subr.bf16.mxu0 0
        %3946 = vmatpush1.bf16.msra.mxu0 0
        %3947 = vmatprep.subr.bf16.mxu0 0
        %3948 = vmatpush1.bf16.msra.mxu0 0
        %3949 = vmatprep.subr.bf16.mxu0 0
        %3950 = vmatpush1.bf16.msra.mxu0 0
        %3951 = vmatprep.subr.bf16.mxu0 0
        %3952 = vmatpush1.bf16.msra.mxu0 0
        %3953 = vmatprep.subr.bf16.mxu0 0
        %3954 = vmatpush1.bf16.msra.mxu0 0
        %3955 = vmatprep.subr.bf16.mxu0 0
        %3956 = vmatpush1.bf16.msra.mxu0 0
        %3957 = vmatprep.mubr.bf16.mxu0 0
        %3958 = vmatmul.mubr.bf16.gmra.mrb[0].mxu0 %v3902
        %v3959 = vpop.f32.mrb[0].mxu0
        %v3960 = vadd.f32 0.0, %v3959
        %v3961 = vpop.f32.mrb[0].mxu0
        %v3962 = vpop.f32.mrb[0].mxu0
        %v3963 = vadd.f32 0.0, %v3962
        %v3964 = vpop.f32.mrb[0].mxu0
        %3965 = vmatprep.mubr.bf16.mxu0 0
        %3966 = vmatmul.mubr.bf16.gmra.mrb[0].mxu0 %v3905
        %v3967 = vpop.f32.mrb[0].mxu0
        %v3968 = vadd.f32 0.0, %v3967
        %v3969 = vpop.f32.mrb[0].mxu0
        %v3970 = vpop.f32.mrb[0].mxu0
        %v3971 = vadd.f32 0.0, %v3970
        %v3972 = vpop.f32.mrb[0].mxu0
        %3973 = vmatprep.mubr.bf16.mxu0 0
        %3974 = vmatmul.mubr.bf16.gmra.mrb[0].mxu0 %v3908
        %v3975 = vpop.f32.mrb[0].mxu0
        %v3976 = vadd.f32 0.0, %v3975
        %v3977 = vpop.f32.mrb[0].mxu0
        %v3978 = vpop.f32.mrb[0].mxu0
        %v3979 = vadd.f32 0.0, %v3978
        %v3980 = vpop.f32.mrb[0].mxu0
        %3981 = vmatprep.mubr.bf16.mxu0 0
        %3982 = vmatmul.mubr.bf16.gmra.mrb[0].mxu0 %v3911
        %v3983 = vpop.f32.mrb[0].mxu0
        %v3984 = vadd.f32 0.0, %v3983
        %v3985 = vpop.f32.mrb[0].mxu0
        %v3986 = vpop.f32.mrb[0].mxu0
        %v3987 = vadd.f32 0.0, %v3986
        %v3988 = vpop.f32.mrb[0].mxu0
        %3989 = vmatprep.mubr.bf16.mxu0 0
        %3990 = vmatmul.mubr.bf16.gmra.mrb[0].mxu0 %v3914
        %v3991 = vpop.f32.mrb[0].mxu0
        %v3992 = vadd.f32 0.0, %v3991
        %v3993 = vpop.f32.mrb[0].mxu0
        %v3994 = vpop.f32.mrb[0].mxu0
        %v3995 = vadd.f32 0.0, %v3994
        %v3996 = vpop.f32.mrb[0].mxu0
        %3997 = vmatprep.mubr.bf16.mxu0 0
        %3998 = vmatmul.mubr.bf16.gmra.mrb[0].mxu0 %v3917
        %v3999 = vpop.f32.mrb[0].mxu0
        %v4000 = vadd.f32 0.0, %v3999
        %v4001 = vpop.f32.mrb[0].mxu0
        %v4002 = vpop.f32.mrb[0].mxu0
        %v4003 = vadd.f32 0.0, %v4002
        %v4004 = vpop.f32.mrb[0].mxu0
        %4005 = vmatprep.mubr.bf16.mxu0 0
        %4006 = vmatmul.mubr.bf16.gmra.mrb[0].mxu0 %v3920
        %v4007 = vpop.f32.mrb[0].mxu0
        %v4008 = vadd.f32 0.0, %v4007
        %v4009 = vpop.f32.mrb[0].mxu0
        %v4010 = vpop.f32.mrb[0].mxu0
        %v4011 = vadd.f32 0.0, %v4010
        %v4012 = vpop.f32.mrb[0].mxu0
        %4013 = vmatprep.mubr.bf16.mxu0 0
        %4014 = vmatmul.mubr.bf16.gmra.mrb[0].mxu0 %v3923
        %v4015 = vpop.f32.mrb[0].mxu0
        %v4016 = vadd.f32 0.0, %v4015
        %v4017 = vpop.f32.mrb[0].mxu0
        %v4018 = vpop.f32.mrb[0].mxu0
        %v4019 = vadd.f32 0.0, %v4018
        %v4020 = vpop.f32.mrb[0].mxu0
        %4021 = vdwg.mxu0
        %v4022 = vadd.f32 %v3685, %v3960
        %v4023 = vadd.f32 %v3688, %v3963
        %v4024 = vadd.f32 %v3693, %v3968
        %v4025 = vadd.f32 %v3696, %v3971
        %v4026 = vadd.f32 %v3701, %v3976
        %v4027 = vadd.f32 %v3704, %v3979
        %v4028 = vadd.f32 %v3709, %v3984
        %v4029 = vadd.f32 %v3712, %v3987
        %v4030 = vadd.f32 %v3717, %v3992
        %v4031 = vadd.f32 %v3720, %v3995
        %v4032 = vadd.f32 %v3725, %v4000
        %v4033 = vadd.f32 %v3728, %v4003
        %v4034 = vadd.f32 %v3733, %v4008
        %v4035 = vadd.f32 %v3736, %v4011
        %v4036 = vadd.f32 %v3741, %v4016
        %v4037 = vadd.f32 %v3744, %v4019
        %v4038 = vld [vmem:[#allocation2 + $0xf] sm:$0xff]
        %v4039 = vld [vmem:[#allocation2 + $0x17] sm:$0xff]
        %v4040 = vld [vmem:[#allocation2 + $0x1f] sm:$0xff]
        %v4041 = vld [vmem:[#allocation2 + $0x27] sm:$0xff]
        %v4042 = vld [vmem:[#allocation2 + $0x2f] sm:$0xff]
        %v4043 = vld [vmem:[#allocation2 + $0x37] sm:$0xff]
        %v4044 = vld [vmem:[#allocation2 + $0x3f] sm:$0xff]
        %v4045 = vld [vmem:[#allocation2 + $0x47] sm:$0xff]
        %v4046 = vld [vmem:[#allocation2 + $0x4f] sm:$0xff]
        %v4047 = vld [vmem:[#allocation2 + $0x57] sm:$0xff]
        %v4048 = vld [vmem:[#allocation2 + $0x5f] sm:$0xff]
        %v4049 = vld [vmem:[#allocation2 + $0x67] sm:$0xff]
        %v4050 = vld [vmem:[#allocation2 + $0x6f] sm:$0xff]
        %v4051 = vld [vmem:[#allocation2 + $0x77] sm:$0xff]
        %v4052 = vld [vmem:[#allocation2 + $0x7f] sm:$0xff]
        %v4053 = vld [vmem:[#allocation2 + $0x87] sm:$0xff]
        %s4054 = scalar_lea.vmem %s1, 384
        %v4055 = vld [vmem:[%s4054] sm:$0xff]
        %v4056 = vld [vmem:[%s4054 + $0x8] sm:$0xff]
        %v4057 = vld [vmem:[%s4054 + $0x10] sm:$0xff]
        %v4058 = vld [vmem:[%s4054 + $0x18] sm:$0xff]
        %v4059 = vld [vmem:[%s4054 + $0x20] sm:$0xff]
        %v4060 = vld [vmem:[%s4054 + $0x28] sm:$0xff]
        %v4061 = vld [vmem:[%s4054 + $0x30] sm:$0xff]
        %v4062 = vld [vmem:[%s4054 + $0x38] sm:$0xff]
        %v4063 = vld [vmem:[%s4054 + $0x40] sm:$0xff]
        %v4064 = vld [vmem:[%s4054 + $0x48] sm:$0xff]
        %v4065 = vld [vmem:[%s4054 + $0x50] sm:$0xff]
        %v4066 = vld [vmem:[%s4054 + $0x58] sm:$0xff]
        %v4067 = vld [vmem:[%s4054 + $0x60] sm:$0xff]
        %v4068 = vld [vmem:[%s4054 + $0x68] sm:$0xff]
        %v4069 = vld [vmem:[%s4054 + $0x70] sm:$0xff]
        %v4070 = vld [vmem:[%s4054 + $0x78] sm:$0xff]
        %4072 = vset.pattern.permute.xlu0 0
        %4073 = vperm.xlu0 %4072, %v4055
        %v4074 = vpop.permute.xlu0 %4073
        %4077 = vset.pattern.permute.xlu0 0
        %4078 = vperm.xlu0 %4077, %v4056
        %v4079 = vpop.permute.xlu0 %4078
        %4082 = vset.pattern.permute.xlu0 0
        %4083 = vperm.xlu0 %4082, %v4057
        %v4084 = vpop.permute.xlu0 %4083
        %4087 = vset.pattern.permute.xlu0 0
        %4088 = vperm.xlu0 %4087, %v4058
        %v4089 = vpop.permute.xlu0 %4088
        %4092 = vset.pattern.permute.xlu0 0
        %4093 = vperm.xlu0 %4092, %v4059
        %v4094 = vpop.permute.xlu0 %4093
        %4097 = vset.pattern.permute.xlu0 0
        %4098 = vperm.xlu0 %4097, %v4060
        %v4099 = vpop.permute.xlu0 %4098
        %4102 = vset.pattern.permute.xlu0 0
        %4103 = vperm.xlu0 %4102, %v4061
        %v4104 = vpop.permute.xlu0 %4103
        %4107 = vset.pattern.permute.xlu0 0
        %4108 = vperm.xlu0 %4107, %v4062
        %v4109 = vpop.permute.xlu0 %4108
        %4112 = vset.pattern.permute.xlu0 0
        %4113 = vperm.xlu0 %4112, %v4063
        %v4114 = vpop.permute.xlu0 %4113
        %4117 = vset.pattern.permute.xlu0 0
        %4118 = vperm.xlu0 %4117, %v4064
        %v4119 = vpop.permute.xlu0 %4118
        %4122 = vset.pattern.permute.xlu0 0
        %4123 = vperm.xlu0 %4122, %v4065
        %v4124 = vpop.permute.xlu0 %4123
        %4127 = vset.pattern.permute.xlu0 0
        %4128 = vperm.xlu0 %4127, %v4066
        %v4129 = vpop.permute.xlu0 %4128
        %4132 = vset.pattern.permute.xlu0 0
        %4133 = vperm.xlu0 %4132, %v4067
        %v4134 = vpop.permute.xlu0 %4133
        %4137 = vset.pattern.permute.xlu0 0
        %4138 = vperm.xlu0 %4137, %v4068
        %v4139 = vpop.permute.xlu0 %4138
        %4142 = vset.pattern.permute.xlu0 0
        %4143 = vperm.xlu0 %4142, %v4069
        %v4144 = vpop.permute.xlu0 %4143
        %4147 = vset.pattern.permute.xlu0 0
        %4148 = vperm.xlu0 %4147, %v4070
        %v4149 = vpop.permute.xlu0 %4148
        %v4151 = vmul.f32 %v4038, %v4074
        %v4152 = vmul.f32 %v4039, %v4079
        %v4153 = vmul.f32 %v4040, %v4084
        %v4154 = vmul.f32 %v4041, %v4089
        %v4155 = vmul.f32 %v4042, %v4094
        %v4156 = vmul.f32 %v4043, %v4099
        %v4157 = vmul.f32 %v4044, %v4104
        %v4158 = vmul.f32 %v4045, %v4109
        %v4159 = vmul.f32 %v4046, %v4114
        %v4160 = vmul.f32 %v4047, %v4119
        %v4161 = vmul.f32 %v4048, %v4124
        %v4162 = vmul.f32 %v4049, %v4129
        %v4163 = vmul.f32 %v4050, %v4134
        %v4164 = vmul.f32 %v4051, %v4139
        %v4165 = vmul.f32 %v4052, %v4144
        %v4166 = vmul.f32 %v4053, %v4149
        %v4167 = vpack.c.bf16 %v4152, %v4151
        %v4168 = vpack.c.bf16 %v4154, %v4153
        %v4169 = vpack.c.bf16 %v4156, %v4155
        %v4170 = vpack.c.bf16 %v4158, %v4157
        %v4171 = vpack.c.bf16 %v4160, %v4159
        %v4172 = vpack.c.bf16 %v4162, %v4161
        %v4173 = vpack.c.bf16 %v4164, %v4163
        %v4174 = vpack.c.bf16 %v4166, %v4165
        %s4175 = scalar_lea.vmem %s614, 48
        %v4176 = vld [vmem:[%s4175] sm:$0xf]
        %v4177 = vld [vmem:[%s4175 + $0x4] sm:$0xf]
        %v4178 = vld [vmem:[%s4175 + $0x8] sm:$0xf]
        %v4179 = vld [vmem:[%s4175 + $0xc] sm:$0xf]
        %v4184 = vunpack.c.l.b16 %v4176
        %v4185 = vunpack.c.l.b16 %v4177
        %v4186 = vunpack.c.l.b16 %v4178
        %v4187 = vunpack.c.l.b16 %v4179
        %v4188 = vpack.c.b16 %v4185, %v4184
        %v4189 = vpack.c.b16 %v4187, %v4186
        %v4193 = vsel %vm3492, %v4167, 0
        %v4196 = vsel %vm3492, %v4168, 0
        %v4199 = vsel %vm3492, %v4169, 0
        %v4202 = vsel %vm3492, %v4170, 0
        %v4205 = vsel %vm3492, %v4171, 0
        %v4208 = vsel %vm3492, %v4172, 0
        %v4211 = vsel %vm3492, %v4173, 0
        %v4214 = vsel %vm3492, %v4174, 0
        %4216 = vmatprep.subr.bf16.mxu0 0
        %4217 = vmatpush1.bf16.msra.mxu0 %v4188
        %4218 = vmatprep.subr.bf16.mxu0 0
        %4219 = vmatpush1.bf16.msra.mxu0 %v4189
        %4220 = vmatprep.subr.bf16.mxu0 0
        %4221 = vmatpush1.bf16.msra.mxu0 0
        %4222 = vmatprep.subr.bf16.mxu0 0
        %4223 = vmatpush1.bf16.msra.mxu0 0
        %4224 = vmatprep.subr.bf16.mxu0 0
        %4225 = vmatpush1.bf16.msra.mxu0 0
        %4226 = vmatprep.subr.bf16.mxu0 0
        %4227 = vmatpush1.bf16.msra.mxu0 0
        %4228 = vmatprep.subr.bf16.mxu0 0
        %4229 = vmatpush1.bf16.msra.mxu0 0
        %4230 = vmatprep.subr.bf16.mxu0 0
        %4231 = vmatpush1.bf16.msra.mxu0 0
        %4232 = vmatprep.subr.bf16.mxu0 0
        %4233 = vmatpush1.bf16.msra.mxu0 0
        %4234 = vmatprep.subr.bf16.mxu0 0
        %4235 = vmatpush1.bf16.msra.mxu0 0
        %4236 = vmatprep.subr.bf16.mxu0 0
        %4237 = vmatpush1.bf16.msra.mxu0 0
        %4238 = vmatprep.subr.bf16.mxu0 0
        %4239 = vmatpush1.bf16.msra.mxu0 0
        %4240 = vmatprep.subr.bf16.mxu0 0
        %4241 = vmatpush1.bf16.msra.mxu0 0
        %4242 = vmatprep.subr.bf16.mxu0 0
        %4243 = vmatpush1.bf16.msra.mxu0 0
        %4244 = vmatprep.subr.bf16.mxu0 0
        %4245 = vmatpush1.bf16.msra.mxu0 0
        %4246 = vmatprep.subr.bf16.mxu0 0
        %4247 = vmatpush1.bf16.msra.mxu0 0
        %4248 = vmatprep.mubr.bf16.mxu0 0
        %4249 = vmatmul.mubr.bf16.gmra.mrb[0].mxu0 %v4193
        %v4250 = vpop.f32.mrb[0].mxu0
        %v4251 = vadd.f32 0.0, %v4250
        %v4252 = vpop.f32.mrb[0].mxu0
        %v4253 = vpop.f32.mrb[0].mxu0
        %v4254 = vadd.f32 0.0, %v4253
        %v4255 = vpop.f32.mrb[0].mxu0
        %4256 = vmatprep.mubr.bf16.mxu0 0
        %4257 = vmatmul.mubr.bf16.gmra.mrb[0].mxu0 %v4196
        %v4258 = vpop.f32.mrb[0].mxu0
        %v4259 = vadd.f32 0.0, %v4258
        %v4260 = vpop.f32.mrb[0].mxu0
        %v4261 = vpop.f32.mrb[0].mxu0
        %v4262 = vadd.f32 0.0, %v4261
        %v4263 = vpop.f32.mrb[0].mxu0
        %4264 = vmatprep.mubr.bf16.mxu0 0
        %4265 = vmatmul.mubr.bf16.gmra.mrb[0].mxu0 %v4199
        %v4266 = vpop.f32.mrb[0].mxu0
        %v4267 = vadd.f32 0.0, %v4266
        %v4268 = vpop.f32.mrb[0].mxu0
        %v4269 = vpop.f32.mrb[0].mxu0
        %v4270 = vadd.f32 0.0, %v4269
        %v4271 = vpop.f32.mrb[0].mxu0
        %4272 = vmatprep.mubr.bf16.mxu0 0
        %4273 = vmatmul.mubr.bf16.gmra.mrb[0].mxu0 %v4202
        %v4274 = vpop.f32.mrb[0].mxu0
        %v4275 = vadd.f32 0.0, %v4274
        %v4276 = vpop.f32.mrb[0].mxu0
        %v4277 = vpop.f32.mrb[0].mxu0
        %v4278 = vadd.f32 0.0, %v4277
        %v4279 = vpop.f32.mrb[0].mxu0
        %4280 = vmatprep.mubr.bf16.mxu0 0
        %4281 = vmatmul.mubr.bf16.gmra.mrb[0].mxu0 %v4205
        %v4282 = vpop.f32.mrb[0].mxu0
        %v4283 = vadd.f32 0.0, %v4282
        %v4284 = vpop.f32.mrb[0].mxu0
        %v4285 = vpop.f32.mrb[0].mxu0
        %v4286 = vadd.f32 0.0, %v4285
        %v4287 = vpop.f32.mrb[0].mxu0
        %4288 = vmatprep.mubr.bf16.mxu0 0
        %4289 = vmatmul.mubr.bf16.gmra.mrb[0].mxu0 %v4208
        %v4290 = vpop.f32.mrb[0].mxu0
        %v4291 = vadd.f32 0.0, %v4290
        %v4292 = vpop.f32.mrb[0].mxu0
        %v4293 = vpop.f32.mrb[0].mxu0
        %v4294 = vadd.f32 0.0, %v4293
        %v4295 = vpop.f32.mrb[0].mxu0
        %4296 = vmatprep.mubr.bf16.mxu0 0
        %4297 = vmatmul.mubr.bf16.gmra.mrb[0].mxu0 %v4211
        %v4298 = vpop.f32.mrb[0].mxu0
        %v4299 = vadd.f32 0.0, %v4298
        %v4300 = vpop.f32.mrb[0].mxu0
        %v4301 = vpop.f32.mrb[0].mxu0
        %v4302 = vadd.f32 0.0, %v4301
        %v4303 = vpop.f32.mrb[0].mxu0
        %4304 = vmatprep.mubr.bf16.mxu0 0
        %4305 = vmatmul.mubr.bf16.gmra.mrb[0].mxu0 %v4214
        %v4306 = vpop.f32.mrb[0].mxu0
        %v4307 = vadd.f32 0.0, %v4306
        %v4308 = vpop.f32.mrb[0].mxu0
        %v4309 = vpop.f32.mrb[0].mxu0
        %v4310 = vadd.f32 0.0, %v4309
        %v4311 = vpop.f32.mrb[0].mxu0
        %4312 = vdwg.mxu0
        %v4313 = vadd.f32 %v4022, %v4251
        %v4314 = vadd.f32 %v4023, %v4254
        %v4315 = vadd.f32 %v4024, %v4259
        %v4316 = vadd.f32 %v4025, %v4262
        %v4317 = vadd.f32 %v4026, %v4267
        %v4318 = vadd.f32 %v4027, %v4270
        %v4319 = vadd.f32 %v4028, %v4275
        %v4320 = vadd.f32 %v4029, %v4278
        %v4321 = vadd.f32 %v4030, %v4283
        %v4322 = vadd.f32 %v4031, %v4286
        %v4323 = vadd.f32 %v4032, %v4291
        %v4324 = vadd.f32 %v4033, %v4294
        %v4325 = vadd.f32 %v4034, %v4299
        %v4326 = vadd.f32 %v4035, %v4302
        %v4327 = vadd.f32 %v4036, %v4307
        %v4328 = vadd.f32 %v4037, %v4310
        %v4329 = vpack.c.bf16 %v3183, %v3182
        %v4330 = vpack.c.bf16 %v3185, %v3184
        %v4331 = vpack.c.bf16 %v3187, %v3186
        %v4332 = vpack.c.bf16 %v3189, %v3188
        %v4333 = vpack.c.bf16 %v3191, %v3190
        %v4334 = vpack.c.bf16 %v3193, %v3192
        %v4335 = vpack.c.bf16 %v3195, %v3194
        %v4336 = vpack.c.bf16 %v3197, %v3196
        %s4337 = scalar_lea.vmem %s614, 64
        %v4338 = vld [vmem:[%s4337] sm:$0xf]
        %v4339 = vld [vmem:[%s4337 + $0x4] sm:$0xf]
        %v4340 = vld [vmem:[%s4337 + $0x8] sm:$0xf]
        %v4341 = vld [vmem:[%s4337 + $0xc] sm:$0xf]
        %v4346 = vunpack.c.l.b16 %v4338
        %v4347 = vunpack.c.l.b16 %v4339
        %v4348 = vunpack.c.l.b16 %v4340
        %v4349 = vunpack.c.l.b16 %v4341
        %v4350 = vpack.c.b16 %v4347, %v4346
        %v4351 = vpack.c.b16 %v4349, %v4348
        %v4355 = vsel %vm3492, %v4329, 0
        %v4358 = vsel %vm3492, %v4330, 0
        %v4361 = vsel %vm3492, %v4331, 0
        %v4364 = vsel %vm3492, %v4332, 0
        %v4367 = vsel %vm3492, %v4333, 0
        %v4370 = vsel %vm3492, %v4334, 0
        %v4373 = vsel %vm3492, %v4335, 0
        %v4376 = vsel %vm3492, %v4336, 0
        %4378 = vmatprep.subr.bf16.mxu0 0
        %4379 = vmatpush1.bf16.msra.mxu0 %v4350
        %4380 = vmatprep.subr.bf16.mxu0 0
        %4381 = vmatpush1.bf16.msra.mxu0 %v4351
        %4382 = vmatprep.subr.bf16.mxu0 0
        %4383 = vmatpush1.bf16.msra.mxu0 0
        %4384 = vmatprep.subr.bf16.mxu0 0
        %4385 = vmatpush1.bf16.msra.mxu0 0
        %4386 = vmatprep.subr.bf16.mxu0 0
        %4387 = vmatpush1.bf16.msra.mxu0 0
        %4388 = vmatprep.subr.bf16.mxu0 0
        %4389 = vmatpush1.bf16.msra.mxu0 0
        %4390 = vmatprep.subr.bf16.mxu0 0
        %4391 = vmatpush1.bf16.msra.mxu0 0
        %4392 = vmatprep.subr.bf16.mxu0 0
        %4393 = vmatpush1.bf16.msra.mxu0 0
        %4394 = vmatprep.subr.bf16.mxu0 0
        %4395 = vmatpush1.bf16.msra.mxu0 0
        %4396 = vmatprep.subr.bf16.mxu0 0
        %4397 = vmatpush1.bf16.msra.mxu0 0
        %4398 = vmatprep.subr.bf16.mxu0 0
        %4399 = vmatpush1.bf16.msra.mxu0 0
        %4400 = vmatprep.subr.bf16.mxu0 0
        %4401 = vmatpush1.bf16.msra.mxu0 0
        %4402 = vmatprep.subr.bf16.mxu0 0
        %4403 = vmatpush1.bf16.msra.mxu0 0
        %4404 = vmatprep.subr.bf16.mxu0 0
        %4405 = vmatpush1.bf16.msra.mxu0 0
        %4406 = vmatprep.subr.bf16.mxu0 0
        %4407 = vmatpush1.bf16.msra.mxu0 0
        %4408 = vmatprep.subr.bf16.mxu0 0
        %4409 = vmatpush1.bf16.msra.mxu0 0
        %4410 = vmatprep.mubr.bf16.mxu0 0
        %4411 = vmatmul.mubr.bf16.gmra.mrb[0].mxu0 %v4355
        %v4412 = vpop.f32.mrb[0].mxu0
        %v4413 = vadd.f32 0.0, %v4412
        %v4414 = vpop.f32.mrb[0].mxu0
        %v4415 = vpop.f32.mrb[0].mxu0
        %v4416 = vadd.f32 0.0, %v4415
        %v4417 = vpop.f32.mrb[0].mxu0
        %4418 = vmatprep.mubr.bf16.mxu0 0
        %4419 = vmatmul.mubr.bf16.gmra.mrb[0].mxu0 %v4358
        %v4420 = vpop.f32.mrb[0].mxu0
        %v4421 = vadd.f32 0.0, %v4420
        %v4422 = vpop.f32.mrb[0].mxu0
        %v4423 = vpop.f32.mrb[0].mxu0
        %v4424 = vadd.f32 0.0, %v4423
        %v4425 = vpop.f32.mrb[0].mxu0
        %4426 = vmatprep.mubr.bf16.mxu0 0
        %4427 = vmatmul.mubr.bf16.gmra.mrb[0].mxu0 %v4361
        %v4428 = vpop.f32.mrb[0].mxu0
        %v4429 = vadd.f32 0.0, %v4428
        %v4430 = vpop.f32.mrb[0].mxu0
        %v4431 = vpop.f32.mrb[0].mxu0
        %v4432 = vadd.f32 0.0, %v4431
        %v4433 = vpop.f32.mrb[0].mxu0
        %4434 = vmatprep.mubr.bf16.mxu0 0
        %4435 = vmatmul.mubr.bf16.gmra.mrb[0].mxu0 %v4364
        %v4436 = vpop.f32.mrb[0].mxu0
        %v4437 = vadd.f32 0.0, %v4436
        %v4438 = vpop.f32.mrb[0].mxu0
        %v4439 = vpop.f32.mrb[0].mxu0
        %v4440 = vadd.f32 0.0, %v4439
        %v4441 = vpop.f32.mrb[0].mxu0
        %4442 = vmatprep.mubr.bf16.mxu0 0
        %4443 = vmatmul.mubr.bf16.gmra.mrb[0].mxu0 %v4367
        %v4444 = vpop.f32.mrb[0].mxu0
        %v4445 = vadd.f32 0.0, %v4444
        %v4446 = vpop.f32.mrb[0].mxu0
        %v4447 = vpop.f32.mrb[0].mxu0
        %v4448 = vadd.f32 0.0, %v4447
        %v4449 = vpop.f32.mrb[0].mxu0
        %4450 = vmatprep.mubr.bf16.mxu0 0
        %4451 = vmatmul.mubr.bf16.gmra.mrb[0].mxu0 %v4370
        %v4452 = vpop.f32.mrb[0].mxu0
        %v4453 = vadd.f32 0.0, %v4452
        %v4454 = vpop.f32.mrb[0].mxu0
        %v4455 = vpop.f32.mrb[0].mxu0
        %v4456 = vadd.f32 0.0, %v4455
        %v4457 = vpop.f32.mrb[0].mxu0
        %4458 = vmatprep.mubr.bf16.mxu0 0
        %4459 = vmatmul.mubr.bf16.gmra.mrb[0].mxu0 %v4373
        %v4460 = vpop.f32.mrb[0].mxu0
        %v4461 = vadd.f32 0.0, %v4460
        %v4462 = vpop.f32.mrb[0].mxu0
        %v4463 = vpop.f32.mrb[0].mxu0
        %v4464 = vadd.f32 0.0, %v4463
        %v4465 = vpop.f32.mrb[0].mxu0
        %4466 = vmatprep.mubr.bf16.mxu0 0
        %4467 = vmatmul.mubr.bf16.gmra.mrb[0].mxu0 %v4376
        %v4468 = vpop.f32.mrb[0].mxu0
        %v4469 = vadd.f32 0.0, %v4468
        %v4470 = vpop.f32.mrb[0].mxu0
        %v4471 = vpop.f32.mrb[0].mxu0
        %v4472 = vadd.f32 0.0, %v4471
        %v4473 = vpop.f32.mrb[0].mxu0
        %4474 = vdwg.mxu0
        %v4475 = vadd.f32 %v4313, %v4413
        %v4476 = vadd.f32 %v4314, %v4416
        %v4477 = vadd.f32 %v4315, %v4421
        %v4478 = vadd.f32 %v4316, %v4424
        %v4479 = vadd.f32 %v4317, %v4429
        %v4480 = vadd.f32 %v4318, %v4432
        %v4481 = vadd.f32 %v4319, %v4437
        %v4482 = vadd.f32 %v4320, %v4440
        %v4483 = vadd.f32 %v4321, %v4445
        %v4484 = vadd.f32 %v4322, %v4448
        %v4485 = vadd.f32 %v4323, %v4453
        %v4486 = vadd.f32 %v4324, %v4456
        %v4487 = vadd.f32 %v4325, %v4461
        %v4488 = vadd.f32 %v4326, %v4464
        %v4489 = vadd.f32 %v4327, %v4469
        %v4490 = vadd.f32 %v4328, %v4472
        %v4491 = vld [vmem:[#allocation2 + $0x11] sm:$0xff]
        %v4492 = vld [vmem:[#allocation2 + $0x19] sm:$0xff]
        %v4493 = vld [vmem:[#allocation2 + $0x21] sm:$0xff]
        %v4494 = vld [vmem:[#allocation2 + $0x29] sm:$0xff]
        %v4495 = vld [vmem:[#allocation2 + $0x31] sm:$0xff]
        %v4496 = vld [vmem:[#allocation2 + $0x39] sm:$0xff]
        %v4497 = vld [vmem:[#allocation2 + $0x41] sm:$0xff]
        %v4498 = vld [vmem:[#allocation2 + $0x49] sm:$0xff]
        %v4499 = vld [vmem:[#allocation2 + $0x51] sm:$0xff]
        %v4500 = vld [vmem:[#allocation2 + $0x59] sm:$0xff]
        %v4501 = vld [vmem:[#allocation2 + $0x61] sm:$0xff]
        %v4502 = vld [vmem:[#allocation2 + $0x69] sm:$0xff]
        %v4503 = vld [vmem:[#allocation2 + $0x71] sm:$0xff]
        %v4504 = vld [vmem:[#allocation2 + $0x79] sm:$0xff]
        %v4505 = vld [vmem:[#allocation2 + $0x81] sm:$0xff]
        %v4506 = vld [vmem:[#allocation2 + $0x89] sm:$0xff]
        %s4507 = scalar_lea.vmem %s1, 640
        %v4508 = vld [vmem:[%s4507] sm:$0xff]
        %v4509 = vld [vmem:[%s4507 + $0x8] sm:$0xff]
        %v4510 = vld [vmem:[%s4507 + $0x10] sm:$0xff]
        %v4511 = vld [vmem:[%s4507 + $0x18] sm:$0xff]
        %v4512 = vld [vmem:[%s4507 + $0x20] sm:$0xff]
        %v4513 = vld [vmem:[%s4507 + $0x28] sm:$0xff]
        %v4514 = vld [vmem:[%s4507 + $0x30] sm:$0xff]
        %v4515 = vld [vmem:[%s4507 + $0x38] sm:$0xff]
        %v4516 = vld [vmem:[%s4507 + $0x40] sm:$0xff]
        %v4517 = vld [vmem:[%s4507 + $0x48] sm:$0xff]
        %v4518 = vld [vmem:[%s4507 + $0x50] sm:$0xff]
        %v4519 = vld [vmem:[%s4507 + $0x58] sm:$0xff]
        %v4520 = vld [vmem:[%s4507 + $0x60] sm:$0xff]
        %v4521 = vld [vmem:[%s4507 + $0x68] sm:$0xff]
        %v4522 = vld [vmem:[%s4507 + $0x70] sm:$0xff]
        %v4523 = vld [vmem:[%s4507 + $0x78] sm:$0xff]
        %4525 = vset.pattern.permute.xlu0 0
        %4526 = vperm.xlu0 %4525, %v4508
        %v4527 = vpop.permute.xlu0 %4526
        %4530 = vset.pattern.permute.xlu0 0
        %4531 = vperm.xlu0 %4530, %v4509
        %v4532 = vpop.permute.xlu0 %4531
        %4535 = vset.pattern.permute.xlu0 0
        %4536 = vperm.xlu0 %4535, %v4510
        %v4537 = vpop.permute.xlu0 %4536
        %4540 = vset.pattern.permute.xlu0 0
        %4541 = vperm.xlu0 %4540, %v4511
        %v4542 = vpop.permute.xlu0 %4541
        %4545 = vset.pattern.permute.xlu0 0
        %4546 = vperm.xlu0 %4545, %v4512
        %v4547 = vpop.permute.xlu0 %4546
        %4550 = vset.pattern.permute.xlu0 0
        %4551 = vperm.xlu0 %4550, %v4513
        %v4552 = vpop.permute.xlu0 %4551
        %4555 = vset.pattern.permute.xlu0 0
        %4556 = vperm.xlu0 %4555, %v4514
        %v4557 = vpop.permute.xlu0 %4556
        %4560 = vset.pattern.permute.xlu0 0
        %4561 = vperm.xlu0 %4560, %v4515
        %v4562 = vpop.permute.xlu0 %4561
        %4565 = vset.pattern.permute.xlu0 0
        %4566 = vperm.xlu0 %4565, %v4516
        %v4567 = vpop.permute.xlu0 %4566
        %4570 = vset.pattern.permute.xlu0 0
        %4571 = vperm.xlu0 %4570, %v4517
        %v4572 = vpop.permute.xlu0 %4571
        %4575 = vset.pattern.permute.xlu0 0
        %4576 = vperm.xlu0 %4575, %v4518
        %v4577 = vpop.permute.xlu0 %4576
        %4580 = vset.pattern.permute.xlu0 0
        %4581 = vperm.xlu0 %4580, %v4519
        %v4582 = vpop.permute.xlu0 %4581
        %4585 = vset.pattern.permute.xlu0 0
        %4586 = vperm.xlu0 %4585, %v4520
        %v4587 = vpop.permute.xlu0 %4586
        %4590 = vset.pattern.permute.xlu0 0
        %4591 = vperm.xlu0 %4590, %v4521
        %v4592 = vpop.permute.xlu0 %4591
        %4595 = vset.pattern.permute.xlu0 0
        %4596 = vperm.xlu0 %4595, %v4522
        %v4597 = vpop.permute.xlu0 %4596
        %4600 = vset.pattern.permute.xlu0 0
        %4601 = vperm.xlu0 %4600, %v4523
        %v4602 = vpop.permute.xlu0 %4601
        %v4604 = vmul.f32 %v4491, %v4527
        %v4605 = vmul.f32 %v4492, %v4532
        %v4606 = vmul.f32 %v4493, %v4537
        %v4607 = vmul.f32 %v4494, %v4542
        %v4608 = vmul.f32 %v4495, %v4547
        %v4609 = vmul.f32 %v4496, %v4552
        %v4610 = vmul.f32 %v4497, %v4557
        %v4611 = vmul.f32 %v4498, %v4562
        %v4612 = vmul.f32 %v4499, %v4567
        %v4613 = vmul.f32 %v4500, %v4572
        %v4614 = vmul.f32 %v4501, %v4577
        %v4615 = vmul.f32 %v4502, %v4582
        %v4616 = vmul.f32 %v4503, %v4587
        %v4617 = vmul.f32 %v4504, %v4592
        %v4618 = vmul.f32 %v4505, %v4597
        %v4619 = vmul.f32 %v4506, %v4602
        %v4620 = vpack.c.bf16 %v4605, %v4604
        %v4621 = vpack.c.bf16 %v4607, %v4606
        %v4622 = vpack.c.bf16 %v4609, %v4608
        %v4623 = vpack.c.bf16 %v4611, %v4610
        %v4624 = vpack.c.bf16 %v4613, %v4612
        %v4625 = vpack.c.bf16 %v4615, %v4614
        %v4626 = vpack.c.bf16 %v4617, %v4616
        %v4627 = vpack.c.bf16 %v4619, %v4618
        %s4628 = scalar_lea.vmem %s614, 80
        %v4629 = vld [vmem:[%s4628] sm:$0xf]
        %v4630 = vld [vmem:[%s4628 + $0x4] sm:$0xf]
        %v4631 = vld [vmem:[%s4628 + $0x8] sm:$0xf]
        %v4632 = vld [vmem:[%s4628 + $0xc] sm:$0xf]
        %v4637 = vunpack.c.l.b16 %v4629
        %v4638 = vunpack.c.l.b16 %v4630
        %v4639 = vunpack.c.l.b16 %v4631
        %v4640 = vunpack.c.l.b16 %v4632
        %v4641 = vpack.c.b16 %v4638, %v4637
        %v4642 = vpack.c.b16 %v4640, %v4639
        %v4646 = vsel %vm3492, %v4620, 0
        %v4649 = vsel %vm3492, %v4621, 0
        %v4652 = vsel %vm3492, %v4622, 0
        %v4655 = vsel %vm3492, %v4623, 0
        %v4658 = vsel %vm3492, %v4624, 0
        %v4661 = vsel %vm3492, %v4625, 0
        %v4664 = vsel %vm3492, %v4626, 0
        %v4667 = vsel %vm3492, %v4627, 0
        %4669 = vmatprep.subr.bf16.mxu0 0
        %4670 = vmatpush1.bf16.msra.mxu0 %v4641
        %4671 = vmatprep.subr.bf16.mxu0 0
        %4672 = vmatpush1.bf16.msra.mxu0 %v4642
        %4673 = vmatprep.subr.bf16.mxu0 0
        %4674 = vmatpush1.bf16.msra.mxu0 0
        %4675 = vmatprep.subr.bf16.mxu0 0
        %4676 = vmatpush1.bf16.msra.mxu0 0
        %4677 = vmatprep.subr.bf16.mxu0 0
        %4678 = vmatpush1.bf16.msra.mxu0 0
        %4679 = vmatprep.subr.bf16.mxu0 0
        %4680 = vmatpush1.bf16.msra.mxu0 0
        %4681 = vmatprep.subr.bf16.mxu0 0
        %4682 = vmatpush1.bf16.msra.mxu0 0
        %4683 = vmatprep.subr.bf16.mxu0 0
        %4684 = vmatpush1.bf16.msra.mxu0 0
        %4685 = vmatprep.subr.bf16.mxu0 0
        %4686 = vmatpush1.bf16.msra.mxu0 0
        %4687 = vmatprep.subr.bf16.mxu0 0
        %4688 = vmatpush1.bf16.msra.mxu0 0
        %4689 = vmatprep.subr.bf16.mxu0 0
        %4690 = vmatpush1.bf16.msra.mxu0 0
        %4691 = vmatprep.subr.bf16.mxu0 0
        %4692 = vmatpush1.bf16.msra.mxu0 0
        %4693 = vmatprep.subr.bf16.mxu0 0
        %4694 = vmatpush1.bf16.msra.mxu0 0
        %4695 = vmatprep.subr.bf16.mxu0 0
        %4696 = vmatpush1.bf16.msra.mxu0 0
        %4697 = vmatprep.subr.bf16.mxu0 0
        %4698 = vmatpush1.bf16.msra.mxu0 0
        %4699 = vmatprep.subr.bf16.mxu0 0
        %4700 = vmatpush1.bf16.msra.mxu0 0
        %4701 = vmatprep.mubr.bf16.mxu0 0
        %4702 = vmatmul.mubr.bf16.gmra.mrb[0].mxu0 %v4646
        %v4703 = vpop.f32.mrb[0].mxu0
        %v4704 = vadd.f32 0.0, %v4703
        %v4705 = vpop.f32.mrb[0].mxu0
        %v4706 = vpop.f32.mrb[0].mxu0
        %v4707 = vadd.f32 0.0, %v4706
        %v4708 = vpop.f32.mrb[0].mxu0
        %4709 = vmatprep.mubr.bf16.mxu0 0
        %4710 = vmatmul.mubr.bf16.gmra.mrb[0].mxu0 %v4649
        %v4711 = vpop.f32.mrb[0].mxu0
        %v4712 = vadd.f32 0.0, %v4711
        %v4713 = vpop.f32.mrb[0].mxu0
        %v4714 = vpop.f32.mrb[0].mxu0
        %v4715 = vadd.f32 0.0, %v4714
        %v4716 = vpop.f32.mrb[0].mxu0
        %4717 = vmatprep.mubr.bf16.mxu0 0
        %4718 = vmatmul.mubr.bf16.gmra.mrb[0].mxu0 %v4652
        %v4719 = vpop.f32.mrb[0].mxu0
        %v4720 = vadd.f32 0.0, %v4719
        %v4721 = vpop.f32.mrb[0].mxu0
        %v4722 = vpop.f32.mrb[0].mxu0
        %v4723 = vadd.f32 0.0, %v4722
        %v4724 = vpop.f32.mrb[0].mxu0
        %4725 = vmatprep.mubr.bf16.mxu0 0
        %4726 = vmatmul.mubr.bf16.gmra.mrb[0].mxu0 %v4655
        %v4727 = vpop.f32.mrb[0].mxu0
        %v4728 = vadd.f32 0.0, %v4727
        %v4729 = vpop.f32.mrb[0].mxu0
        %v4730 = vpop.f32.mrb[0].mxu0
        %v4731 = vadd.f32 0.0, %v4730
        %v4732 = vpop.f32.mrb[0].mxu0
        %4733 = vmatprep.mubr.bf16.mxu0 0
        %4734 = vmatmul.mubr.bf16.gmra.mrb[0].mxu0 %v4658
        %v4735 = vpop.f32.mrb[0].mxu0
        %v4736 = vadd.f32 0.0, %v4735
        %v4737 = vpop.f32.mrb[0].mxu0
        %v4738 = vpop.f32.mrb[0].mxu0
        %v4739 = vadd.f32 0.0, %v4738
        %v4740 = vpop.f32.mrb[0].mxu0
        %4741 = vmatprep.mubr.bf16.mxu0 0
        %4742 = vmatmul.mubr.bf16.gmra.mrb[0].mxu0 %v4661
        %v4743 = vpop.f32.mrb[0].mxu0
        %v4744 = vadd.f32 0.0, %v4743
        %v4745 = vpop.f32.mrb[0].mxu0
        %v4746 = vpop.f32.mrb[0].mxu0
        %v4747 = vadd.f32 0.0, %v4746
        %v4748 = vpop.f32.mrb[0].mxu0
        %4749 = vmatprep.mubr.bf16.mxu0 0
        %4750 = vmatmul.mubr.bf16.gmra.mrb[0].mxu0 %v4664
        %v4751 = vpop.f32.mrb[0].mxu0
        %v4752 = vadd.f32 0.0, %v4751
        %v4753 = vpop.f32.mrb[0].mxu0
        %v4754 = vpop.f32.mrb[0].mxu0
        %v4755 = vadd.f32 0.0, %v4754
        %v4756 = vpop.f32.mrb[0].mxu0
        %4757 = vmatprep.mubr.bf16.mxu0 0
        %4758 = vmatmul.mubr.bf16.gmra.mrb[0].mxu0 %v4667
        %v4759 = vpop.f32.mrb[0].mxu0
        %v4760 = vadd.f32 0.0, %v4759
        %v4761 = vpop.f32.mrb[0].mxu0
        %v4762 = vpop.f32.mrb[0].mxu0
        %v4763 = vadd.f32 0.0, %v4762
        %v4764 = vpop.f32.mrb[0].mxu0
        %4765 = vdwg.mxu0
        %v4766 = vadd.f32 %v4475, %v4704
        %v4767 = vadd.f32 %v4476, %v4707
        %v4768 = vadd.f32 %v4477, %v4712
        %v4769 = vadd.f32 %v4478, %v4715
        %v4770 = vadd.f32 %v4479, %v4720
        %v4771 = vadd.f32 %v4480, %v4723
        %v4772 = vadd.f32 %v4481, %v4728
        %v4773 = vadd.f32 %v4482, %v4731
        %v4774 = vadd.f32 %v4483, %v4736
        %v4775 = vadd.f32 %v4484, %v4739
        %v4776 = vadd.f32 %v4485, %v4744
        %v4777 = vadd.f32 %v4486, %v4747
        %v4778 = vadd.f32 %v4487, %v4752
        %v4779 = vadd.f32 %v4488, %v4755
        %v4780 = vadd.f32 %v4489, %v4760
        %v4781 = vadd.f32 %v4490, %v4763
        %v4782 = vld [vmem:[#allocation2 + $0x17] sm:$0xff]
        %v4783 = vld [vmem:[#allocation2 + $0x1f] sm:$0xff]
        %v4784 = vld [vmem:[#allocation2 + $0x27] sm:$0xff]
        %v4785 = vld [vmem:[#allocation2 + $0x2f] sm:$0xff]
        %v4786 = vld [vmem:[#allocation2 + $0x37] sm:$0xff]
        %v4787 = vld [vmem:[#allocation2 + $0x3f] sm:$0xff]
        %v4788 = vld [vmem:[#allocation2 + $0x47] sm:$0xff]
        %v4789 = vld [vmem:[#allocation2 + $0x4f] sm:$0xff]
        %v4790 = vld [vmem:[#allocation2 + $0x57] sm:$0xff]
        %v4791 = vld [vmem:[#allocation2 + $0x5f] sm:$0xff]
        %v4792 = vld [vmem:[#allocation2 + $0x67] sm:$0xff]
        %v4793 = vld [vmem:[#allocation2 + $0x6f] sm:$0xff]
        %v4794 = vld [vmem:[#allocation2 + $0x77] sm:$0xff]
        %v4795 = vld [vmem:[#allocation2 + $0x7f] sm:$0xff]
        %v4796 = vld [vmem:[#allocation2 + $0x87] sm:$0xff]
        %v4797 = vld [vmem:[#allocation2 + $0x8f] sm:$0xff]
        %s4798 = scalar_lea.vmem %s1, 768
        %v4799 = vld [vmem:[%s4798] sm:$0xff]
        %v4800 = vld [vmem:[%s4798 + $0x8] sm:$0xff]
        %v4801 = vld [vmem:[%s4798 + $0x10] sm:$0xff]
        %v4802 = vld [vmem:[%s4798 + $0x18] sm:$0xff]
        %v4803 = vld [vmem:[%s4798 + $0x20] sm:$0xff]
        %v4804 = vld [vmem:[%s4798 + $0x28] sm:$0xff]
        %v4805 = vld [vmem:[%s4798 + $0x30] sm:$0xff]
        %v4806 = vld [vmem:[%s4798 + $0x38] sm:$0xff]
        %v4807 = vld [vmem:[%s4798 + $0x40] sm:$0xff]
        %v4808 = vld [vmem:[%s4798 + $0x48] sm:$0xff]
        %v4809 = vld [vmem:[%s4798 + $0x50] sm:$0xff]
        %v4810 = vld [vmem:[%s4798 + $0x58] sm:$0xff]
        %v4811 = vld [vmem:[%s4798 + $0x60] sm:$0xff]
        %v4812 = vld [vmem:[%s4798 + $0x68] sm:$0xff]
        %v4813 = vld [vmem:[%s4798 + $0x70] sm:$0xff]
        %v4814 = vld [vmem:[%s4798 + $0x78] sm:$0xff]
        %4816 = vset.pattern.permute.xlu0 0
        %4817 = vperm.xlu0 %4816, %v4799
        %v4818 = vpop.permute.xlu0 %4817
        %4821 = vset.pattern.permute.xlu0 0
        %4822 = vperm.xlu0 %4821, %v4800
        %v4823 = vpop.permute.xlu0 %4822
        %4826 = vset.pattern.permute.xlu0 0
        %4827 = vperm.xlu0 %4826, %v4801
        %v4828 = vpop.permute.xlu0 %4827
        %4831 = vset.pattern.permute.xlu0 0
        %4832 = vperm.xlu0 %4831, %v4802
        %v4833 = vpop.permute.xlu0 %4832
        %4836 = vset.pattern.permute.xlu0 0
        %4837 = vperm.xlu0 %4836, %v4803
        %v4838 = vpop.permute.xlu0 %4837
        %4841 = vset.pattern.permute.xlu0 0
        %4842 = vperm.xlu0 %4841, %v4804
        %v4843 = vpop.permute.xlu0 %4842
        %4846 = vset.pattern.permute.xlu0 0
        %4847 = vperm.xlu0 %4846, %v4805
        %v4848 = vpop.permute.xlu0 %4847
        %4851 = vset.pattern.permute.xlu0 0
        %4852 = vperm.xlu0 %4851, %v4806
        %v4853 = vpop.permute.xlu0 %4852
        %4856 = vset.pattern.permute.xlu0 0
        %4857 = vperm.xlu0 %4856, %v4807
        %v4858 = vpop.permute.xlu0 %4857
        %4861 = vset.pattern.permute.xlu0 0
        %4862 = vperm.xlu0 %4861, %v4808
        %v4863 = vpop.permute.xlu0 %4862
        %4866 = vset.pattern.permute.xlu0 0
        %4867 = vperm.xlu0 %4866, %v4809
        %v4868 = vpop.permute.xlu0 %4867
        %4871 = vset.pattern.permute.xlu0 0
        %4872 = vperm.xlu0 %4871, %v4810
        %v4873 = vpop.permute.xlu0 %4872
        %4876 = vset.pattern.permute.xlu0 0
        %4877 = vperm.xlu0 %4876, %v4811
        %v4878 = vpop.permute.xlu0 %4877
        %4881 = vset.pattern.permute.xlu0 0
        %4882 = vperm.xlu0 %4881, %v4812
        %v4883 = vpop.permute.xlu0 %4882
        %4886 = vset.pattern.permute.xlu0 0
        %4887 = vperm.xlu0 %4886, %v4813
        %v4888 = vpop.permute.xlu0 %4887
        %4891 = vset.pattern.permute.xlu0 0
        %4892 = vperm.xlu0 %4891, %v4814
        %v4893 = vpop.permute.xlu0 %4892
        %v4895 = vmul.f32 %v4782, %v4818
        %v4896 = vmul.f32 %v4783, %v4823
        %v4897 = vmul.f32 %v4784, %v4828
        %v4898 = vmul.f32 %v4785, %v4833
        %v4899 = vmul.f32 %v4786, %v4838
        %v4900 = vmul.f32 %v4787, %v4843
        %v4901 = vmul.f32 %v4788, %v4848
        %v4902 = vmul.f32 %v4789, %v4853
        %v4903 = vmul.f32 %v4790, %v4858
        %v4904 = vmul.f32 %v4791, %v4863
        %v4905 = vmul.f32 %v4792, %v4868
        %v4906 = vmul.f32 %v4793, %v4873
        %v4907 = vmul.f32 %v4794, %v4878
        %v4908 = vmul.f32 %v4795, %v4883
        %v4909 = vmul.f32 %v4796, %v4888
        %v4910 = vmul.f32 %v4797, %v4893
        %v4911 = vpack.c.bf16 %v4896, %v4895
        %v4912 = vpack.c.bf16 %v4898, %v4897
        %v4913 = vpack.c.bf16 %v4900, %v4899
        %v4914 = vpack.c.bf16 %v4902, %v4901
        %v4915 = vpack.c.bf16 %v4904, %v4903
        %v4916 = vpack.c.bf16 %v4906, %v4905
        %v4917 = vpack.c.bf16 %v4908, %v4907
        %v4918 = vpack.c.bf16 %v4910, %v4909
        %s4919 = scalar_lea.vmem %s614, 96
        %v4920 = vld [vmem:[%s4919] sm:$0xf]
        %v4921 = vld [vmem:[%s4919 + $0x4] sm:$0xf]
        %v4922 = vld [vmem:[%s4919 + $0x8] sm:$0xf]
        %v4923 = vld [vmem:[%s4919 + $0xc] sm:$0xf]
        %v4928 = vunpack.c.l.b16 %v4920
        %v4929 = vunpack.c.l.b16 %v4921
        %v4930 = vunpack.c.l.b16 %v4922
        %v4931 = vunpack.c.l.b16 %v4923
        %v4932 = vpack.c.b16 %v4929, %v4928
        %v4933 = vpack.c.b16 %v4931, %v4930
        %v4937 = vsel %vm3492, %v4911, 0
        %v4940 = vsel %vm3492, %v4912, 0
        %v4943 = vsel %vm3492, %v4913, 0
        %v4946 = vsel %vm3492, %v4914, 0
        %v4949 = vsel %vm3492, %v4915, 0
        %v4952 = vsel %vm3492, %v4916, 0
        %v4955 = vsel %vm3492, %v4917, 0
        %v4958 = vsel %vm3492, %v4918, 0
        %4960 = vmatprep.subr.bf16.mxu0 0
        %4961 = vmatpush1.bf16.msra.mxu0 %v4932
        %4962 = vmatprep.subr.bf16.mxu0 0
        %4963 = vmatpush1.bf16.msra.mxu0 %v4933
        %4964 = vmatprep.subr.bf16.mxu0 0
        %4965 = vmatpush1.bf16.msra.mxu0 0
        %4966 = vmatprep.subr.bf16.mxu0 0
        %4967 = vmatpush1.bf16.msra.mxu0 0
        %4968 = vmatprep.subr.bf16.mxu0 0
        %4969 = vmatpush1.bf16.msra.mxu0 0
        %4970 = vmatprep.subr.bf16.mxu0 0
        %4971 = vmatpush1.bf16.msra.mxu0 0
        %4972 = vmatprep.subr.bf16.mxu0 0
        %4973 = vmatpush1.bf16.msra.mxu0 0
        %4974 = vmatprep.subr.bf16.mxu0 0
        %4975 = vmatpush1.bf16.msra.mxu0 0
        %4976 = vmatprep.subr.bf16.mxu0 0
        %4977 = vmatpush1.bf16.msra.mxu0 0
        %4978 = vmatprep.subr.bf16.mxu0 0
        %4979 = vmatpush1.bf16.msra.mxu0 0
        %4980 = vmatprep.subr.bf16.mxu0 0
        %4981 = vmatpush1.bf16.msra.mxu0 0
        %4982 = vmatprep.subr.bf16.mxu0 0
        %4983 = vmatpush1.bf16.msra.mxu0 0
        %4984 = vmatprep.subr.bf16.mxu0 0
        %4985 = vmatpush1.bf16.msra.mxu0 0
        %4986 = vmatprep.subr.bf16.mxu0 0
        %4987 = vmatpush1.bf16.msra.mxu0 0
        %4988 = vmatprep.subr.bf16.mxu0 0
        %4989 = vmatpush1.bf16.msra.mxu0 0
        %4990 = vmatprep.subr.bf16.mxu0 0
        %4991 = vmatpush1.bf16.msra.mxu0 0
        %4992 = vmatprep.mubr.bf16.mxu0 0
        %4993 = vmatmul.mubr.bf16.gmra.mrb[0].mxu0 %v4937
        %v4994 = vpop.f32.mrb[0].mxu0
        %v4995 = vadd.f32 0.0, %v4994
        %v4996 = vpop.f32.mrb[0].mxu0
        %v4997 = vpop.f32.mrb[0].mxu0
        %v4998 = vadd.f32 0.0, %v4997
        %v4999 = vpop.f32.mrb[0].mxu0
        %5000 = vmatprep.mubr.bf16.mxu0 0
        %5001 = vmatmul.mubr.bf16.gmra.mrb[0].mxu0 %v4940
        %v5002 = vpop.f32.mrb[0].mxu0
        %v5003 = vadd.f32 0.0, %v5002
        %v5004 = vpop.f32.mrb[0].mxu0
        %v5005 = vpop.f32.mrb[0].mxu0
        %v5006 = vadd.f32 0.0, %v5005
        %v5007 = vpop.f32.mrb[0].mxu0
        %5008 = vmatprep.mubr.bf16.mxu0 0
        %5009 = vmatmul.mubr.bf16.gmra.mrb[0].mxu0 %v4943
        %v5010 = vpop.f32.mrb[0].mxu0
        %v5011 = vadd.f32 0.0, %v5010
        %v5012 = vpop.f32.mrb[0].mxu0
        %v5013 = vpop.f32.mrb[0].mxu0
        %v5014 = vadd.f32 0.0, %v5013
        %v5015 = vpop.f32.mrb[0].mxu0
        %5016 = vmatprep.mubr.bf16.mxu0 0
        %5017 = vmatmul.mubr.bf16.gmra.mrb[0].mxu0 %v4946
        %v5018 = vpop.f32.mrb[0].mxu0
        %v5019 = vadd.f32 0.0, %v5018
        %v5020 = vpop.f32.mrb[0].mxu0
        %v5021 = vpop.f32.mrb[0].mxu0
        %v5022 = vadd.f32 0.0, %v5021
        %v5023 = vpop.f32.mrb[0].mxu0
        %5024 = vmatprep.mubr.bf16.mxu0 0
        %5025 = vmatmul.mubr.bf16.gmra.mrb[0].mxu0 %v4949
        %v5026 = vpop.f32.mrb[0].mxu0
        %v5027 = vadd.f32 0.0, %v5026
        %v5028 = vpop.f32.mrb[0].mxu0
        %v5029 = vpop.f32.mrb[0].mxu0
        %v5030 = vadd.f32 0.0, %v5029
        %v5031 = vpop.f32.mrb[0].mxu0
        %5032 = vmatprep.mubr.bf16.mxu0 0
        %5033 = vmatmul.mubr.bf16.gmra.mrb[0].mxu0 %v4952
        %v5034 = vpop.f32.mrb[0].mxu0
        %v5035 = vadd.f32 0.0, %v5034
        %v5036 = vpop.f32.mrb[0].mxu0
        %v5037 = vpop.f32.mrb[0].mxu0
        %v5038 = vadd.f32 0.0, %v5037
        %v5039 = vpop.f32.mrb[0].mxu0
        %5040 = vmatprep.mubr.bf16.mxu0 0
        %5041 = vmatmul.mubr.bf16.gmra.mrb[0].mxu0 %v4955
        %v5042 = vpop.f32.mrb[0].mxu0
        %v5043 = vadd.f32 0.0, %v5042
        %v5044 = vpop.f32.mrb[0].mxu0
        %v5045 = vpop.f32.mrb[0].mxu0
        %v5046 = vadd.f32 0.0, %v5045
        %v5047 = vpop.f32.mrb[0].mxu0
        %5048 = vmatprep.mubr.bf16.mxu0 0
        %5049 = vmatmul.mubr.bf16.gmra.mrb[0].mxu0 %v4958
        %v5050 = vpop.f32.mrb[0].mxu0
        %v5051 = vadd.f32 0.0, %v5050
        %v5052 = vpop.f32.mrb[0].mxu0
        %v5053 = vpop.f32.mrb[0].mxu0
        %v5054 = vadd.f32 0.0, %v5053
        %v5055 = vpop.f32.mrb[0].mxu0
        %5056 = vdwg.mxu0
        %v5057 = vadd.f32 %v4766, %v4995
        %v5058 = vadd.f32 %v4767, %v4998
        %v5059 = vadd.f32 %v4768, %v5003
        %v5060 = vadd.f32 %v4769, %v5006
        %v5061 = vadd.f32 %v4770, %v5011
        %v5062 = vadd.f32 %v4771, %v5014
        %v5063 = vadd.f32 %v4772, %v5019
        %v5064 = vadd.f32 %v4773, %v5022
        %v5065 = vadd.f32 %v4774, %v5027
        %v5066 = vadd.f32 %v4775, %v5030
        %v5067 = vadd.f32 %v4776, %v5035
        %v5068 = vadd.f32 %v4777, %v5038
        %v5069 = vadd.f32 %v4778, %v5043
        %v5070 = vadd.f32 %v4779, %v5046
        %v5071 = vadd.f32 %v4780, %v5051
        %v5072 = vadd.f32 %v4781, %v5054
        %v5073 = vld [vmem:[#allocation2 + $0x18] sm:$0xff]
        %v5074 = vld [vmem:[#allocation2 + $0x20] sm:$0xff]
        %v5075 = vld [vmem:[#allocation2 + $0x28] sm:$0xff]
        %v5076 = vld [vmem:[#allocation2 + $0x30] sm:$0xff]
        %v5077 = vld [vmem:[#allocation2 + $0x38] sm:$0xff]
        %v5078 = vld [vmem:[#allocation2 + $0x40] sm:$0xff]
        %v5079 = vld [vmem:[#allocation2 + $0x48] sm:$0xff]
        %v5080 = vld [vmem:[#allocation2 + $0x50] sm:$0xff]
        %v5081 = vld [vmem:[#allocation2 + $0x58] sm:$0xff]
        %v5082 = vld [vmem:[#allocation2 + $0x60] sm:$0xff]
        %v5083 = vld [vmem:[#allocation2 + $0x68] sm:$0xff]
        %v5084 = vld [vmem:[#allocation2 + $0x70] sm:$0xff]
        %v5085 = vld [vmem:[#allocation2 + $0x78] sm:$0xff]
        %v5086 = vld [vmem:[#allocation2 + $0x80] sm:$0xff]
        %v5087 = vld [vmem:[#allocation2 + $0x88] sm:$0xff]
        %v5088 = vld [vmem:[#allocation2 + $0x90] sm:$0xff]
        %s5089 = scalar_lea.vmem %s1, 896
        %v5090 = vld [vmem:[%s5089] sm:$0xff]
        %v5091 = vld [vmem:[%s5089 + $0x8] sm:$0xff]
        %v5092 = vld [vmem:[%s5089 + $0x10] sm:$0xff]
        %v5093 = vld [vmem:[%s5089 + $0x18] sm:$0xff]
        %v5094 = vld [vmem:[%s5089 + $0x20] sm:$0xff]
        %v5095 = vld [vmem:[%s5089 + $0x28] sm:$0xff]
        %v5096 = vld [vmem:[%s5089 + $0x30] sm:$0xff]
        %v5097 = vld [vmem:[%s5089 + $0x38] sm:$0xff]
        %v5098 = vld [vmem:[%s5089 + $0x40] sm:$0xff]
        %v5099 = vld [vmem:[%s5089 + $0x48] sm:$0xff]
        %v5100 = vld [vmem:[%s5089 + $0x50] sm:$0xff]
        %v5101 = vld [vmem:[%s5089 + $0x58] sm:$0xff]
        %v5102 = vld [vmem:[%s5089 + $0x60] sm:$0xff]
        %v5103 = vld [vmem:[%s5089 + $0x68] sm:$0xff]
        %v5104 = vld [vmem:[%s5089 + $0x70] sm:$0xff]
        %v5105 = vld [vmem:[%s5089 + $0x78] sm:$0xff]
        %5107 = vset.pattern.permute.xlu0 0
        %5108 = vperm.xlu0 %5107, %v5090
        %v5109 = vpop.permute.xlu0 %5108
        %5112 = vset.pattern.permute.xlu0 0
        %5113 = vperm.xlu0 %5112, %v5091
        %v5114 = vpop.permute.xlu0 %5113
        %5117 = vset.pattern.permute.xlu0 0
        %5118 = vperm.xlu0 %5117, %v5092
        %v5119 = vpop.permute.xlu0 %5118
        %5122 = vset.pattern.permute.xlu0 0
        %5123 = vperm.xlu0 %5122, %v5093
        %v5124 = vpop.permute.xlu0 %5123
        %5127 = vset.pattern.permute.xlu0 0
        %5128 = vperm.xlu0 %5127, %v5094
        %v5129 = vpop.permute.xlu0 %5128
        %5132 = vset.pattern.permute.xlu0 0
        %5133 = vperm.xlu0 %5132, %v5095
        %v5134 = vpop.permute.xlu0 %5133
        %5137 = vset.pattern.permute.xlu0 0
        %5138 = vperm.xlu0 %5137, %v5096
        %v5139 = vpop.permute.xlu0 %5138
        %5142 = vset.pattern.permute.xlu0 0
        %5143 = vperm.xlu0 %5142, %v5097
        %v5144 = vpop.permute.xlu0 %5143
        %5147 = vset.pattern.permute.xlu0 0
        %5148 = vperm.xlu0 %5147, %v5098
        %v5149 = vpop.permute.xlu0 %5148
        %5152 = vset.pattern.permute.xlu0 0
        %5153 = vperm.xlu0 %5152, %v5099
        %v5154 = vpop.permute.xlu0 %5153
        %5157 = vset.pattern.permute.xlu0 0
        %5158 = vperm.xlu0 %5157, %v5100
        %v5159 = vpop.permute.xlu0 %5158
        %5162 = vset.pattern.permute.xlu0 0
        %5163 = vperm.xlu0 %5162, %v5101
        %v5164 = vpop.permute.xlu0 %5163
        %5167 = vset.pattern.permute.xlu0 0
        %5168 = vperm.xlu0 %5167, %v5102
        %v5169 = vpop.permute.xlu0 %5168
        %5172 = vset.pattern.permute.xlu0 0
        %5173 = vperm.xlu0 %5172, %v5103
        %v5174 = vpop.permute.xlu0 %5173
        %5177 = vset.pattern.permute.xlu0 0
        %5178 = vperm.xlu0 %5177, %v5104
        %v5179 = vpop.permute.xlu0 %5178
        %5182 = vset.pattern.permute.xlu0 0
        %5183 = vperm.xlu0 %5182, %v5105
        %v5184 = vpop.permute.xlu0 %5183
        %v5186 = vmul.f32 %v5073, %v5109
        %v5187 = vmul.f32 %v5074, %v5114
        %v5188 = vmul.f32 %v5075, %v5119
        %v5189 = vmul.f32 %v5076, %v5124
        %v5190 = vmul.f32 %v5077, %v5129
        %v5191 = vmul.f32 %v5078, %v5134
        %v5192 = vmul.f32 %v5079, %v5139
        %v5193 = vmul.f32 %v5080, %v5144
        %v5194 = vmul.f32 %v5081, %v5149
        %v5195 = vmul.f32 %v5082, %v5154
        %v5196 = vmul.f32 %v5083, %v5159
        %v5197 = vmul.f32 %v5084, %v5164
        %v5198 = vmul.f32 %v5085, %v5169
        %v5199 = vmul.f32 %v5086, %v5174
        %v5200 = vmul.f32 %v5087, %v5179
        %v5201 = vmul.f32 %v5088, %v5184
        %v5202 = vpack.c.bf16 %v5187, %v5186
        %v5203 = vpack.c.bf16 %v5189, %v5188
        %v5204 = vpack.c.bf16 %v5191, %v5190
        %v5205 = vpack.c.bf16 %v5193, %v5192
        %v5206 = vpack.c.bf16 %v5195, %v5194
        %v5207 = vpack.c.bf16 %v5197, %v5196
        %v5208 = vpack.c.bf16 %v5199, %v5198
        %v5209 = vpack.c.bf16 %v5201, %v5200
        %s5210 = scalar_lea.vmem %s614, 112
        %v5211 = vld [vmem:[%s5210] sm:$0xf]
        %v5212 = vld [vmem:[%s5210 + $0x4] sm:$0xf]
        %v5213 = vld [vmem:[%s5210 + $0x8] sm:$0xf]
        %v5214 = vld [vmem:[%s5210 + $0xc] sm:$0xf]
        %v5219 = vunpack.c.l.b16 %v5211
        %v5220 = vunpack.c.l.b16 %v5212
        %v5221 = vunpack.c.l.b16 %v5213
        %v5222 = vunpack.c.l.b16 %v5214
        %v5223 = vpack.c.b16 %v5220, %v5219
        %v5224 = vpack.c.b16 %v5222, %v5221
        %v5228 = vsel %vm3492, %v5202, 0
        %v5231 = vsel %vm3492, %v5203, 0
        %v5234 = vsel %vm3492, %v5204, 0
        %v5237 = vsel %vm3492, %v5205, 0
        %v5240 = vsel %vm3492, %v5206, 0
        %v5243 = vsel %vm3492, %v5207, 0
        %v5246 = vsel %vm3492, %v5208, 0
        %v5249 = vsel %vm3492, %v5209, 0
        %5251 = vmatprep.subr.bf16.mxu0 0
        %5252 = vmatpush1.bf16.msra.mxu0 %v5223
        %5253 = vmatprep.subr.bf16.mxu0 0
        %5254 = vmatpush1.bf16.msra.mxu0 %v5224
        %5255 = vmatprep.subr.bf16.mxu0 0
        %5256 = vmatpush1.bf16.msra.mxu0 0
        %5257 = vmatprep.subr.bf16.mxu0 0
        %5258 = vmatpush1.bf16.msra.mxu0 0
        %5259 = vmatprep.subr.bf16.mxu0 0
        %5260 = vmatpush1.bf16.msra.mxu0 0
        %5261 = vmatprep.subr.bf16.mxu0 0
        %5262 = vmatpush1.bf16.msra.mxu0 0
        %5263 = vmatprep.subr.bf16.mxu0 0
        %5264 = vmatpush1.bf16.msra.mxu0 0
        %5265 = vmatprep.subr.bf16.mxu0 0
        %5266 = vmatpush1.bf16.msra.mxu0 0
        %5267 = vmatprep.subr.bf16.mxu0 0
        %5268 = vmatpush1.bf16.msra.mxu0 0
        %5269 = vmatprep.subr.bf16.mxu0 0
        %5270 = vmatpush1.bf16.msra.mxu0 0
        %5271 = vmatprep.subr.bf16.mxu0 0
        %5272 = vmatpush1.bf16.msra.mxu0 0
        %5273 = vmatprep.subr.bf16.mxu0 0
        %5274 = vmatpush1.bf16.msra.mxu0 0
        %5275 = vmatprep.subr.bf16.mxu0 0
        %5276 = vmatpush1.bf16.msra.mxu0 0
        %5277 = vmatprep.subr.bf16.mxu0 0
        %5278 = vmatpush1.bf16.msra.mxu0 0
        %5279 = vmatprep.subr.bf16.mxu0 0
        %5280 = vmatpush1.bf16.msra.mxu0 0
        %5281 = vmatprep.subr.bf16.mxu0 0
        %5282 = vmatpush1.bf16.msra.mxu0 0
        %5283 = vmatprep.mubr.bf16.mxu0 0
        %5284 = vmatmul.mubr.bf16.gmra.mrb[0].mxu0 %v5228
        %v5285 = vpop.f32.mrb[0].mxu0
        %v5286 = vadd.f32 0.0, %v5285
        %v5287 = vpop.f32.mrb[0].mxu0
        %v5288 = vpop.f32.mrb[0].mxu0
        %v5289 = vadd.f32 0.0, %v5288
        %v5290 = vpop.f32.mrb[0].mxu0
        %5291 = vmatprep.mubr.bf16.mxu0 0
        %5292 = vmatmul.mubr.bf16.gmra.mrb[0].mxu0 %v5231
        %v5293 = vpop.f32.mrb[0].mxu0
        %v5294 = vadd.f32 0.0, %v5293
        %v5295 = vpop.f32.mrb[0].mxu0
        %v5296 = vpop.f32.mrb[0].mxu0
        %v5297 = vadd.f32 0.0, %v5296
        %v5298 = vpop.f32.mrb[0].mxu0
        %5299 = vmatprep.mubr.bf16.mxu0 0
        %5300 = vmatmul.mubr.bf16.gmra.mrb[0].mxu0 %v5234
        %v5301 = vpop.f32.mrb[0].mxu0
        %v5302 = vadd.f32 0.0, %v5301
        %v5303 = vpop.f32.mrb[0].mxu0
        %v5304 = vpop.f32.mrb[0].mxu0
        %v5305 = vadd.f32 0.0, %v5304
        %v5306 = vpop.f32.mrb[0].mxu0
        %5307 = vmatprep.mubr.bf16.mxu0 0
        %5308 = vmatmul.mubr.bf16.gmra.mrb[0].mxu0 %v5237
        %v5309 = vpop.f32.mrb[0].mxu0
        %v5310 = vadd.f32 0.0, %v5309
        %v5311 = vpop.f32.mrb[0].mxu0
        %v5312 = vpop.f32.mrb[0].mxu0
        %v5313 = vadd.f32 0.0, %v5312
        %v5314 = vpop.f32.mrb[0].mxu0
        %5315 = vmatprep.mubr.bf16.mxu0 0
        %5316 = vmatmul.mubr.bf16.gmra.mrb[0].mxu0 %v5240
        %v5317 = vpop.f32.mrb[0].mxu0
        %v5318 = vadd.f32 0.0, %v5317
        %v5319 = vpop.f32.mrb[0].mxu0
        %v5320 = vpop.f32.mrb[0].mxu0
        %v5321 = vadd.f32 0.0, %v5320
        %v5322 = vpop.f32.mrb[0].mxu0
        %5323 = vmatprep.mubr.bf16.mxu0 0
        %5324 = vmatmul.mubr.bf16.gmra.mrb[0].mxu0 %v5243
        %v5325 = vpop.f32.mrb[0].mxu0
        %v5326 = vadd.f32 0.0, %v5325
        %v5327 = vpop.f32.mrb[0].mxu0
        %v5328 = vpop.f32.mrb[0].mxu0
        %v5329 = vadd.f32 0.0, %v5328
        %v5330 = vpop.f32.mrb[0].mxu0
        %5331 = vmatprep.mubr.bf16.mxu0 0
        %5332 = vmatmul.mubr.bf16.gmra.mrb[0].mxu0 %v5246
        %v5333 = vpop.f32.mrb[0].mxu0
        %v5334 = vadd.f32 0.0, %v5333
        %v5335 = vpop.f32.mrb[0].mxu0
        %v5336 = vpop.f32.mrb[0].mxu0
        %v5337 = vadd.f32 0.0, %v5336
        %v5338 = vpop.f32.mrb[0].mxu0
        %5339 = vmatprep.mubr.bf16.mxu0 0
        %5340 = vmatmul.mubr.bf16.gmra.mrb[0].mxu0 %v5249
        %v5341 = vpop.f32.mrb[0].mxu0
        %v5342 = vadd.f32 0.0, %v5341
        %v5343 = vpop.f32.mrb[0].mxu0
        %v5344 = vpop.f32.mrb[0].mxu0
        %v5345 = vadd.f32 0.0, %v5344
        %v5346 = vpop.f32.mrb[0].mxu0
        %5347 = vdwg.mxu0
        %v5348 = vadd.f32 %v5057, %v5286
        %v5349 = vadd.f32 %v5058, %v5289
        %v5350 = vadd.f32 %v5059, %v5294
        %v5351 = vadd.f32 %v5060, %v5297
        %v5352 = vadd.f32 %v5061, %v5302
        %v5353 = vadd.f32 %v5062, %v5305
        %v5354 = vadd.f32 %v5063, %v5310
        %v5355 = vadd.f32 %v5064, %v5313
        %v5356 = vadd.f32 %v5065, %v5318
        %v5357 = vadd.f32 %v5066, %v5321
        %v5358 = vadd.f32 %v5067, %v5326
        %v5359 = vadd.f32 %v5068, %v5329
        %v5360 = vadd.f32 %v5069, %v5334
        %v5361 = vadd.f32 %v5070, %v5337
        %v5362 = vadd.f32 %v5071, %v5342
        %v5363 = vadd.f32 %v5072, %v5345
        %v5364 = vld [vmem:[#allocation2 + $0x19] sm:$0xff]
        %v5365 = vld [vmem:[#allocation2 + $0x21] sm:$0xff]
        %v5366 = vld [vmem:[#allocation2 + $0x29] sm:$0xff]
        %v5367 = vld [vmem:[#allocation2 + $0x31] sm:$0xff]
        %v5368 = vld [vmem:[#allocation2 + $0x39] sm:$0xff]
        %v5369 = vld [vmem:[#allocation2 + $0x41] sm:$0xff]
        %v5370 = vld [vmem:[#allocation2 + $0x49] sm:$0xff]
        %v5371 = vld [vmem:[#allocation2 + $0x51] sm:$0xff]
        %v5372 = vld [vmem:[#allocation2 + $0x59] sm:$0xff]
        %v5373 = vld [vmem:[#allocation2 + $0x61] sm:$0xff]
        %v5374 = vld [vmem:[#allocation2 + $0x69] sm:$0xff]
        %v5375 = vld [vmem:[#allocation2 + $0x71] sm:$0xff]
        %v5376 = vld [vmem:[#allocation2 + $0x79] sm:$0xff]
        %v5377 = vld [vmem:[#allocation2 + $0x81] sm:$0xff]
        %v5378 = vld [vmem:[#allocation2 + $0x89] sm:$0xff]
        %v5379 = vld [vmem:[#allocation2 + $0x91] sm:$0xff]
        %s5380 = scalar_lea.vmem %s1, 1024
        %v5381 = vld [vmem:[%s5380] sm:$0xff]
        %v5382 = vld [vmem:[%s5380 + $0x8] sm:$0xff]
        %v5383 = vld [vmem:[%s5380 + $0x10] sm:$0xff]
        %v5384 = vld [vmem:[%s5380 + $0x18] sm:$0xff]
        %v5385 = vld [vmem:[%s5380 + $0x20] sm:$0xff]
        %v5386 = vld [vmem:[%s5380 + $0x28] sm:$0xff]
        %v5387 = vld [vmem:[%s5380 + $0x30] sm:$0xff]
        %v5388 = vld [vmem:[%s5380 + $0x38] sm:$0xff]
        %v5389 = vld [vmem:[%s5380 + $0x40] sm:$0xff]
        %v5390 = vld [vmem:[%s5380 + $0x48] sm:$0xff]
        %v5391 = vld [vmem:[%s5380 + $0x50] sm:$0xff]
        %v5392 = vld [vmem:[%s5380 + $0x58] sm:$0xff]
        %v5393 = vld [vmem:[%s5380 + $0x60] sm:$0xff]
        %v5394 = vld [vmem:[%s5380 + $0x68] sm:$0xff]
        %v5395 = vld [vmem:[%s5380 + $0x70] sm:$0xff]
        %v5396 = vld [vmem:[%s5380 + $0x78] sm:$0xff]
        %5398 = vset.pattern.permute.xlu0 0
        %5399 = vperm.xlu0 %5398, %v5381
        %v5400 = vpop.permute.xlu0 %5399
        %5403 = vset.pattern.permute.xlu0 0
        %5404 = vperm.xlu0 %5403, %v5382
        %v5405 = vpop.permute.xlu0 %5404
        %5408 = vset.pattern.permute.xlu0 0
        %5409 = vperm.xlu0 %5408, %v5383
        %v5410 = vpop.permute.xlu0 %5409
        %5413 = vset.pattern.permute.xlu0 0
        %5414 = vperm.xlu0 %5413, %v5384
        %v5415 = vpop.permute.xlu0 %5414
        %5418 = vset.pattern.permute.xlu0 0
        %5419 = vperm.xlu0 %5418, %v5385
        %v5420 = vpop.permute.xlu0 %5419
        %5423 = vset.pattern.permute.xlu0 0
        %5424 = vperm.xlu0 %5423, %v5386
        %v5425 = vpop.permute.xlu0 %5424
        %5428 = vset.pattern.permute.xlu0 0
        %5429 = vperm.xlu0 %5428, %v5387
        %v5430 = vpop.permute.xlu0 %5429
        %5433 = vset.pattern.permute.xlu0 0
        %5434 = vperm.xlu0 %5433, %v5388
        %v5435 = vpop.permute.xlu0 %5434
        %5438 = vset.pattern.permute.xlu0 0
        %5439 = vperm.xlu0 %5438, %v5389
        %v5440 = vpop.permute.xlu0 %5439
        %5443 = vset.pattern.permute.xlu0 0
        %5444 = vperm.xlu0 %5443, %v5390
        %v5445 = vpop.permute.xlu0 %5444
        %5448 = vset.pattern.permute.xlu0 0
        %5449 = vperm.xlu0 %5448, %v5391
        %v5450 = vpop.permute.xlu0 %5449
        %5453 = vset.pattern.permute.xlu0 0
        %5454 = vperm.xlu0 %5453, %v5392
        %v5455 = vpop.permute.xlu0 %5454
        %5458 = vset.pattern.permute.xlu0 0
        %5459 = vperm.xlu0 %5458, %v5393
        %v5460 = vpop.permute.xlu0 %5459
        %5463 = vset.pattern.permute.xlu0 0
        %5464 = vperm.xlu0 %5463, %v5394
        %v5465 = vpop.permute.xlu0 %5464
        %5468 = vset.pattern.permute.xlu0 0
        %5469 = vperm.xlu0 %5468, %v5395
        %v5470 = vpop.permute.xlu0 %5469
        %5473 = vset.pattern.permute.xlu0 0
        %5474 = vperm.xlu0 %5473, %v5396
        %v5475 = vpop.permute.xlu0 %5474
        %v5477 = vmul.f32 %v5364, %v5400
        %v5478 = vmul.f32 %v5365, %v5405
        %v5479 = vmul.f32 %v5366, %v5410
        %v5480 = vmul.f32 %v5367, %v5415
        %v5481 = vmul.f32 %v5368, %v5420
        %v5482 = vmul.f32 %v5369, %v5425
        %v5483 = vmul.f32 %v5370, %v5430
        %v5484 = vmul.f32 %v5371, %v5435
        %v5485 = vmul.f32 %v5372, %v5440
        %v5486 = vmul.f32 %v5373, %v5445
        %v5487 = vmul.f32 %v5374, %v5450
        %v5488 = vmul.f32 %v5375, %v5455
        %v5489 = vmul.f32 %v5376, %v5460
        %v5490 = vmul.f32 %v5377, %v5465
        %v5491 = vmul.f32 %v5378, %v5470
        %v5492 = vmul.f32 %v5379, %v5475
        %v5493 = vpack.c.bf16 %v5478, %v5477
        %v5494 = vpack.c.bf16 %v5480, %v5479
        %v5495 = vpack.c.bf16 %v5482, %v5481
        %v5496 = vpack.c.bf16 %v5484, %v5483
        %v5497 = vpack.c.bf16 %v5486, %v5485
        %v5498 = vpack.c.bf16 %v5488, %v5487
        %v5499 = vpack.c.bf16 %v5490, %v5489
        %v5500 = vpack.c.bf16 %v5492, %v5491
        %s5501 = scalar_lea.vmem %s614, 128
        %v5502 = vld [vmem:[%s5501] sm:$0xf]
        %v5503 = vld [vmem:[%s5501 + $0x4] sm:$0xf]
        %v5504 = vld [vmem:[%s5501 + $0x8] sm:$0xf]
        %v5505 = vld [vmem:[%s5501 + $0xc] sm:$0xf]
        %v5510 = vunpack.c.l.b16 %v5502
        %v5511 = vunpack.c.l.b16 %v5503
        %v5512 = vunpack.c.l.b16 %v5504
        %v5513 = vunpack.c.l.b16 %v5505
        %v5514 = vpack.c.b16 %v5511, %v5510
        %v5515 = vpack.c.b16 %v5513, %v5512
        %v5519 = vsel %vm3492, %v5493, 0
        %v5522 = vsel %vm3492, %v5494, 0
        %v5525 = vsel %vm3492, %v5495, 0
        %v5528 = vsel %vm3492, %v5496, 0
        %v5531 = vsel %vm3492, %v5497, 0
        %v5534 = vsel %vm3492, %v5498, 0
        %v5537 = vsel %vm3492, %v5499, 0
        %v5540 = vsel %vm3492, %v5500, 0
        %5542 = vmatprep.subr.bf16.mxu0 0
        %5543 = vmatpush1.bf16.msra.mxu0 %v5514
        %5544 = vmatprep.subr.bf16.mxu0 0
        %5545 = vmatpush1.bf16.msra.mxu0 %v5515
        %5546 = vmatprep.subr.bf16.mxu0 0
        %5547 = vmatpush1.bf16.msra.mxu0 0
        %5548 = vmatprep.subr.bf16.mxu0 0
        %5549 = vmatpush1.bf16.msra.mxu0 0
        %5550 = vmatprep.subr.bf16.mxu0 0
        %5551 = vmatpush1.bf16.msra.mxu0 0
        %5552 = vmatprep.subr.bf16.mxu0 0
        %5553 = vmatpush1.bf16.msra.mxu0 0
        %5554 = vmatprep.subr.bf16.mxu0 0
        %5555 = vmatpush1.bf16.msra.mxu0 0
        %5556 = vmatprep.subr.bf16.mxu0 0
        %5557 = vmatpush1.bf16.msra.mxu0 0
        %5558 = vmatprep.subr.bf16.mxu0 0
        %5559 = vmatpush1.bf16.msra.mxu0 0
        %5560 = vmatprep.subr.bf16.mxu0 0
        %5561 = vmatpush1.bf16.msra.mxu0 0
        %5562 = vmatprep.subr.bf16.mxu0 0
        %5563 = vmatpush1.bf16.msra.mxu0 0
        %5564 = vmatprep.subr.bf16.mxu0 0
        %5565 = vmatpush1.bf16.msra.mxu0 0
        %5566 = vmatprep.subr.bf16.mxu0 0
        %5567 = vmatpush1.bf16.msra.mxu0 0
        %5568 = vmatprep.subr.bf16.mxu0 0
        %5569 = vmatpush1.bf16.msra.mxu0 0
        %5570 = vmatprep.subr.bf16.mxu0 0
        %5571 = vmatpush1.bf16.msra.mxu0 0
        %5572 = vmatprep.subr.bf16.mxu0 0
        %5573 = vmatpush1.bf16.msra.mxu0 0
        %5574 = vmatprep.mubr.bf16.mxu0 0
        %5575 = vmatmul.mubr.bf16.gmra.mrb[0].mxu0 %v5519
        %v5576 = vpop.f32.mrb[0].mxu0
        %v5577 = vadd.f32 0.0, %v5576
        %v5578 = vpop.f32.mrb[0].mxu0
        %v5579 = vpop.f32.mrb[0].mxu0
        %v5580 = vadd.f32 0.0, %v5579
        %v5581 = vpop.f32.mrb[0].mxu0
        %5582 = vmatprep.mubr.bf16.mxu0 0
        %5583 = vmatmul.mubr.bf16.gmra.mrb[0].mxu0 %v5522
        %v5584 = vpop.f32.mrb[0].mxu0
        %v5585 = vadd.f32 0.0, %v5584
        %v5586 = vpop.f32.mrb[0].mxu0
        %v5587 = vpop.f32.mrb[0].mxu0
        %v5588 = vadd.f32 0.0, %v5587
        %v5589 = vpop.f32.mrb[0].mxu0
        %5590 = vmatprep.mubr.bf16.mxu0 0
        %5591 = vmatmul.mubr.bf16.gmra.mrb[0].mxu0 %v5525
        %v5592 = vpop.f32.mrb[0].mxu0
        %v5593 = vadd.f32 0.0, %v5592
        %v5594 = vpop.f32.mrb[0].mxu0
        %v5595 = vpop.f32.mrb[0].mxu0
        %v5596 = vadd.f32 0.0, %v5595
        %v5597 = vpop.f32.mrb[0].mxu0
        %5598 = vmatprep.mubr.bf16.mxu0 0
        %5599 = vmatmul.mubr.bf16.gmra.mrb[0].mxu0 %v5528
        %v5600 = vpop.f32.mrb[0].mxu0
        %v5601 = vadd.f32 0.0, %v5600
        %v5602 = vpop.f32.mrb[0].mxu0
        %v5603 = vpop.f32.mrb[0].mxu0
        %v5604 = vadd.f32 0.0, %v5603
        %v5605 = vpop.f32.mrb[0].mxu0
        %5606 = vmatprep.mubr.bf16.mxu0 0
        %5607 = vmatmul.mubr.bf16.gmra.mrb[0].mxu0 %v5531
        %v5608 = vpop.f32.mrb[0].mxu0
        %v5609 = vadd.f32 0.0, %v5608
        %v5610 = vpop.f32.mrb[0].mxu0
        %v5611 = vpop.f32.mrb[0].mxu0
        %v5612 = vadd.f32 0.0, %v5611
        %v5613 = vpop.f32.mrb[0].mxu0
        %5614 = vmatprep.mubr.bf16.mxu0 0
        %5615 = vmatmul.mubr.bf16.gmra.mrb[0].mxu0 %v5534
        %v5616 = vpop.f32.mrb[0].mxu0
        %v5617 = vadd.f32 0.0, %v5616
        %v5618 = vpop.f32.mrb[0].mxu0
        %v5619 = vpop.f32.mrb[0].mxu0
        %v5620 = vadd.f32 0.0, %v5619
        %v5621 = vpop.f32.mrb[0].mxu0
        %5622 = vmatprep.mubr.bf16.mxu0 0
        %5623 = vmatmul.mubr.bf16.gmra.mrb[0].mxu0 %v5537
        %v5624 = vpop.f32.mrb[0].mxu0
        %v5625 = vadd.f32 0.0, %v5624
        %v5626 = vpop.f32.mrb[0].mxu0
        %v5627 = vpop.f32.mrb[0].mxu0
        %v5628 = vadd.f32 0.0, %v5627
        %v5629 = vpop.f32.mrb[0].mxu0
        %5630 = vmatprep.mubr.bf16.mxu0 0
        %5631 = vmatmul.mubr.bf16.gmra.mrb[0].mxu0 %v5540
        %v5632 = vpop.f32.mrb[0].mxu0
        %v5633 = vadd.f32 0.0, %v5632
        %v5634 = vpop.f32.mrb[0].mxu0
        %v5635 = vpop.f32.mrb[0].mxu0
        %v5636 = vadd.f32 0.0, %v5635
        %v5637 = vpop.f32.mrb[0].mxu0
        %5638 = vdwg.mxu0
        %v5639 = vadd.f32 %v5348, %v5577
        %v5640 = vadd.f32 %v5349, %v5580
        %v5641 = vadd.f32 %v5350, %v5585
        %v5642 = vadd.f32 %v5351, %v5588
        %v5643 = vadd.f32 %v5352, %v5593
        %v5644 = vadd.f32 %v5353, %v5596
        %v5645 = vadd.f32 %v5354, %v5601
        %v5646 = vadd.f32 %v5355, %v5604
        %v5647 = vadd.f32 %v5356, %v5609
        %v5648 = vadd.f32 %v5357, %v5612
        %v5649 = vadd.f32 %v5358, %v5617
        %v5650 = vadd.f32 %v5359, %v5620
        %v5651 = vadd.f32 %v5360, %v5625
        %v5652 = vadd.f32 %v5361, %v5628
        %v5653 = vadd.f32 %v5362, %v5633
        %v5654 = vadd.f32 %v5363, %v5636
        %v5655 = vlaneseq
        %v5656 = vshrl.u32 %v5655, 7
        %v5657 = vsub.s32 0, %v5656
        %v5658 = vrot.slane %v3181, %v5657
        %v5659 = vadd.f32 %v5639, %v5658
        %v5660 = vadd.f32 %v5640, %v5658
        %v5661 = vadd.f32 %v5641, %v5658
        %v5662 = vadd.f32 %v5642, %v5658
        %v5663 = vadd.f32 %v5643, %v5658
        %v5664 = vadd.f32 %v5644, %v5658
        %v5665 = vadd.f32 %v5645, %v5658
        %v5666 = vadd.f32 %v5646, %v5658
        %v5667 = vadd.f32 %v5647, %v5658
        %v5668 = vadd.f32 %v5648, %v5658
        %v5669 = vadd.f32 %v5649, %v5658
        %v5670 = vadd.f32 %v5650, %v5658
        %v5671 = vadd.f32 %v5651, %v5658
        %v5672 = vadd.f32 %v5652, %v5658
        %v5673 = vadd.f32 %v5653, %v5658
        %v5674 = vadd.f32 %v5654, %v5658
        %v5675 = vsel %vm3492, %v5659, 0.0
        %v5676 = vsel %vm3492, %v5660, 0.0
        %v5677 = vadd.f32 %v5675, %v5676
        %v5678 = vsel %vm3492, %v5661, 0.0
        %v5679 = vadd.f32 %v5677, %v5678
        %v5680 = vsel %vm3492, %v5662, 0.0
        %v5681 = vadd.f32 %v5679, %v5680
        %v5682 = vsel %vm3492, %v5663, 0.0
        %v5683 = vadd.f32 %v5681, %v5682
        %v5684 = vsel %vm3492, %v5664, 0.0
        %v5685 = vadd.f32 %v5683, %v5684
        %v5686 = vsel %vm3492, %v5665, 0.0
        %v5687 = vadd.f32 %v5685, %v5686
        %v5688 = vsel %vm3492, %v5666, 0.0
        %v5689 = vadd.f32 %v5687, %v5688
        %v5690 = vsel %vm3492, %v5667, 0.0
        %v5691 = vadd.f32 %v5689, %v5690
        %v5692 = vsel %vm3492, %v5668, 0.0
        %v5693 = vadd.f32 %v5691, %v5692
        %v5694 = vsel %vm3492, %v5669, 0.0
        %v5695 = vadd.f32 %v5693, %v5694
        %v5696 = vsel %vm3492, %v5670, 0.0
        %v5697 = vadd.f32 %v5695, %v5696
        %v5698 = vsel %vm3492, %v5671, 0.0
        %v5699 = vadd.f32 %v5697, %v5698
        %v5700 = vsel %vm3492, %v5672, 0.0
        %v5701 = vadd.f32 %v5699, %v5700
        %v5702 = vsel %vm3492, %v5673, 0.0
        %v5703 = vadd.f32 %v5701, %v5702
        %v5704 = vsel %vm3492, %v5674, 0.0
        %v5705 = vadd.f32 %v5703, %v5704
        %v5706 = vrot.slane %v5705, 4
        %v5707 = vadd.f32 %v5705, %v5706
        %v5708 = vrot.slane %v5707, 2
        %v5709 = vadd.f32 %v5707, %v5708
        %v5710 = vrot.slane %v5709, 1
        %v5711 = vadd.f32 %v5709, %v5710
        %v5712 = vrcp.pop 128.0
        %v5713 = vmul.f32 %v5711, %v5712
        %v5714 = vmul.f32 %v5659, %v5659
        %v5715 = vmul.f32 %v5660, %v5660
        %v5716 = vmul.f32 %v5661, %v5661
        %v5717 = vmul.f32 %v5662, %v5662
        %v5718 = vmul.f32 %v5663, %v5663
        %v5719 = vmul.f32 %v5664, %v5664
        %v5720 = vmul.f32 %v5665, %v5665
        %v5721 = vmul.f32 %v5666, %v5666
        %v5722 = vmul.f32 %v5667, %v5667
        %v5723 = vmul.f32 %v5668, %v5668
        %v5724 = vmul.f32 %v5669, %v5669
        %v5725 = vmul.f32 %v5670, %v5670
        %v5726 = vmul.f32 %v5671, %v5671
        %v5727 = vmul.f32 %v5672, %v5672
        %v5728 = vmul.f32 %v5673, %v5673
        %v5729 = vmul.f32 %v5674, %v5674
        %v5730 = vsel %vm3492, %v5714, 0.0
        %v5731 = vsel %vm3492, %v5715, 0.0
        %v5732 = vadd.f32 %v5730, %v5731
        %v5733 = vsel %vm3492, %v5716, 0.0
        %v5734 = vadd.f32 %v5732, %v5733
        %v5735 = vsel %vm3492, %v5717, 0.0
        %v5736 = vadd.f32 %v5734, %v5735
        %v5737 = vsel %vm3492, %v5718, 0.0
        %v5738 = vadd.f32 %v5736, %v5737
        %v5739 = vsel %vm3492, %v5719, 0.0
        %v5740 = vadd.f32 %v5738, %v5739
        %v5741 = vsel %vm3492, %v5720, 0.0
        %v5742 = vadd.f32 %v5740, %v5741
        %v5743 = vsel %vm3492, %v5721, 0.0
        %v5744 = vadd.f32 %v5742, %v5743
        %v5745 = vsel %vm3492, %v5722, 0.0
        %v5746 = vadd.f32 %v5744, %v5745
        %v5747 = vsel %vm3492, %v5723, 0.0
        %v5748 = vadd.f32 %v5746, %v5747
        %v5749 = vsel %vm3492, %v5724, 0.0
        %v5750 = vadd.f32 %v5748, %v5749
        %v5751 = vsel %vm3492, %v5725, 0.0
        %v5752 = vadd.f32 %v5750, %v5751
        %v5753 = vsel %vm3492, %v5726, 0.0
        %v5754 = vadd.f32 %v5752, %v5753
        %v5755 = vsel %vm3492, %v5727, 0.0
        %v5756 = vadd.f32 %v5754, %v5755
        %v5757 = vsel %vm3492, %v5728, 0.0
        %v5758 = vadd.f32 %v5756, %v5757
        %v5759 = vsel %vm3492, %v5729, 0.0
        %v5760 = vadd.f32 %v5758, %v5759
        %v5761 = vrot.slane %v5760, 4
        %v5762 = vadd.f32 %v5760, %v5761
        %v5763 = vrot.slane %v5762, 2
        %v5764 = vadd.f32 %v5762, %v5763
        %v5765 = vrot.slane %v5764, 1
        %v5766 = vadd.f32 %v5764, %v5765
        %v5767 = vmul.f32 %v5766, %v5712
        %v5768 = vmul.f32 %v5713, %v5713
        %v5769 = vsub.f32 %v5767, %v5768
        %v5770 = vmax.f32 %v5769, 0.0
        %v5771 = vsub.f32 %v5659, %v5713
        %v5772 = vsub.f32 %v5660, %v5713
        %v5773 = vsub.f32 %v5661, %v5713
        %v5774 = vsub.f32 %v5662, %v5713
        %v5775 = vsub.f32 %v5663, %v5713
        %v5776 = vsub.f32 %v5664, %v5713
        %v5777 = vsub.f32 %v5665, %v5713
        %v5778 = vsub.f32 %v5666, %v5713
        %v5779 = vsub.f32 %v5667, %v5713
        %v5780 = vsub.f32 %v5668, %v5713
        %v5781 = vsub.f32 %v5669, %v5713
        %v5782 = vsub.f32 %v5670, %v5713
        %v5783 = vsub.f32 %v5671, %v5713
        %v5784 = vsub.f32 %v5672, %v5713
        %v5785 = vsub.f32 %v5673, %v5713
        %v5786 = vsub.f32 %v5674, %v5713
        %v5787 = vadd.f32 %v5770, 1e-05
        %v5788 = vrsqrt.pop %v5787
        %v5789 = vmul.f32 %v5771, %v5788
        %v5790 = vmul.f32 %v5772, %v5788
        %v5791 = vmul.f32 %v5773, %v5788
        %v5792 = vmul.f32 %v5774, %v5788
        %v5793 = vmul.f32 %v5775, %v5788
        %v5794 = vmul.f32 %v5776, %v5788
        %v5795 = vmul.f32 %v5777, %v5788
        %v5796 = vmul.f32 %v5778, %v5788
        %v5797 = vmul.f32 %v5779, %v5788
        %v5798 = vmul.f32 %v5780, %v5788
        %v5799 = vmul.f32 %v5781, %v5788
        %v5800 = vmul.f32 %v5782, %v5788
        %v5801 = vmul.f32 %v5783, %v5788
        %v5802 = vmul.f32 %v5784, %v5788
        %v5803 = vmul.f32 %v5785, %v5788
        %v5804 = vmul.f32 %v5786, %v5788
        %v5805 = vlaneseq
        %v5806 = vshrl.u32 %v5805, 7
        %v5807 = vsub.s32 1, %v5806
        %v5808 = vrot.slane %v3181, %v5807
        %v5809 = vmul.f32 %v5789, %v5808
        %v5810 = vmul.f32 %v5790, %v5808
        %v5811 = vmul.f32 %v5791, %v5808
        %v5812 = vmul.f32 %v5792, %v5808
        %v5813 = vmul.f32 %v5793, %v5808
        %v5814 = vmul.f32 %v5794, %v5808
        %v5815 = vmul.f32 %v5795, %v5808
        %v5816 = vmul.f32 %v5796, %v5808
        %v5817 = vmul.f32 %v5797, %v5808
        %v5818 = vmul.f32 %v5798, %v5808
        %v5819 = vmul.f32 %v5799, %v5808
        %v5820 = vmul.f32 %v5800, %v5808
        %v5821 = vmul.f32 %v5801, %v5808
        %v5822 = vmul.f32 %v5802, %v5808
        %v5823 = vmul.f32 %v5803, %v5808
        %v5824 = vmul.f32 %v5804, %v5808
        %v5825 = vlaneseq
        %v5826 = vshrl.u32 %v5825, 7
        %v5827 = vsub.s32 2, %v5826
        %v5828 = vrot.slane %v3181, %v5827
        %v5829 = vadd.f32 %v5809, %v5828
        %v5830 = vadd.f32 %v5810, %v5828
        %v5831 = vadd.f32 %v5811, %v5828
        %v5832 = vadd.f32 %v5812, %v5828
        %v5833 = vadd.f32 %v5813, %v5828
        %v5834 = vadd.f32 %v5814, %v5828
        %v5835 = vadd.f32 %v5815, %v5828
        %v5836 = vadd.f32 %v5816, %v5828
        %v5837 = vadd.f32 %v5817, %v5828
        %v5838 = vadd.f32 %v5818, %v5828
        %v5839 = vadd.f32 %v5819, %v5828
        %v5840 = vadd.f32 %v5820, %v5828
        %v5841 = vadd.f32 %v5821, %v5828
        %v5842 = vadd.f32 %v5822, %v5828
        %v5843 = vadd.f32 %v5823, %v5828
        %v5844 = vadd.f32 %v5824, %v5828
        %v5845 = vmax.f32 %v5829, 0.0
        %v5846 = vmax.f32 %v5830, 0.0
        %v5847 = vmax.f32 %v5831, 0.0
        %v5848 = vmax.f32 %v5832, 0.0
        %v5849 = vmax.f32 %v5833, 0.0
        %v5850 = vmax.f32 %v5834, 0.0
        %v5851 = vmax.f32 %v5835, 0.0
        %v5852 = vmax.f32 %v5836, 0.0
        %v5853 = vmax.f32 %v5837, 0.0
        %v5854 = vmax.f32 %v5838, 0.0
        %v5855 = vmax.f32 %v5839, 0.0
        %v5856 = vmax.f32 %v5840, 0.0
        %v5857 = vmax.f32 %v5841, 0.0
        %v5858 = vmax.f32 %v5842, 0.0
        %v5859 = vmax.f32 %v5843, 0.0
        %v5860 = vmax.f32 %v5844, 0.0
        %5861 = vst.msk [vmem:[#allocation3 + $0x10] sm:$0xff] %vm3492, %v5845
        %5862 = vst.msk [vmem:[#allocation3 + $0x18] sm:$0xff] %vm3492, %v5846
        %5863 = vst.msk [vmem:[#allocation3 + $0x20] sm:$0xff] %vm3492, %v5847
        %5864 = vst.msk [vmem:[#allocation3 + $0x28] sm:$0xff] %vm3492, %v5848
        %5865 = vst.msk [vmem:[#allocation3 + $0x30] sm:$0xff] %vm3492, %v5849
        %5866 = vst.msk [vmem:[#allocation3 + $0x38] sm:$0xff] %vm3492, %v5850
        %5867 = vst.msk [vmem:[#allocation3 + $0x40] sm:$0xff] %vm3492, %v5851
        %5868 = vst.msk [vmem:[#allocation3 + $0x48] sm:$0xff] %vm3492, %v5852
        %5869 = vst.msk [vmem:[#allocation3 + $0x50] sm:$0xff] %vm3492, %v5853
        %5870 = vst.msk [vmem:[#allocation3 + $0x58] sm:$0xff] %vm3492, %v5854
        %5871 = vst.msk [vmem:[#allocation3 + $0x60] sm:$0xff] %vm3492, %v5855
        %5872 = vst.msk [vmem:[#allocation3 + $0x68] sm:$0xff] %vm3492, %v5856
        %5873 = vst.msk [vmem:[#allocation3 + $0x70] sm:$0xff] %vm3492, %v5857
        %5874 = vst.msk [vmem:[#allocation3 + $0x78] sm:$0xff] %vm3492, %v5858
        %5875 = vst.msk [vmem:[#allocation3 + $0x80] sm:$0xff] %vm3492, %v5859
        %5876 = vst.msk [vmem:[#allocation3 + $0x88] sm:$0xff] %vm3492, %v5860
        %v5877 = vld [vmem:[#allocation3 + $0x7] sm:$0xff]
        %v5878 = vld [vmem:[#allocation3 + $0xf] sm:$0xff]
        %v5879 = vld [vmem:[#allocation3 + $0x17] sm:$0xff]
        %v5880 = vld [vmem:[#allocation3 + $0x1f] sm:$0xff]
        %v5881 = vld [vmem:[#allocation3 + $0x27] sm:$0xff]
        %v5882 = vld [vmem:[#allocation3 + $0x2f] sm:$0xff]
        %v5883 = vld [vmem:[#allocation3 + $0x37] sm:$0xff]
        %v5884 = vld [vmem:[#allocation3 + $0x3f] sm:$0xff]
        %v5885 = vld [vmem:[#allocation3 + $0x47] sm:$0xff]
        %v5886 = vld [vmem:[#allocation3 + $0x4f] sm:$0xff]
        %v5887 = vld [vmem:[#allocation3 + $0x57] sm:$0xff]
        %v5888 = vld [vmem:[#allocation3 + $0x5f] sm:$0xff]
        %v5889 = vld [vmem:[#allocation3 + $0x67] sm:$0xff]
        %v5890 = vld [vmem:[#allocation3 + $0x6f] sm:$0xff]
        %v5891 = vld [vmem:[#allocation3 + $0x77] sm:$0xff]
        %v5892 = vld [vmem:[#allocation3 + $0x7f] sm:$0xff]
        %v5893 = vld [vmem:[%s1] sm:$0xff]
        %v5894 = vld [vmem:[%s1 + $0x8] sm:$0xff]
        %v5895 = vld [vmem:[%s1 + $0x10] sm:$0xff]
        %v5896 = vld [vmem:[%s1 + $0x18] sm:$0xff]
        %v5897 = vld [vmem:[%s1 + $0x20] sm:$0xff]
        %v5898 = vld [vmem:[%s1 + $0x28] sm:$0xff]
        %v5899 = vld [vmem:[%s1 + $0x30] sm:$0xff]
        %v5900 = vld [vmem:[%s1 + $0x38] sm:$0xff]
        %v5901 = vld [vmem:[%s1 + $0x40] sm:$0xff]
        %v5902 = vld [vmem:[%s1 + $0x48] sm:$0xff]
        %v5903 = vld [vmem:[%s1 + $0x50] sm:$0xff]
        %v5904 = vld [vmem:[%s1 + $0x58] sm:$0xff]
        %v5905 = vld [vmem:[%s1 + $0x60] sm:$0xff]
        %v5906 = vld [vmem:[%s1 + $0x68] sm:$0xff]
        %v5907 = vld [vmem:[%s1 + $0x70] sm:$0xff]
        %v5908 = vld [vmem:[%s1 + $0x78] sm:$0xff]
        %5910 = vset.pattern.permute.xlu0 0
        %5911 = vperm.xlu0 %5910, %v5893
        %v5912 = vpop.permute.xlu0 %5911
        %5915 = vset.pattern.permute.xlu0 0
        %5916 = vperm.xlu0 %5915, %v5894
        %v5917 = vpop.permute.xlu0 %5916
        %5920 = vset.pattern.permute.xlu0 0
        %5921 = vperm.xlu0 %5920, %v5895
        %v5922 = vpop.permute.xlu0 %5921
        %5925 = vset.pattern.permute.xlu0 0
        %5926 = vperm.xlu0 %5925, %v5896
        %v5927 = vpop.permute.xlu0 %5926
        %5930 = vset.pattern.permute.xlu0 0
        %5931 = vperm.xlu0 %5930, %v5897
        %v5932 = vpop.permute.xlu0 %5931
        %5935 = vset.pattern.permute.xlu0 0
        %5936 = vperm.xlu0 %5935, %v5898
        %v5937 = vpop.permute.xlu0 %5936
        %5940 = vset.pattern.permute.xlu0 0
        %5941 = vperm.xlu0 %5940, %v5899
        %v5942 = vpop.permute.xlu0 %5941
        %5945 = vset.pattern.permute.xlu0 0
        %5946 = vperm.xlu0 %5945, %v5900
        %v5947 = vpop.permute.xlu0 %5946
        %5950 = vset.pattern.permute.xlu0 0
        %5951 = vperm.xlu0 %5950, %v5901
        %v5952 = vpop.permute.xlu0 %5951
        %5955 = vset.pattern.permute.xlu0 0
        %5956 = vperm.xlu0 %5955, %v5902
        %v5957 = vpop.permute.xlu0 %5956
        %5960 = vset.pattern.permute.xlu0 0
        %5961 = vperm.xlu0 %5960, %v5903
        %v5962 = vpop.permute.xlu0 %5961
        %5965 = vset.pattern.permute.xlu0 0
        %5966 = vperm.xlu0 %5965, %v5904
        %v5967 = vpop.permute.xlu0 %5966
        %5970 = vset.pattern.permute.xlu0 0
        %5971 = vperm.xlu0 %5970, %v5905
        %v5972 = vpop.permute.xlu0 %5971
        %5975 = vset.pattern.permute.xlu0 0
        %5976 = vperm.xlu0 %5975, %v5906
        %v5977 = vpop.permute.xlu0 %5976
        %5980 = vset.pattern.permute.xlu0 0
        %5981 = vperm.xlu0 %5980, %v5907
        %v5982 = vpop.permute.xlu0 %5981
        %5985 = vset.pattern.permute.xlu0 0
        %5986 = vperm.xlu0 %5985, %v5908
        %v5987 = vpop.permute.xlu0 %5986
        %v5989 = vmul.f32 %v5877, %v5912
        %v5990 = vmul.f32 %v5878, %v5917
        %v5991 = vmul.f32 %v5879, %v5922
        %v5992 = vmul.f32 %v5880, %v5927
        %v5993 = vmul.f32 %v5881, %v5932
        %v5994 = vmul.f32 %v5882, %v5937
        %v5995 = vmul.f32 %v5883, %v5942
        %v5996 = vmul.f32 %v5884, %v5947
        %v5997 = vmul.f32 %v5885, %v5952
        %v5998 = vmul.f32 %v5886, %v5957
        %v5999 = vmul.f32 %v5887, %v5962
        %v6000 = vmul.f32 %v5888, %v5967
        %v6001 = vmul.f32 %v5889, %v5972
        %v6002 = vmul.f32 %v5890, %v5977
        %v6003 = vmul.f32 %v5891, %v5982
        %v6004 = vmul.f32 %v5892, %v5987
        %v6005 = vpack.c.bf16 %v5990, %v5989
        %v6006 = vpack.c.bf16 %v5992, %v5991
        %v6007 = vpack.c.bf16 %v5994, %v5993
        %v6008 = vpack.c.bf16 %v5996, %v5995
        %v6009 = vpack.c.bf16 %v5998, %v5997
        %v6010 = vpack.c.bf16 %v6000, %v5999
        %v6011 = vpack.c.bf16 %v6002, %v6001
        %v6012 = vpack.c.bf16 %v6004, %v6003
        %v6013 = vld [vmem:[%s619] sm:$0xf]
        %v6014 = vld [vmem:[%s619 + $0x4] sm:$0xf]
        %v6015 = vld [vmem:[%s619 + $0x8] sm:$0xf]
        %v6016 = vld [vmem:[%s619 + $0xc] sm:$0xf]
        %v6017 = vld [vmem:[#allocation3 + $0x8] sm:$0xff]
        %v6018 = vld [vmem:[#allocation3 + $0x10] sm:$0xff]
        %v6019 = vld [vmem:[#allocation3 + $0x18] sm:$0xff]
        %v6020 = vld [vmem:[#allocation3 + $0x20] sm:$0xff]
        %v6021 = vld [vmem:[#allocation3 + $0x28] sm:$0xff]
        %v6022 = vld [vmem:[#allocation3 + $0x30] sm:$0xff]
        %v6023 = vld [vmem:[#allocation3 + $0x38] sm:$0xff]
        %v6024 = vld [vmem:[#allocation3 + $0x40] sm:$0xff]
        %v6025 = vld [vmem:[#allocation3 + $0x48] sm:$0xff]
        %v6026 = vld [vmem:[#allocation3 + $0x50] sm:$0xff]
        %v6027 = vld [vmem:[#allocation3 + $0x58] sm:$0xff]
        %v6028 = vld [vmem:[#allocation3 + $0x60] sm:$0xff]
        %v6029 = vld [vmem:[#allocation3 + $0x68] sm:$0xff]
        %v6030 = vld [vmem:[#allocation3 + $0x70] sm:$0xff]
        %v6031 = vld [vmem:[#allocation3 + $0x78] sm:$0xff]
        %v6032 = vld [vmem:[#allocation3 + $0x80] sm:$0xff]
        %v6033 = vld [vmem:[%s3354] sm:$0xff]
        %v6034 = vld [vmem:[%s3354 + $0x8] sm:$0xff]
        %v6035 = vld [vmem:[%s3354 + $0x10] sm:$0xff]
        %v6036 = vld [vmem:[%s3354 + $0x18] sm:$0xff]
        %v6037 = vld [vmem:[%s3354 + $0x20] sm:$0xff]
        %v6038 = vld [vmem:[%s3354 + $0x28] sm:$0xff]
        %v6039 = vld [vmem:[%s3354 + $0x30] sm:$0xff]
        %v6040 = vld [vmem:[%s3354 + $0x38] sm:$0xff]
        %v6041 = vld [vmem:[%s3354 + $0x40] sm:$0xff]
        %v6042 = vld [vmem:[%s3354 + $0x48] sm:$0xff]
        %v6043 = vld [vmem:[%s3354 + $0x50] sm:$0xff]
        %v6044 = vld [vmem:[%s3354 + $0x58] sm:$0xff]
        %v6045 = vld [vmem:[%s3354 + $0x60] sm:$0xff]
        %v6046 = vld [vmem:[%s3354 + $0x68] sm:$0xff]
        %v6047 = vld [vmem:[%s3354 + $0x70] sm:$0xff]
        %v6048 = vld [vmem:[%s3354 + $0x78] sm:$0xff]
        %6050 = vset.pattern.permute.xlu0 0
        %6051 = vperm.xlu0 %6050, %v6033
        %v6052 = vpop.permute.xlu0 %6051
        %6055 = vset.pattern.permute.xlu0 0
        %6056 = vperm.xlu0 %6055, %v6034
        %v6057 = vpop.permute.xlu0 %6056
        %6060 = vset.pattern.permute.xlu0 0
        %6061 = vperm.xlu0 %6060, %v6035
        %v6062 = vpop.permute.xlu0 %6061
        %6065 = vset.pattern.permute.xlu0 0
        %6066 = vperm.xlu0 %6065, %v6036
        %v6067 = vpop.permute.xlu0 %6066
        %6070 = vset.pattern.permute.xlu0 0
        %6071 = vperm.xlu0 %6070, %v6037
        %v6072 = vpop.permute.xlu0 %6071
        %6075 = vset.pattern.permute.xlu0 0
        %6076 = vperm.xlu0 %6075, %v6038
        %v6077 = vpop.permute.xlu0 %6076
        %6080 = vset.pattern.permute.xlu0 0
        %6081 = vperm.xlu0 %6080, %v6039
        %v6082 = vpop.permute.xlu0 %6081
        %6085 = vset.pattern.permute.xlu0 0
        %6086 = vperm.xlu0 %6085, %v6040
        %v6087 = vpop.permute.xlu0 %6086
        %6090 = vset.pattern.permute.xlu0 0
        %6091 = vperm.xlu0 %6090, %v6041
        %v6092 = vpop.permute.xlu0 %6091
        %6095 = vset.pattern.permute.xlu0 0
        %6096 = vperm.xlu0 %6095, %v6042
        %v6097 = vpop.permute.xlu0 %6096
        %6100 = vset.pattern.permute.xlu0 0
        %6101 = vperm.xlu0 %6100, %v6043
        %v6102 = vpop.permute.xlu0 %6101
        %6105 = vset.pattern.permute.xlu0 0
        %6106 = vperm.xlu0 %6105, %v6044
        %v6107 = vpop.permute.xlu0 %6106
        %6110 = vset.pattern.permute.xlu0 0
        %6111 = vperm.xlu0 %6110, %v6045
        %v6112 = vpop.permute.xlu0 %6111
        %6115 = vset.pattern.permute.xlu0 0
        %6116 = vperm.xlu0 %6115, %v6046
        %v6117 = vpop.permute.xlu0 %6116
        %6120 = vset.pattern.permute.xlu0 0
        %6121 = vperm.xlu0 %6120, %v6047
        %v6122 = vpop.permute.xlu0 %6121
        %6125 = vset.pattern.permute.xlu0 0
        %6126 = vperm.xlu0 %6125, %v6048
        %v6127 = vpop.permute.xlu0 %6126
        %v6129 = vmul.f32 %v6017, %v6052
        %v6130 = vmul.f32 %v6018, %v6057
        %v6131 = vmul.f32 %v6019, %v6062
        %v6132 = vmul.f32 %v6020, %v6067
        %v6133 = vmul.f32 %v6021, %v6072
        %v6134 = vmul.f32 %v6022, %v6077
        %v6135 = vmul.f32 %v6023, %v6082
        %v6136 = vmul.f32 %v6024, %v6087
        %v6137 = vmul.f32 %v6025, %v6092
        %v6138 = vmul.f32 %v6026, %v6097
        %v6139 = vmul.f32 %v6027, %v6102
        %v6140 = vmul.f32 %v6028, %v6107
        %v6141 = vmul.f32 %v6029, %v6112
        %v6142 = vmul.f32 %v6030, %v6117
        %v6143 = vmul.f32 %v6031, %v6122
        %v6144 = vmul.f32 %v6032, %v6127
        %v6145 = vpack.c.bf16 %v6130, %v6129
        %v6146 = vpack.c.bf16 %v6132, %v6131
        %v6147 = vpack.c.bf16 %v6134, %v6133
        %v6148 = vpack.c.bf16 %v6136, %v6135
        %v6149 = vpack.c.bf16 %v6138, %v6137
        %v6150 = vpack.c.bf16 %v6140, %v6139
        %v6151 = vpack.c.bf16 %v6142, %v6141
        %v6152 = vpack.c.bf16 %v6144, %v6143
        %s6153 = scalar_lea.vmem %s619, 16
        %v6154 = vld [vmem:[%s6153] sm:$0xf]
        %v6155 = vld [vmem:[%s6153 + $0x4] sm:$0xf]
        %v6156 = vld [vmem:[%s6153 + $0x8] sm:$0xf]
        %v6157 = vld [vmem:[%s6153 + $0xc] sm:$0xf]
        %v6162 = vunpack.c.l.b16 %v6154
        %v6163 = vunpack.c.l.b16 %v6155
        %v6164 = vunpack.c.l.b16 %v6156
        %v6165 = vunpack.c.l.b16 %v6157
        %v6166 = vpack.c.b16 %v6163, %v6162
        %v6167 = vpack.c.b16 %v6165, %v6164
        %v6171 = vsel %vm3492, %v6145, 0
        %v6174 = vsel %vm3492, %v6146, 0
        %v6177 = vsel %vm3492, %v6147, 0
        %v6180 = vsel %vm3492, %v6148, 0
        %v6183 = vsel %vm3492, %v6149, 0
        %v6186 = vsel %vm3492, %v6150, 0
        %v6189 = vsel %vm3492, %v6151, 0
        %v6192 = vsel %vm3492, %v6152, 0
        %6194 = vmatprep.subr.bf16.mxu0 0
        %6195 = vmatpush1.bf16.msra.mxu0 %v6166
        %6196 = vmatprep.subr.bf16.mxu0 0
        %6197 = vmatpush1.bf16.msra.mxu0 %v6167
        %6198 = vmatprep.subr.bf16.mxu0 0
        %6199 = vmatpush1.bf16.msra.mxu0 0
        %6200 = vmatprep.subr.bf16.mxu0 0
        %6201 = vmatpush1.bf16.msra.mxu0 0
        %6202 = vmatprep.subr.bf16.mxu0 0
        %6203 = vmatpush1.bf16.msra.mxu0 0
        %6204 = vmatprep.subr.bf16.mxu0 0
        %6205 = vmatpush1.bf16.msra.mxu0 0
        %6206 = vmatprep.subr.bf16.mxu0 0
        %6207 = vmatpush1.bf16.msra.mxu0 0
        %6208 = vmatprep.subr.bf16.mxu0 0
        %6209 = vmatpush1.bf16.msra.mxu0 0
        %6210 = vmatprep.subr.bf16.mxu0 0
        %6211 = vmatpush1.bf16.msra.mxu0 0
        %6212 = vmatprep.subr.bf16.mxu0 0
        %6213 = vmatpush1.bf16.msra.mxu0 0
        %6214 = vmatprep.subr.bf16.mxu0 0
        %6215 = vmatpush1.bf16.msra.mxu0 0
        %6216 = vmatprep.subr.bf16.mxu0 0
        %6217 = vmatpush1.bf16.msra.mxu0 0
        %6218 = vmatprep.subr.bf16.mxu0 0
        %6219 = vmatpush1.bf16.msra.mxu0 0
        %6220 = vmatprep.subr.bf16.mxu0 0
        %6221 = vmatpush1.bf16.msra.mxu0 0
        %6222 = vmatprep.subr.bf16.mxu0 0
        %6223 = vmatpush1.bf16.msra.mxu0 0
        %6224 = vmatprep.subr.bf16.mxu0 0
        %6225 = vmatpush1.bf16.msra.mxu0 0
        %6226 = vmatprep.mubr.bf16.mxu0 0
        %6227 = vmatmul.mubr.bf16.gmra.mrb[0].mxu0 %v6171
        %v6228 = vpop.f32.mrb[0].mxu0
        %v6229 = vadd.f32 0.0, %v6228
        %v6230 = vpop.f32.mrb[0].mxu0
        %v6231 = vpop.f32.mrb[0].mxu0
        %v6232 = vadd.f32 0.0, %v6231
        %v6233 = vpop.f32.mrb[0].mxu0
        %6234 = vmatprep.mubr.bf16.mxu0 0
        %6235 = vmatmul.mubr.bf16.gmra.mrb[0].mxu0 %v6174
        %v6236 = vpop.f32.mrb[0].mxu0
        %v6237 = vadd.f32 0.0, %v6236
        %v6238 = vpop.f32.mrb[0].mxu0
        %v6239 = vpop.f32.mrb[0].mxu0
        %v6240 = vadd.f32 0.0, %v6239
        %v6241 = vpop.f32.mrb[0].mxu0
        %6242 = vmatprep.mubr.bf16.mxu0 0
        %6243 = vmatmul.mubr.bf16.gmra.mrb[0].mxu0 %v6177
        %v6244 = vpop.f32.mrb[0].mxu0
        %v6245 = vadd.f32 0.0, %v6244
        %v6246 = vpop.f32.mrb[0].mxu0
        %v6247 = vpop.f32.mrb[0].mxu0
        %v6248 = vadd.f32 0.0, %v6247
        %v6249 = vpop.f32.mrb[0].mxu0
        %6250 = vmatprep.mubr.bf16.mxu0 0
        %6251 = vmatmul.mubr.bf16.gmra.mrb[0].mxu0 %v6180
        %v6252 = vpop.f32.mrb[0].mxu0
        %v6253 = vadd.f32 0.0, %v6252
        %v6254 = vpop.f32.mrb[0].mxu0
        %v6255 = vpop.f32.mrb[0].mxu0
        %v6256 = vadd.f32 0.0, %v6255
        %v6257 = vpop.f32.mrb[0].mxu0
        %6258 = vmatprep.mubr.bf16.mxu0 0
        %6259 = vmatmul.mubr.bf16.gmra.mrb[0].mxu0 %v6183
        %v6260 = vpop.f32.mrb[0].mxu0
        %v6261 = vadd.f32 0.0, %v6260
        %v6262 = vpop.f32.mrb[0].mxu0
        %v6263 = vpop.f32.mrb[0].mxu0
        %v6264 = vadd.f32 0.0, %v6263
        %v6265 = vpop.f32.mrb[0].mxu0
        %6266 = vmatprep.mubr.bf16.mxu0 0
        %6267 = vmatmul.mubr.bf16.gmra.mrb[0].mxu0 %v6186
        %v6268 = vpop.f32.mrb[0].mxu0
        %v6269 = vadd.f32 0.0, %v6268
        %v6270 = vpop.f32.mrb[0].mxu0
        %v6271 = vpop.f32.mrb[0].mxu0
        %v6272 = vadd.f32 0.0, %v6271
        %v6273 = vpop.f32.mrb[0].mxu0
        %6274 = vmatprep.mubr.bf16.mxu0 0
        %6275 = vmatmul.mubr.bf16.gmra.mrb[0].mxu0 %v6189
        %v6276 = vpop.f32.mrb[0].mxu0
        %v6277 = vadd.f32 0.0, %v6276
        %v6278 = vpop.f32.mrb[0].mxu0
        %v6279 = vpop.f32.mrb[0].mxu0
        %v6280 = vadd.f32 0.0, %v6279
        %v6281 = vpop.f32.mrb[0].mxu0
        %6282 = vmatprep.mubr.bf16.mxu0 0
        %6283 = vmatmul.mubr.bf16.gmra.mrb[0].mxu0 %v6192
        %v6284 = vpop.f32.mrb[0].mxu0
        %v6285 = vadd.f32 0.0, %v6284
        %v6286 = vpop.f32.mrb[0].mxu0
        %v6287 = vpop.f32.mrb[0].mxu0
        %v6288 = vadd.f32 0.0, %v6287
        %v6289 = vpop.f32.mrb[0].mxu0
        %6290 = vdwg.mxu0
        %v6295 = vunpack.c.l.b16 %v6013
        %v6296 = vunpack.c.l.b16 %v6014
        %v6297 = vunpack.c.l.b16 %v6015
        %v6298 = vunpack.c.l.b16 %v6016
        %v6299 = vpack.c.b16 %v6296, %v6295
        %v6300 = vpack.c.b16 %v6298, %v6297
        %v6304 = vsel %vm3492, %v6005, 0
        %v6307 = vsel %vm3492, %v6006, 0
        %v6310 = vsel %vm3492, %v6007, 0
        %v6313 = vsel %vm3492, %v6008, 0
        %v6316 = vsel %vm3492, %v6009, 0
        %v6319 = vsel %vm3492, %v6010, 0
        %v6322 = vsel %vm3492, %v6011, 0
        %v6325 = vsel %vm3492, %v6012, 0
        %6327 = vmatprep.subr.bf16.mxu0 0
        %6328 = vmatpush1.bf16.msra.mxu0 %v6299
        %6329 = vmatprep.subr.bf16.mxu0 0
        %6330 = vmatpush1.bf16.msra.mxu0 %v6300
        %6331 = vmatprep.subr.bf16.mxu0 0
        %6332 = vmatpush1.bf16.msra.mxu0 0
        %6333 = vmatprep.subr.bf16.mxu0 0
        %6334 = vmatpush1.bf16.msra.mxu0 0
        %6335 = vmatprep.subr.bf16.mxu0 0
        %6336 = vmatpush1.bf16.msra.mxu0 0
        %6337 = vmatprep.subr.bf16.mxu0 0
        %6338 = vmatpush1.bf16.msra.mxu0 0
        %6339 = vmatprep.subr.bf16.mxu0 0
        %6340 = vmatpush1.bf16.msra.mxu0 0
        %6341 = vmatprep.subr.bf16.mxu0 0
        %6342 = vmatpush1.bf16.msra.mxu0 0
        %6343 = vmatprep.subr.bf16.mxu0 0
        %6344 = vmatpush1.bf16.msra.mxu0 0
        %6345 = vmatprep.subr.bf16.mxu0 0
        %6346 = vmatpush1.bf16.msra.mxu0 0
        %6347 = vmatprep.subr.bf16.mxu0 0
        %6348 = vmatpush1.bf16.msra.mxu0 0
        %6349 = vmatprep.subr.bf16.mxu0 0
        %6350 = vmatpush1.bf16.msra.mxu0 0
        %6351 = vmatprep.subr.bf16.mxu0 0
        %6352 = vmatpush1.bf16.msra.mxu0 0
        %6353 = vmatprep.subr.bf16.mxu0 0
        %6354 = vmatpush1.bf16.msra.mxu0 0
        %6355 = vmatprep.subr.bf16.mxu0 0
        %6356 = vmatpush1.bf16.msra.mxu0 0
        %6357 = vmatprep.subr.bf16.mxu0 0
        %6358 = vmatpush1.bf16.msra.mxu0 0
        %6359 = vmatprep.mubr.bf16.mxu0 0
        %6360 = vmatmul.mubr.bf16.gmra.mrb[0].mxu0 %v6304
        %v6361 = vpop.f32.mrb[0].mxu0
        %v6362 = vadd.f32 %v6229, %v6361
        %v6363 = vpop.f32.mrb[0].mxu0
        %v6364 = vpop.f32.mrb[0].mxu0
        %v6365 = vadd.f32 %v6232, %v6364
        %v6366 = vpop.f32.mrb[0].mxu0
        %6367 = vmatprep.mubr.bf16.mxu0 0
        %6368 = vmatmul.mubr.bf16.gmra.mrb[0].mxu0 %v6307
        %v6369 = vpop.f32.mrb[0].mxu0
        %v6370 = vadd.f32 %v6237, %v6369
        %v6371 = vpop.f32.mrb[0].mxu0
        %v6372 = vpop.f32.mrb[0].mxu0
        %v6373 = vadd.f32 %v6240, %v6372
        %v6374 = vpop.f32.mrb[0].mxu0
        %6375 = vmatprep.mubr.bf16.mxu0 0
        %6376 = vmatmul.mubr.bf16.gmra.mrb[0].mxu0 %v6310
        %v6377 = vpop.f32.mrb[0].mxu0
        %v6378 = vadd.f32 %v6245, %v6377
        %v6379 = vpop.f32.mrb[0].mxu0
        %v6380 = vpop.f32.mrb[0].mxu0
        %v6381 = vadd.f32 %v6248, %v6380
        %v6382 = vpop.f32.mrb[0].mxu0
        %6383 = vmatprep.mubr.bf16.mxu0 0
        %6384 = vmatmul.mubr.bf16.gmra.mrb[0].mxu0 %v6313
        %v6385 = vpop.f32.mrb[0].mxu0
        %v6386 = vadd.f32 %v6253, %v6385
        %v6387 = vpop.f32.mrb[0].mxu0
        %v6388 = vpop.f32.mrb[0].mxu0
        %v6389 = vadd.f32 %v6256, %v6388
        %v6390 = vpop.f32.mrb[0].mxu0
        %6391 = vmatprep.mubr.bf16.mxu0 0
        %6392 = vmatmul.mubr.bf16.gmra.mrb[0].mxu0 %v6316
        %v6393 = vpop.f32.mrb[0].mxu0
        %v6394 = vadd.f32 %v6261, %v6393
        %v6395 = vpop.f32.mrb[0].mxu0
        %v6396 = vpop.f32.mrb[0].mxu0
        %v6397 = vadd.f32 %v6264, %v6396
        %v6398 = vpop.f32.mrb[0].mxu0
        %6399 = vmatprep.mubr.bf16.mxu0 0
        %6400 = vmatmul.mubr.bf16.gmra.mrb[0].mxu0 %v6319
        %v6401 = vpop.f32.mrb[0].mxu0
        %v6402 = vadd.f32 %v6269, %v6401
        %v6403 = vpop.f32.mrb[0].mxu0
        %v6404 = vpop.f32.mrb[0].mxu0
        %v6405 = vadd.f32 %v6272, %v6404
        %v6406 = vpop.f32.mrb[0].mxu0
        %6407 = vmatprep.mubr.bf16.mxu0 0
        %6408 = vmatmul.mubr.bf16.gmra.mrb[0].mxu0 %v6322
        %v6409 = vpop.f32.mrb[0].mxu0
        %v6410 = vadd.f32 %v6277, %v6409
        %v6411 = vpop.f32.mrb[0].mxu0
        %v6412 = vpop.f32.mrb[0].mxu0
        %v6413 = vadd.f32 %v6280, %v6412
        %v6414 = vpop.f32.mrb[0].mxu0
        %6415 = vmatprep.mubr.bf16.mxu0 0
        %6416 = vmatmul.mubr.bf16.gmra.mrb[0].mxu0 %v6325
        %v6417 = vpop.f32.mrb[0].mxu0
        %v6418 = vadd.f32 %v6285, %v6417
        %v6419 = vpop.f32.mrb[0].mxu0
        %v6420 = vpop.f32.mrb[0].mxu0
        %v6421 = vadd.f32 %v6288, %v6420
        %v6422 = vpop.f32.mrb[0].mxu0
        %6423 = vdwg.mxu0
        %v6424 = vld [vmem:[#allocation3 + $0x9] sm:$0xff]
        %v6425 = vld [vmem:[#allocation3 + $0x11] sm:$0xff]
        %v6426 = vld [vmem:[#allocation3 + $0x19] sm:$0xff]
        %v6427 = vld [vmem:[#allocation3 + $0x21] sm:$0xff]
        %v6428 = vld [vmem:[#allocation3 + $0x29] sm:$0xff]
        %v6429 = vld [vmem:[#allocation3 + $0x31] sm:$0xff]
        %v6430 = vld [vmem:[#allocation3 + $0x39] sm:$0xff]
        %v6431 = vld [vmem:[#allocation3 + $0x41] sm:$0xff]
        %v6432 = vld [vmem:[#allocation3 + $0x49] sm:$0xff]
        %v6433 = vld [vmem:[#allocation3 + $0x51] sm:$0xff]
        %v6434 = vld [vmem:[#allocation3 + $0x59] sm:$0xff]
        %v6435 = vld [vmem:[#allocation3 + $0x61] sm:$0xff]
        %v6436 = vld [vmem:[#allocation3 + $0x69] sm:$0xff]
        %v6437 = vld [vmem:[#allocation3 + $0x71] sm:$0xff]
        %v6438 = vld [vmem:[#allocation3 + $0x79] sm:$0xff]
        %v6439 = vld [vmem:[#allocation3 + $0x81] sm:$0xff]
        %v6440 = vld [vmem:[%s3763] sm:$0xff]
        %v6441 = vld [vmem:[%s3763 + $0x8] sm:$0xff]
        %v6442 = vld [vmem:[%s3763 + $0x10] sm:$0xff]
        %v6443 = vld [vmem:[%s3763 + $0x18] sm:$0xff]
        %v6444 = vld [vmem:[%s3763 + $0x20] sm:$0xff]
        %v6445 = vld [vmem:[%s3763 + $0x28] sm:$0xff]
        %v6446 = vld [vmem:[%s3763 + $0x30] sm:$0xff]
        %v6447 = vld [vmem:[%s3763 + $0x38] sm:$0xff]
        %v6448 = vld [vmem:[%s3763 + $0x40] sm:$0xff]
        %v6449 = vld [vmem:[%s3763 + $0x48] sm:$0xff]
        %v6450 = vld [vmem:[%s3763 + $0x50] sm:$0xff]
        %v6451 = vld [vmem:[%s3763 + $0x58] sm:$0xff]
        %v6452 = vld [vmem:[%s3763 + $0x60] sm:$0xff]
        %v6453 = vld [vmem:[%s3763 + $0x68] sm:$0xff]
        %v6454 = vld [vmem:[%s3763 + $0x70] sm:$0xff]
        %v6455 = vld [vmem:[%s3763 + $0x78] sm:$0xff]
        %6457 = vset.pattern.permute.xlu0 0
        %6458 = vperm.xlu0 %6457, %v6440
        %v6459 = vpop.permute.xlu0 %6458
        %6462 = vset.pattern.permute.xlu0 0
        %6463 = vperm.xlu0 %6462, %v6441
        %v6464 = vpop.permute.xlu0 %6463
        %6467 = vset.pattern.permute.xlu0 0
        %6468 = vperm.xlu0 %6467, %v6442
        %v6469 = vpop.permute.xlu0 %6468
        %6472 = vset.pattern.permute.xlu0 0
        %6473 = vperm.xlu0 %6472, %v6443
        %v6474 = vpop.permute.xlu0 %6473
        %6477 = vset.pattern.permute.xlu0 0
        %6478 = vperm.xlu0 %6477, %v6444
        %v6479 = vpop.permute.xlu0 %6478
        %6482 = vset.pattern.permute.xlu0 0
        %6483 = vperm.xlu0 %6482, %v6445
        %v6484 = vpop.permute.xlu0 %6483
        %6487 = vset.pattern.permute.xlu0 0
        %6488 = vperm.xlu0 %6487, %v6446
        %v6489 = vpop.permute.xlu0 %6488
        %6492 = vset.pattern.permute.xlu0 0
        %6493 = vperm.xlu0 %6492, %v6447
        %v6494 = vpop.permute.xlu0 %6493
        %6497 = vset.pattern.permute.xlu0 0
        %6498 = vperm.xlu0 %6497, %v6448
        %v6499 = vpop.permute.xlu0 %6498
        %6502 = vset.pattern.permute.xlu0 0
        %6503 = vperm.xlu0 %6502, %v6449
        %v6504 = vpop.permute.xlu0 %6503
        %6507 = vset.pattern.permute.xlu0 0
        %6508 = vperm.xlu0 %6507, %v6450
        %v6509 = vpop.permute.xlu0 %6508
        %6512 = vset.pattern.permute.xlu0 0
        %6513 = vperm.xlu0 %6512, %v6451
        %v6514 = vpop.permute.xlu0 %6513
        %6517 = vset.pattern.permute.xlu0 0
        %6518 = vperm.xlu0 %6517, %v6452
        %v6519 = vpop.permute.xlu0 %6518
        %6522 = vset.pattern.permute.xlu0 0
        %6523 = vperm.xlu0 %6522, %v6453
        %v6524 = vpop.permute.xlu0 %6523
        %6527 = vset.pattern.permute.xlu0 0
        %6528 = vperm.xlu0 %6527, %v6454
        %v6529 = vpop.permute.xlu0 %6528
        %6532 = vset.pattern.permute.xlu0 0
        %6533 = vperm.xlu0 %6532, %v6455
        %v6534 = vpop.permute.xlu0 %6533
        %v6536 = vmul.f32 %v6424, %v6459
        %v6537 = vmul.f32 %v6425, %v6464
        %v6538 = vmul.f32 %v6426, %v6469
        %v6539 = vmul.f32 %v6427, %v6474
        %v6540 = vmul.f32 %v6428, %v6479
        %v6541 = vmul.f32 %v6429, %v6484
        %v6542 = vmul.f32 %v6430, %v6489
        %v6543 = vmul.f32 %v6431, %v6494
        %v6544 = vmul.f32 %v6432, %v6499
        %v6545 = vmul.f32 %v6433, %v6504
        %v6546 = vmul.f32 %v6434, %v6509
        %v6547 = vmul.f32 %v6435, %v6514
        %v6548 = vmul.f32 %v6436, %v6519
        %v6549 = vmul.f32 %v6437, %v6524
        %v6550 = vmul.f32 %v6438, %v6529
        %v6551 = vmul.f32 %v6439, %v6534
        %v6552 = vpack.c.bf16 %v6537, %v6536
        %v6553 = vpack.c.bf16 %v6539, %v6538
        %v6554 = vpack.c.bf16 %v6541, %v6540
        %v6555 = vpack.c.bf16 %v6543, %v6542
        %v6556 = vpack.c.bf16 %v6545, %v6544
        %v6557 = vpack.c.bf16 %v6547, %v6546
        %v6558 = vpack.c.bf16 %v6549, %v6548
        %v6559 = vpack.c.bf16 %v6551, %v6550
        %s6560 = scalar_lea.vmem %s619, 32
        %v6561 = vld [vmem:[%s6560] sm:$0xf]
        %v6562 = vld [vmem:[%s6560 + $0x4] sm:$0xf]
        %v6563 = vld [vmem:[%s6560 + $0x8] sm:$0xf]
        %v6564 = vld [vmem:[%s6560 + $0xc] sm:$0xf]
        %v6569 = vunpack.c.l.b16 %v6561
        %v6570 = vunpack.c.l.b16 %v6562
        %v6571 = vunpack.c.l.b16 %v6563
        %v6572 = vunpack.c.l.b16 %v6564
        %v6573 = vpack.c.b16 %v6570, %v6569
        %v6574 = vpack.c.b16 %v6572, %v6571
        %v6578 = vsel %vm3492, %v6552, 0
        %v6581 = vsel %vm3492, %v6553, 0
        %v6584 = vsel %vm3492, %v6554, 0
        %v6587 = vsel %vm3492, %v6555, 0
        %v6590 = vsel %vm3492, %v6556, 0
        %v6593 = vsel %vm3492, %v6557, 0
        %v6596 = vsel %vm3492, %v6558, 0
        %v6599 = vsel %vm3492, %v6559, 0
        %6601 = vmatprep.subr.bf16.mxu0 0
        %6602 = vmatpush1.bf16.msra.mxu0 %v6573
        %6603 = vmatprep.subr.bf16.mxu0 0
        %6604 = vmatpush1.bf16.msra.mxu0 %v6574
        %6605 = vmatprep.subr.bf16.mxu0 0
        %6606 = vmatpush1.bf16.msra.mxu0 0
        %6607 = vmatprep.subr.bf16.mxu0 0
        %6608 = vmatpush1.bf16.msra.mxu0 0
        %6609 = vmatprep.subr.bf16.mxu0 0
        %6610 = vmatpush1.bf16.msra.mxu0 0
        %6611 = vmatprep.subr.bf16.mxu0 0
        %6612 = vmatpush1.bf16.msra.mxu0 0
        %6613 = vmatprep.subr.bf16.mxu0 0
        %6614 = vmatpush1.bf16.msra.mxu0 0
        %6615 = vmatprep.subr.bf16.mxu0 0
        %6616 = vmatpush1.bf16.msra.mxu0 0
        %6617 = vmatprep.subr.bf16.mxu0 0
        %6618 = vmatpush1.bf16.msra.mxu0 0
        %6619 = vmatprep.subr.bf16.mxu0 0
        %6620 = vmatpush1.bf16.msra.mxu0 0
        %6621 = vmatprep.subr.bf16.mxu0 0
        %6622 = vmatpush1.bf16.msra.mxu0 0
        %6623 = vmatprep.subr.bf16.mxu0 0
        %6624 = vmatpush1.bf16.msra.mxu0 0
        %6625 = vmatprep.subr.bf16.mxu0 0
        %6626 = vmatpush1.bf16.msra.mxu0 0
        %6627 = vmatprep.subr.bf16.mxu0 0
        %6628 = vmatpush1.bf16.msra.mxu0 0
        %6629 = vmatprep.subr.bf16.mxu0 0
        %6630 = vmatpush1.bf16.msra.mxu0 0
        %6631 = vmatprep.subr.bf16.mxu0 0
        %6632 = vmatpush1.bf16.msra.mxu0 0
        %6633 = vmatprep.mubr.bf16.mxu0 0
        %6634 = vmatmul.mubr.bf16.gmra.mrb[0].mxu0 %v6578
        %v6635 = vpop.f32.mrb[0].mxu0
        %v6636 = vadd.f32 0.0, %v6635
        %v6637 = vpop.f32.mrb[0].mxu0
        %v6638 = vpop.f32.mrb[0].mxu0
        %v6639 = vadd.f32 0.0, %v6638
        %v6640 = vpop.f32.mrb[0].mxu0
        %6641 = vmatprep.mubr.bf16.mxu0 0
        %6642 = vmatmul.mubr.bf16.gmra.mrb[0].mxu0 %v6581
        %v6643 = vpop.f32.mrb[0].mxu0
        %v6644 = vadd.f32 0.0, %v6643
        %v6645 = vpop.f32.mrb[0].mxu0
        %v6646 = vpop.f32.mrb[0].mxu0
        %v6647 = vadd.f32 0.0, %v6646
        %v6648 = vpop.f32.mrb[0].mxu0
        %6649 = vmatprep.mubr.bf16.mxu0 0
        %6650 = vmatmul.mubr.bf16.gmra.mrb[0].mxu0 %v6584
        %v6651 = vpop.f32.mrb[0].mxu0
        %v6652 = vadd.f32 0.0, %v6651
        %v6653 = vpop.f32.mrb[0].mxu0
        %v6654 = vpop.f32.mrb[0].mxu0
        %v6655 = vadd.f32 0.0, %v6654
        %v6656 = vpop.f32.mrb[0].mxu0
        %6657 = vmatprep.mubr.bf16.mxu0 0
        %6658 = vmatmul.mubr.bf16.gmra.mrb[0].mxu0 %v6587
        %v6659 = vpop.f32.mrb[0].mxu0
        %v6660 = vadd.f32 0.0, %v6659
        %v6661 = vpop.f32.mrb[0].mxu0
        %v6662 = vpop.f32.mrb[0].mxu0
        %v6663 = vadd.f32 0.0, %v6662
        %v6664 = vpop.f32.mrb[0].mxu0
        %6665 = vmatprep.mubr.bf16.mxu0 0
        %6666 = vmatmul.mubr.bf16.gmra.mrb[0].mxu0 %v6590
        %v6667 = vpop.f32.mrb[0].mxu0
        %v6668 = vadd.f32 0.0, %v6667
        %v6669 = vpop.f32.mrb[0].mxu0
        %v6670 = vpop.f32.mrb[0].mxu0
        %v6671 = vadd.f32 0.0, %v6670
        %v6672 = vpop.f32.mrb[0].mxu0
        %6673 = vmatprep.mubr.bf16.mxu0 0
        %6674 = vmatmul.mubr.bf16.gmra.mrb[0].mxu0 %v6593
        %v6675 = vpop.f32.mrb[0].mxu0
        %v6676 = vadd.f32 0.0, %v6675
        %v6677 = vpop.f32.mrb[0].mxu0
        %v6678 = vpop.f32.mrb[0].mxu0
        %v6679 = vadd.f32 0.0, %v6678
        %v6680 = vpop.f32.mrb[0].mxu0
        %6681 = vmatprep.mubr.bf16.mxu0 0
        %6682 = vmatmul.mubr.bf16.gmra.mrb[0].mxu0 %v6596
        %v6683 = vpop.f32.mrb[0].mxu0
        %v6684 = vadd.f32 0.0, %v6683
        %v6685 = vpop.f32.mrb[0].mxu0
        %v6686 = vpop.f32.mrb[0].mxu0
        %v6687 = vadd.f32 0.0, %v6686
        %v6688 = vpop.f32.mrb[0].mxu0
        %6689 = vmatprep.mubr.bf16.mxu0 0
        %6690 = vmatmul.mubr.bf16.gmra.mrb[0].mxu0 %v6599
        %v6691 = vpop.f32.mrb[0].mxu0
        %v6692 = vadd.f32 0.0, %v6691
        %v6693 = vpop.f32.mrb[0].mxu0
        %v6694 = vpop.f32.mrb[0].mxu0
        %v6695 = vadd.f32 0.0, %v6694
        %v6696 = vpop.f32.mrb[0].mxu0
        %6697 = vdwg.mxu0
        %v6698 = vadd.f32 %v6362, %v6636
        %v6699 = vadd.f32 %v6365, %v6639
        %v6700 = vadd.f32 %v6370, %v6644
        %v6701 = vadd.f32 %v6373, %v6647
        %v6702 = vadd.f32 %v6378, %v6652
        %v6703 = vadd.f32 %v6381, %v6655
        %v6704 = vadd.f32 %v6386, %v6660
        %v6705 = vadd.f32 %v6389, %v6663
        %v6706 = vadd.f32 %v6394, %v6668
        %v6707 = vadd.f32 %v6397, %v6671
        %v6708 = vadd.f32 %v6402, %v6676
        %v6709 = vadd.f32 %v6405, %v6679
        %v6710 = vadd.f32 %v6410, %v6684
        %v6711 = vadd.f32 %v6413, %v6687
        %v6712 = vadd.f32 %v6418, %v6692
        %v6713 = vadd.f32 %v6421, %v6695
        %v6714 = vld [vmem:[#allocation3 + $0xf] sm:$0xff]
        %v6715 = vld [vmem:[#allocation3 + $0x17] sm:$0xff]
        %v6716 = vld [vmem:[#allocation3 + $0x1f] sm:$0xff]
        %v6717 = vld [vmem:[#allocation3 + $0x27] sm:$0xff]
        %v6718 = vld [vmem:[#allocation3 + $0x2f] sm:$0xff]
        %v6719 = vld [vmem:[#allocation3 + $0x37] sm:$0xff]
        %v6720 = vld [vmem:[#allocation3 + $0x3f] sm:$0xff]
        %v6721 = vld [vmem:[#allocation3 + $0x47] sm:$0xff]
        %v6722 = vld [vmem:[#allocation3 + $0x4f] sm:$0xff]
        %v6723 = vld [vmem:[#allocation3 + $0x57] sm:$0xff]
        %v6724 = vld [vmem:[#allocation3 + $0x5f] sm:$0xff]
        %v6725 = vld [vmem:[#allocation3 + $0x67] sm:$0xff]
        %v6726 = vld [vmem:[#allocation3 + $0x6f] sm:$0xff]
        %v6727 = vld [vmem:[#allocation3 + $0x77] sm:$0xff]
        %v6728 = vld [vmem:[#allocation3 + $0x7f] sm:$0xff]
        %v6729 = vld [vmem:[#allocation3 + $0x87] sm:$0xff]
        %v6730 = vld [vmem:[%s4054] sm:$0xff]
        %v6731 = vld [vmem:[%s4054 + $0x8] sm:$0xff]
        %v6732 = vld [vmem:[%s4054 + $0x10] sm:$0xff]
        %v6733 = vld [vmem:[%s4054 + $0x18] sm:$0xff]
        %v6734 = vld [vmem:[%s4054 + $0x20] sm:$0xff]
        %v6735 = vld [vmem:[%s4054 + $0x28] sm:$0xff]
        %v6736 = vld [vmem:[%s4054 + $0x30] sm:$0xff]
        %v6737 = vld [vmem:[%s4054 + $0x38] sm:$0xff]
        %v6738 = vld [vmem:[%s4054 + $0x40] sm:$0xff]
        %v6739 = vld [vmem:[%s4054 + $0x48] sm:$0xff]
        %v6740 = vld [vmem:[%s4054 + $0x50] sm:$0xff]
        %v6741 = vld [vmem:[%s4054 + $0x58] sm:$0xff]
        %v6742 = vld [vmem:[%s4054 + $0x60] sm:$0xff]
        %v6743 = vld [vmem:[%s4054 + $0x68] sm:$0xff]
        %v6744 = vld [vmem:[%s4054 + $0x70] sm:$0xff]
        %v6745 = vld [vmem:[%s4054 + $0x78] sm:$0xff]
        %6747 = vset.pattern.permute.xlu0 0
        %6748 = vperm.xlu0 %6747, %v6730
        %v6749 = vpop.permute.xlu0 %6748
        %6752 = vset.pattern.permute.xlu0 0
        %6753 = vperm.xlu0 %6752, %v6731
        %v6754 = vpop.permute.xlu0 %6753
        %6757 = vset.pattern.permute.xlu0 0
        %6758 = vperm.xlu0 %6757, %v6732
        %v6759 = vpop.permute.xlu0 %6758
        %6762 = vset.pattern.permute.xlu0 0
        %6763 = vperm.xlu0 %6762, %v6733
        %v6764 = vpop.permute.xlu0 %6763
        %6767 = vset.pattern.permute.xlu0 0
        %6768 = vperm.xlu0 %6767, %v6734
        %v6769 = vpop.permute.xlu0 %6768
        %6772 = vset.pattern.permute.xlu0 0
        %6773 = vperm.xlu0 %6772, %v6735
        %v6774 = vpop.permute.xlu0 %6773
        %6777 = vset.pattern.permute.xlu0 0
        %6778 = vperm.xlu0 %6777, %v6736
        %v6779 = vpop.permute.xlu0 %6778
        %6782 = vset.pattern.permute.xlu0 0
        %6783 = vperm.xlu0 %6782, %v6737
        %v6784 = vpop.permute.xlu0 %6783
        %6787 = vset.pattern.permute.xlu0 0
        %6788 = vperm.xlu0 %6787, %v6738
        %v6789 = vpop.permute.xlu0 %6788
        %6792 = vset.pattern.permute.xlu0 0
        %6793 = vperm.xlu0 %6792, %v6739
        %v6794 = vpop.permute.xlu0 %6793
        %6797 = vset.pattern.permute.xlu0 0
        %6798 = vperm.xlu0 %6797, %v6740
        %v6799 = vpop.permute.xlu0 %6798
        %6802 = vset.pattern.permute.xlu0 0
        %6803 = vperm.xlu0 %6802, %v6741
        %v6804 = vpop.permute.xlu0 %6803
        %6807 = vset.pattern.permute.xlu0 0
        %6808 = vperm.xlu0 %6807, %v6742
        %v6809 = vpop.permute.xlu0 %6808
        %6812 = vset.pattern.permute.xlu0 0
        %6813 = vperm.xlu0 %6812, %v6743
        %v6814 = vpop.permute.xlu0 %6813
        %6817 = vset.pattern.permute.xlu0 0
        %6818 = vperm.xlu0 %6817, %v6744
        %v6819 = vpop.permute.xlu0 %6818
        %6822 = vset.pattern.permute.xlu0 0
        %6823 = vperm.xlu0 %6822, %v6745
        %v6824 = vpop.permute.xlu0 %6823
        %v6826 = vmul.f32 %v6714, %v6749
        %v6827 = vmul.f32 %v6715, %v6754
        %v6828 = vmul.f32 %v6716, %v6759
        %v6829 = vmul.f32 %v6717, %v6764
        %v6830 = vmul.f32 %v6718, %v6769
        %v6831 = vmul.f32 %v6719, %v6774
        %v6832 = vmul.f32 %v6720, %v6779
        %v6833 = vmul.f32 %v6721, %v6784
        %v6834 = vmul.f32 %v6722, %v6789
        %v6835 = vmul.f32 %v6723, %v6794
        %v6836 = vmul.f32 %v6724, %v6799
        %v6837 = vmul.f32 %v6725, %v6804
        %v6838 = vmul.f32 %v6726, %v6809
        %v6839 = vmul.f32 %v6727, %v6814
        %v6840 = vmul.f32 %v6728, %v6819
        %v6841 = vmul.f32 %v6729, %v6824
        %v6842 = vpack.c.bf16 %v6827, %v6826
        %v6843 = vpack.c.bf16 %v6829, %v6828
        %v6844 = vpack.c.bf16 %v6831, %v6830
        %v6845 = vpack.c.bf16 %v6833, %v6832
        %v6846 = vpack.c.bf16 %v6835, %v6834
        %v6847 = vpack.c.bf16 %v6837, %v6836
        %v6848 = vpack.c.bf16 %v6839, %v6838
        %v6849 = vpack.c.bf16 %v6841, %v6840
        %s6850 = scalar_lea.vmem %s619, 48
        %v6851 = vld [vmem:[%s6850] sm:$0xf]
        %v6852 = vld [vmem:[%s6850 + $0x4] sm:$0xf]
        %v6853 = vld [vmem:[%s6850 + $0x8] sm:$0xf]
        %v6854 = vld [vmem:[%s6850 + $0xc] sm:$0xf]
        %v6859 = vunpack.c.l.b16 %v6851
        %v6860 = vunpack.c.l.b16 %v6852
        %v6861 = vunpack.c.l.b16 %v6853
        %v6862 = vunpack.c.l.b16 %v6854
        %v6863 = vpack.c.b16 %v6860, %v6859
        %v6864 = vpack.c.b16 %v6862, %v6861
        %v6868 = vsel %vm3492, %v6842, 0
        %v6871 = vsel %vm3492, %v6843, 0
        %v6874 = vsel %vm3492, %v6844, 0
        %v6877 = vsel %vm3492, %v6845, 0
        %v6880 = vsel %vm3492, %v6846, 0
        %v6883 = vsel %vm3492, %v6847, 0
        %v6886 = vsel %vm3492, %v6848, 0
        %v6889 = vsel %vm3492, %v6849, 0
        %6891 = vmatprep.subr.bf16.mxu0 0
        %6892 = vmatpush1.bf16.msra.mxu0 %v6863
        %6893 = vmatprep.subr.bf16.mxu0 0
        %6894 = vmatpush1.bf16.msra.mxu0 %v6864
        %6895 = vmatprep.subr.bf16.mxu0 0
        %6896 = vmatpush1.bf16.msra.mxu0 0
        %6897 = vmatprep.subr.bf16.mxu0 0
        %6898 = vmatpush1.bf16.msra.mxu0 0
        %6899 = vmatprep.subr.bf16.mxu0 0
        %6900 = vmatpush1.bf16.msra.mxu0 0
        %6901 = vmatprep.subr.bf16.mxu0 0
        %6902 = vmatpush1.bf16.msra.mxu0 0
        %6903 = vmatprep.subr.bf16.mxu0 0
        %6904 = vmatpush1.bf16.msra.mxu0 0
        %6905 = vmatprep.subr.bf16.mxu0 0
        %6906 = vmatpush1.bf16.msra.mxu0 0
        %6907 = vmatprep.subr.bf16.mxu0 0
        %6908 = vmatpush1.bf16.msra.mxu0 0
        %6909 = vmatprep.subr.bf16.mxu0 0
        %6910 = vmatpush1.bf16.msra.mxu0 0
        %6911 = vmatprep.subr.bf16.mxu0 0
        %6912 = vmatpush1.bf16.msra.mxu0 0
        %6913 = vmatprep.subr.bf16.mxu0 0
        %6914 = vmatpush1.bf16.msra.mxu0 0
        %6915 = vmatprep.subr.bf16.mxu0 0
        %6916 = vmatpush1.bf16.msra.mxu0 0
        %6917 = vmatprep.subr.bf16.mxu0 0
        %6918 = vmatpush1.bf16.msra.mxu0 0
        %6919 = vmatprep.subr.bf16.mxu0 0
        %6920 = vmatpush1.bf16.msra.mxu0 0
        %6921 = vmatprep.subr.bf16.mxu0 0
        %6922 = vmatpush1.bf16.msra.mxu0 0
        %6923 = vmatprep.mubr.bf16.mxu0 0
        %6924 = vmatmul.mubr.bf16.gmra.mrb[0].mxu0 %v6868
        %v6925 = vpop.f32.mrb[0].mxu0
        %v6926 = vadd.f32 0.0, %v6925
        %v6927 = vpop.f32.mrb[0].mxu0
        %v6928 = vpop.f32.mrb[0].mxu0
        %v6929 = vadd.f32 0.0, %v6928
        %v6930 = vpop.f32.mrb[0].mxu0
        %6931 = vmatprep.mubr.bf16.mxu0 0
        %6932 = vmatmul.mubr.bf16.gmra.mrb[0].mxu0 %v6871
        %v6933 = vpop.f32.mrb[0].mxu0
        %v6934 = vadd.f32 0.0, %v6933
        %v6935 = vpop.f32.mrb[0].mxu0
        %v6936 = vpop.f32.mrb[0].mxu0
        %v6937 = vadd.f32 0.0, %v6936
        %v6938 = vpop.f32.mrb[0].mxu0
        %6939 = vmatprep.mubr.bf16.mxu0 0
        %6940 = vmatmul.mubr.bf16.gmra.mrb[0].mxu0 %v6874
        %v6941 = vpop.f32.mrb[0].mxu0
        %v6942 = vadd.f32 0.0, %v6941
        %v6943 = vpop.f32.mrb[0].mxu0
        %v6944 = vpop.f32.mrb[0].mxu0
        %v6945 = vadd.f32 0.0, %v6944
        %v6946 = vpop.f32.mrb[0].mxu0
        %6947 = vmatprep.mubr.bf16.mxu0 0
        %6948 = vmatmul.mubr.bf16.gmra.mrb[0].mxu0 %v6877
        %v6949 = vpop.f32.mrb[0].mxu0
        %v6950 = vadd.f32 0.0, %v6949
        %v6951 = vpop.f32.mrb[0].mxu0
        %v6952 = vpop.f32.mrb[0].mxu0
        %v6953 = vadd.f32 0.0, %v6952
        %v6954 = vpop.f32.mrb[0].mxu0
        %6955 = vmatprep.mubr.bf16.mxu0 0
        %6956 = vmatmul.mubr.bf16.gmra.mrb[0].mxu0 %v6880
        %v6957 = vpop.f32.mrb[0].mxu0
        %v6958 = vadd.f32 0.0, %v6957
        %v6959 = vpop.f32.mrb[0].mxu0
        %v6960 = vpop.f32.mrb[0].mxu0
        %v6961 = vadd.f32 0.0, %v6960
        %v6962 = vpop.f32.mrb[0].mxu0
        %6963 = vmatprep.mubr.bf16.mxu0 0
        %6964 = vmatmul.mubr.bf16.gmra.mrb[0].mxu0 %v6883
        %v6965 = vpop.f32.mrb[0].mxu0
        %v6966 = vadd.f32 0.0, %v6965
        %v6967 = vpop.f32.mrb[0].mxu0
        %v6968 = vpop.f32.mrb[0].mxu0
        %v6969 = vadd.f32 0.0, %v6968
        %v6970 = vpop.f32.mrb[0].mxu0
        %6971 = vmatprep.mubr.bf16.mxu0 0
        %6972 = vmatmul.mubr.bf16.gmra.mrb[0].mxu0 %v6886
        %v6973 = vpop.f32.mrb[0].mxu0
        %v6974 = vadd.f32 0.0, %v6973
        %v6975 = vpop.f32.mrb[0].mxu0
        %v6976 = vpop.f32.mrb[0].mxu0
        %v6977 = vadd.f32 0.0, %v6976
        %v6978 = vpop.f32.mrb[0].mxu0
        %6979 = vmatprep.mubr.bf16.mxu0 0
        %6980 = vmatmul.mubr.bf16.gmra.mrb[0].mxu0 %v6889
        %v6981 = vpop.f32.mrb[0].mxu0
        %v6982 = vadd.f32 0.0, %v6981
        %v6983 = vpop.f32.mrb[0].mxu0
        %v6984 = vpop.f32.mrb[0].mxu0
        %v6985 = vadd.f32 0.0, %v6984
        %v6986 = vpop.f32.mrb[0].mxu0
        %6987 = vdwg.mxu0
        %v6988 = vadd.f32 %v6698, %v6926
        %v6989 = vadd.f32 %v6699, %v6929
        %v6990 = vadd.f32 %v6700, %v6934
        %v6991 = vadd.f32 %v6701, %v6937
        %v6992 = vadd.f32 %v6702, %v6942
        %v6993 = vadd.f32 %v6703, %v6945
        %v6994 = vadd.f32 %v6704, %v6950
        %v6995 = vadd.f32 %v6705, %v6953
        %v6996 = vadd.f32 %v6706, %v6958
        %v6997 = vadd.f32 %v6707, %v6961
        %v6998 = vadd.f32 %v6708, %v6966
        %v6999 = vadd.f32 %v6709, %v6969
        %v7000 = vadd.f32 %v6710, %v6974
        %v7001 = vadd.f32 %v6711, %v6977
        %v7002 = vadd.f32 %v6712, %v6982
        %v7003 = vadd.f32 %v6713, %v6985
        %v7004 = vld [vmem:[#allocation3 + $0x10] sm:$0xff]
        %v7005 = vld [vmem:[#allocation3 + $0x18] sm:$0xff]
        %v7006 = vld [vmem:[#allocation3 + $0x20] sm:$0xff]
        %v7007 = vld [vmem:[#allocation3 + $0x28] sm:$0xff]
        %v7008 = vld [vmem:[#allocation3 + $0x30] sm:$0xff]
        %v7009 = vld [vmem:[#allocation3 + $0x38] sm:$0xff]
        %v7010 = vld [vmem:[#allocation3 + $0x40] sm:$0xff]
        %v7011 = vld [vmem:[#allocation3 + $0x48] sm:$0xff]
        %v7012 = vld [vmem:[#allocation3 + $0x50] sm:$0xff]
        %v7013 = vld [vmem:[#allocation3 + $0x58] sm:$0xff]
        %v7014 = vld [vmem:[#allocation3 + $0x60] sm:$0xff]
        %v7015 = vld [vmem:[#allocation3 + $0x68] sm:$0xff]
        %v7016 = vld [vmem:[#allocation3 + $0x70] sm:$0xff]
        %v7017 = vld [vmem:[#allocation3 + $0x78] sm:$0xff]
        %v7018 = vld [vmem:[#allocation3 + $0x80] sm:$0xff]
        %v7019 = vld [vmem:[#allocation3 + $0x88] sm:$0xff]
        %v7020 = vpack.c.bf16 %v7005, %v7004
        %v7021 = vpack.c.bf16 %v7007, %v7006
        %v7022 = vpack.c.bf16 %v7009, %v7008
        %v7023 = vpack.c.bf16 %v7011, %v7010
        %v7024 = vpack.c.bf16 %v7013, %v7012
        %v7025 = vpack.c.bf16 %v7015, %v7014
        %v7026 = vpack.c.bf16 %v7017, %v7016
        %v7027 = vpack.c.bf16 %v7019, %v7018
        %s7028 = scalar_lea.vmem %s619, 64
        %v7029 = vld [vmem:[%s7028] sm:$0xf]
        %v7030 = vld [vmem:[%s7028 + $0x4] sm:$0xf]
        %v7031 = vld [vmem:[%s7028 + $0x8] sm:$0xf]
        %v7032 = vld [vmem:[%s7028 + $0xc] sm:$0xf]
        %v7037 = vunpack.c.l.b16 %v7029
        %v7038 = vunpack.c.l.b16 %v7030
        %v7039 = vunpack.c.l.b16 %v7031
        %v7040 = vunpack.c.l.b16 %v7032
        %v7041 = vpack.c.b16 %v7038, %v7037
        %v7042 = vpack.c.b16 %v7040, %v7039
        %v7046 = vsel %vm3492, %v7020, 0
        %v7049 = vsel %vm3492, %v7021, 0
        %v7052 = vsel %vm3492, %v7022, 0
        %v7055 = vsel %vm3492, %v7023, 0
        %v7058 = vsel %vm3492, %v7024, 0
        %v7061 = vsel %vm3492, %v7025, 0
        %v7064 = vsel %vm3492, %v7026, 0
        %v7067 = vsel %vm3492, %v7027, 0
        %7069 = vmatprep.subr.bf16.mxu0 0
        %7070 = vmatpush1.bf16.msra.mxu0 %v7041
        %7071 = vmatprep.subr.bf16.mxu0 0
        %7072 = vmatpush1.bf16.msra.mxu0 %v7042
        %7073 = vmatprep.subr.bf16.mxu0 0
        %7074 = vmatpush1.bf16.msra.mxu0 0
        %7075 = vmatprep.subr.bf16.mxu0 0
        %7076 = vmatpush1.bf16.msra.mxu0 0
        %7077 = vmatprep.subr.bf16.mxu0 0
        %7078 = vmatpush1.bf16.msra.mxu0 0
        %7079 = vmatprep.subr.bf16.mxu0 0
        %7080 = vmatpush1.bf16.msra.mxu0 0
        %7081 = vmatprep.subr.bf16.mxu0 0
        %7082 = vmatpush1.bf16.msra.mxu0 0
        %7083 = vmatprep.subr.bf16.mxu0 0
        %7084 = vmatpush1.bf16.msra.mxu0 0
        %7085 = vmatprep.subr.bf16.mxu0 0
        %7086 = vmatpush1.bf16.msra.mxu0 0
        %7087 = vmatprep.subr.bf16.mxu0 0
        %7088 = vmatpush1.bf16.msra.mxu0 0
        %7089 = vmatprep.subr.bf16.mxu0 0
        %7090 = vmatpush1.bf16.msra.mxu0 0
        %7091 = vmatprep.subr.bf16.mxu0 0
        %7092 = vmatpush1.bf16.msra.mxu0 0
        %7093 = vmatprep.subr.bf16.mxu0 0
        %7094 = vmatpush1.bf16.msra.mxu0 0
        %7095 = vmatprep.subr.bf16.mxu0 0
        %7096 = vmatpush1.bf16.msra.mxu0 0
        %7097 = vmatprep.subr.bf16.mxu0 0
        %7098 = vmatpush1.bf16.msra.mxu0 0
        %7099 = vmatprep.subr.bf16.mxu0 0
        %7100 = vmatpush1.bf16.msra.mxu0 0
        %7101 = vmatprep.mubr.bf16.mxu0 0
        %7102 = vmatmul.mubr.bf16.gmra.mrb[0].mxu0 %v7046
        %v7103 = vpop.f32.mrb[0].mxu0
        %v7104 = vadd.f32 0.0, %v7103
        %v7105 = vpop.f32.mrb[0].mxu0
        %v7106 = vpop.f32.mrb[0].mxu0
        %v7107 = vadd.f32 0.0, %v7106
        %v7108 = vpop.f32.mrb[0].mxu0
        %7109 = vmatprep.mubr.bf16.mxu0 0
        %7110 = vmatmul.mubr.bf16.gmra.mrb[0].mxu0 %v7049
        %v7111 = vpop.f32.mrb[0].mxu0
        %v7112 = vadd.f32 0.0, %v7111
        %v7113 = vpop.f32.mrb[0].mxu0
        %v7114 = vpop.f32.mrb[0].mxu0
        %v7115 = vadd.f32 0.0, %v7114
        %v7116 = vpop.f32.mrb[0].mxu0
        %7117 = vmatprep.mubr.bf16.mxu0 0
        %7118 = vmatmul.mubr.bf16.gmra.mrb[0].mxu0 %v7052
        %v7119 = vpop.f32.mrb[0].mxu0
        %v7120 = vadd.f32 0.0, %v7119
        %v7121 = vpop.f32.mrb[0].mxu0
        %v7122 = vpop.f32.mrb[0].mxu0
        %v7123 = vadd.f32 0.0, %v7122
        %v7124 = vpop.f32.mrb[0].mxu0
        %7125 = vmatprep.mubr.bf16.mxu0 0
        %7126 = vmatmul.mubr.bf16.gmra.mrb[0].mxu0 %v7055
        %v7127 = vpop.f32.mrb[0].mxu0
        %v7128 = vadd.f32 0.0, %v7127
        %v7129 = vpop.f32.mrb[0].mxu0
        %v7130 = vpop.f32.mrb[0].mxu0
        %v7131 = vadd.f32 0.0, %v7130
        %v7132 = vpop.f32.mrb[0].mxu0
        %7133 = vmatprep.mubr.bf16.mxu0 0
        %7134 = vmatmul.mubr.bf16.gmra.mrb[0].mxu0 %v7058
        %v7135 = vpop.f32.mrb[0].mxu0
        %v7136 = vadd.f32 0.0, %v7135
        %v7137 = vpop.f32.mrb[0].mxu0
        %v7138 = vpop.f32.mrb[0].mxu0
        %v7139 = vadd.f32 0.0, %v7138
        %v7140 = vpop.f32.mrb[0].mxu0
        %7141 = vmatprep.mubr.bf16.mxu0 0
        %7142 = vmatmul.mubr.bf16.gmra.mrb[0].mxu0 %v7061
        %v7143 = vpop.f32.mrb[0].mxu0
        %v7144 = vadd.f32 0.0, %v7143
        %v7145 = vpop.f32.mrb[0].mxu0
        %v7146 = vpop.f32.mrb[0].mxu0
        %v7147 = vadd.f32 0.0, %v7146
        %v7148 = vpop.f32.mrb[0].mxu0
        %7149 = vmatprep.mubr.bf16.mxu0 0
        %7150 = vmatmul.mubr.bf16.gmra.mrb[0].mxu0 %v7064
        %v7151 = vpop.f32.mrb[0].mxu0
        %v7152 = vadd.f32 0.0, %v7151
        %v7153 = vpop.f32.mrb[0].mxu0
        %v7154 = vpop.f32.mrb[0].mxu0
        %v7155 = vadd.f32 0.0, %v7154
        %v7156 = vpop.f32.mrb[0].mxu0
        %7157 = vmatprep.mubr.bf16.mxu0 0
        %7158 = vmatmul.mubr.bf16.gmra.mrb[0].mxu0 %v7067
        %v7159 = vpop.f32.mrb[0].mxu0
        %v7160 = vadd.f32 0.0, %v7159
        %v7161 = vpop.f32.mrb[0].mxu0
        %v7162 = vpop.f32.mrb[0].mxu0
        %v7163 = vadd.f32 0.0, %v7162
        %v7164 = vpop.f32.mrb[0].mxu0
        %7165 = vdwg.mxu0
        %v7166 = vadd.f32 %v6988, %v7104
        %v7167 = vadd.f32 %v6989, %v7107
        %v7168 = vadd.f32 %v6990, %v7112
        %v7169 = vadd.f32 %v6991, %v7115
        %v7170 = vadd.f32 %v6992, %v7120
        %v7171 = vadd.f32 %v6993, %v7123
        %v7172 = vadd.f32 %v6994, %v7128
        %v7173 = vadd.f32 %v6995, %v7131
        %v7174 = vadd.f32 %v6996, %v7136
        %v7175 = vadd.f32 %v6997, %v7139
        %v7176 = vadd.f32 %v6998, %v7144
        %v7177 = vadd.f32 %v6999, %v7147
        %v7178 = vadd.f32 %v7000, %v7152
        %v7179 = vadd.f32 %v7001, %v7155
        %v7180 = vadd.f32 %v7002, %v7160
        %v7181 = vadd.f32 %v7003, %v7163
        %v7182 = vld [vmem:[#allocation3 + $0x11] sm:$0xff]
        %v7183 = vld [vmem:[#allocation3 + $0x19] sm:$0xff]
        %v7184 = vld [vmem:[#allocation3 + $0x21] sm:$0xff]
        %v7185 = vld [vmem:[#allocation3 + $0x29] sm:$0xff]
        %v7186 = vld [vmem:[#allocation3 + $0x31] sm:$0xff]
        %v7187 = vld [vmem:[#allocation3 + $0x39] sm:$0xff]
        %v7188 = vld [vmem:[#allocation3 + $0x41] sm:$0xff]
        %v7189 = vld [vmem:[#allocation3 + $0x49] sm:$0xff]
        %v7190 = vld [vmem:[#allocation3 + $0x51] sm:$0xff]
        %v7191 = vld [vmem:[#allocation3 + $0x59] sm:$0xff]
        %v7192 = vld [vmem:[#allocation3 + $0x61] sm:$0xff]
        %v7193 = vld [vmem:[#allocation3 + $0x69] sm:$0xff]
        %v7194 = vld [vmem:[#allocation3 + $0x71] sm:$0xff]
        %v7195 = vld [vmem:[#allocation3 + $0x79] sm:$0xff]
        %v7196 = vld [vmem:[#allocation3 + $0x81] sm:$0xff]
        %v7197 = vld [vmem:[#allocation3 + $0x89] sm:$0xff]
        %v7198 = vld [vmem:[%s4507] sm:$0xff]
        %v7199 = vld [vmem:[%s4507 + $0x8] sm:$0xff]
        %v7200 = vld [vmem:[%s4507 + $0x10] sm:$0xff]
        %v7201 = vld [vmem:[%s4507 + $0x18] sm:$0xff]
        %v7202 = vld [vmem:[%s4507 + $0x20] sm:$0xff]
        %v7203 = vld [vmem:[%s4507 + $0x28] sm:$0xff]
        %v7204 = vld [vmem:[%s4507 + $0x30] sm:$0xff]
        %v7205 = vld [vmem:[%s4507 + $0x38] sm:$0xff]
        %v7206 = vld [vmem:[%s4507 + $0x40] sm:$0xff]
        %v7207 = vld [vmem:[%s4507 + $0x48] sm:$0xff]
        %v7208 = vld [vmem:[%s4507 + $0x50] sm:$0xff]
        %v7209 = vld [vmem:[%s4507 + $0x58] sm:$0xff]
        %v7210 = vld [vmem:[%s4507 + $0x60] sm:$0xff]
        %v7211 = vld [vmem:[%s4507 + $0x68] sm:$0xff]
        %v7212 = vld [vmem:[%s4507 + $0x70] sm:$0xff]
        %v7213 = vld [vmem:[%s4507 + $0x78] sm:$0xff]
        %7215 = vset.pattern.permute.xlu0 0
        %7216 = vperm.xlu0 %7215, %v7198
        %v7217 = vpop.permute.xlu0 %7216
        %7220 = vset.pattern.permute.xlu0 0
        %7221 = vperm.xlu0 %7220, %v7199
        %v7222 = vpop.permute.xlu0 %7221
        %7225 = vset.pattern.permute.xlu0 0
        %7226 = vperm.xlu0 %7225, %v7200
        %v7227 = vpop.permute.xlu0 %7226
        %7230 = vset.pattern.permute.xlu0 0
        %7231 = vperm.xlu0 %7230, %v7201
        %v7232 = vpop.permute.xlu0 %7231
        %7235 = vset.pattern.permute.xlu0 0
        %7236 = vperm.xlu0 %7235, %v7202
        %v7237 = vpop.permute.xlu0 %7236
        %7240 = vset.pattern.permute.xlu0 0
        %7241 = vperm.xlu0 %7240, %v7203
        %v7242 = vpop.permute.xlu0 %7241
        %7245 = vset.pattern.permute.xlu0 0
        %7246 = vperm.xlu0 %7245, %v7204
        %v7247 = vpop.permute.xlu0 %7246
        %7250 = vset.pattern.permute.xlu0 0
        %7251 = vperm.xlu0 %7250, %v7205
        %v7252 = vpop.permute.xlu0 %7251
        %7255 = vset.pattern.permute.xlu0 0
        %7256 = vperm.xlu0 %7255, %v7206
        %v7257 = vpop.permute.xlu0 %7256
        %7260 = vset.pattern.permute.xlu0 0
        %7261 = vperm.xlu0 %7260, %v7207
        %v7262 = vpop.permute.xlu0 %7261
        %7265 = vset.pattern.permute.xlu0 0
        %7266 = vperm.xlu0 %7265, %v7208
        %v7267 = vpop.permute.xlu0 %7266
        %7270 = vset.pattern.permute.xlu0 0
        %7271 = vperm.xlu0 %7270, %v7209
        %v7272 = vpop.permute.xlu0 %7271
        %7275 = vset.pattern.permute.xlu0 0
        %7276 = vperm.xlu0 %7275, %v7210
        %v7277 = vpop.permute.xlu0 %7276
        %7280 = vset.pattern.permute.xlu0 0
        %7281 = vperm.xlu0 %7280, %v7211
        %v7282 = vpop.permute.xlu0 %7281
        %7285 = vset.pattern.permute.xlu0 0
        %7286 = vperm.xlu0 %7285, %v7212
        %v7287 = vpop.permute.xlu0 %7286
        %7290 = vset.pattern.permute.xlu0 0
        %7291 = vperm.xlu0 %7290, %v7213
        %v7292 = vpop.permute.xlu0 %7291
        %v7294 = vmul.f32 %v7182, %v7217
        %v7295 = vmul.f32 %v7183, %v7222
        %v7296 = vmul.f32 %v7184, %v7227
        %v7297 = vmul.f32 %v7185, %v7232
        %v7298 = vmul.f32 %v7186, %v7237
        %v7299 = vmul.f32 %v7187, %v7242
        %v7300 = vmul.f32 %v7188, %v7247
        %v7301 = vmul.f32 %v7189, %v7252
        %v7302 = vmul.f32 %v7190, %v7257
        %v7303 = vmul.f32 %v7191, %v7262
        %v7304 = vmul.f32 %v7192, %v7267
        %v7305 = vmul.f32 %v7193, %v7272
        %v7306 = vmul.f32 %v7194, %v7277
        %v7307 = vmul.f32 %v7195, %v7282
        %v7308 = vmul.f32 %v7196, %v7287
        %v7309 = vmul.f32 %v7197, %v7292
        %v7310 = vpack.c.bf16 %v7295, %v7294
        %v7311 = vpack.c.bf16 %v7297, %v7296
        %v7312 = vpack.c.bf16 %v7299, %v7298
        %v7313 = vpack.c.bf16 %v7301, %v7300
        %v7314 = vpack.c.bf16 %v7303, %v7302
        %v7315 = vpack.c.bf16 %v7305, %v7304
        %v7316 = vpack.c.bf16 %v7307, %v7306
        %v7317 = vpack.c.bf16 %v7309, %v7308
        %s7318 = scalar_lea.vmem %s619, 80
        %v7319 = vld [vmem:[%s7318] sm:$0xf]
        %v7320 = vld [vmem:[%s7318 + $0x4] sm:$0xf]
        %v7321 = vld [vmem:[%s7318 + $0x8] sm:$0xf]
        %v7322 = vld [vmem:[%s7318 + $0xc] sm:$0xf]
        %v7327 = vunpack.c.l.b16 %v7319
        %v7328 = vunpack.c.l.b16 %v7320
        %v7329 = vunpack.c.l.b16 %v7321
        %v7330 = vunpack.c.l.b16 %v7322
        %v7331 = vpack.c.b16 %v7328, %v7327
        %v7332 = vpack.c.b16 %v7330, %v7329
        %v7336 = vsel %vm3492, %v7310, 0
        %v7339 = vsel %vm3492, %v7311, 0
        %v7342 = vsel %vm3492, %v7312, 0
        %v7345 = vsel %vm3492, %v7313, 0
        %v7348 = vsel %vm3492, %v7314, 0
        %v7351 = vsel %vm3492, %v7315, 0
        %v7354 = vsel %vm3492, %v7316, 0
        %v7357 = vsel %vm3492, %v7317, 0
        %7359 = vmatprep.subr.bf16.mxu0 0
        %7360 = vmatpush1.bf16.msra.mxu0 %v7331
        %7361 = vmatprep.subr.bf16.mxu0 0
        %7362 = vmatpush1.bf16.msra.mxu0 %v7332
        %7363 = vmatprep.subr.bf16.mxu0 0
        %7364 = vmatpush1.bf16.msra.mxu0 0
        %7365 = vmatprep.subr.bf16.mxu0 0
        %7366 = vmatpush1.bf16.msra.mxu0 0
        %7367 = vmatprep.subr.bf16.mxu0 0
        %7368 = vmatpush1.bf16.msra.mxu0 0
        %7369 = vmatprep.subr.bf16.mxu0 0
        %7370 = vmatpush1.bf16.msra.mxu0 0
        %7371 = vmatprep.subr.bf16.mxu0 0
        %7372 = vmatpush1.bf16.msra.mxu0 0
        %7373 = vmatprep.subr.bf16.mxu0 0
        %7374 = vmatpush1.bf16.msra.mxu0 0
        %7375 = vmatprep.subr.bf16.mxu0 0
        %7376 = vmatpush1.bf16.msra.mxu0 0
        %7377 = vmatprep.subr.bf16.mxu0 0
        %7378 = vmatpush1.bf16.msra.mxu0 0
        %7379 = vmatprep.subr.bf16.mxu0 0
        %7380 = vmatpush1.bf16.msra.mxu0 0
        %7381 = vmatprep.subr.bf16.mxu0 0
        %7382 = vmatpush1.bf16.msra.mxu0 0
        %7383 = vmatprep.subr.bf16.mxu0 0
        %7384 = vmatpush1.bf16.msra.mxu0 0
        %7385 = vmatprep.subr.bf16.mxu0 0
        %7386 = vmatpush1.bf16.msra.mxu0 0
        %7387 = vmatprep.subr.bf16.mxu0 0
        %7388 = vmatpush1.bf16.msra.mxu0 0
        %7389 = vmatprep.subr.bf16.mxu0 0
        %7390 = vmatpush1.bf16.msra.mxu0 0
        %7391 = vmatprep.mubr.bf16.mxu0 0
        %7392 = vmatmul.mubr.bf16.gmra.mrb[0].mxu0 %v7336
        %v7393 = vpop.f32.mrb[0].mxu0
        %v7394 = vadd.f32 0.0, %v7393
        %v7395 = vpop.f32.mrb[0].mxu0
        %v7396 = vpop.f32.mrb[0].mxu0
        %v7397 = vadd.f32 0.0, %v7396
        %v7398 = vpop.f32.mrb[0].mxu0
        %7399 = vmatprep.mubr.bf16.mxu0 0
        %7400 = vmatmul.mubr.bf16.gmra.mrb[0].mxu0 %v7339
        %v7401 = vpop.f32.mrb[0].mxu0
        %v7402 = vadd.f32 0.0, %v7401
        %v7403 = vpop.f32.mrb[0].mxu0
        %v7404 = vpop.f32.mrb[0].mxu0
        %v7405 = vadd.f32 0.0, %v7404
        %v7406 = vpop.f32.mrb[0].mxu0
        %7407 = vmatprep.mubr.bf16.mxu0 0
        %7408 = vmatmul.mubr.bf16.gmra.mrb[0].mxu0 %v7342
        %v7409 = vpop.f32.mrb[0].mxu0
        %v7410 = vadd.f32 0.0, %v7409
        %v7411 = vpop.f32.mrb[0].mxu0
        %v7412 = vpop.f32.mrb[0].mxu0
        %v7413 = vadd.f32 0.0, %v7412
        %v7414 = vpop.f32.mrb[0].mxu0
        %7415 = vmatprep.mubr.bf16.mxu0 0
        %7416 = vmatmul.mubr.bf16.gmra.mrb[0].mxu0 %v7345
        %v7417 = vpop.f32.mrb[0].mxu0
        %v7418 = vadd.f32 0.0, %v7417
        %v7419 = vpop.f32.mrb[0].mxu0
        %v7420 = vpop.f32.mrb[0].mxu0
        %v7421 = vadd.f32 0.0, %v7420
        %v7422 = vpop.f32.mrb[0].mxu0
        %7423 = vmatprep.mubr.bf16.mxu0 0
        %7424 = vmatmul.mubr.bf16.gmra.mrb[0].mxu0 %v7348
        %v7425 = vpop.f32.mrb[0].mxu0
        %v7426 = vadd.f32 0.0, %v7425
        %v7427 = vpop.f32.mrb[0].mxu0
        %v7428 = vpop.f32.mrb[0].mxu0
        %v7429 = vadd.f32 0.0, %v7428
        %v7430 = vpop.f32.mrb[0].mxu0
        %7431 = vmatprep.mubr.bf16.mxu0 0
        %7432 = vmatmul.mubr.bf16.gmra.mrb[0].mxu0 %v7351
        %v7433 = vpop.f32.mrb[0].mxu0
        %v7434 = vadd.f32 0.0, %v7433
        %v7435 = vpop.f32.mrb[0].mxu0
        %v7436 = vpop.f32.mrb[0].mxu0
        %v7437 = vadd.f32 0.0, %v7436
        %v7438 = vpop.f32.mrb[0].mxu0
        %7439 = vmatprep.mubr.bf16.mxu0 0
        %7440 = vmatmul.mubr.bf16.gmra.mrb[0].mxu0 %v7354
        %v7441 = vpop.f32.mrb[0].mxu0
        %v7442 = vadd.f32 0.0, %v7441
        %v7443 = vpop.f32.mrb[0].mxu0
        %v7444 = vpop.f32.mrb[0].mxu0
        %v7445 = vadd.f32 0.0, %v7444
        %v7446 = vpop.f32.mrb[0].mxu0
        %7447 = vmatprep.mubr.bf16.mxu0 0
        %7448 = vmatmul.mubr.bf16.gmra.mrb[0].mxu0 %v7357
        %v7449 = vpop.f32.mrb[0].mxu0
        %v7450 = vadd.f32 0.0, %v7449
        %v7451 = vpop.f32.mrb[0].mxu0
        %v7452 = vpop.f32.mrb[0].mxu0
        %v7453 = vadd.f32 0.0, %v7452
        %v7454 = vpop.f32.mrb[0].mxu0
        %7455 = vdwg.mxu0
        %v7456 = vadd.f32 %v7166, %v7394
        %v7457 = vadd.f32 %v7167, %v7397
        %v7458 = vadd.f32 %v7168, %v7402
        %v7459 = vadd.f32 %v7169, %v7405
        %v7460 = vadd.f32 %v7170, %v7410
        %v7461 = vadd.f32 %v7171, %v7413
        %v7462 = vadd.f32 %v7172, %v7418
        %v7463 = vadd.f32 %v7173, %v7421
        %v7464 = vadd.f32 %v7174, %v7426
        %v7465 = vadd.f32 %v7175, %v7429
        %v7466 = vadd.f32 %v7176, %v7434
        %v7467 = vadd.f32 %v7177, %v7437
        %v7468 = vadd.f32 %v7178, %v7442
        %v7469 = vadd.f32 %v7179, %v7445
        %v7470 = vadd.f32 %v7180, %v7450
        %v7471 = vadd.f32 %v7181, %v7453
        %v7472 = vld [vmem:[#allocation3 + $0x17] sm:$0xff]
        %v7473 = vld [vmem:[#allocation3 + $0x1f] sm:$0xff]
        %v7474 = vld [vmem:[#allocation3 + $0x27] sm:$0xff]
        %v7475 = vld [vmem:[#allocation3 + $0x2f] sm:$0xff]
        %v7476 = vld [vmem:[#allocation3 + $0x37] sm:$0xff]
        %v7477 = vld [vmem:[#allocation3 + $0x3f] sm:$0xff]
        %v7478 = vld [vmem:[#allocation3 + $0x47] sm:$0xff]
        %v7479 = vld [vmem:[#allocation3 + $0x4f] sm:$0xff]
        %v7480 = vld [vmem:[#allocation3 + $0x57] sm:$0xff]
        %v7481 = vld [vmem:[#allocation3 + $0x5f] sm:$0xff]
        %v7482 = vld [vmem:[#allocation3 + $0x67] sm:$0xff]
        %v7483 = vld [vmem:[#allocation3 + $0x6f] sm:$0xff]
        %v7484 = vld [vmem:[#allocation3 + $0x77] sm:$0xff]
        %v7485 = vld [vmem:[#allocation3 + $0x7f] sm:$0xff]
        %v7486 = vld [vmem:[#allocation3 + $0x87] sm:$0xff]
        %v7487 = vld [vmem:[#allocation3 + $0x8f] sm:$0xff]
        %v7488 = vld [vmem:[%s4798] sm:$0xff]
        %v7489 = vld [vmem:[%s4798 + $0x8] sm:$0xff]
        %v7490 = vld [vmem:[%s4798 + $0x10] sm:$0xff]
        %v7491 = vld [vmem:[%s4798 + $0x18] sm:$0xff]
        %v7492 = vld [vmem:[%s4798 + $0x20] sm:$0xff]
        %v7493 = vld [vmem:[%s4798 + $0x28] sm:$0xff]
        %v7494 = vld [vmem:[%s4798 + $0x30] sm:$0xff]
        %v7495 = vld [vmem:[%s4798 + $0x38] sm:$0xff]
        %v7496 = vld [vmem:[%s4798 + $0x40] sm:$0xff]
        %v7497 = vld [vmem:[%s4798 + $0x48] sm:$0xff]
        %v7498 = vld [vmem:[%s4798 + $0x50] sm:$0xff]
        %v7499 = vld [vmem:[%s4798 + $0x58] sm:$0xff]
        %v7500 = vld [vmem:[%s4798 + $0x60] sm:$0xff]
        %v7501 = vld [vmem:[%s4798 + $0x68] sm:$0xff]
        %v7502 = vld [vmem:[%s4798 + $0x70] sm:$0xff]
        %v7503 = vld [vmem:[%s4798 + $0x78] sm:$0xff]
        %7505 = vset.pattern.permute.xlu0 0
        %7506 = vperm.xlu0 %7505, %v7488
        %v7507 = vpop.permute.xlu0 %7506
        %7510 = vset.pattern.permute.xlu0 0
        %7511 = vperm.xlu0 %7510, %v7489
        %v7512 = vpop.permute.xlu0 %7511
        %7515 = vset.pattern.permute.xlu0 0
        %7516 = vperm.xlu0 %7515, %v7490
        %v7517 = vpop.permute.xlu0 %7516
        %7520 = vset.pattern.permute.xlu0 0
        %7521 = vperm.xlu0 %7520, %v7491
        %v7522 = vpop.permute.xlu0 %7521
        %7525 = vset.pattern.permute.xlu0 0
        %7526 = vperm.xlu0 %7525, %v7492
        %v7527 = vpop.permute.xlu0 %7526
        %7530 = vset.pattern.permute.xlu0 0
        %7531 = vperm.xlu0 %7530, %v7493
        %v7532 = vpop.permute.xlu0 %7531
        %7535 = vset.pattern.permute.xlu0 0
        %7536 = vperm.xlu0 %7535, %v7494
        %v7537 = vpop.permute.xlu0 %7536
        %7540 = vset.pattern.permute.xlu0 0
        %7541 = vperm.xlu0 %7540, %v7495
        %v7542 = vpop.permute.xlu0 %7541
        %7545 = vset.pattern.permute.xlu0 0
        %7546 = vperm.xlu0 %7545, %v7496
        %v7547 = vpop.permute.xlu0 %7546
        %7550 = vset.pattern.permute.xlu0 0
        %7551 = vperm.xlu0 %7550, %v7497
        %v7552 = vpop.permute.xlu0 %7551
        %7555 = vset.pattern.permute.xlu0 0
        %7556 = vperm.xlu0 %7555, %v7498
        %v7557 = vpop.permute.xlu0 %7556
        %7560 = vset.pattern.permute.xlu0 0
        %7561 = vperm.xlu0 %7560, %v7499
        %v7562 = vpop.permute.xlu0 %7561
        %7565 = vset.pattern.permute.xlu0 0
        %7566 = vperm.xlu0 %7565, %v7500
        %v7567 = vpop.permute.xlu0 %7566
        %7570 = vset.pattern.permute.xlu0 0
        %7571 = vperm.xlu0 %7570, %v7501
        %v7572 = vpop.permute.xlu0 %7571
        %7575 = vset.pattern.permute.xlu0 0
        %7576 = vperm.xlu0 %7575, %v7502
        %v7577 = vpop.permute.xlu0 %7576
        %7580 = vset.pattern.permute.xlu0 0
        %7581 = vperm.xlu0 %7580, %v7503
        %v7582 = vpop.permute.xlu0 %7581
        %v7584 = vmul.f32 %v7472, %v7507
        %v7585 = vmul.f32 %v7473, %v7512
        %v7586 = vmul.f32 %v7474, %v7517
        %v7587 = vmul.f32 %v7475, %v7522
        %v7588 = vmul.f32 %v7476, %v7527
        %v7589 = vmul.f32 %v7477, %v7532
        %v7590 = vmul.f32 %v7478, %v7537
        %v7591 = vmul.f32 %v7479, %v7542
        %v7592 = vmul.f32 %v7480, %v7547
        %v7593 = vmul.f32 %v7481, %v7552
        %v7594 = vmul.f32 %v7482, %v7557
        %v7595 = vmul.f32 %v7483, %v7562
        %v7596 = vmul.f32 %v7484, %v7567
        %v7597 = vmul.f32 %v7485, %v7572
        %v7598 = vmul.f32 %v7486, %v7577
        %v7599 = vmul.f32 %v7487, %v7582
        %v7600 = vpack.c.bf16 %v7585, %v7584
        %v7601 = vpack.c.bf16 %v7587, %v7586
        %v7602 = vpack.c.bf16 %v7589, %v7588
        %v7603 = vpack.c.bf16 %v7591, %v7590
        %v7604 = vpack.c.bf16 %v7593, %v7592
        %v7605 = vpack.c.bf16 %v7595, %v7594
        %v7606 = vpack.c.bf16 %v7597, %v7596
        %v7607 = vpack.c.bf16 %v7599, %v7598
        %s7608 = scalar_lea.vmem %s619, 96
        %v7609 = vld [vmem:[%s7608] sm:$0xf]
        %v7610 = vld [vmem:[%s7608 + $0x4] sm:$0xf]
        %v7611 = vld [vmem:[%s7608 + $0x8] sm:$0xf]
        %v7612 = vld [vmem:[%s7608 + $0xc] sm:$0xf]
        %v7617 = vunpack.c.l.b16 %v7609
        %v7618 = vunpack.c.l.b16 %v7610
        %v7619 = vunpack.c.l.b16 %v7611
        %v7620 = vunpack.c.l.b16 %v7612
        %v7621 = vpack.c.b16 %v7618, %v7617
        %v7622 = vpack.c.b16 %v7620, %v7619
        %v7626 = vsel %vm3492, %v7600, 0
        %v7629 = vsel %vm3492, %v7601, 0
        %v7632 = vsel %vm3492, %v7602, 0
        %v7635 = vsel %vm3492, %v7603, 0
        %v7638 = vsel %vm3492, %v7604, 0
        %v7641 = vsel %vm3492, %v7605, 0
        %v7644 = vsel %vm3492, %v7606, 0
        %v7647 = vsel %vm3492, %v7607, 0
        %7649 = vmatprep.subr.bf16.mxu0 0
        %7650 = vmatpush1.bf16.msra.mxu0 %v7621
        %7651 = vmatprep.subr.bf16.mxu0 0
        %7652 = vmatpush1.bf16.msra.mxu0 %v7622
        %7653 = vmatprep.subr.bf16.mxu0 0
        %7654 = vmatpush1.bf16.msra.mxu0 0
        %7655 = vmatprep.subr.bf16.mxu0 0
        %7656 = vmatpush1.bf16.msra.mxu0 0
        %7657 = vmatprep.subr.bf16.mxu0 0
        %7658 = vmatpush1.bf16.msra.mxu0 0
        %7659 = vmatprep.subr.bf16.mxu0 0
        %7660 = vmatpush1.bf16.msra.mxu0 0
        %7661 = vmatprep.subr.bf16.mxu0 0
        %7662 = vmatpush1.bf16.msra.mxu0 0
        %7663 = vmatprep.subr.bf16.mxu0 0
        %7664 = vmatpush1.bf16.msra.mxu0 0
        %7665 = vmatprep.subr.bf16.mxu0 0
        %7666 = vmatpush1.bf16.msra.mxu0 0
        %7667 = vmatprep.subr.bf16.mxu0 0
        %7668 = vmatpush1.bf16.msra.mxu0 0
        %7669 = vmatprep.subr.bf16.mxu0 0
        %7670 = vmatpush1.bf16.msra.mxu0 0
        %7671 = vmatprep.subr.bf16.mxu0 0
        %7672 = vmatpush1.bf16.msra.mxu0 0
        %7673 = vmatprep.subr.bf16.mxu0 0
        %7674 = vmatpush1.bf16.msra.mxu0 0
        %7675 = vmatprep.subr.bf16.mxu0 0
        %7676 = vmatpush1.bf16.msra.mxu0 0
        %7677 = vmatprep.subr.bf16.mxu0 0
        %7678 = vmatpush1.bf16.msra.mxu0 0
        %7679 = vmatprep.subr.bf16.mxu0 0
        %7680 = vmatpush1.bf16.msra.mxu0 0
        %7681 = vmatprep.mubr.bf16.mxu0 0
        %7682 = vmatmul.mubr.bf16.gmra.mrb[0].mxu0 %v7626
        %v7683 = vpop.f32.mrb[0].mxu0
        %v7684 = vadd.f32 0.0, %v7683
        %v7685 = vpop.f32.mrb[0].mxu0
        %v7686 = vpop.f32.mrb[0].mxu0
        %v7687 = vadd.f32 0.0, %v7686
        %v7688 = vpop.f32.mrb[0].mxu0
        %7689 = vmatprep.mubr.bf16.mxu0 0
        %7690 = vmatmul.mubr.bf16.gmra.mrb[0].mxu0 %v7629
        %v7691 = vpop.f32.mrb[0].mxu0
        %v7692 = vadd.f32 0.0, %v7691
        %v7693 = vpop.f32.mrb[0].mxu0
        %v7694 = vpop.f32.mrb[0].mxu0
        %v7695 = vadd.f32 0.0, %v7694
        %v7696 = vpop.f32.mrb[0].mxu0
        %7697 = vmatprep.mubr.bf16.mxu0 0
        %7698 = vmatmul.mubr.bf16.gmra.mrb[0].mxu0 %v7632
        %v7699 = vpop.f32.mrb[0].mxu0
        %v7700 = vadd.f32 0.0, %v7699
        %v7701 = vpop.f32.mrb[0].mxu0
        %v7702 = vpop.f32.mrb[0].mxu0
        %v7703 = vadd.f32 0.0, %v7702
        %v7704 = vpop.f32.mrb[0].mxu0
        %7705 = vmatprep.mubr.bf16.mxu0 0
        %7706 = vmatmul.mubr.bf16.gmra.mrb[0].mxu0 %v7635
        %v7707 = vpop.f32.mrb[0].mxu0
        %v7708 = vadd.f32 0.0, %v7707
        %v7709 = vpop.f32.mrb[0].mxu0
        %v7710 = vpop.f32.mrb[0].mxu0
        %v7711 = vadd.f32 0.0, %v7710
        %v7712 = vpop.f32.mrb[0].mxu0
        %7713 = vmatprep.mubr.bf16.mxu0 0
        %7714 = vmatmul.mubr.bf16.gmra.mrb[0].mxu0 %v7638
        %v7715 = vpop.f32.mrb[0].mxu0
        %v7716 = vadd.f32 0.0, %v7715
        %v7717 = vpop.f32.mrb[0].mxu0
        %v7718 = vpop.f32.mrb[0].mxu0
        %v7719 = vadd.f32 0.0, %v7718
        %v7720 = vpop.f32.mrb[0].mxu0
        %7721 = vmatprep.mubr.bf16.mxu0 0
        %7722 = vmatmul.mubr.bf16.gmra.mrb[0].mxu0 %v7641
        %v7723 = vpop.f32.mrb[0].mxu0
        %v7724 = vadd.f32 0.0, %v7723
        %v7725 = vpop.f32.mrb[0].mxu0
        %v7726 = vpop.f32.mrb[0].mxu0
        %v7727 = vadd.f32 0.0, %v7726
        %v7728 = vpop.f32.mrb[0].mxu0
        %7729 = vmatprep.mubr.bf16.mxu0 0
        %7730 = vmatmul.mubr.bf16.gmra.mrb[0].mxu0 %v7644
        %v7731 = vpop.f32.mrb[0].mxu0
        %v7732 = vadd.f32 0.0, %v7731
        %v7733 = vpop.f32.mrb[0].mxu0
        %v7734 = vpop.f32.mrb[0].mxu0
        %v7735 = vadd.f32 0.0, %v7734
        %v7736 = vpop.f32.mrb[0].mxu0
        %7737 = vmatprep.mubr.bf16.mxu0 0
        %7738 = vmatmul.mubr.bf16.gmra.mrb[0].mxu0 %v7647
        %v7739 = vpop.f32.mrb[0].mxu0
        %v7740 = vadd.f32 0.0, %v7739
        %v7741 = vpop.f32.mrb[0].mxu0
        %v7742 = vpop.f32.mrb[0].mxu0
        %v7743 = vadd.f32 0.0, %v7742
        %v7744 = vpop.f32.mrb[0].mxu0
        %7745 = vdwg.mxu0
        %v7746 = vadd.f32 %v7456, %v7684
        %v7747 = vadd.f32 %v7457, %v7687
        %v7748 = vadd.f32 %v7458, %v7692
        %v7749 = vadd.f32 %v7459, %v7695
        %v7750 = vadd.f32 %v7460, %v7700
        %v7751 = vadd.f32 %v7461, %v7703
        %v7752 = vadd.f32 %v7462, %v7708
        %v7753 = vadd.f32 %v7463, %v7711
        %v7754 = vadd.f32 %v7464, %v7716
        %v7755 = vadd.f32 %v7465, %v7719
        %v7756 = vadd.f32 %v7466, %v7724
        %v7757 = vadd.f32 %v7467, %v7727
        %v7758 = vadd.f32 %v7468, %v7732
        %v7759 = vadd.f32 %v7469, %v7735
        %v7760 = vadd.f32 %v7470, %v7740
        %v7761 = vadd.f32 %v7471, %v7743
        %v7762 = vld [vmem:[#allocation3 + $0x18] sm:$0xff]
        %v7763 = vld [vmem:[#allocation3 + $0x20] sm:$0xff]
        %v7764 = vld [vmem:[#allocation3 + $0x28] sm:$0xff]
        %v7765 = vld [vmem:[#allocation3 + $0x30] sm:$0xff]
        %v7766 = vld [vmem:[#allocation3 + $0x38] sm:$0xff]
        %v7767 = vld [vmem:[#allocation3 + $0x40] sm:$0xff]
        %v7768 = vld [vmem:[#allocation3 + $0x48] sm:$0xff]
        %v7769 = vld [vmem:[#allocation3 + $0x50] sm:$0xff]
        %v7770 = vld [vmem:[#allocation3 + $0x58] sm:$0xff]
        %v7771 = vld [vmem:[#allocation3 + $0x60] sm:$0xff]
        %v7772 = vld [vmem:[#allocation3 + $0x68] sm:$0xff]
        %v7773 = vld [vmem:[#allocation3 + $0x70] sm:$0xff]
        %v7774 = vld [vmem:[#allocation3 + $0x78] sm:$0xff]
        %v7775 = vld [vmem:[#allocation3 + $0x80] sm:$0xff]
        %v7776 = vld [vmem:[#allocation3 + $0x88] sm:$0xff]
        %v7777 = vld [vmem:[#allocation3 + $0x90] sm:$0xff]
        %v7778 = vld [vmem:[%s5089] sm:$0xff]
        %v7779 = vld [vmem:[%s5089 + $0x8] sm:$0xff]
        %v7780 = vld [vmem:[%s5089 + $0x10] sm:$0xff]
        %v7781 = vld [vmem:[%s5089 + $0x18] sm:$0xff]
        %v7782 = vld [vmem:[%s5089 + $0x20] sm:$0xff]
        %v7783 = vld [vmem:[%s5089 + $0x28] sm:$0xff]
        %v7784 = vld [vmem:[%s5089 + $0x30] sm:$0xff]
        %v7785 = vld [vmem:[%s5089 + $0x38] sm:$0xff]
        %v7786 = vld [vmem:[%s5089 + $0x40] sm:$0xff]
        %v7787 = vld [vmem:[%s5089 + $0x48] sm:$0xff]
        %v7788 = vld [vmem:[%s5089 + $0x50] sm:$0xff]
        %v7789 = vld [vmem:[%s5089 + $0x58] sm:$0xff]
        %v7790 = vld [vmem:[%s5089 + $0x60] sm:$0xff]
        %v7791 = vld [vmem:[%s5089 + $0x68] sm:$0xff]
        %v7792 = vld [vmem:[%s5089 + $0x70] sm:$0xff]
        %v7793 = vld [vmem:[%s5089 + $0x78] sm:$0xff]
        %7795 = vset.pattern.permute.xlu0 0
        %7796 = vperm.xlu0 %7795, %v7778
        %v7797 = vpop.permute.xlu0 %7796
        %7800 = vset.pattern.permute.xlu0 0
        %7801 = vperm.xlu0 %7800, %v7779
        %v7802 = vpop.permute.xlu0 %7801
        %7805 = vset.pattern.permute.xlu0 0
        %7806 = vperm.xlu0 %7805, %v7780
        %v7807 = vpop.permute.xlu0 %7806
        %7810 = vset.pattern.permute.xlu0 0
        %7811 = vperm.xlu0 %7810, %v7781
        %v7812 = vpop.permute.xlu0 %7811
        %7815 = vset.pattern.permute.xlu0 0
        %7816 = vperm.xlu0 %7815, %v7782
        %v7817 = vpop.permute.xlu0 %7816
        %7820 = vset.pattern.permute.xlu0 0
        %7821 = vperm.xlu0 %7820, %v7783
        %v7822 = vpop.permute.xlu0 %7821
        %7825 = vset.pattern.permute.xlu0 0
        %7826 = vperm.xlu0 %7825, %v7784
        %v7827 = vpop.permute.xlu0 %7826
        %7830 = vset.pattern.permute.xlu0 0
        %7831 = vperm.xlu0 %7830, %v7785
        %v7832 = vpop.permute.xlu0 %7831
        %7835 = vset.pattern.permute.xlu0 0
        %7836 = vperm.xlu0 %7835, %v7786
        %v7837 = vpop.permute.xlu0 %7836
        %7840 = vset.pattern.permute.xlu0 0
        %7841 = vperm.xlu0 %7840, %v7787
        %v7842 = vpop.permute.xlu0 %7841
        %7845 = vset.pattern.permute.xlu0 0
        %7846 = vperm.xlu0 %7845, %v7788
        %v7847 = vpop.permute.xlu0 %7846
        %7850 = vset.pattern.permute.xlu0 0
        %7851 = vperm.xlu0 %7850, %v7789
        %v7852 = vpop.permute.xlu0 %7851
        %7855 = vset.pattern.permute.xlu0 0
        %7856 = vperm.xlu0 %7855, %v7790
        %v7857 = vpop.permute.xlu0 %7856
        %7860 = vset.pattern.permute.xlu0 0
        %7861 = vperm.xlu0 %7860, %v7791
        %v7862 = vpop.permute.xlu0 %7861
        %7865 = vset.pattern.permute.xlu0 0
        %7866 = vperm.xlu0 %7865, %v7792
        %v7867 = vpop.permute.xlu0 %7866
        %7870 = vset.pattern.permute.xlu0 0
        %7871 = vperm.xlu0 %7870, %v7793
        %v7872 = vpop.permute.xlu0 %7871
        %v7874 = vmul.f32 %v7762, %v7797
        %v7875 = vmul.f32 %v7763, %v7802
        %v7876 = vmul.f32 %v7764, %v7807
        %v7877 = vmul.f32 %v7765, %v7812
        %v7878 = vmul.f32 %v7766, %v7817
        %v7879 = vmul.f32 %v7767, %v7822
        %v7880 = vmul.f32 %v7768, %v7827
        %v7881 = vmul.f32 %v7769, %v7832
        %v7882 = vmul.f32 %v7770, %v7837
        %v7883 = vmul.f32 %v7771, %v7842
        %v7884 = vmul.f32 %v7772, %v7847
        %v7885 = vmul.f32 %v7773, %v7852
        %v7886 = vmul.f32 %v7774, %v7857
        %v7887 = vmul.f32 %v7775, %v7862
        %v7888 = vmul.f32 %v7776, %v7867
        %v7889 = vmul.f32 %v7777, %v7872
        %v7890 = vpack.c.bf16 %v7875, %v7874
        %v7891 = vpack.c.bf16 %v7877, %v7876
        %v7892 = vpack.c.bf16 %v7879, %v7878
        %v7893 = vpack.c.bf16 %v7881, %v7880
        %v7894 = vpack.c.bf16 %v7883, %v7882
        %v7895 = vpack.c.bf16 %v7885, %v7884
        %v7896 = vpack.c.bf16 %v7887, %v7886
        %v7897 = vpack.c.bf16 %v7889, %v7888
        %s7898 = scalar_lea.vmem %s619, 112
        %v7899 = vld [vmem:[%s7898] sm:$0xf]
        %v7900 = vld [vmem:[%s7898 + $0x4] sm:$0xf]
        %v7901 = vld [vmem:[%s7898 + $0x8] sm:$0xf]
        %v7902 = vld [vmem:[%s7898 + $0xc] sm:$0xf]
        %v7907 = vunpack.c.l.b16 %v7899
        %v7908 = vunpack.c.l.b16 %v7900
        %v7909 = vunpack.c.l.b16 %v7901
        %v7910 = vunpack.c.l.b16 %v7902
        %v7911 = vpack.c.b16 %v7908, %v7907
        %v7912 = vpack.c.b16 %v7910, %v7909
        %v7916 = vsel %vm3492, %v7890, 0
        %v7919 = vsel %vm3492, %v7891, 0
        %v7922 = vsel %vm3492, %v7892, 0
        %v7925 = vsel %vm3492, %v7893, 0
        %v7928 = vsel %vm3492, %v7894, 0
        %v7931 = vsel %vm3492, %v7895, 0
        %v7934 = vsel %vm3492, %v7896, 0
        %v7937 = vsel %vm3492, %v7897, 0
        %7939 = vmatprep.subr.bf16.mxu0 0
        %7940 = vmatpush1.bf16.msra.mxu0 %v7911
        %7941 = vmatprep.subr.bf16.mxu0 0
        %7942 = vmatpush1.bf16.msra.mxu0 %v7912
        %7943 = vmatprep.subr.bf16.mxu0 0
        %7944 = vmatpush1.bf16.msra.mxu0 0
        %7945 = vmatprep.subr.bf16.mxu0 0
        %7946 = vmatpush1.bf16.msra.mxu0 0
        %7947 = vmatprep.subr.bf16.mxu0 0
        %7948 = vmatpush1.bf16.msra.mxu0 0
        %7949 = vmatprep.subr.bf16.mxu0 0
        %7950 = vmatpush1.bf16.msra.mxu0 0
        %7951 = vmatprep.subr.bf16.mxu0 0
        %7952 = vmatpush1.bf16.msra.mxu0 0
        %7953 = vmatprep.subr.bf16.mxu0 0
        %7954 = vmatpush1.bf16.msra.mxu0 0
        %7955 = vmatprep.subr.bf16.mxu0 0
        %7956 = vmatpush1.bf16.msra.mxu0 0
        %7957 = vmatprep.subr.bf16.mxu0 0
        %7958 = vmatpush1.bf16.msra.mxu0 0
        %7959 = vmatprep.subr.bf16.mxu0 0
        %7960 = vmatpush1.bf16.msra.mxu0 0
        %7961 = vmatprep.subr.bf16.mxu0 0
        %7962 = vmatpush1.bf16.msra.mxu0 0
        %7963 = vmatprep.subr.bf16.mxu0 0
        %7964 = vmatpush1.bf16.msra.mxu0 0
        %7965 = vmatprep.subr.bf16.mxu0 0
        %7966 = vmatpush1.bf16.msra.mxu0 0
        %7967 = vmatprep.subr.bf16.mxu0 0
        %7968 = vmatpush1.bf16.msra.mxu0 0
        %7969 = vmatprep.subr.bf16.mxu0 0
        %7970 = vmatpush1.bf16.msra.mxu0 0
        %7971 = vmatprep.mubr.bf16.mxu0 0
        %7972 = vmatmul.mubr.bf16.gmra.mrb[0].mxu0 %v7916
        %v7973 = vpop.f32.mrb[0].mxu0
        %v7974 = vadd.f32 0.0, %v7973
        %v7975 = vpop.f32.mrb[0].mxu0
        %v7976 = vpop.f32.mrb[0].mxu0
        %v7977 = vadd.f32 0.0, %v7976
        %v7978 = vpop.f32.mrb[0].mxu0
        %7979 = vmatprep.mubr.bf16.mxu0 0
        %7980 = vmatmul.mubr.bf16.gmra.mrb[0].mxu0 %v7919
        %v7981 = vpop.f32.mrb[0].mxu0
        %v7982 = vadd.f32 0.0, %v7981
        %v7983 = vpop.f32.mrb[0].mxu0
        %v7984 = vpop.f32.mrb[0].mxu0
        %v7985 = vadd.f32 0.0, %v7984
        %v7986 = vpop.f32.mrb[0].mxu0
        %7987 = vmatprep.mubr.bf16.mxu0 0
        %7988 = vmatmul.mubr.bf16.gmra.mrb[0].mxu0 %v7922
        %v7989 = vpop.f32.mrb[0].mxu0
        %v7990 = vadd.f32 0.0, %v7989
        %v7991 = vpop.f32.mrb[0].mxu0
        %v7992 = vpop.f32.mrb[0].mxu0
        %v7993 = vadd.f32 0.0, %v7992
        %v7994 = vpop.f32.mrb[0].mxu0
        %7995 = vmatprep.mubr.bf16.mxu0 0
        %7996 = vmatmul.mubr.bf16.gmra.mrb[0].mxu0 %v7925
        %v7997 = vpop.f32.mrb[0].mxu0
        %v7998 = vadd.f32 0.0, %v7997
        %v7999 = vpop.f32.mrb[0].mxu0
        %v8000 = vpop.f32.mrb[0].mxu0
        %v8001 = vadd.f32 0.0, %v8000
        %v8002 = vpop.f32.mrb[0].mxu0
        %8003 = vmatprep.mubr.bf16.mxu0 0
        %8004 = vmatmul.mubr.bf16.gmra.mrb[0].mxu0 %v7928
        %v8005 = vpop.f32.mrb[0].mxu0
        %v8006 = vadd.f32 0.0, %v8005
        %v8007 = vpop.f32.mrb[0].mxu0
        %v8008 = vpop.f32.mrb[0].mxu0
        %v8009 = vadd.f32 0.0, %v8008
        %v8010 = vpop.f32.mrb[0].mxu0
        %8011 = vmatprep.mubr.bf16.mxu0 0
        %8012 = vmatmul.mubr.bf16.gmra.mrb[0].mxu0 %v7931
        %v8013 = vpop.f32.mrb[0].mxu0
        %v8014 = vadd.f32 0.0, %v8013
        %v8015 = vpop.f32.mrb[0].mxu0
        %v8016 = vpop.f32.mrb[0].mxu0
        %v8017 = vadd.f32 0.0, %v8016
        %v8018 = vpop.f32.mrb[0].mxu0
        %8019 = vmatprep.mubr.bf16.mxu0 0
        %8020 = vmatmul.mubr.bf16.gmra.mrb[0].mxu0 %v7934
        %v8021 = vpop.f32.mrb[0].mxu0
        %v8022 = vadd.f32 0.0, %v8021
        %v8023 = vpop.f32.mrb[0].mxu0
        %v8024 = vpop.f32.mrb[0].mxu0
        %v8025 = vadd.f32 0.0, %v8024
        %v8026 = vpop.f32.mrb[0].mxu0
        %8027 = vmatprep.mubr.bf16.mxu0 0
        %8028 = vmatmul.mubr.bf16.gmra.mrb[0].mxu0 %v7937
        %v8029 = vpop.f32.mrb[0].mxu0
        %v8030 = vadd.f32 0.0, %v8029
        %v8031 = vpop.f32.mrb[0].mxu0
        %v8032 = vpop.f32.mrb[0].mxu0
        %v8033 = vadd.f32 0.0, %v8032
        %v8034 = vpop.f32.mrb[0].mxu0
        %8035 = vdwg.mxu0
        %v8036 = vadd.f32 %v7746, %v7974
        %v8037 = vadd.f32 %v7747, %v7977
        %v8038 = vadd.f32 %v7748, %v7982
        %v8039 = vadd.f32 %v7749, %v7985
        %v8040 = vadd.f32 %v7750, %v7990
        %v8041 = vadd.f32 %v7751, %v7993
        %v8042 = vadd.f32 %v7752, %v7998
        %v8043 = vadd.f32 %v7753, %v8001
        %v8044 = vadd.f32 %v7754, %v8006
        %v8045 = vadd.f32 %v7755, %v8009
        %v8046 = vadd.f32 %v7756, %v8014
        %v8047 = vadd.f32 %v7757, %v8017
        %v8048 = vadd.f32 %v7758, %v8022
        %v8049 = vadd.f32 %v7759, %v8025
        %v8050 = vadd.f32 %v7760, %v8030
        %v8051 = vadd.f32 %v7761, %v8033
        %v8052 = vld [vmem:[#allocation3 + $0x19] sm:$0xff]
        %v8053 = vld [vmem:[#allocation3 + $0x21] sm:$0xff]
        %v8054 = vld [vmem:[#allocation3 + $0x29] sm:$0xff]
        %v8055 = vld [vmem:[#allocation3 + $0x31] sm:$0xff]
        %v8056 = vld [vmem:[#allocation3 + $0x39] sm:$0xff]
        %v8057 = vld [vmem:[#allocation3 + $0x41] sm:$0xff]
        %v8058 = vld [vmem:[#allocation3 + $0x49] sm:$0xff]
        %v8059 = vld [vmem:[#allocation3 + $0x51] sm:$0xff]
        %v8060 = vld [vmem:[#allocation3 + $0x59] sm:$0xff]
        %v8061 = vld [vmem:[#allocation3 + $0x61] sm:$0xff]
        %v8062 = vld [vmem:[#allocation3 + $0x69] sm:$0xff]
        %v8063 = vld [vmem:[#allocation3 + $0x71] sm:$0xff]
        %v8064 = vld [vmem:[#allocation3 + $0x79] sm:$0xff]
        %v8065 = vld [vmem:[#allocation3 + $0x81] sm:$0xff]
        %v8066 = vld [vmem:[#allocation3 + $0x89] sm:$0xff]
        %v8067 = vld [vmem:[#allocation3 + $0x91] sm:$0xff]
        %v8068 = vld [vmem:[%s5380] sm:$0xff]
        %v8069 = vld [vmem:[%s5380 + $0x8] sm:$0xff]
        %v8070 = vld [vmem:[%s5380 + $0x10] sm:$0xff]
        %v8071 = vld [vmem:[%s5380 + $0x18] sm:$0xff]
        %v8072 = vld [vmem:[%s5380 + $0x20] sm:$0xff]
        %v8073 = vld [vmem:[%s5380 + $0x28] sm:$0xff]
        %v8074 = vld [vmem:[%s5380 + $0x30] sm:$0xff]
        %v8075 = vld [vmem:[%s5380 + $0x38] sm:$0xff]
        %v8076 = vld [vmem:[%s5380 + $0x40] sm:$0xff]
        %v8077 = vld [vmem:[%s5380 + $0x48] sm:$0xff]
        %v8078 = vld [vmem:[%s5380 + $0x50] sm:$0xff]
        %v8079 = vld [vmem:[%s5380 + $0x58] sm:$0xff]
        %v8080 = vld [vmem:[%s5380 + $0x60] sm:$0xff]
        %v8081 = vld [vmem:[%s5380 + $0x68] sm:$0xff]
        %v8082 = vld [vmem:[%s5380 + $0x70] sm:$0xff]
        %v8083 = vld [vmem:[%s5380 + $0x78] sm:$0xff]
        %8085 = vset.pattern.permute.xlu0 0
        %8086 = vperm.xlu0 %8085, %v8068
        %v8087 = vpop.permute.xlu0 %8086
        %8090 = vset.pattern.permute.xlu0 0
        %8091 = vperm.xlu0 %8090, %v8069
        %v8092 = vpop.permute.xlu0 %8091
        %8095 = vset.pattern.permute.xlu0 0
        %8096 = vperm.xlu0 %8095, %v8070
        %v8097 = vpop.permute.xlu0 %8096
        %8100 = vset.pattern.permute.xlu0 0
        %8101 = vperm.xlu0 %8100, %v8071
        %v8102 = vpop.permute.xlu0 %8101
        %8105 = vset.pattern.permute.xlu0 0
        %8106 = vperm.xlu0 %8105, %v8072
        %v8107 = vpop.permute.xlu0 %8106
        %8110 = vset.pattern.permute.xlu0 0
        %8111 = vperm.xlu0 %8110, %v8073
        %v8112 = vpop.permute.xlu0 %8111
        %8115 = vset.pattern.permute.xlu0 0
        %8116 = vperm.xlu0 %8115, %v8074
        %v8117 = vpop.permute.xlu0 %8116
        %8120 = vset.pattern.permute.xlu0 0
        %8121 = vperm.xlu0 %8120, %v8075
        %v8122 = vpop.permute.xlu0 %8121
        %8125 = vset.pattern.permute.xlu0 0
        %8126 = vperm.xlu0 %8125, %v8076
        %v8127 = vpop.permute.xlu0 %8126
        %8130 = vset.pattern.permute.xlu0 0
        %8131 = vperm.xlu0 %8130, %v8077
        %v8132 = vpop.permute.xlu0 %8131
        %8135 = vset.pattern.permute.xlu0 0
        %8136 = vperm.xlu0 %8135, %v8078
        %v8137 = vpop.permute.xlu0 %8136
        %8140 = vset.pattern.permute.xlu0 0
        %8141 = vperm.xlu0 %8140, %v8079
        %v8142 = vpop.permute.xlu0 %8141
        %8145 = vset.pattern.permute.xlu0 0
        %8146 = vperm.xlu0 %8145, %v8080
        %v8147 = vpop.permute.xlu0 %8146
        %8150 = vset.pattern.permute.xlu0 0
        %8151 = vperm.xlu0 %8150, %v8081
        %v8152 = vpop.permute.xlu0 %8151
        %8155 = vset.pattern.permute.xlu0 0
        %8156 = vperm.xlu0 %8155, %v8082
        %v8157 = vpop.permute.xlu0 %8156
        %8160 = vset.pattern.permute.xlu0 0
        %8161 = vperm.xlu0 %8160, %v8083
        %v8162 = vpop.permute.xlu0 %8161
        %v8164 = vmul.f32 %v8052, %v8087
        %v8165 = vmul.f32 %v8053, %v8092
        %v8166 = vmul.f32 %v8054, %v8097
        %v8167 = vmul.f32 %v8055, %v8102
        %v8168 = vmul.f32 %v8056, %v8107
        %v8169 = vmul.f32 %v8057, %v8112
        %v8170 = vmul.f32 %v8058, %v8117
        %v8171 = vmul.f32 %v8059, %v8122
        %v8172 = vmul.f32 %v8060, %v8127
        %v8173 = vmul.f32 %v8061, %v8132
        %v8174 = vmul.f32 %v8062, %v8137
        %v8175 = vmul.f32 %v8063, %v8142
        %v8176 = vmul.f32 %v8064, %v8147
        %v8177 = vmul.f32 %v8065, %v8152
        %v8178 = vmul.f32 %v8066, %v8157
        %v8179 = vmul.f32 %v8067, %v8162
        %v8180 = vpack.c.bf16 %v8165, %v8164
        %v8181 = vpack.c.bf16 %v8167, %v8166
        %v8182 = vpack.c.bf16 %v8169, %v8168
        %v8183 = vpack.c.bf16 %v8171, %v8170
        %v8184 = vpack.c.bf16 %v8173, %v8172
        %v8185 = vpack.c.bf16 %v8175, %v8174
        %v8186 = vpack.c.bf16 %v8177, %v8176
        %v8187 = vpack.c.bf16 %v8179, %v8178
        %s8188 = scalar_lea.vmem %s619, 128
        %v8189 = vld [vmem:[%s8188] sm:$0xf]
        %v8190 = vld [vmem:[%s8188 + $0x4] sm:$0xf]
        %v8191 = vld [vmem:[%s8188 + $0x8] sm:$0xf]
        %v8192 = vld [vmem:[%s8188 + $0xc] sm:$0xf]
        %v8197 = vunpack.c.l.b16 %v8189
        %v8198 = vunpack.c.l.b16 %v8190
        %v8199 = vunpack.c.l.b16 %v8191
        %v8200 = vunpack.c.l.b16 %v8192
        %v8201 = vpack.c.b16 %v8198, %v8197
        %v8202 = vpack.c.b16 %v8200, %v8199
        %v8206 = vsel %vm3492, %v8180, 0
        %v8209 = vsel %vm3492, %v8181, 0
        %v8212 = vsel %vm3492, %v8182, 0
        %v8215 = vsel %vm3492, %v8183, 0
        %v8218 = vsel %vm3492, %v8184, 0
        %v8221 = vsel %vm3492, %v8185, 0
        %v8224 = vsel %vm3492, %v8186, 0
        %v8227 = vsel %vm3492, %v8187, 0
        %8229 = vmatprep.subr.bf16.mxu0 0
        %8230 = vmatpush1.bf16.msra.mxu0 %v8201
        %8231 = vmatprep.subr.bf16.mxu0 0
        %8232 = vmatpush1.bf16.msra.mxu0 %v8202
        %8233 = vmatprep.subr.bf16.mxu0 0
        %8234 = vmatpush1.bf16.msra.mxu0 0
        %8235 = vmatprep.subr.bf16.mxu0 0
        %8236 = vmatpush1.bf16.msra.mxu0 0
        %8237 = vmatprep.subr.bf16.mxu0 0
        %8238 = vmatpush1.bf16.msra.mxu0 0
        %8239 = vmatprep.subr.bf16.mxu0 0
        %8240 = vmatpush1.bf16.msra.mxu0 0
        %8241 = vmatprep.subr.bf16.mxu0 0
        %8242 = vmatpush1.bf16.msra.mxu0 0
        %8243 = vmatprep.subr.bf16.mxu0 0
        %8244 = vmatpush1.bf16.msra.mxu0 0
        %8245 = vmatprep.subr.bf16.mxu0 0
        %8246 = vmatpush1.bf16.msra.mxu0 0
        %8247 = vmatprep.subr.bf16.mxu0 0
        %8248 = vmatpush1.bf16.msra.mxu0 0
        %8249 = vmatprep.subr.bf16.mxu0 0
        %8250 = vmatpush1.bf16.msra.mxu0 0
        %8251 = vmatprep.subr.bf16.mxu0 0
        %8252 = vmatpush1.bf16.msra.mxu0 0
        %8253 = vmatprep.subr.bf16.mxu0 0
        %8254 = vmatpush1.bf16.msra.mxu0 0
        %8255 = vmatprep.subr.bf16.mxu0 0
        %8256 = vmatpush1.bf16.msra.mxu0 0
        %8257 = vmatprep.subr.bf16.mxu0 0
        %8258 = vmatpush1.bf16.msra.mxu0 0
        %8259 = vmatprep.subr.bf16.mxu0 0
        %8260 = vmatpush1.bf16.msra.mxu0 0
        %8261 = vmatprep.mubr.bf16.mxu0 0
        %8262 = vmatmul.mubr.bf16.gmra.mrb[0].mxu0 %v8206
        %v8263 = vpop.f32.mrb[0].mxu0
        %v8264 = vadd.f32 0.0, %v8263
        %v8265 = vpop.f32.mrb[0].mxu0
        %v8266 = vpop.f32.mrb[0].mxu0
        %v8267 = vadd.f32 0.0, %v8266
        %v8268 = vpop.f32.mrb[0].mxu0
        %8269 = vmatprep.mubr.bf16.mxu0 0
        %8270 = vmatmul.mubr.bf16.gmra.mrb[0].mxu0 %v8209
        %v8271 = vpop.f32.mrb[0].mxu0
        %v8272 = vadd.f32 0.0, %v8271
        %v8273 = vpop.f32.mrb[0].mxu0
        %v8274 = vpop.f32.mrb[0].mxu0
        %v8275 = vadd.f32 0.0, %v8274
        %v8276 = vpop.f32.mrb[0].mxu0
        %8277 = vmatprep.mubr.bf16.mxu0 0
        %8278 = vmatmul.mubr.bf16.gmra.mrb[0].mxu0 %v8212
        %v8279 = vpop.f32.mrb[0].mxu0
        %v8280 = vadd.f32 0.0, %v8279
        %v8281 = vpop.f32.mrb[0].mxu0
        %v8282 = vpop.f32.mrb[0].mxu0
        %v8283 = vadd.f32 0.0, %v8282
        %v8284 = vpop.f32.mrb[0].mxu0
        %8285 = vmatprep.mubr.bf16.mxu0 0
        %8286 = vmatmul.mubr.bf16.gmra.mrb[0].mxu0 %v8215
        %v8287 = vpop.f32.mrb[0].mxu0
        %v8288 = vadd.f32 0.0, %v8287
        %v8289 = vpop.f32.mrb[0].mxu0
        %v8290 = vpop.f32.mrb[0].mxu0
        %v8291 = vadd.f32 0.0, %v8290
        %v8292 = vpop.f32.mrb[0].mxu0
        %8293 = vmatprep.mubr.bf16.mxu0 0
        %8294 = vmatmul.mubr.bf16.gmra.mrb[0].mxu0 %v8218
        %v8295 = vpop.f32.mrb[0].mxu0
        %v8296 = vadd.f32 0.0, %v8295
        %v8297 = vpop.f32.mrb[0].mxu0
        %v8298 = vpop.f32.mrb[0].mxu0
        %v8299 = vadd.f32 0.0, %v8298
        %v8300 = vpop.f32.mrb[0].mxu0
        %8301 = vmatprep.mubr.bf16.mxu0 0
        %8302 = vmatmul.mubr.bf16.gmra.mrb[0].mxu0 %v8221
        %v8303 = vpop.f32.mrb[0].mxu0
        %v8304 = vadd.f32 0.0, %v8303
        %v8305 = vpop.f32.mrb[0].mxu0
        %v8306 = vpop.f32.mrb[0].mxu0
        %v8307 = vadd.f32 0.0, %v8306
        %v8308 = vpop.f32.mrb[0].mxu0
        %8309 = vmatprep.mubr.bf16.mxu0 0
        %8310 = vmatmul.mubr.bf16.gmra.mrb[0].mxu0 %v8224
        %v8311 = vpop.f32.mrb[0].mxu0
        %v8312 = vadd.f32 0.0, %v8311
        %v8313 = vpop.f32.mrb[0].mxu0
        %v8314 = vpop.f32.mrb[0].mxu0
        %v8315 = vadd.f32 0.0, %v8314
        %v8316 = vpop.f32.mrb[0].mxu0
        %8317 = vmatprep.mubr.bf16.mxu0 0
        %8318 = vmatmul.mubr.bf16.gmra.mrb[0].mxu0 %v8227
        %v8319 = vpop.f32.mrb[0].mxu0
        %v8320 = vadd.f32 0.0, %v8319
        %v8321 = vpop.f32.mrb[0].mxu0
        %v8322 = vpop.f32.mrb[0].mxu0
        %v8323 = vadd.f32 0.0, %v8322
        %v8324 = vpop.f32.mrb[0].mxu0
        %8325 = vdwg.mxu0
        %v8326 = vadd.f32 %v8036, %v8264
        %v8327 = vadd.f32 %v8037, %v8267
        %v8328 = vadd.f32 %v8038, %v8272
        %v8329 = vadd.f32 %v8039, %v8275
        %v8330 = vadd.f32 %v8040, %v8280
        %v8331 = vadd.f32 %v8041, %v8283
        %v8332 = vadd.f32 %v8042, %v8288
        %v8333 = vadd.f32 %v8043, %v8291
        %v8334 = vadd.f32 %v8044, %v8296
        %v8335 = vadd.f32 %v8045, %v8299
        %v8336 = vadd.f32 %v8046, %v8304
        %v8337 = vadd.f32 %v8047, %v8307
        %v8338 = vadd.f32 %v8048, %v8312
        %v8339 = vadd.f32 %v8049, %v8315
        %v8340 = vadd.f32 %v8050, %v8320
        %v8341 = vadd.f32 %v8051, %v8323
        %v8342 = vlaneseq
        %v8343 = vshrl.u32 %v8342, 7
        %v8344 = vsub.s32 3, %v8343
        %v8345 = vrot.slane %v3181, %v8344
        %v8346 = vadd.f32 %v8326, %v8345
        %v8347 = vadd.f32 %v8327, %v8345
        %v8348 = vadd.f32 %v8328, %v8345
        %v8349 = vadd.f32 %v8329, %v8345
        %v8350 = vadd.f32 %v8330, %v8345
        %v8351 = vadd.f32 %v8331, %v8345
        %v8352 = vadd.f32 %v8332, %v8345
        %v8353 = vadd.f32 %v8333, %v8345
        %v8354 = vadd.f32 %v8334, %v8345
        %v8355 = vadd.f32 %v8335, %v8345
        %v8356 = vadd.f32 %v8336, %v8345
        %v8357 = vadd.f32 %v8337, %v8345
        %v8358 = vadd.f32 %v8338, %v8345
        %v8359 = vadd.f32 %v8339, %v8345
        %v8360 = vadd.f32 %v8340, %v8345
        %v8361 = vadd.f32 %v8341, %v8345
        %v8362 = vsel %vm3492, %v8346, 0.0
        %v8363 = vsel %vm3492, %v8347, 0.0
        %v8364 = vadd.f32 %v8362, %v8363
        %v8365 = vsel %vm3492, %v8348, 0.0
        %v8366 = vadd.f32 %v8364, %v8365
        %v8367 = vsel %vm3492, %v8349, 0.0
        %v8368 = vadd.f32 %v8366, %v8367
        %v8369 = vsel %vm3492, %v8350, 0.0
        %v8370 = vadd.f32 %v8368, %v8369
        %v8371 = vsel %vm3492, %v8351, 0.0
        %v8372 = vadd.f32 %v8370, %v8371
        %v8373 = vsel %vm3492, %v8352, 0.0
        %v8374 = vadd.f32 %v8372, %v8373
        %v8375 = vsel %vm3492, %v8353, 0.0
        %v8376 = vadd.f32 %v8374, %v8375
        %v8377 = vsel %vm3492, %v8354, 0.0
        %v8378 = vadd.f32 %v8376, %v8377
        %v8379 = vsel %vm3492, %v8355, 0.0
        %v8380 = vadd.f32 %v8378, %v8379
        %v8381 = vsel %vm3492, %v8356, 0.0
        %v8382 = vadd.f32 %v8380, %v8381
        %v8383 = vsel %vm3492, %v8357, 0.0
        %v8384 = vadd.f32 %v8382, %v8383
        %v8385 = vsel %vm3492, %v8358, 0.0
        %v8386 = vadd.f32 %v8384, %v8385
        %v8387 = vsel %vm3492, %v8359, 0.0
        %v8388 = vadd.f32 %v8386, %v8387
        %v8389 = vsel %vm3492, %v8360, 0.0
        %v8390 = vadd.f32 %v8388, %v8389
        %v8391 = vsel %vm3492, %v8361, 0.0
        %v8392 = vadd.f32 %v8390, %v8391
        %v8393 = vrot.slane %v8392, 4
        %v8394 = vadd.f32 %v8392, %v8393
        %v8395 = vrot.slane %v8394, 2
        %v8396 = vadd.f32 %v8394, %v8395
        %v8397 = vrot.slane %v8396, 1
        %v8398 = vadd.f32 %v8396, %v8397
        %v8399 = vmul.f32 %v8398, %v5712
        %v8400 = vmul.f32 %v8346, %v8346
        %v8401 = vmul.f32 %v8347, %v8347
        %v8402 = vmul.f32 %v8348, %v8348
        %v8403 = vmul.f32 %v8349, %v8349
        %v8404 = vmul.f32 %v8350, %v8350
        %v8405 = vmul.f32 %v8351, %v8351
        %v8406 = vmul.f32 %v8352, %v8352
        %v8407 = vmul.f32 %v8353, %v8353
        %v8408 = vmul.f32 %v8354, %v8354
        %v8409 = vmul.f32 %v8355, %v8355
        %v8410 = vmul.f32 %v8356, %v8356
        %v8411 = vmul.f32 %v8357, %v8357
        %v8412 = vmul.f32 %v8358, %v8358
        %v8413 = vmul.f32 %v8359, %v8359
        %v8414 = vmul.f32 %v8360, %v8360
        %v8415 = vmul.f32 %v8361, %v8361
        %v8416 = vsel %vm3492, %v8400, 0.0
        %v8417 = vsel %vm3492, %v8401, 0.0
        %v8418 = vadd.f32 %v8416, %v8417
        %v8419 = vsel %vm3492, %v8402, 0.0
        %v8420 = vadd.f32 %v8418, %v8419
        %v8421 = vsel %vm3492, %v8403, 0.0
        %v8422 = vadd.f32 %v8420, %v8421
        %v8423 = vsel %vm3492, %v8404, 0.0
        %v8424 = vadd.f32 %v8422, %v8423
        %v8425 = vsel %vm3492, %v8405, 0.0
        %v8426 = vadd.f32 %v8424, %v8425
        %v8427 = vsel %vm3492, %v8406, 0.0
        %v8428 = vadd.f32 %v8426, %v8427
        %v8429 = vsel %vm3492, %v8407, 0.0
        %v8430 = vadd.f32 %v8428, %v8429
        %v8431 = vsel %vm3492, %v8408, 0.0
        %v8432 = vadd.f32 %v8430, %v8431
        %v8433 = vsel %vm3492, %v8409, 0.0
        %v8434 = vadd.f32 %v8432, %v8433
        %v8435 = vsel %vm3492, %v8410, 0.0
        %v8436 = vadd.f32 %v8434, %v8435
        %v8437 = vsel %vm3492, %v8411, 0.0
        %v8438 = vadd.f32 %v8436, %v8437
        %v8439 = vsel %vm3492, %v8412, 0.0
        %v8440 = vadd.f32 %v8438, %v8439
        %v8441 = vsel %vm3492, %v8413, 0.0
        %v8442 = vadd.f32 %v8440, %v8441
        %v8443 = vsel %vm3492, %v8414, 0.0
        %v8444 = vadd.f32 %v8442, %v8443
        %v8445 = vsel %vm3492, %v8415, 0.0
        %v8446 = vadd.f32 %v8444, %v8445
        %v8447 = vrot.slane %v8446, 4
        %v8448 = vadd.f32 %v8446, %v8447
        %v8449 = vrot.slane %v8448, 2
        %v8450 = vadd.f32 %v8448, %v8449
        %v8451 = vrot.slane %v8450, 1
        %v8452 = vadd.f32 %v8450, %v8451
        %v8453 = vmul.f32 %v8452, %v5712
        %v8454 = vmul.f32 %v8399, %v8399
        %v8455 = vsub.f32 %v8453, %v8454
        %v8456 = vmax.f32 %v8455, 0.0
        %v8457 = vsub.f32 %v8346, %v8399
        %v8458 = vsub.f32 %v8347, %v8399
        %v8459 = vsub.f32 %v8348, %v8399
        %v8460 = vsub.f32 %v8349, %v8399
        %v8461 = vsub.f32 %v8350, %v8399
        %v8462 = vsub.f32 %v8351, %v8399
        %v8463 = vsub.f32 %v8352, %v8399
        %v8464 = vsub.f32 %v8353, %v8399
        %v8465 = vsub.f32 %v8354, %v8399
        %v8466 = vsub.f32 %v8355, %v8399
        %v8467 = vsub.f32 %v8356, %v8399
        %v8468 = vsub.f32 %v8357, %v8399
        %v8469 = vsub.f32 %v8358, %v8399
        %v8470 = vsub.f32 %v8359, %v8399
        %v8471 = vsub.f32 %v8360, %v8399
        %v8472 = vsub.f32 %v8361, %v8399
        %v8473 = vadd.f32 %v8456, 1e-05
        %v8474 = vrsqrt.pop %v8473
        %v8475 = vmul.f32 %v8457, %v8474
        %v8476 = vmul.f32 %v8458, %v8474
        %v8477 = vmul.f32 %v8459, %v8474
        %v8478 = vmul.f32 %v8460, %v8474
        %v8479 = vmul.f32 %v8461, %v8474
        %v8480 = vmul.f32 %v8462, %v8474
        %v8481 = vmul.f32 %v8463, %v8474
        %v8482 = vmul.f32 %v8464, %v8474
        %v8483 = vmul.f32 %v8465, %v8474
        %v8484 = vmul.f32 %v8466, %v8474
        %v8485 = vmul.f32 %v8467, %v8474
        %v8486 = vmul.f32 %v8468, %v8474
        %v8487 = vmul.f32 %v8469, %v8474
        %v8488 = vmul.f32 %v8470, %v8474
        %v8489 = vmul.f32 %v8471, %v8474
        %v8490 = vmul.f32 %v8472, %v8474
        %v8491 = vlaneseq
        %v8492 = vshrl.u32 %v8491, 7
        %v8493 = vsub.s32 4, %v8492
        %v8494 = vrot.slane %v3181, %v8493
        %v8495 = vmul.f32 %v8475, %v8494
        %v8496 = vmul.f32 %v8476, %v8494
        %v8497 = vmul.f32 %v8477, %v8494
        %v8498 = vmul.f32 %v8478, %v8494
        %v8499 = vmul.f32 %v8479, %v8494
        %v8500 = vmul.f32 %v8480, %v8494
        %v8501 = vmul.f32 %v8481, %v8494
        %v8502 = vmul.f32 %v8482, %v8494
        %v8503 = vmul.f32 %v8483, %v8494
        %v8504 = vmul.f32 %v8484, %v8494
        %v8505 = vmul.f32 %v8485, %v8494
        %v8506 = vmul.f32 %v8486, %v8494
        %v8507 = vmul.f32 %v8487, %v8494
        %v8508 = vmul.f32 %v8488, %v8494
        %v8509 = vmul.f32 %v8489, %v8494
        %v8510 = vmul.f32 %v8490, %v8494
        %v8511 = vlaneseq
        %v8512 = vshrl.u32 %v8511, 7
        %v8513 = vsub.s32 5, %v8512
        %v8514 = vrot.slane %v3181, %v8513
        %v8515 = vadd.f32 %v8495, %v8514
        %v8516 = vadd.f32 %v8496, %v8514
        %v8517 = vadd.f32 %v8497, %v8514
        %v8518 = vadd.f32 %v8498, %v8514
        %v8519 = vadd.f32 %v8499, %v8514
        %v8520 = vadd.f32 %v8500, %v8514
        %v8521 = vadd.f32 %v8501, %v8514
        %v8522 = vadd.f32 %v8502, %v8514
        %v8523 = vadd.f32 %v8503, %v8514
        %v8524 = vadd.f32 %v8504, %v8514
        %v8525 = vadd.f32 %v8505, %v8514
        %v8526 = vadd.f32 %v8506, %v8514
        %v8527 = vadd.f32 %v8507, %v8514
        %v8528 = vadd.f32 %v8508, %v8514
        %v8529 = vadd.f32 %v8509, %v8514
        %v8530 = vadd.f32 %v8510, %v8514
        %v8531 = vadd.f32 %v8515, %v3182
        %v8532 = vadd.f32 %v8516, %v3183
        %v8533 = vadd.f32 %v8517, %v3184
        %v8534 = vadd.f32 %v8518, %v3185
        %v8535 = vadd.f32 %v8519, %v3186
        %v8536 = vadd.f32 %v8520, %v3187
        %v8537 = vadd.f32 %v8521, %v3188
        %v8538 = vadd.f32 %v8522, %v3189
        %v8539 = vadd.f32 %v8523, %v3190
        %v8540 = vadd.f32 %v8524, %v3191
        %v8541 = vadd.f32 %v8525, %v3192
        %v8542 = vadd.f32 %v8526, %v3193
        %v8543 = vadd.f32 %v8527, %v3194
        %v8544 = vadd.f32 %v8528, %v3195
        %v8545 = vadd.f32 %v8529, %v3196
        %v8546 = vadd.f32 %v8530, %v3197
        %v8547 = vmax.f32 %v8531, 0.0
        %v8548 = vmax.f32 %v8532, 0.0
        %v8549 = vmax.f32 %v8533, 0.0
        %v8550 = vmax.f32 %v8534, 0.0
        %v8551 = vmax.f32 %v8535, 0.0
        %v8552 = vmax.f32 %v8536, 0.0
        %v8553 = vmax.f32 %v8537, 0.0
        %v8554 = vmax.f32 %v8538, 0.0
        %v8555 = vmax.f32 %v8539, 0.0
        %v8556 = vmax.f32 %v8540, 0.0
        %v8557 = vmax.f32 %v8541, 0.0
        %v8558 = vmax.f32 %v8542, 0.0
        %v8559 = vmax.f32 %v8543, 0.0
        %v8560 = vmax.f32 %v8544, 0.0
        %v8561 = vmax.f32 %v8545, 0.0
        %v8562 = vmax.f32 %v8546, 0.0
        %8563 = vst.msk [vmem:[#allocation2 + $0x10] sm:$0xff] %vm3492, %v8547
        %8564 = vst.msk [vmem:[#allocation2 + $0x18] sm:$0xff] %vm3492, %v8548
        %8565 = vst.msk [vmem:[#allocation2 + $0x20] sm:$0xff] %vm3492, %v8549
        %8566 = vst.msk [vmem:[#allocation2 + $0x28] sm:$0xff] %vm3492, %v8550
        %8567 = vst.msk [vmem:[#allocation2 + $0x30] sm:$0xff] %vm3492, %v8551
        %8568 = vst.msk [vmem:[#allocation2 + $0x38] sm:$0xff] %vm3492, %v8552
        %8569 = vst.msk [vmem:[#allocation2 + $0x40] sm:$0xff] %vm3492, %v8553
        %8570 = vst.msk [vmem:[#allocation2 + $0x48] sm:$0xff] %vm3492, %v8554
        %8571 = vst.msk [vmem:[#allocation2 + $0x50] sm:$0xff] %vm3492, %v8555
        %8572 = vst.msk [vmem:[#allocation2 + $0x58] sm:$0xff] %vm3492, %v8556
        %8573 = vst.msk [vmem:[#allocation2 + $0x60] sm:$0xff] %vm3492, %v8557
        %8574 = vst.msk [vmem:[#allocation2 + $0x68] sm:$0xff] %vm3492, %v8558
        %8575 = vst.msk [vmem:[#allocation2 + $0x70] sm:$0xff] %vm3492, %v8559
        %8576 = vst.msk [vmem:[#allocation2 + $0x78] sm:$0xff] %vm3492, %v8560
        %8577 = vst.msk [vmem:[#allocation2 + $0x80] sm:$0xff] %vm3492, %v8561
        %8578 = vst.msk [vmem:[#allocation2 + $0x88] sm:$0xff] %vm3492, %v8562
        %p8579 = scmp.eq.s32.totalorder %s32, 1
        // Predicated region
        $region97: #{muzero_atari_forward.1} parent=91 // pred_check
          %p8580 = pneg %p8579
        $region98: #{muzero_atari_forward.1} parent=91 // pred_check_branch
          %8582 = sbr.rel (%p8580) target = $region100
        $region99: #{muzero_atari_forward.1} parent=91 // pred_region
          %v8583 = vpack.c.bf16 %v8548, %v8547
          %v8584 = vpack.c.bf16 %v8550, %v8549
          %v8585 = vpack.c.bf16 %v8552, %v8551
          %v8586 = vpack.c.bf16 %v8554, %v8553
          %v8587 = vpack.c.bf16 %v8556, %v8555
          %v8588 = vpack.c.bf16 %v8558, %v8557
          %v8589 = vpack.c.bf16 %v8560, %v8559
          %v8590 = vpack.c.bf16 %v8562, %v8561
          %v8591 = vld [vmem:[%s7] sm:$0xf]
          %v8592 = vld [vmem:[%s7 + $0x4] sm:$0xf]
          %v8593 = vld [vmem:[%s7 + $0x8] sm:$0xf]
          %v8594 = vld [vmem:[%s7 + $0xc] sm:$0xf]
          %v8595 = vld [vmem:[%s8] sm:$0x7]
          %v8596 = vlaneseq
          %v8597 = vshrl.u32 %v8596, 7
          %v8598 = vsub.s32 0, %v8597
          %v8599 = vrot.slane %v8595, %v8598
          %v8604 = vunpack.c.l.b16 %v8591
          %v8605 = vunpack.c.l.b16 %v8592
          %v8606 = vunpack.c.l.b16 %v8593
          %v8607 = vunpack.c.l.b16 %v8594
          %v8608 = vpack.c.b16 %v8605, %v8604
          %v8609 = vpack.c.b16 %v8607, %v8606
          %v8613 = vsel %vm3492, %v8583, 0
          %v8616 = vsel %vm3492, %v8584, 0
          %v8619 = vsel %vm3492, %v8585, 0
          %v8622 = vsel %vm3492, %v8586, 0
          %v8625 = vsel %vm3492, %v8587, 0
          %v8628 = vsel %vm3492, %v8588, 0
          %v8631 = vsel %vm3492, %v8589, 0
          %v8634 = vsel %vm3492, %v8590, 0
          %8636 = vmatprep.subr.bf16.mxu0 0
          %8637 = vmatpush1.bf16.msra.mxu0 %v8608
          %8638 = vmatprep.subr.bf16.mxu0 0
          %8639 = vmatpush1.bf16.msra.mxu0 %v8609
          %8640 = vmatprep.subr.bf16.mxu0 0
          %8641 = vmatpush1.bf16.msra.mxu0 0
          %8642 = vmatprep.subr.bf16.mxu0 0
          %8643 = vmatpush1.bf16.msra.mxu0 0
          %8644 = vmatprep.subr.bf16.mxu0 0
          %8645 = vmatpush1.bf16.msra.mxu0 0
          %8646 = vmatprep.subr.bf16.mxu0 0
          %8647 = vmatpush1.bf16.msra.mxu0 0
          %8648 = vmatprep.subr.bf16.mxu0 0
          %8649 = vmatpush1.bf16.msra.mxu0 0
          %8650 = vmatprep.subr.bf16.mxu0 0
          %8651 = vmatpush1.bf16.msra.mxu0 0
          %8652 = vmatprep.subr.bf16.mxu0 0
          %8653 = vmatpush1.bf16.msra.mxu0 0
          %8654 = vmatprep.subr.bf16.mxu0 0
          %8655 = vmatpush1.bf16.msra.mxu0 0
          %8656 = vmatprep.subr.bf16.mxu0 0
          %8657 = vmatpush1.bf16.msra.mxu0 0
          %8658 = vmatprep.subr.bf16.mxu0 0
          %8659 = vmatpush1.bf16.msra.mxu0 0
          %8660 = vmatprep.subr.bf16.mxu0 0
          %8661 = vmatpush1.bf16.msra.mxu0 0
          %8662 = vmatprep.subr.bf16.mxu0 0
          %8663 = vmatpush1.bf16.msra.mxu0 0
          %8664 = vmatprep.subr.bf16.mxu0 0
          %8665 = vmatpush1.bf16.msra.mxu0 0
          %8666 = vmatprep.subr.bf16.mxu0 0
          %8667 = vmatpush1.bf16.msra.mxu0 0
          %8668 = vmatprep.mubr.bf16.mxu0 0
          %8669 = vmatmul.mubr.bf16.gmra.mrb[0].mxu0 %v8613
          %v8670 = vpop.f32.mrb[0].mxu0
          %v8671 = vadd.f32 %v8599, %v8670
          %v8672 = vpop.f32.mrb[0].mxu0
          %v8673 = vpop.f32.mrb[0].mxu0
          %v8674 = vadd.f32 %v8599, %v8673
          %v8675 = vpop.f32.mrb[0].mxu0
          %8676 = vmatprep.mubr.bf16.mxu0 0
          %8677 = vmatmul.mubr.bf16.gmra.mrb[0].mxu0 %v8616
          %v8678 = vpop.f32.mrb[0].mxu0
          %v8679 = vadd.f32 %v8599, %v8678
          %v8680 = vpop.f32.mrb[0].mxu0
          %v8681 = vpop.f32.mrb[0].mxu0
          %v8682 = vadd.f32 %v8599, %v8681
          %v8683 = vpop.f32.mrb[0].mxu0
          %8684 = vmatprep.mubr.bf16.mxu0 0
          %8685 = vmatmul.mubr.bf16.gmra.mrb[0].mxu0 %v8619
          %v8686 = vpop.f32.mrb[0].mxu0
          %v8687 = vadd.f32 %v8599, %v8686
          %v8688 = vpop.f32.mrb[0].mxu0
          %v8689 = vpop.f32.mrb[0].mxu0
          %v8690 = vadd.f32 %v8599, %v8689
          %v8691 = vpop.f32.mrb[0].mxu0
          %8692 = vmatprep.mubr.bf16.mxu0 0
          %8693 = vmatmul.mubr.bf16.gmra.mrb[0].mxu0 %v8622
          %v8694 = vpop.f32.mrb[0].mxu0
          %v8695 = vadd.f32 %v8599, %v8694
          %v8696 = vpop.f32.mrb[0].mxu0
          %v8697 = vpop.f32.mrb[0].mxu0
          %v8698 = vadd.f32 %v8599, %v8697
          %v8699 = vpop.f32.mrb[0].mxu0
          %8700 = vmatprep.mubr.bf16.mxu0 0
          %8701 = vmatmul.mubr.bf16.gmra.mrb[0].mxu0 %v8625
          %v8702 = vpop.f32.mrb[0].mxu0
          %v8703 = vadd.f32 %v8599, %v8702
          %v8704 = vpop.f32.mrb[0].mxu0
          %v8705 = vpop.f32.mrb[0].mxu0
          %v8706 = vadd.f32 %v8599, %v8705
          %v8707 = vpop.f32.mrb[0].mxu0
          %8708 = vmatprep.mubr.bf16.mxu0 0
          %8709 = vmatmul.mubr.bf16.gmra.mrb[0].mxu0 %v8628
          %v8710 = vpop.f32.mrb[0].mxu0
          %v8711 = vadd.f32 %v8599, %v8710
          %v8712 = vpop.f32.mrb[0].mxu0
          %v8713 = vpop.f32.mrb[0].mxu0
          %v8714 = vadd.f32 %v8599, %v8713
          %v8715 = vpop.f32.mrb[0].mxu0
          %8716 = vmatprep.mubr.bf16.mxu0 0
          %8717 = vmatmul.mubr.bf16.gmra.mrb[0].mxu0 %v8631
          %v8718 = vpop.f32.mrb[0].mxu0
          %v8719 = vadd.f32 %v8599, %v8718
          %v8720 = vpop.f32.mrb[0].mxu0
          %v8721 = vpop.f32.mrb[0].mxu0
          %v8722 = vadd.f32 %v8599, %v8721
          %v8723 = vpop.f32.mrb[0].mxu0
          %8724 = vmatprep.mubr.bf16.mxu0 0
          %8725 = vmatmul.mubr.bf16.gmra.mrb[0].mxu0 %v8634
          %v8726 = vpop.f32.mrb[0].mxu0
          %v8727 = vadd.f32 %v8599, %v8726
          %v8728 = vpop.f32.mrb[0].mxu0
          %v8729 = vpop.f32.mrb[0].mxu0
          %v8730 = vadd.f32 %v8599, %v8729
          %v8731 = vpop.f32.mrb[0].mxu0
          %8732 = vdwg.mxu0
          %vm8733 = vcmask 23552
          %v8734 = vsel %vm8733, %v8671, 0.0
          %v8735 = vsel %vm8733, %v8674, 0.0
          %v8736 = vadd.f32 %v8734, %v8735
          %v8737 = vsel %vm8733, %v8679, 0.0
          %v8738 = vadd.f32 %v8736, %v8737
          %v8739 = vsel %vm8733, %v8682, 0.0
          %v8740 = vadd.f32 %v8738, %v8739
          %v8741 = vsel %vm8733, %v8687, 0.0
          %v8742 = vadd.f32 %v8740, %v8741
          %v8743 = vsel %vm8733, %v8690, 0.0
          %v8744 = vadd.f32 %v8742, %v8743
          %v8745 = vsel %vm8733, %v8695, 0.0
          %v8746 = vadd.f32 %v8744, %v8745
          %v8747 = vsel %vm8733, %v8698, 0.0
          %v8748 = vadd.f32 %v8746, %v8747
          %v8749 = vsel %vm8733, %v8703, 0.0
          %v8750 = vadd.f32 %v8748, %v8749
          %v8751 = vsel %vm8733, %v8706, 0.0
          %v8752 = vadd.f32 %v8750, %v8751
          %v8753 = vsel %vm8733, %v8711, 0.0
          %v8754 = vadd.f32 %v8752, %v8753
          %v8755 = vsel %vm8733, %v8714, 0.0
          %v8756 = vadd.f32 %v8754, %v8755
          %v8757 = vsel %vm8733, %v8719, 0.0
          %v8758 = vadd.f32 %v8756, %v8757
          %v8759 = vsel %vm8733, %v8722, 0.0
          %v8760 = vadd.f32 %v8758, %v8759
          %v8761 = vsel %vm8733, %v8727, 0.0
          %v8762 = vadd.f32 %v8760, %v8761
          %v8763 = vsel %vm8733, %v8730, 0.0
          %v8764 = vadd.f32 %v8762, %v8763
          %v8765 = vrot.slane %v8764, 4
          %v8766 = vadd.f32 %v8764, %v8765
          %v8767 = vrot.slane %v8766, 2
          %v8768 = vadd.f32 %v8766, %v8767
          %v8769 = vrot.slane %v8768, 1
          %v8770 = vadd.f32 %v8768, %v8769
          %v8771 = vmul.f32 %v8770, %v5712
          %v8772 = vmul.f32 %v8671, %v8671
          %v8773 = vmul.f32 %v8674, %v8674
          %v8774 = vmul.f32 %v8679, %v8679
          %v8775 = vmul.f32 %v8682, %v8682
          %v8776 = vmul.f32 %v8687, %v8687
          %v8777 = vmul.f32 %v8690, %v8690
          %v8778 = vmul.f32 %v8695, %v8695
          %v8779 = vmul.f32 %v8698, %v8698
          %v8780 = vmul.f32 %v8703, %v8703
          %v8781 = vmul.f32 %v8706, %v8706
          %v8782 = vmul.f32 %v8711, %v8711
          %v8783 = vmul.f32 %v8714, %v8714
          %v8784 = vmul.f32 %v8719, %v8719
          %v8785 = vmul.f32 %v8722, %v8722
          %v8786 = vmul.f32 %v8727, %v8727
          %v8787 = vmul.f32 %v8730, %v8730
          %v8788 = vsel %vm8733, %v8772, 0.0
          %v8789 = vsel %vm8733, %v8773, 0.0
          %v8790 = vadd.f32 %v8788, %v8789
          %v8791 = vsel %vm8733, %v8774, 0.0
          %v8792 = vadd.f32 %v8790, %v8791
          %v8793 = vsel %vm8733, %v8775, 0.0
          %v8794 = vadd.f32 %v8792, %v8793
          %v8795 = vsel %vm8733, %v8776, 0.0
          %v8796 = vadd.f32 %v8794, %v8795
          %v8797 = vsel %vm8733, %v8777, 0.0
          %v8798 = vadd.f32 %v8796, %v8797
          %v8799 = vsel %vm8733, %v8778, 0.0
          %v8800 = vadd.f32 %v8798, %v8799
          %v8801 = vsel %vm8733, %v8779, 0.0
          %v8802 = vadd.f32 %v8800, %v8801
          %v8803 = vsel %vm8733, %v8780, 0.0
          %v8804 = vadd.f32 %v8802, %v8803
          %v8805 = vsel %vm8733, %v8781, 0.0
          %v8806 = vadd.f32 %v8804, %v8805
          %v8807 = vsel %vm8733, %v8782, 0.0
          %v8808 = vadd.f32 %v8806, %v8807
          %v8809 = vsel %vm8733, %v8783, 0.0
          %v8810 = vadd.f32 %v8808, %v8809
          %v8811 = vsel %vm8733, %v8784, 0.0
          %v8812 = vadd.f32 %v8810, %v8811
          %v8813 = vsel %vm8733, %v8785, 0.0
          %v8814 = vadd.f32 %v8812, %v8813
          %v8815 = vsel %vm8733, %v8786, 0.0
          %v8816 = vadd.f32 %v8814, %v8815
          %v8817 = vsel %vm8733, %v8787, 0.0
          %v8818 = vadd.f32 %v8816, %v8817
          %v8819 = vrot.slane %v8818, 4
          %v8820 = vadd.f32 %v8818, %v8819
          %v8821 = vrot.slane %v8820, 2
          %v8822 = vadd.f32 %v8820, %v8821
          %v8823 = vrot.slane %v8822, 1
          %v8824 = vadd.f32 %v8822, %v8823
          %v8825 = vmul.f32 %v8824, %v5712
          %v8826 = vmul.f32 %v8771, %v8771
          %v8827 = vsub.f32 %v8825, %v8826
          %v8828 = vmax.f32 %v8827, 0.0
          %v8829 = vsub.f32 %v8671, %v8771
          %v8830 = vsub.f32 %v8674, %v8771
          %v8831 = vsub.f32 %v8679, %v8771
          %v8832 = vsub.f32 %v8682, %v8771
          %v8833 = vsub.f32 %v8687, %v8771
          %v8834 = vsub.f32 %v8690, %v8771
          %v8835 = vsub.f32 %v8695, %v8771
          %v8836 = vsub.f32 %v8698, %v8771
          %v8837 = vsub.f32 %v8703, %v8771
          %v8838 = vsub.f32 %v8706, %v8771
          %v8839 = vsub.f32 %v8711, %v8771
          %v8840 = vsub.f32 %v8714, %v8771
          %v8841 = vsub.f32 %v8719, %v8771
          %v8842 = vsub.f32 %v8722, %v8771
          %v8843 = vsub.f32 %v8727, %v8771
          %v8844 = vsub.f32 %v8730, %v8771
          %v8845 = vadd.f32 %v8828, 1e-05
          %v8846 = vrsqrt.pop %v8845
          %v8847 = vmul.f32 %v8829, %v8846
          %v8848 = vmul.f32 %v8830, %v8846
          %v8849 = vmul.f32 %v8831, %v8846
          %v8850 = vmul.f32 %v8832, %v8846
          %v8851 = vmul.f32 %v8833, %v8846
          %v8852 = vmul.f32 %v8834, %v8846
          %v8853 = vmul.f32 %v8835, %v8846
          %v8854 = vmul.f32 %v8836, %v8846
          %v8855 = vmul.f32 %v8837, %v8846
          %v8856 = vmul.f32 %v8838, %v8846
          %v8857 = vmul.f32 %v8839, %v8846
          %v8858 = vmul.f32 %v8840, %v8846
          %v8859 = vmul.f32 %v8841, %v8846
          %v8860 = vmul.f32 %v8842, %v8846
          %v8861 = vmul.f32 %v8843, %v8846
          %v8862 = vmul.f32 %v8844, %v8846
          %v8863 = vlaneseq
          %v8864 = vshrl.u32 %v8863, 7
          %v8865 = vsub.s32 1, %v8864
          %v8866 = vrot.slane %v8595, %v8865
          %v8867 = vmul.f32 %v8847, %v8866
          %v8868 = vmul.f32 %v8848, %v8866
          %v8869 = vmul.f32 %v8849, %v8866
          %v8870 = vmul.f32 %v8850, %v8866
          %v8871 = vmul.f32 %v8851, %v8866
          %v8872 = vmul.f32 %v8852, %v8866
          %v8873 = vmul.f32 %v8853, %v8866
          %v8874 = vmul.f32 %v8854, %v8866
          %v8875 = vmul.f32 %v8855, %v8866
          %v8876 = vmul.f32 %v8856, %v8866
          %v8877 = vmul.f32 %v8857, %v8866
          %v8878 = vmul.f32 %v8858, %v8866
          %v8879 = vmul.f32 %v8859, %v8866
          %v8880 = vmul.f32 %v8860, %v8866
          %v8881 = vmul.f32 %v8861, %v8866
          %v8882 = vmul.f32 %v8862, %v8866
          %v8883 = vlaneseq
          %v8884 = vshrl.u32 %v8883, 7
          %v8885 = vsub.s32 2, %v8884
          %v8886 = vrot.slane %v8595, %v8885
          %v8887 = vadd.f32 %v8867, %v8886
          %v8888 = vadd.f32 %v8868, %v8886
          %v8889 = vadd.f32 %v8869, %v8886
          %v8890 = vadd.f32 %v8870, %v8886
          %v8891 = vadd.f32 %v8871, %v8886
          %v8892 = vadd.f32 %v8872, %v8886
          %v8893 = vadd.f32 %v8873, %v8886
          %v8894 = vadd.f32 %v8874, %v8886
          %v8895 = vadd.f32 %v8875, %v8886
          %v8896 = vadd.f32 %v8876, %v8886
          %v8897 = vadd.f32 %v8877, %v8886
          %v8898 = vadd.f32 %v8878, %v8886
          %v8899 = vadd.f32 %v8879, %v8886
          %v8900 = vadd.f32 %v8880, %v8886
          %v8901 = vadd.f32 %v8881, %v8886
          %v8902 = vadd.f32 %v8882, %v8886
          %v8903 = vmax.f32 %v8887, 0.0
          %v8904 = vmax.f32 %v8888, 0.0
          %v8905 = vmax.f32 %v8889, 0.0
          %v8906 = vmax.f32 %v8890, 0.0
          %v8907 = vmax.f32 %v8891, 0.0
          %v8908 = vmax.f32 %v8892, 0.0
          %v8909 = vmax.f32 %v8893, 0.0
          %v8910 = vmax.f32 %v8894, 0.0
          %v8911 = vmax.f32 %v8895, 0.0
          %v8912 = vmax.f32 %v8896, 0.0
          %v8913 = vmax.f32 %v8897, 0.0
          %v8914 = vmax.f32 %v8898, 0.0
          %v8915 = vmax.f32 %v8899, 0.0
          %v8916 = vmax.f32 %v8900, 0.0
          %v8917 = vmax.f32 %v8901, 0.0
          %v8918 = vmax.f32 %v8902, 0.0
          %v8919 = vld [vmem:[%s9] sm:$0x1]
          %v8920 = vld [vmem:[%s10] sm:$0xff]
          %v8921 = vld [vmem:[%s10 + $0x8] sm:$0xff]
          %v8922 = vld [vmem:[%s10 + $0x10] sm:$0xff]
          %v8923 = vld [vmem:[%s10 + $0x18] sm:$0xff]
          %v8924 = vld [vmem:[%s10 + $0x20] sm:$0xff]
          %v8925 = vld [vmem:[%s10 + $0x28] sm:$0xff]
          %v8926 = vld [vmem:[%s10 + $0x30] sm:$0xff]
          %v8927 = vld [vmem:[%s10 + $0x38] sm:$0xff]
          %v8928 = vld [vmem:[%s10 + $0x40] sm:$0xff]
          %v8929 = vld [vmem:[%s10 + $0x48] sm:$0xff]
          %v8930 = vld [vmem:[%s10 + $0x50] sm:$0xff]
          %v8931 = vld [vmem:[%s10 + $0x58] sm:$0xff]
          %v8932 = vld [vmem:[%s10 + $0x60] sm:$0xff]
          %v8933 = vld [vmem:[%s10 + $0x68] sm:$0xff]
          %v8934 = vld [vmem:[%s10 + $0x70] sm:$0xff]
          %v8935 = vld [vmem:[%s10 + $0x78] sm:$0xff]
          %8937 = vset.pattern.permute.xlu0 0
          %8938 = vperm.xlu0 %8937, %v8903
          %v8939 = vpop.permute.xlu0 %8938
          %8942 = vset.pattern.permute.xlu0 0
          %8943 = vperm.xlu0 %8942, %v8904
          %v8944 = vpop.permute.xlu0 %8943
          %8947 = vset.pattern.permute.xlu0 0
          %8948 = vperm.xlu0 %8947, %v8905
          %v8949 = vpop.permute.xlu0 %8948
          %8952 = vset.pattern.permute.xlu0 0
          %8953 = vperm.xlu0 %8952, %v8906
          %v8954 = vpop.permute.xlu0 %8953
          %8957 = vset.pattern.permute.xlu0 0
          %8958 = vperm.xlu0 %8957, %v8907
          %v8959 = vpop.permute.xlu0 %8958
          %8962 = vset.pattern.permute.xlu0 0
          %8963 = vperm.xlu0 %8962, %v8908
          %v8964 = vpop.permute.xlu0 %8963
          %8967 = vset.pattern.permute.xlu0 0
          %8968 = vperm.xlu0 %8967, %v8909
          %v8969 = vpop.permute.xlu0 %8968
          %8972 = vset.pattern.permute.xlu0 0
          %8973 = vperm.xlu0 %8972, %v8910
          %v8974 = vpop.permute.xlu0 %8973
          %8977 = vset.pattern.permute.xlu0 0
          %8978 = vperm.xlu0 %8977, %v8911
          %v8979 = vpop.permute.xlu0 %8978
          %8982 = vset.pattern.permute.xlu0 0
          %8983 = vperm.xlu0 %8982, %v8912
          %v8984 = vpop.permute.xlu0 %8983
          %8987 = vset.pattern.permute.xlu0 0
          %8988 = vperm.xlu0 %8987, %v8913
          %v8989 = vpop.permute.xlu0 %8988
          %8992 = vset.pattern.permute.xlu0 0
          %8993 = vperm.xlu0 %8992, %v8914
          %v8994 = vpop.permute.xlu0 %8993
          %8997 = vset.pattern.permute.xlu0 0
          %8998 = vperm.xlu0 %8997, %v8915
          %v8999 = vpop.permute.xlu0 %8998
          %9002 = vset.pattern.permute.xlu0 0
          %9003 = vperm.xlu0 %9002, %v8916
          %v9004 = vpop.permute.xlu0 %9003
          %9007 = vset.pattern.permute.xlu0 0
          %9008 = vperm.xlu0 %9007, %v8917
          %v9009 = vpop.permute.xlu0 %9008
          %9012 = vset.pattern.permute.xlu0 0
          %9013 = vperm.xlu0 %9012, %v8918
          %v9014 = vpop.permute.xlu0 %9013
          %v9016 = vmul.f32 %v8939, %v8920
          %v9017 = vmul.f32 %v8944, %v8921
          %v9018 = vmul.f32 %v8949, %v8922
          %v9019 = vmul.f32 %v8954, %v8923
          %v9020 = vmul.f32 %v8959, %v8924
          %v9021 = vmul.f32 %v8964, %v8925
          %v9022 = vmul.f32 %v8969, %v8926
          %v9023 = vmul.f32 %v8974, %v8927
          %v9024 = vmul.f32 %v8979, %v8928
          %v9025 = vmul.f32 %v8984, %v8929
          %v9026 = vmul.f32 %v8989, %v8930
          %v9027 = vmul.f32 %v8994, %v8931
          %v9028 = vmul.f32 %v8999, %v8932
          %v9029 = vmul.f32 %v9004, %v8933
          %v9030 = vmul.f32 %v9009, %v8934
          %v9031 = vmul.f32 %v9014, %v8935
          %v9032 = vld [vmem:[%s11] sm:$0xff]
          %v9033 = vld [vmem:[%s11 + $0x8] sm:$0xff]
          %v9034 = vld [vmem:[%s11 + $0x10] sm:$0xff]
          %v9035 = vld [vmem:[%s11 + $0x18] sm:$0xff]
          %v9036 = vld [vmem:[%s11 + $0x20] sm:$0xff]
          %v9037 = vld [vmem:[%s11 + $0x28] sm:$0xff]
          %v9038 = vld [vmem:[%s11 + $0x30] sm:$0xff]
          %v9039 = vld [vmem:[%s11 + $0x38] sm:$0xff]
          %v9040 = vld [vmem:[%s11 + $0x40] sm:$0xff]
          %v9041 = vld [vmem:[%s11 + $0x48] sm:$0xff]
          %v9042 = vld [vmem:[%s11 + $0x50] sm:$0xff]
          %v9043 = vld [vmem:[%s11 + $0x58] sm:$0xff]
          %v9044 = vld [vmem:[%s11 + $0x60] sm:$0xff]
          %v9045 = vld [vmem:[%s11 + $0x68] sm:$0xff]
          %v9046 = vld [vmem:[%s11 + $0x70] sm:$0xff]
          %v9047 = vld [vmem:[%s11 + $0x78] sm:$0xff]
          %9048 = vset.pattern.permute.xlu0 1
          %9049 = vperm.xlu0 %9048, %v8903
          %v9050 = vpop.permute.xlu0 %9049
          %9052 = vset.pattern.permute.xlu0 1
          %9053 = vperm.xlu0 %9052, %v8904
          %v9054 = vpop.permute.xlu0 %9053
          %9056 = vset.pattern.permute.xlu0 1
          %9057 = vperm.xlu0 %9056, %v8905
          %v9058 = vpop.permute.xlu0 %9057
          %9060 = vset.pattern.permute.xlu0 1
          %9061 = vperm.xlu0 %9060, %v8906
          %v9062 = vpop.permute.xlu0 %9061
          %9064 = vset.pattern.permute.xlu0 1
          %9065 = vperm.xlu0 %9064, %v8907
          %v9066 = vpop.permute.xlu0 %9065
          %9068 = vset.pattern.permute.xlu0 1
          %9069 = vperm.xlu0 %9068, %v8908
          %v9070 = vpop.permute.xlu0 %9069
          %9072 = vset.pattern.permute.xlu0 1
          %9073 = vperm.xlu0 %9072, %v8909
          %v9074 = vpop.permute.xlu0 %9073
          %9076 = vset.pattern.permute.xlu0 1
          %9077 = vperm.xlu0 %9076, %v8910
          %v9078 = vpop.permute.xlu0 %9077
          %9080 = vset.pattern.permute.xlu0 1
          %9081 = vperm.xlu0 %9080, %v8911
          %v9082 = vpop.permute.xlu0 %9081
          %9084 = vset.pattern.permute.xlu0 1
          %9085 = vperm.xlu0 %9084, %v8912
          %v9086 = vpop.permute.xlu0 %9085
          %9088 = vset.pattern.permute.xlu0 1
          %9089 = vperm.xlu0 %9088, %v8913
          %v9090 = vpop.permute.xlu0 %9089
          %9092 = vset.pattern.permute.xlu0 1
          %9093 = vperm.xlu0 %9092, %v8914
          %v9094 = vpop.permute.xlu0 %9093
          %9096 = vset.pattern.permute.xlu0 1
          %9097 = vperm.xlu0 %9096, %v8915
          %v9098 = vpop.permute.xlu0 %9097
          %9100 = vset.pattern.permute.xlu0 1
          %9101 = vperm.xlu0 %9100, %v8916
          %v9102 = vpop.permute.xlu0 %9101
          %9104 = vset.pattern.permute.xlu0 1
          %9105 = vperm.xlu0 %9104, %v8917
          %v9106 = vpop.permute.xlu0 %9105
          %9108 = vset.pattern.permute.xlu0 1
          %9109 = vperm.xlu0 %9108, %v8918
          %v9110 = vpop.permute.xlu0 %9109
          %v9112 = vmul.f32 %v9050, %v9032
          %v9113 = vmul.f32 %v9054, %v9033
          %v9114 = vmul.f32 %v9058, %v9034
          %v9115 = vmul.f32 %v9062, %v9035
          %v9116 = vmul.f32 %v9066, %v9036
          %v9117 = vmul.f32 %v9070, %v9037
          %v9118 = vmul.f32 %v9074, %v9038
          %v9119 = vmul.f32 %v9078, %v9039
          %v9120 = vmul.f32 %v9082, %v9040
          %v9121 = vmul.f32 %v9086, %v9041
          %v9122 = vmul.f32 %v9090, %v9042
          %v9123 = vmul.f32 %v9094, %v9043
          %v9124 = vmul.f32 %v9098, %v9044
          %v9125 = vmul.f32 %v9102, %v9045
          %v9126 = vmul.f32 %v9106, %v9046
          %v9127 = vmul.f32 %v9110, %v9047
          %v9128 = vadd.f32 %v9016, %v9112
          %v9129 = vadd.f32 %v9017, %v9113
          %v9130 = vadd.f32 %v9018, %v9114
          %v9131 = vadd.f32 %v9019, %v9115
          %v9132 = vadd.f32 %v9020, %v9116
          %v9133 = vadd.f32 %v9021, %v9117
          %v9134 = vadd.f32 %v9022, %v9118
          %v9135 = vadd.f32 %v9023, %v9119
          %v9136 = vadd.f32 %v9024, %v9120
          %v9137 = vadd.f32 %v9025, %v9121
          %v9138 = vadd.f32 %v9026, %v9122
          %v9139 = vadd.f32 %v9027, %v9123
          %v9140 = vadd.f32 %v9028, %v9124
          %v9141 = vadd.f32 %v9029, %v9125
          %v9142 = vadd.f32 %v9030, %v9126
          %v9143 = vadd.f32 %v9031, %v9127
          %v9144 = vpack.c.bf16 %v9129, %v9128
          %v9145 = vpack.c.bf16 %v9131, %v9130
          %v9146 = vpack.c.bf16 %v9133, %v9132
          %v9147 = vpack.c.bf16 %v9135, %v9134
          %v9148 = vpack.c.bf16 %v9137, %v9136
          %v9149 = vpack.c.bf16 %v9139, %v9138
          %v9150 = vpack.c.bf16 %v9141, %v9140
          %v9151 = vpack.c.bf16 %v9143, %v9142
          %v9152 = vld [vmem:[%s12] sm:$0x1]
          %v9154 = vlaneseq
          %v9155 = vshrl.u32 %v9154, 7
          %v9156 = vsub.s32 0, %v9155
          %v9157 = vrot.slane %v9152, %v9156
          %9159 = vmatprep.subr.bf16.mxu0 0
          %9160 = vmatpush1.bf16.msra.mxu0 %v9144
          %9161 = vmatprep.subr.bf16.mxu0 0
          %9162 = vmatpush1.bf16.msra.mxu0 %v9145
          %9163 = vmatprep.subr.bf16.mxu0 0
          %9164 = vmatpush1.bf16.msra.mxu0 %v9146
          %9165 = vmatprep.subr.bf16.mxu0 0
          %9166 = vmatpush1.bf16.msra.mxu0 %v9147
          %9167 = vmatprep.subr.bf16.mxu0 0
          %9168 = vmatpush1.bf16.msra.mxu0 %v9148
          %9169 = vmatprep.subr.bf16.mxu0 0
          %9170 = vmatpush1.bf16.msra.mxu0 %v9149
          %9171 = vmatprep.subr.bf16.mxu0 0
          %9172 = vmatpush1.bf16.msra.mxu0 %v9150
          %9173 = vmatprep.subr.bf16.mxu0 0
          %9174 = vmatpush1.bf16.msra.mxu0 %v9151
          %9175 = vmatprep.subr.bf16.mxu0 0
          %9176 = vmatpush1.bf16.msra.mxu0 0
          %9177 = vmatprep.subr.bf16.mxu0 0
          %9178 = vmatpush1.bf16.msra.mxu0 0
          %9179 = vmatprep.subr.bf16.mxu0 0
          %9180 = vmatpush1.bf16.msra.mxu0 0
          %9181 = vmatprep.subr.bf16.mxu0 0
          %9182 = vmatpush1.bf16.msra.mxu0 0
          %9183 = vmatprep.subr.bf16.mxu0 0
          %9184 = vmatpush1.bf16.msra.mxu0 0
          %9185 = vmatprep.subr.bf16.mxu0 0
          %9186 = vmatpush1.bf16.msra.mxu0 0
          %9187 = vmatprep.subr.bf16.mxu0 0
          %9188 = vmatpush1.bf16.msra.mxu0 0
          %9189 = vmatprep.subr.bf16.mxu0 0
          %9190 = vmatpush1.bf16.msra.mxu0 0
          %9191 = vmatprep.mubr.bf16.mxu0 0
          %9192 = vmatmul.mubr.bf16.gmra.mrb[0].mxu0 %v8919
          %v9193 = vpop.f32.mrb[0].mxu0
          %v9194 = vadd.f32 %v9157, %v9193
          %v9195 = vpop.f32.mrb[0].mxu0
          %v9196 = vpop.f32.mrb[0].mxu0
          %v9197 = vpop.f32.mrb[0].mxu0
          %9198 = vdwg.mxu0
          %vm9199 = vcmask 25600
          %v9200 = vsel %vm9199, %v9194, -inf
          %9201 = vmax.xlane.f32.xlu0 %v9200
          %v9202 = vpop.xlane.xlu0 %9201
          %v9203 = vsub.f32 %v9194, %v9202
          %v9204 = vmul.f32 %v9203, 1.442695
          %v9205 = vpow.pop %v9204
          %v9206 = vsel %vm9199, %v9205, 0.0
          %9207 = vadd.xlane.f32.xlu0 %v9206
          %v9208 = vpop.xlane.xlu0 %9207
          %v9209 = vrcp.pop %v9208
          %v9210 = vmul.f32 %v9205, %v9209
          %9211 = vst.msk [vmem:[#allocation4] sm:$0x3] %vm9199, %v9210
          %v9212 = vld [vmem:[%s13] sm:$0xff]
          %v9213 = vld [vmem:[%s13 + $0x8] sm:$0xff]
          %v9214 = vld [vmem:[%s13 + $0x10] sm:$0xff]
          %v9215 = vld [vmem:[%s13 + $0x18] sm:$0xff]
          %v9216 = vld [vmem:[%s13 + $0x20] sm:$0xff]
          %v9217 = vld [vmem:[%s13 + $0x28] sm:$0xff]
          %v9218 = vld [vmem:[%s13 + $0x30] sm:$0xff]
          %v9219 = vld [vmem:[%s13 + $0x38] sm:$0xff]
          %v9220 = vld [vmem:[%s13 + $0x40] sm:$0xff]
          %v9221 = vld [vmem:[%s13 + $0x48] sm:$0xff]
          %v9222 = vld [vmem:[%s13 + $0x50] sm:$0xff]
          %v9223 = vld [vmem:[%s13 + $0x58] sm:$0xff]
          %v9224 = vld [vmem:[%s13 + $0x60] sm:$0xff]
          %v9225 = vld [vmem:[%s13 + $0x68] sm:$0xff]
          %v9226 = vld [vmem:[%s13 + $0x70] sm:$0xff]
          %v9227 = vld [vmem:[%s13 + $0x78] sm:$0xff]
          %9228 = vset.pattern.permute.xlu0 2
          %9229 = vperm.xlu0 %9228, %v8903
          %v9230 = vpop.permute.xlu0 %9229
          %9232 = vset.pattern.permute.xlu0 2
          %9233 = vperm.xlu0 %9232, %v8904
          %v9234 = vpop.permute.xlu0 %9233
          %9236 = vset.pattern.permute.xlu0 2
          %9237 = vperm.xlu0 %9236, %v8905
          %v9238 = vpop.permute.xlu0 %9237
          %9240 = vset.pattern.permute.xlu0 2
          %9241 = vperm.xlu0 %9240, %v8906
          %v9242 = vpop.permute.xlu0 %9241
          %9244 = vset.pattern.permute.xlu0 2
          %9245 = vperm.xlu0 %9244, %v8907
          %v9246 = vpop.permute.xlu0 %9245
          %9248 = vset.pattern.permute.xlu0 2
          %9249 = vperm.xlu0 %9248, %v8908
          %v9250 = vpop.permute.xlu0 %9249
          %9252 = vset.pattern.permute.xlu0 2
          %9253 = vperm.xlu0 %9252, %v8909
          %v9254 = vpop.permute.xlu0 %9253
          %9256 = vset.pattern.permute.xlu0 2
          %9257 = vperm.xlu0 %9256, %v8910
          %v9258 = vpop.permute.xlu0 %9257
          %9260 = vset.pattern.permute.xlu0 2
          %9261 = vperm.xlu0 %9260, %v8911
          %v9262 = vpop.permute.xlu0 %9261
          %9264 = vset.pattern.permute.xlu0 2
          %9265 = vperm.xlu0 %9264, %v8912
          %v9266 = vpop.permute.xlu0 %9265
          %9268 = vset.pattern.permute.xlu0 2
          %9269 = vperm.xlu0 %9268, %v8913
          %v9270 = vpop.permute.xlu0 %9269
          %9272 = vset.pattern.permute.xlu0 2
          %9273 = vperm.xlu0 %9272, %v8914
          %v9274 = vpop.permute.xlu0 %9273
          %9276 = vset.pattern.permute.xlu0 2
          %9277 = vperm.xlu0 %9276, %v8915
          %v9278 = vpop.permute.xlu0 %9277
          %9280 = vset.pattern.permute.xlu0 2
          %9281 = vperm.xlu0 %9280, %v8916
          %v9282 = vpop.permute.xlu0 %9281
          %9284 = vset.pattern.permute.xlu0 2
          %9285 = vperm.xlu0 %9284, %v8917
          %v9286 = vpop.permute.xlu0 %9285
          %9288 = vset.pattern.permute.xlu0 2
          %9289 = vperm.xlu0 %9288, %v8918
          %v9290 = vpop.permute.xlu0 %9289
          %v9292 = vmul.f32 %v9230, %v9212
          %v9293 = vmul.f32 %v9234, %v9213
          %v9294 = vmul.f32 %v9238, %v9214
          %v9295 = vmul.f32 %v9242, %v9215
          %v9296 = vmul.f32 %v9246, %v9216
          %v9297 = vmul.f32 %v9250, %v9217
          %v9298 = vmul.f32 %v9254, %v9218
          %v9299 = vmul.f32 %v9258, %v9219
          %v9300 = vmul.f32 %v9262, %v9220
          %v9301 = vmul.f32 %v9266, %v9221
          %v9302 = vmul.f32 %v9270, %v9222
          %v9303 = vmul.f32 %v9274, %v9223
          %v9304 = vmul.f32 %v9278, %v9224
          %v9305 = vmul.f32 %v9282, %v9225
          %v9306 = vmul.f32 %v9286, %v9226
          %v9307 = vmul.f32 %v9290, %v9227
          %v9308 = vpack.c.bf16 %v9293, %v9292
          %v9309 = vpack.c.bf16 %v9295, %v9294
          %v9310 = vpack.c.bf16 %v9297, %v9296
          %v9311 = vpack.c.bf16 %v9299, %v9298
          %v9312 = vpack.c.bf16 %v9301, %v9300
          %v9313 = vpack.c.bf16 %v9303, %v9302
          %v9314 = vpack.c.bf16 %v9305, %v9304
          %v9315 = vpack.c.bf16 %v9307, %v9306
          %v9316 = vld [vmem:[%s14] sm:$0x1]
          %v9318 = vlaneseq
          %v9319 = vshrl.u32 %v9318, 7
          %v9320 = vsub.s32 0, %v9319
          %v9321 = vrot.slane %v9316, %v9320
          %9323 = vmatprep.subr.bf16.mxu0 0
          %9324 = vmatpush1.bf16.msra.mxu0 %v9308
          %9325 = vmatprep.subr.bf16.mxu0 0
          %9326 = vmatpush1.bf16.msra.mxu0 %v9309
          %9327 = vmatprep.subr.bf16.mxu0 0
          %9328 = vmatpush1.bf16.msra.mxu0 %v9310
          %9329 = vmatprep.subr.bf16.mxu0 0
          %9330 = vmatpush1.bf16.msra.mxu0 %v9311
          %9331 = vmatprep.subr.bf16.mxu0 0
          %9332 = vmatpush1.bf16.msra.mxu0 %v9312
          %9333 = vmatprep.subr.bf16.mxu0 0
          %9334 = vmatpush1.bf16.msra.mxu0 %v9313
          %9335 = vmatprep.subr.bf16.mxu0 0
          %9336 = vmatpush1.bf16.msra.mxu0 %v9314
          %9337 = vmatprep.subr.bf16.mxu0 0
          %9338 = vmatpush1.bf16.msra.mxu0 %v9315
          %9339 = vmatprep.subr.bf16.mxu0 0
          %9340 = vmatpush1.bf16.msra.mxu0 0
          %9341 = vmatprep.subr.bf16.mxu0 0
          %9342 = vmatpush1.bf16.msra.mxu0 0
          %9343 = vmatprep.subr.bf16.mxu0 0
          %9344 = vmatpush1.bf16.msra.mxu0 0
          %9345 = vmatprep.subr.bf16.mxu0 0
          %9346 = vmatpush1.bf16.msra.mxu0 0
          %9347 = vmatprep.subr.bf16.mxu0 0
          %9348 = vmatpush1.bf16.msra.mxu0 0
          %9349 = vmatprep.subr.bf16.mxu0 0
          %9350 = vmatpush1.bf16.msra.mxu0 0
          %9351 = vmatprep.subr.bf16.mxu0 0
          %9352 = vmatpush1.bf16.msra.mxu0 0
          %9353 = vmatprep.subr.bf16.mxu0 0
          %9354 = vmatpush1.bf16.msra.mxu0 0
          %9355 = vmatprep.mubr.bf16.mxu0 0
          %9356 = vmatmul.mubr.bf16.gmra.mrb[0].mxu0 %v8919
          %v9357 = vpop.f32.mrb[0].mxu0
          %v9358 = vadd.f32 %v9321, %v9357
          %v9359 = vpop.f32.mrb[0].mxu0
          %v9360 = vpop.f32.mrb[0].mxu0
          %v9361 = vpop.f32.mrb[0].mxu0
          %9362 = vdwg.mxu0
          %v9363 = vmax.f32 %v9358, 0.0
          %v9364 = vpack.c.bf16 %v9363, %v9363
          %v9365 = vld [vmem:[%s15] sm:$0xf]
          %v9366 = vld [vmem:[%s15 + $0x4] sm:$0xf]
          %v9367 = vld [vmem:[%s15 + $0x8] sm:$0xf]
          %v9368 = vld [vmem:[%s15 + $0xc] sm:$0xf]
          %v9369 = vld [vmem:[%s16] sm:$0x1]
          %v9371 = vlaneseq
          %v9372 = vshrl.u32 %v9371, 7
          %v9373 = vsub.s32 0, %v9372
          %v9374 = vrot.slane %v9369, %v9373
          %v9380 = vunpack.c.l.b16 %v9365
          %v9381 = vunpack.c.l.b16 %v9366
          %v9382 = vunpack.c.l.b16 %v9367
          %v9383 = vunpack.c.l.b16 %v9368
          %v9384 = vpack.c.b16 %v9381, %v9380
          %v9385 = vpack.c.b16 %v9383, %v9382
          %v9389 = vsel %vm3492, %v9364, 0
          %9391 = vmatprep.subr.bf16.mxu0 0
          %9392 = vmatpush1.bf16.msra.mxu0 %v9384
          %9393 = vmatprep.subr.bf16.mxu0 0
          %9394 = vmatpush1.bf16.msra.mxu0 %v9385
          %9395 = vmatprep.subr.bf16.mxu0 0
          %9396 = vmatpush1.bf16.msra.mxu0 0
          %9397 = vmatprep.subr.bf16.mxu0 0
          %9398 = vmatpush1.bf16.msra.mxu0 0
          %9399 = vmatprep.subr.bf16.mxu0 0
          %9400 = vmatpush1.bf16.msra.mxu0 0
          %9401 = vmatprep.subr.bf16.mxu0 0
          %9402 = vmatpush1.bf16.msra.mxu0 0
          %9403 = vmatprep.subr.bf16.mxu0 0
          %9404 = vmatpush1.bf16.msra.mxu0 0
          %9405 = vmatprep.subr.bf16.mxu0 0
          %9406 = vmatpush1.bf16.msra.mxu0 0
          %9407 = vmatprep.subr.bf16.mxu0 0
          %9408 = vmatpush1.bf16.msra.mxu0 0
          %9409 = vmatprep.subr.bf16.mxu0 0
          %9410 = vmatpush1.bf16.msra.mxu0 0
          %9411 = vmatprep.subr.bf16.mxu0 0
          %9412 = vmatpush1.bf16.msra.mxu0 0
          %9413 = vmatprep.subr.bf16.mxu0 0
          %9414 = vmatpush1.bf16.msra.mxu0 0
          %9415 = vmatprep.subr.bf16.mxu0 0
          %9416 = vmatpush1.bf16.msra.mxu0 0
          %9417 = vmatprep.subr.bf16.mxu0 0
          %9418 = vmatpush1.bf16.msra.mxu0 0
          %9419 = vmatprep.subr.bf16.mxu0 0
          %9420 = vmatpush1.bf16.msra.mxu0 0
          %9421 = vmatprep.subr.bf16.mxu0 0
          %9422 = vmatpush1.bf16.msra.mxu0 0
          %9423 = vmatprep.mubr.bf16.mxu0 0
          %9424 = vmatmul.mubr.bf16.gmra.mrb[0].mxu0 %v9389
          %v9425 = vpop.f32.mrb[0].mxu0
          %v9426 = vadd.f32 %v9374, %v9425
          %v9427 = vpop.f32.mrb[0].mxu0
          %v9428 = vpop.f32.mrb[0].mxu0
          %v9429 = vpop.f32.mrb[0].mxu0
          %9430 = vdwg.mxu0
          %vm9431 = vcmask 50176
          %v9432 = vsel %vm9431, %v9426, -inf
          %9433 = vmax.xlane.f32.xlu0 %v9432
          %v9434 = vpop.xlane.xlu0 %9433
          %v9435 = vsub.f32 %v9426, %v9434
          %v9436 = vmul.f32 %v9435, 1.442695
          %v9437 = vpow.pop %v9436
          %v9438 = vsel %vm9431, %v9437, 0.0
          %9439 = vadd.xlane.f32.xlu0 %v9438
          %v9440 = vpop.xlane.xlu0 %9439
          %v9441 = vrcp.pop %v9440
          %v9442 = vmul.f32 %v9437, %v9441
          %v9443 = vld [vmem:[%s17] sm:$0x1]
          %v9445 = vlaneseq
          %v9446 = vshrl.u32 %v9445, 7
          %v9447 = vsub.s32 0, %v9446
          %v9448 = vrot.slane %v9443, %v9447
          %v9450 = vmul.f32 %v9448, %v9442
          %v9451 = vsel %vm9431, %v9450, 0.0
          %9452 = vadd.xlane.f32.xlu0 %v9451
          %v9453 = vpop.xlane.xlu0 %9452
          %vm9454 = vcmp.gt.f32.partialorder %v9453, 0.0
          %vm9455 = vcmp.lt.f32.partialorder %v9453, 0.0
          %v9456 = vsel %vm9455, -1.0, 0.0
          %v9457 = vsel %vm9454, 1.0, %v9456
          %v9458 = vand.u32 2147483647, %v9453
          %v9459 = vadd.f32 %v9458, 1.0
          %v9460 = vadd.f32 %v9459, 0.001
          %v9461 = vmul.f32 %v9460, 0.004
          %v9462 = vadd.f32 %v9461, 1.0
          %v9463 = vrsqrt.pop %v9462
          %v9464 = vmul.f32 %v9462, %v9463
          %vm9465 = vcmp.eq.f32.partialorder %v9462, inf
          %v9466 = vsel %vm9465, %v9462, %v9464
          %vm9467 = vcmp.eq.f32.partialorder %v9462, 0.0
          %v9468 = vand.u32 %v9462, 2147483648
          %v9469 = vsel %vm9467, %v9468, %v9466
          %v9470 = vsub.f32 %v9469, 1.0
          %v9471 = vrcp.pop 0.002
          %v9472 = vmul.f32 %v9470, %v9471
          %v9473 = vmul.f32 %v9472, %v9472
          %v9474 = vsub.f32 %v9473, 1.0
          %v9475 = vmul.f32 %v9457, %v9474
          %vm9476 = vcmask 1024
          %9477 = vst.msk [vmem:[%s19] sm:$0x3] %vm9476, %v9475
        $region100: #{muzero_atari_forward.1} parent=91 // pred_fallthru
          _
        // Predicated region
        $region101: #{muzero_atari_forward.1} parent=91 // pred_check
          %p9478 = pneg %p438
        $region102: #{muzero_atari_forward.1} parent=91 // pred_check_branch
          %9480 = sbr.rel (%p9478) target = $region104
        $region103: #{muzero_atari_forward.1} parent=91 // pred_region
          %s9482 = ssub.s32 32, 32
          %9483 = vsyncadd [#allocation5], %s9482
          %s9485 = sshll.u32 [#allocation4], 4
          %s9486 = int_to_ptr.vmem [resolvable:$true] %s9485
          %9488 = dma.vmem_to_hbm [thread:$0]  %s9486, 32, %s18, [#allocation5]
        $region104: #{muzero_atari_forward.1} parent=91 // pred_fallthru
          _
        // Predicated region
        $region105: #{muzero_atari_forward.1} parent=91 // pred_check
          %p9489 = pneg %p459
        $region106: #{muzero_atari_forward.1} parent=91 // pred_check_branch
          %9491 = sbr.rel (%p9489) target = $region108
        $region107: #{muzero_atari_forward.1} parent=91 // pred_region
          _
        $region108: #{muzero_atari_forward.1} parent=91 // pred_fallthru
          _
        // Predicated region
        $region109: #{muzero_atari_forward.1} parent=91 // pred_check
          %p9492 = pneg %p438
        $region110: #{muzero_atari_forward.1} parent=91 // pred_check_branch
          %9494 = sbr.rel (%p9492) target = $region112
        $region111: #{muzero_atari_forward.1} parent=91 // pred_region
          %9495 = dma.done [#allocation5], 32
        $region112: #{muzero_atari_forward.1} parent=91 // pred_fallthru
          _
        // Predicated region
        $region113: #{muzero_atari_forward.1} parent=91 // pred_check
          %p9496 = pneg %p459
        $region114: #{muzero_atari_forward.1} parent=91 // pred_check_branch
          %9498 = sbr.rel (%p9496) target = $region116
        $region115: #{muzero_atari_forward.1} parent=91 // pred_region
          _
        $region116: #{muzero_atari_forward.1} parent=91 // pred_fallthru
          _
      $region92: #{muzero_atari_forward.1} parent=5 // pred_fallthru
        _
      %p9499 = scmp.le.s32.totalorder 2, %s27
      // Predicated region
      $region117: #{muzero_atari_forward.1} parent=5 // pred_check
        %p9500 = pneg %p9499
      $region118: #{muzero_atari_forward.1} parent=5 // pred_check_branch
        %9502 = sbr.rel (%p9500) target = $region120
      $region119: #{muzero_atari_forward.1} parent=5 // pred_region
        %s9503 = ssub.s32 %s27, 2
      $region120: #{muzero_atari_forward.1} parent=5 // pred_fallthru
        _
    $region6: #{muzero_atari_forward.1} parent=1 // loop_footer
      %s31 = sadd.s32 1, %s27
    $region7: #{muzero_atari_forward.1} parent=1 // loop_footer_branch
      %26 = sbr.rel target = $region3
    $region8: #{muzero_atari_forward.1} parent=1 // loop_exit
      _
    %9504 = vsyncpa [#allocation5], 1
    %s9505 = scalar_lea.sflag [#allocation5], 1
    %9506 = vsyncpa %s9505, 1

</llo_original>
